<compile_context>
chip_gen: v7x
topology: tpu7x:2x2x1
jax: 0.10.0
libtpu: 0.0.40
codegen_flags: <defaults>
</compile_context>

<pallas_src>
import functools

import jax
import jax.numpy as jnp
import numpy as np
from jax.experimental import pallas as pl
from jax.experimental.pallas import tpu as pltpu

LEAKY_SLOPE = 0.01   # nn.LeakyReLU default
NEG_INF = -1e30

N_DATA = 6    # node_feats, edge_feats, s_src(bf16), s_dst(bf16), s_dst_t(f32), neg_mask(f32)
N_CTX = 14    # GetContext (+AttentiveGRU1) parameters
N_LAYER = 9   # GNNLayer (+AttentiveGRU2) parameters (stacked over layers)


# ----------------------------------------------------------------------------
# activations / GRU shared by kernel and reference
# ----------------------------------------------------------------------------
def _leaky_relu(x):
    return jnp.where(x > 0, x, LEAKY_SLOPE * x)


def _elu(x):
    # clamp the exp argument so the untaken (positive) lane cannot overflow
    return jnp.where(x > 0, x, jnp.exp(jnp.minimum(x, 0.0)) - 1.0)


def _gru_relu(context, hidden, w_ih, w_hh, b_ih, b_hh, G):
    """relu(GRUCell(context, hidden)) with PyTorch gate order [r | z | n]."""
    f32 = jnp.float32
    gi = jnp.dot(context, w_ih, preferred_element_type=f32) + b_ih   # (V, 3G)
    gh = jnp.dot(hidden, w_hh, preferred_element_type=f32) + b_hh    # (V, 3G)
    r = jax.nn.sigmoid(gi[:, 0:G] + gh[:, 0:G])
    z = jax.nn.sigmoid(gi[:, G:2 * G] + gh[:, G:2 * G])
    n = jnp.tanh(gi[:, 2 * G:3 * G] + r * gh[:, 2 * G:3 * G])
    return jnp.maximum((1.0 - z) * n + z * hidden, 0.0)


# ----------------------------------------------------------------------------
# kernel-side math
# ----------------------------------------------------------------------------
def _gather_bf16(onehot_bf16, feats):
    """Row gather on the MXU's native bf16 path: (R,V)bf16 @ (V,D) -> f32."""
    return jnp.dot(onehot_bf16, feats.astype(onehot_bf16.dtype),
                   preferred_element_type=jnp.float32)


def _attn_exp(logits, s_dst_bf, neg_mask):
    """exp(logit - per-destination max), f32 (E,1).

    Additive precomputed mask (one VPU add over (E,V)), per-node max on the
    XLU, and the gather-back of the max runs on the MXU (bf16 rounding of the
    max cancels exactly in the softmax shift)."""
    E, V = neg_mask.shape
    masked = logits + neg_mask                                       # (E, V)
    node_max = jnp.max(masked, axis=0, keepdims=True)                # (1, V)
    # (1,V) -> (V,1): sublane-broadcast + tile-shaped XLU transpose (negligible)
    node_max_col = jnp.transpose(jnp.broadcast_to(node_max, (8, V)))[:, :1]
    edge_max = _gather_bf16(s_dst_bf, node_max_col)                  # (E, 1)
    return jnp.exp(logits - edge_max)


def _softmax_aggregate(exp_l, edge_vals, s_dst_t):
    """ELU of the edge-softmax-weighted sum of edge_vals grouped by destination.

    Folded normalization: scatter exp*vals and exp separately with the
    pre-transposed (V,E) f32 incidence (plain MXU matmuls, no transpose, fully
    f32), then divide on the node side. Mathematically identical to the
    per-edge softmax followed by a sum."""
    f32 = jnp.float32
    num = jnp.dot(s_dst_t, exp_l * edge_vals, preferred_element_type=f32)   # (V, G)
    den = jnp.dot(s_dst_t, exp_l, preferred_element_type=f32)               # (V, 1)
    return _elu(num / jnp.maximum(den, 1e-30))   # den==0 only for isolated nodes (num==0)


def _get_context_math(hv, he, graph, params, G):
    """GetContext forward (incl. AttentiveGRU1)."""
    s_src, s_dst, s_dst_t, neg_mask = graph
    (w_pn, b_pn, w_pe1a, w_pe1b, b_pe1, w_pe2a, w_pe2b, b_pe2,
     w_et, b_et, w_ih, w_hh, b_ih, b_hh) = params
    f32 = jnp.float32

    hv_new = _leaky_relu(jnp.dot(hv, w_pn, preferred_element_type=f32) + b_pn)        # (V, G)
    src_hv = _gather_bf16(s_src, hv)                                                   # (E, Dn)
    he1 = _leaky_relu(jnp.dot(src_hv, w_pe1a, preferred_element_type=f32)
                      + jnp.dot(he, w_pe1b, preferred_element_type=f32) + b_pe1)       # (E, G)
    dst_hv_new = _gather_bf16(s_dst, hv_new)                                           # (E, G)
    logits = _leaky_relu(jnp.dot(dst_hv_new, w_pe2a, preferred_element_type=f32)
                         + jnp.dot(he1, w_pe2b, preferred_element_type=f32) + b_pe2)   # (E, 1)
    exp_l = _attn_exp(logits, s_dst, neg_mask)                                         # (E, 1)
    msg = jnp.dot(he1, w_et, preferred_element_type=f32) + b_et                        # (E, G)
    context = _softmax_aggregate(exp_l, msg, s_dst_t)                                  # (V, G)
    return _gru_relu(context, hv_new, w_ih, w_hh, b_ih, b_hh, G)


def _gnn_layer_math(hv, graph, params, G):
    """GNNLayer forward (incl. AttentiveGRU2)."""
    s_src, s_dst, s_dst_t, neg_mask = graph
    (w_pea, w_peb, b_pe, w_pn, b_pn, w_ih, w_hh, b_ih, b_hh) = params
    f32 = jnp.float32

    hv_proj = jnp.dot(hv, w_pn, preferred_element_type=f32) + b_pn                     # (V, G)
    dst_hv = _gather_bf16(s_dst, hv)                                                   # (E, G)
    # fused source gather: one (E,V)@(V,2G) MXU pass for both hv and hv_proj
    src_both = _gather_bf16(s_src, jnp.concatenate([hv, hv_proj], axis=1))             # (E, 2G)
    src_hv, src_proj = src_both[:, :G], src_both[:, G:]
    logits = _leaky_relu(jnp.dot(dst_hv, w_pea, preferred_element_type=f32)
                         + jnp.dot(src_hv, w_peb, preferred_element_type=f32) + b_pe)  # (E, 1)
    exp_l = _attn_exp(logits, s_dst, neg_mask)                                         # (E, 1)
    context = _softmax_aggregate(exp_l, src_proj, s_dst_t)                             # (V, G)
    return _gru_relu(context, hv, w_ih, w_hh, b_ih, b_hh, G)


# ----------------------------------------------------------------------------
# fused Pallas kernel: grid axis over layers, node state resident in out_ref
# ----------------------------------------------------------------------------
def _fused_kernel(*refs, G):
    n_in = N_DATA + N_CTX + N_LAYER
    out_ref = refs[n_in]
    (node_ref, edge_ref, s_src_ref, s_dst_ref,
     s_dst_t_ref, mask_ref) = refs[:N_DATA]
    ctx_refs = refs[N_DATA:N_DATA + N_CTX]
    lay_refs = refs[N_DATA + N_CTX:n_in]

    layer = pl.program_id(0)
    graph = (s_src_ref[...], s_dst_ref[...], s_dst_t_ref[...], mask_ref[...])

    @pl.when(layer == 0)
    def _():
        ctx_params = tuple(r[...] for r in ctx_refs)
        out_ref[...] = _get_context_math(node_ref[...], edge_ref[...],
                                         graph, ctx_params, G)

    @pl.when(layer > 0)
    def _():
        lay_params = tuple(r[...] for r in lay_refs)   # leading layer dim is Squeezed
        out_ref[...] = _gnn_layer_math(out_ref[...], graph, lay_params, G)


def _const_spec(shape):
    """Full-array block, same block index every layer step (DMA'd once);
    single-buffered because a constant index never re-DMAs."""
    assert len(shape) == 2
    return pl.BlockSpec(tuple(shape), lambda l: (0, 0),
                        pipeline_mode=pl.Buffered(1))


def _stacked_spec(shape):
    """Per-layer weight slab: squeezed layer dim, slab (layer-1); slab 0
    (unused) at layer 0. Default double buffering prefetches the next slab."""
    return pl.BlockSpec((pl.Squeezed(),) + tuple(shape[1:]),
                        lambda l: (jnp.maximum(l - 1, 0), 0, 0))


def _vmem_limit_bytes():
    try:
        cap = pltpu.get_tpu_info().vmem_capacity_bytes
    except Exception:
        cap = 64 * 1024 * 1024
    # leave headroom for compiler scratch; 96 MiB on 128 MiB parts, 48 MiB on v7x
    return int(min(cap * 3 // 4, 96 * 1024 * 1024))


def attentive_fp_pallas(node_feats, edge_feats, s_src, s_dst,
                        ctx_params, stacked_layer_params, num_layers, G):
    assert num_layers >= 1
    assert len(ctx_params) == N_CTX and len(stacked_layer_params) == N_LAYER
    V = node_feats.shape[0]

    s_src_bf = s_src.astype(jnp.bfloat16)                       # exact 0/1
    s_dst_bf = s_dst.astype(jnp.bfloat16)
    s_dst_t = jnp.transpose(s_dst).astype(jnp.float32)          # (V, E) f32 scatter operand
    neg_mask = ((s_dst - 1.0) * 1e30).astype(jnp.float32)       # additive softmax mask

    data = (node_feats, edge_feats, s_src_bf, s_dst_bf, s_dst_t, neg_mask)
    args = data + tuple(ctx_params) + tuple(stacked_layer_params)
    in_specs = ([_const_spec(a.shape) for a in data]
                + [_const_spec(p.shape) for p in ctx_params]
                + [_stacked_spec(p.shape) for p in stacked_layer_params])

    kernel = functools.partial(_fused_kernel, G=G)
    return pl.pallas_call(
        kernel,
        out_shape=jax.ShapeDtypeStruct((V, G), jnp.float32),
        grid=(num_layers,),
        in_specs=in_specs,
        out_specs=pl.BlockSpec((V, G), lambda l: (0, 0)),   # resident node state
        compiler_params=pltpu.CompilerParams(
            dimension_semantics=("arbitrary",),
            vmem_limit_bytes=_vmem_limit_bytes()),
    )(*args)


# ----------------------------------------------------------------------------
# pure-JAX f32 reference (literal translation of the module semantics)
# ----------------------------------------------------------------------------
def _ref_edge_softmax(logits, s_dst):
    is_dst = s_dst > 0
    node_max = jnp.max(jnp.where(is_dst, logits, NEG_INF), axis=0, keepdims=True)
    edge_max = jnp.max(jnp.where(is_dst, node_max, NEG_INF), axis=1, keepdims=True)
    exp_l = jnp.exp(logits - edge_max)
    node_den = jnp.dot(s_dst.T, exp_l)
    edge_den = jnp.dot(s_dst, node_den)
    return exp_l / edge_den


def _ref_get_context(hv, he, s_src, s_dst, params, G):
    (w_pn, b_pn, w_pe1a, w_pe1b, b_pe1, w_pe2a, w_pe2b, b_pe2,
     w_et, b_et, w_ih, w_hh, b_ih, b_hh) = params
    hv_new = _leaky_relu(hv @ w_pn + b_pn)
    src_hv = s_src @ hv
    he1 = _leaky_relu(src_hv @ w_pe1a + he @ w_pe1b + b_pe1)
    dst_hv_new = s_dst @ hv_new
    logits = _leaky_relu(dst_hv_new @ w_pe2a + he1 @ w_pe2b + b_pe2)
    a = _ref_edge_softmax(logits, s_dst)
    context = _elu(jnp.dot(s_dst.T, a * (he1 @ w_et + b_et)))
    return _gru_relu(context, hv_new, w_ih, w_hh, b_ih, b_hh, G)


def _ref_gnn_layer(hv, s_src, s_dst, params, G):
    (w_pea, w_peb, b_pe, w_pn, b_pn, w_ih, w_hh, b_ih, b_hh) = params
    dst_hv = s_dst @ hv
    src_hv = s_src @ hv
    logits = _leaky_relu(dst_hv @ w_pea + src_hv @ w_peb + b_pe)
    a = _ref_edge_softmax(logits, s_dst)
    hv_proj = hv @ w_pn + b_pn
    context = _elu(jnp.dot(s_dst.T, a * (s_src @ hv_proj)))
    return _gru_relu(context, hv, w_ih, w_hh, b_ih, b_hh, G)


def attentive_fp_reference(node_feats, edge_feats, s_src, s_dst,
                           ctx_params, layer_params_list, G):
    h = _ref_get_context(node_feats, edge_feats, s_src, s_dst, ctx_params, G)
    for lp in layer_params_list:
        h = _ref_gnn_layer(h, s_src, s_dst, lp, G)
    return h


# ----------------------------------------------------------------------------
# deterministic parameter initialization (PyTorch-style uniform bounds)
# ----------------------------------------------------------------------------
def _linear_params(key, fan_in, fan_out):
    k1, k2 = jax.random.split(key)
    bound = 1.0 / np.sqrt(fan_in)
    w = jax.random.uniform(k1, (fan_in, fan_out), jnp.float32, -bound, bound)
    b = jax.random.uniform(k2, (1, fan_out), jnp.float32, -bound, bound)
    return w, b


def _gru_params(key, input_size, hidden_size):
    ks = jax.random.split(key, 4)
    bound = 1.0 / np.sqrt(hidden_size)
    w_ih = jax.random.uniform(ks[0], (input_size, 3 * hidden_size), jnp.float32, -bound, bound)
    w_hh = jax.random.uniform(ks[1], (hidden_size, 3 * hidden_size), jnp.float32, -bound, bound)
    b_ih = jax.random.uniform(ks[2], (1, 3 * hidden_size), jnp.float32, -bound, bound)
    b_hh = jax.random.uniform(ks[3], (1, 3 * hidden_size), jnp.float32, -bound, bound)
    return w_ih, w_hh, b_ih, b_hh


def init_get_context(key, Dn, De, G):
    ks = jax.random.split(key, 5)
    w_pn, b_pn = _linear_params(ks[0], Dn, G)                  # project_node
    w_pe1, b_pe1 = _linear_params(ks[1], Dn + De, G)           # project_edge1
    w_pe1a, w_pe1b = w_pe1[:Dn], w_pe1[Dn:]
    w_pe2, b_pe2 = _linear_params(ks[2], 2 * G, 1)             # project_edge2
    w_pe2a, w_pe2b = w_pe2[:G], w_pe2[G:]
    w_et, b_et = _linear_params(ks[3], G, G)                   # AttentiveGRU1.edge_transform
    gru = _gru_params(ks[4], G, G)
    return (w_pn, b_pn, w_pe1a, w_pe1b, b_pe1, w_pe2a, w_pe2b, b_pe2, w_et, b_et) + gru


def init_gnn_layer(key, G):
    ks = jax.random.split(key, 3)
    w_pe, b_pe = _linear_params(ks[0], 2 * G, 1)               # project_edge
    w_pea, w_peb = w_pe[:G], w_pe[G:]
    w_pn, b_pn = _linear_params(ks[1], G, G)                   # AttentiveGRU2.project_node
    gru = _gru_params(ks[2], G, G)
    return (w_pea, w_peb, b_pe, w_pn, b_pn) + gru


def stack_layer_params(layer_params_list, G):
    """Stack each per-layer parameter along a leading layer axis."""
    if layer_params_list:
        return tuple(jnp.stack(ps, axis=0) for ps in zip(*layer_params_list))
    # no GNN layers: dummy single slab so BlockSpecs stay valid (never read)
    shapes = [(G, 1), (G, 1), (1, 1), (G, G), (1, G),
              (G, 3 * G), (G, 3 * G), (1, 3 * G), (1, 3 * G)]
    return tuple(jnp.zeros((1,) + s, jnp.float32) for s in shapes)


# ----------------------------------------------------------------------------
if __name__ == "__main__":
    key = jax.random.PRNGKey(0)
    Dn, De, G = 32, 16, 128            # node_feat_size, edge_feat_size, graph_feat_size
    V, E = 128, 256                    # nodes / edges, padded to lane/MXU-friendly sizes
    num_layers = 3                     # => 1 GetContext + 2 GNNLayers

    k_n, k_e, k_ctx, k_layers = jax.random.split(key, 4)
    node_feats = jax.random.normal(k_n, (V, Dn), jnp.float32)
    edge_feats = jax.random.normal(k_e, (E, De), jnp.float32)

    # deterministic synthetic graph: every node gets E//V incoming edges
    dst = np.arange(E) % V
    src = (np.arange(E) * 7 + 3) % V
    eye = np.eye(V, dtype=np.float32)
    s_src = jnp.asarray(eye[src])        # (E, V) one-hot source matrix
    s_dst = jnp.asarray(eye[dst])        # (E, V) one-hot destination matrix

    ctx_params = init_get_context(k_ctx, Dn, De, G)
    if num_layers > 1:
        layer_keys = jax.random.split(k_layers, num_layers - 1)
        layer_params = [init_gnn_layer(k, G) for k in layer_keys]
    else:
        layer_params = []
    stacked = stack_layer_params(layer_params, G)

    out = attentive_fp_pallas(node_feats, edge_feats, s_src, s_dst,
                              ctx_params, stacked, num_layers, G)
    out = jax.block_until_ready(out)

    with jax.default_matmul_precision("highest"):
        ref = attentive_fp_reference(node_feats, edge_feats, s_src, s_dst,
                                     ctx_params, layer_params, G)
    ref = jax.block_until_ready(ref)

    assert out.shape == (V, G) and out.dtype == jnp.float32
    assert np.all(np.isfinite(np.asarray(out)))
    if not np.allclose(np.asarray(out), np.asarray(ref), rtol=3e-2, atol=3e-2):
        err = float(np.max(np.abs(np.asarray(out) - np.asarray(ref))))
        raise AssertionError(
            f"Pallas output does not match f32 JAX reference (max abs err {err:.4f})")
    print("KERNEL_OK")
</pallas_src>

<mosaic_0001>
module attributes {stable_mosaic.version = 11 : i64} {
  func.func @_fused_kernel(%arg0: i32, %arg1: memref<128x32xf32, #tpu.memory_space<vmem>>, %arg2: memref<256x16xf32, #tpu.memory_space<vmem>>, %arg3: memref<256x128xbf16, #tpu.memory_space<vmem>>, %arg4: memref<256x128xbf16, #tpu.memory_space<vmem>>, %arg5: memref<128x256xf32, #tpu.memory_space<vmem>>, %arg6: memref<256x128xf32, #tpu.memory_space<vmem>>, %arg7: memref<32x128xf32, #tpu.memory_space<vmem>>, %arg8: memref<1x128xf32, #tpu.memory_space<vmem>>, %arg9: memref<32x128xf32, #tpu.memory_space<vmem>>, %arg10: memref<16x128xf32, #tpu.memory_space<vmem>>, %arg11: memref<1x128xf32, #tpu.memory_space<vmem>>, %arg12: memref<128x1xf32, #tpu.memory_space<vmem>>, %arg13: memref<128x1xf32, #tpu.memory_space<vmem>>, %arg14: memref<1x1xf32, #tpu.memory_space<vmem>>, %arg15: memref<128x128xf32, #tpu.memory_space<vmem>>, %arg16: memref<1x128xf32, #tpu.memory_space<vmem>>, %arg17: memref<128x384xf32, #tpu.memory_space<vmem>>, %arg18: memref<128x384xf32, #tpu.memory_space<vmem>>, %arg19: memref<1x384xf32, #tpu.memory_space<vmem>>, %arg20: memref<1x384xf32, #tpu.memory_space<vmem>>, %arg21: memref<1x128x1xf32, #tpu.memory_space<vmem>>, %arg22: memref<1x128x1xf32, #tpu.memory_space<vmem>>, %arg23: memref<1x1x1xf32, #tpu.memory_space<vmem>>, %arg24: memref<1x128x128xf32, #tpu.memory_space<vmem>>, %arg25: memref<1x1x128xf32, #tpu.memory_space<vmem>>, %arg26: memref<1x128x384xf32, #tpu.memory_space<vmem>>, %arg27: memref<1x128x384xf32, #tpu.memory_space<vmem>>, %arg28: memref<1x1x384xf32, #tpu.memory_space<vmem>>, %arg29: memref<1x1x384xf32, #tpu.memory_space<vmem>>, %arg30: memref<128x128xf32, #tpu.memory_space<vmem>>) attributes {dimension_semantics = [#tpu.dimension_semantics<arbitrary>], iteration_bounds = array<i64: 3>, scalar_prefetch = 0 : i64, scratch_operands = 0 : i64, tpu.core_type = #tpu.core_type<tc>, window_params = [{pipeline_mode = #tpu.pipeline_mode<synchronous>, transform_indices = @transform_0, window_bounds = array<i64: 128, 32>}, {pipeline_mode = #tpu.pipeline_mode<synchronous>, transform_indices = @transform_1, window_bounds = array<i64: 256, 16>}, {pipeline_mode = #tpu.pipeline_mode<synchronous>, transform_indices = @transform_2, window_bounds = array<i64: 256, 128>}, {pipeline_mode = #tpu.pipeline_mode<synchronous>, transform_indices = @transform_3, window_bounds = array<i64: 256, 128>}, {pipeline_mode = #tpu.pipeline_mode<synchronous>, transform_indices = @transform_4, window_bounds = array<i64: 128, 256>}, {pipeline_mode = #tpu.pipeline_mode<synchronous>, transform_indices = @transform_5, window_bounds = array<i64: 256, 128>}, {pipeline_mode = #tpu.pipeline_mode<synchronous>, transform_indices = @transform_6, window_bounds = array<i64: 32, 128>}, {pipeline_mode = #tpu.pipeline_mode<synchronous>, transform_indices = @transform_7, window_bounds = array<i64: 1, 128>}, {pipeline_mode = #tpu.pipeline_mode<synchronous>, transform_indices = @transform_8, window_bounds = array<i64: 32, 128>}, {pipeline_mode = #tpu.pipeline_mode<synchronous>, transform_indices = @transform_9, window_bounds = array<i64: 16, 128>}, {pipeline_mode = #tpu.pipeline_mode<synchronous>, transform_indices = @transform_10, window_bounds = array<i64: 1, 128>}, {pipeline_mode = #tpu.pipeline_mode<synchronous>, transform_indices = @transform_11, window_bounds = array<i64: 128, 1>}, {pipeline_mode = #tpu.pipeline_mode<synchronous>, transform_indices = @transform_12, window_bounds = array<i64: 128, 1>}, {pipeline_mode = #tpu.pipeline_mode<synchronous>, transform_indices = @transform_13, window_bounds = array<i64: 1, 1>}, {pipeline_mode = #tpu.pipeline_mode<synchronous>, transform_indices = @transform_14, window_bounds = array<i64: 128, 128>}, {pipeline_mode = #tpu.pipeline_mode<synchronous>, transform_indices = @transform_15, window_bounds = array<i64: 1, 128>}, {pipeline_mode = #tpu.pipeline_mode<synchronous>, transform_indices = @transform_16, window_bounds = array<i64: 128, 384>}, {pipeline_mode = #tpu.pipeline_mode<synchronous>, transform_indices = @transform_17, window_bounds = array<i64: 128, 384>}, {pipeline_mode = #tpu.pipeline_mode<synchronous>, transform_indices = @transform_18, window_bounds = array<i64: 1, 384>}, {pipeline_mode = #tpu.pipeline_mode<synchronous>, transform_indices = @transform_19, window_bounds = array<i64: 1, 384>}, {transform_indices = @transform_20, window_bounds = array<i64: 1, 128, 1>}, {transform_indices = @transform_21, window_bounds = array<i64: 1, 128, 1>}, {transform_indices = @transform_22, window_bounds = array<i64: 1, 1, 1>}, {transform_indices = @transform_23, window_bounds = array<i64: 1, 128, 128>}, {transform_indices = @transform_24, window_bounds = array<i64: 1, 1, 128>}, {transform_indices = @transform_25, window_bounds = array<i64: 1, 128, 384>}, {transform_indices = @transform_26, window_bounds = array<i64: 1, 128, 384>}, {transform_indices = @transform_27, window_bounds = array<i64: 1, 1, 384>}, {transform_indices = @transform_28, window_bounds = array<i64: 1, 1, 384>}, {pipeline_mode = #tpu.pipeline_mode<synchronous>, transform_indices = @transform_29, window_bounds = array<i64: 128, 128>}]} {
    %c0 = arith.constant 0 : index
    %c0_0 = arith.constant 0 : index
    %0 = vector.load %arg3[%c0, %c0_0] : memref<256x128xbf16, #tpu.memory_space<vmem>>, vector<256x128xbf16>
    %c0_1 = arith.constant 0 : index
    %c0_2 = arith.constant 0 : index
    %1 = vector.load %arg4[%c0_1, %c0_2] : memref<256x128xbf16, #tpu.memory_space<vmem>>, vector<256x128xbf16>
    %c0_3 = arith.constant 0 : index
    %c0_4 = arith.constant 0 : index
    %2 = vector.load %arg5[%c0_3, %c0_4] : memref<128x256xf32, #tpu.memory_space<vmem>>, vector<128x256xf32>
    %c0_5 = arith.constant 0 : index
    %c0_6 = arith.constant 0 : index
    %3 = vector.load %arg6[%c0_5, %c0_6] : memref<256x128xf32, #tpu.memory_space<vmem>>, vector<256x128xf32>
    %c0_i32 = arith.constant 0 : i32
    %4 = arith.cmpi eq, %arg0, %c0_i32 : i32
    %5 = arith.extui %4 : i1 to i32
    %c0_i32_7 = arith.constant 0 : i32
    %6 = arith.cmpi ne, %5, %c0_i32_7 : i32
    scf.if %6 {
      %c0_10 = arith.constant 0 : index
      %c0_11 = arith.constant 0 : index
      %10 = vector.load %arg7[%c0_10, %c0_11] : memref<32x128xf32, #tpu.memory_space<vmem>>, vector<32x128xf32>
      %c0_12 = arith.constant 0 : index
      %c0_13 = arith.constant 0 : index
      %11 = vector.load %arg8[%c0_12, %c0_13] : memref<1x128xf32, #tpu.memory_space<vmem>>, vector<1x128xf32>
      %c0_14 = arith.constant 0 : index
      %c0_15 = arith.constant 0 : index
      %12 = vector.load %arg9[%c0_14, %c0_15] : memref<32x128xf32, #tpu.memory_space<vmem>>, vector<32x128xf32>
      %c0_16 = arith.constant 0 : index
      %c0_17 = arith.constant 0 : index
      %13 = vector.load %arg10[%c0_16, %c0_17] : memref<16x128xf32, #tpu.memory_space<vmem>>, vector<16x128xf32>
      %c0_18 = arith.constant 0 : index
      %c0_19 = arith.constant 0 : index
      %14 = vector.load %arg11[%c0_18, %c0_19] : memref<1x128xf32, #tpu.memory_space<vmem>>, vector<1x128xf32>
      %c0_20 = arith.constant 0 : index
      %c0_21 = arith.constant 0 : index
      %15 = vector.load %arg12[%c0_20, %c0_21] : memref<128x1xf32, #tpu.memory_space<vmem>>, vector<128x1xf32>
      %c0_22 = arith.constant 0 : index
      %c0_23 = arith.constant 0 : index
      %16 = vector.load %arg13[%c0_22, %c0_23] : memref<128x1xf32, #tpu.memory_space<vmem>>, vector<128x1xf32>
      %c0_24 = arith.constant 0 : index
      %c0_25 = arith.constant 0 : index
      %17 = vector.load %arg14[%c0_24, %c0_25] : memref<1x1xf32, #tpu.memory_space<vmem>>, vector<1x1xf32>
      %c0_26 = arith.constant 0 : index
      %c0_27 = arith.constant 0 : index
      %18 = vector.load %arg15[%c0_26, %c0_27] : memref<128x128xf32, #tpu.memory_space<vmem>>, vector<128x128xf32>
      %c0_28 = arith.constant 0 : index
      %c0_29 = arith.constant 0 : index
      %19 = vector.load %arg16[%c0_28, %c0_29] : memref<1x128xf32, #tpu.memory_space<vmem>>, vector<1x128xf32>
      %c0_30 = arith.constant 0 : index
      %c0_31 = arith.constant 0 : index
      %20 = vector.load %arg17[%c0_30, %c0_31] : memref<128x384xf32, #tpu.memory_space<vmem>>, vector<128x384xf32>
      %c0_32 = arith.constant 0 : index
      %c0_33 = arith.constant 0 : index
      %21 = vector.load %arg18[%c0_32, %c0_33] : memref<128x384xf32, #tpu.memory_space<vmem>>, vector<128x384xf32>
      %c0_34 = arith.constant 0 : index
      %c0_35 = arith.constant 0 : index
      %22 = vector.load %arg19[%c0_34, %c0_35] : memref<1x384xf32, #tpu.memory_space<vmem>>, vector<1x384xf32>
      %c0_36 = arith.constant 0 : index
      %c0_37 = arith.constant 0 : index
      %23 = vector.load %arg20[%c0_36, %c0_37] : memref<1x384xf32, #tpu.memory_space<vmem>>, vector<1x384xf32>
      %c0_38 = arith.constant 0 : index
      %c0_39 = arith.constant 0 : index
      %24 = vector.load %arg1[%c0_38, %c0_39] : memref<128x32xf32, #tpu.memory_space<vmem>>, vector<128x32xf32>
      %c0_40 = arith.constant 0 : index
      %c0_41 = arith.constant 0 : index
      %25 = vector.load %arg2[%c0_40, %c0_41] : memref<256x16xf32, #tpu.memory_space<vmem>>, vector<256x16xf32>
      %cst = arith.constant dense<0.000000e+00> : vector<128x128xf32>
      %26 = tpu.matmul %24, %10, %cst {dimension_numbers = #tpu.dot_dimension_numbers<[1], [0], [0], [1], [0, 0, 1, 1], [], []>} : vector<128x32xf32>, vector<32x128xf32>, vector<128x128xf32> -> vector<128x128xf32>
      %27 = vector.broadcast %11 : vector<1x128xf32> to vector<128x128xf32>
      %28 = arith.addf %26, %27 : vector<128x128xf32>
      %cst_42 = arith.constant 0.000000e+00 : f32
      %29 = vector.broadcast %cst_42 : f32 to vector<128x128xf32>
      %30 = arith.cmpf ogt, %28, %29 : vector<128x128xf32>
      %cst_43 = arith.constant 0.00999999977 : f32
      %31 = vector.broadcast %cst_43 : f32 to vector<128x128xf32>
      %32 = arith.mulf %31, %28 : vector<128x128xf32>
      %33 = arith.select %30, %28, %32 : vector<128x128xi1>, vector<128x128xf32>
      %34 = arith.truncf %24 : vector<128x32xf32> to vector<128x32xbf16>
      %cst_44 = arith.constant dense<0.000000e+00> : vector<256x32xf32>
      %35 = tpu.matmul %0, %34, %cst_44 {dimension_numbers = #tpu.dot_dimension_numbers<[1], [0], [0], [1], [0, 0, 1, 1], [], []>} : vector<256x128xbf16>, vector<128x32xbf16>, vector<256x32xf32> -> vector<256x32xf32>
      %cst_45 = arith.constant dense<0.000000e+00> : vector<256x128xf32>
      %36 = tpu.matmul %35, %12, %cst_45 {dimension_numbers = #tpu.dot_dimension_numbers<[1], [0], [0], [1], [0, 0, 1, 1], [], []>} : vector<256x32xf32>, vector<32x128xf32>, vector<256x128xf32> -> vector<256x128xf32>
      %cst_46 = arith.constant dense<0.000000e+00> : vector<256x128xf32>
      %37 = tpu.matmul %25, %13, %cst_46 {dimension_numbers = #tpu.dot_dimension_numbers<[1], [0], [0], [1], [0, 0, 1, 1], [], []>} : vector<256x16xf32>, vector<16x128xf32>, vector<256x128xf32> -> vector<256x128xf32>
      %38 = arith.addf %36, %37 : vector<256x128xf32>
      %39 = vector.broadcast %14 : vector<1x128xf32> to vector<256x128xf32>
      %40 = arith.addf %38, %39 : vector<256x128xf32>
      %cst_47 = arith.constant 0.000000e+00 : f32
      %41 = vector.broadcast %cst_47 : f32 to vector<256x128xf32>
      %42 = arith.cmpf ogt, %40, %41 : vector<256x128xf32>
      %cst_48 = arith.constant 0.00999999977 : f32
      %43 = vector.broadcast %cst_48 : f32 to vector<256x128xf32>
      %44 = arith.mulf %43, %40 : vector<256x128xf32>
      %45 = arith.select %42, %40, %44 : vector<256x128xi1>, vector<256x128xf32>
      %46 = arith.truncf %33 : vector<128x128xf32> to vector<128x128xbf16>
      %cst_49 = arith.constant dense<0.000000e+00> : vector<256x128xf32>
      %47 = tpu.matmul %1, %46, %cst_49 {dimension_numbers = #tpu.dot_dimension_numbers<[1], [0], [0], [1], [0, 0, 1, 1], [], []>} : vector<256x128xbf16>, vector<128x128xbf16>, vector<256x128xf32> -> vector<256x128xf32>
      %cst_50 = arith.constant dense<0.000000e+00> : vector<256x1xf32>
      %48 = tpu.matmul %47, %15, %cst_50 {dimension_numbers = #tpu.dot_dimension_numbers<[1], [0], [0], [1], [0, 0, 1, 1], [], []>} : vector<256x128xf32>, vector<128x1xf32>, vector<256x1xf32> -> vector<256x1xf32>
      %cst_51 = arith.constant dense<0.000000e+00> : vector<256x1xf32>
      %49 = tpu.matmul %45, %16, %cst_51 {dimension_numbers = #tpu.dot_dimension_numbers<[1], [0], [0], [1], [0, 0, 1, 1], [], []>} : vector<256x128xf32>, vector<128x1xf32>, vector<256x1xf32> -> vector<256x1xf32>
      %50 = arith.addf %48, %49 : vector<256x1xf32>
      %51 = vector.broadcast %17 : vector<1x1xf32> to vector<256x1xf32>
      %52 = arith.addf %50, %51 : vector<256x1xf32>
      %cst_52 = arith.constant 0.000000e+00 : f32
      %53 = vector.broadcast %cst_52 : f32 to vector<256x1xf32>
      %54 = arith.cmpf ogt, %52, %53 : vector<256x1xf32>
      %cst_53 = arith.constant 0.00999999977 : f32
      %55 = vector.broadcast %cst_53 : f32 to vector<256x1xf32>
      %56 = arith.mulf %55, %52 : vector<256x1xf32>
      %57 = arith.select %54, %52, %56 : vector<256x1xi1>, vector<256x1xf32>
      %58 = vector.broadcast %57 : vector<256x1xf32> to vector<256x128xf32>
      %59 = arith.addf %58, %3 : vector<256x128xf32>
      %cst_54 = arith.constant dense<0xFF800000> : vector<128xf32>
      %60 = vector.multi_reduction <maximumf>, %59, %cst_54 [0] : vector<256x128xf32> to vector<128xf32>
      %61 = vector.shape_cast %60 : vector<128xf32> to vector<1x128xf32>
      %62 = vector.shape_cast %61 : vector<1x128xf32> to vector<1x128xf32>
      %63 = vector.broadcast %62 : vector<1x128xf32> to vector<8x128xf32>
      %64 = tpu.transpose %63, [1, 0] : vector<8x128xf32> -> vector<128x8xf32>
      %65 = vector.extract_strided_slice %64 {offsets = [0, 0], sizes = [128, 1], strides = [1, 1]} : vector<128x8xf32> to vector<128x1xf32>
      %66 = arith.truncf %65 : vector<128x1xf32> to vector<128x1xbf16>
      %cst_55 = arith.constant dense<0.000000e+00> : vector<256x1xf32>
      %67 = tpu.matmul %1, %66, %cst_55 {dimension_numbers = #tpu.dot_dimension_numbers<[1], [0], [0], [1], [0, 0, 1, 1], [], []>} : vector<256x128xbf16>, vector<128x1xbf16>, vector<256x1xf32> -> vector<256x1xf32>
      %68 = arith.subf %57, %67 : vector<256x1xf32>
      %69 = math.exp %68 : vector<256x1xf32>
      %cst_56 = arith.constant dense<0.000000e+00> : vector<256x128xf32>
      %70 = tpu.matmul %45, %18, %cst_56 {dimension_numbers = #tpu.dot_dimension_numbers<[1], [0], [0], [1], [0, 0, 1, 1], [], []>} : vector<256x128xf32>, vector<128x128xf32>, vector<256x128xf32> -> vector<256x128xf32>
      %71 = vector.broadcast %19 : vector<1x128xf32> to vector<256x128xf32>
      %72 = arith.addf %70, %71 : vector<256x128xf32>
      %73 = vector.broadcast %69 : vector<256x1xf32> to vector<256x128xf32>
      %74 = arith.mulf %73, %72 : vector<256x128xf32>
      %cst_57 = arith.constant dense<0.000000e+00> : vector<128x128xf32>
      %75 = tpu.matmul %2, %74, %cst_57 {dimension_numbers = #tpu.dot_dimension_numbers<[1], [0], [0], [1], [0, 0, 1, 1], [], []>} : vector<128x256xf32>, vector<256x128xf32>, vector<128x128xf32> -> vector<128x128xf32>
      %cst_58 = arith.constant dense<0.000000e+00> : vector<128x1xf32>
      %76 = tpu.matmul %2, %69, %cst_58 {dimension_numbers = #tpu.dot_dimension_numbers<[1], [0], [0], [1], [0, 0, 1, 1], [], []>} : vector<128x256xf32>, vector<256x1xf32>, vector<128x1xf32> -> vector<128x1xf32>
      %cst_59 = arith.constant 1.000000e-30 : f32
      %77 = vector.broadcast %cst_59 : f32 to vector<128x1xf32>
      %78 = arith.maximumf %76, %77 : vector<128x1xf32>
      %79 = vector.broadcast %78 : vector<128x1xf32> to vector<128x128xf32>
      %80 = arith.divf %75, %79 : vector<128x128xf32>
      %cst_60 = arith.constant 0.000000e+00 : f32
      %81 = vector.broadcast %cst_60 : f32 to vector<128x128xf32>
      %82 = arith.cmpf ogt, %80, %81 : vector<128x128xf32>
      %cst_61 = arith.constant 0.000000e+00 : f32
      %83 = vector.broadcast %cst_61 : f32 to vector<128x128xf32>
      %84 = arith.minimumf %80, %83 : vector<128x128xf32>
      %85 = math.exp %84 : vector<128x128xf32>
      %cst_62 = arith.constant 1.000000e+00 : f32
      %86 = vector.broadcast %cst_62 : f32 to vector<128x128xf32>
      %87 = arith.subf %85, %86 : vector<128x128xf32>
      %88 = arith.select %82, %80, %87 : vector<128x128xi1>, vector<128x128xf32>
      %cst_63 = arith.constant dense<0.000000e+00> : vector<128x384xf32>
      %89 = tpu.matmul %88, %20, %cst_63 {dimension_numbers = #tpu.dot_dimension_numbers<[1], [0], [0], [1], [0, 0, 1, 1], [], []>} : vector<128x128xf32>, vector<128x384xf32>, vector<128x384xf32> -> vector<128x384xf32>
      %90 = vector.broadcast %22 : vector<1x384xf32> to vector<128x384xf32>
      %91 = arith.addf %89, %90 : vector<128x384xf32>
      %cst_64 = arith.constant dense<0.000000e+00> : vector<128x384xf32>
      %92 = tpu.matmul %33, %21, %cst_64 {dimension_numbers = #tpu.dot_dimension_numbers<[1], [0], [0], [1], [0, 0, 1, 1], [], []>} : vector<128x128xf32>, vector<128x384xf32>, vector<128x384xf32> -> vector<128x384xf32>
      %93 = vector.broadcast %23 : vector<1x384xf32> to vector<128x384xf32>
      %94 = arith.addf %92, %93 : vector<128x384xf32>
      %95 = vector.extract_strided_slice %91 {offsets = [0, 0], sizes = [128, 128], strides = [1, 1]} : vector<128x384xf32> to vector<128x128xf32>
      %96 = vector.extract_strided_slice %94 {offsets = [0, 0], sizes = [128, 128], strides = [1, 1]} : vector<128x384xf32> to vector<128x128xf32>
      %97 = arith.addf %95, %96 : vector<128x128xf32>
      %98 = arith.negf %97 : vector<128x128xf32>
      %99 = math.exp %98 : vector<128x128xf32>
      %cst_65 = arith.constant 1.000000e+00 : f32
      %100 = vector.broadcast %cst_65 : f32 to vector<128x128xf32>
      %101 = arith.addf %100, %99 : vector<128x128xf32>
      %102 = arith.divf %100, %101 : vector<128x128xf32>
      %103 = vector.extract_strided_slice %91 {offsets = [0, 128], sizes = [128, 128], strides = [1, 1]} : vector<128x384xf32> to vector<128x128xf32>
      %104 = vector.extract_strided_slice %94 {offsets = [0, 128], sizes = [128, 128], strides = [1, 1]} : vector<128x384xf32> to vector<128x128xf32>
      %105 = arith.addf %103, %104 : vector<128x128xf32>
      %106 = arith.negf %105 : vector<128x128xf32>
      %107 = math.exp %106 : vector<128x128xf32>
      %cst_66 = arith.constant 1.000000e+00 : f32
      %108 = vector.broadcast %cst_66 : f32 to vector<128x128xf32>
      %109 = arith.addf %108, %107 : vector<128x128xf32>
      %110 = arith.divf %108, %109 : vector<128x128xf32>
      %111 = vector.extract_strided_slice %91 {offsets = [0, 256], sizes = [128, 128], strides = [1, 1]} : vector<128x384xf32> to vector<128x128xf32>
      %112 = vector.extract_strided_slice %94 {offsets = [0, 256], sizes = [128, 128], strides = [1, 1]} : vector<128x384xf32> to vector<128x128xf32>
      %113 = arith.mulf %102, %112 : vector<128x128xf32>
      %114 = arith.addf %111, %113 : vector<128x128xf32>
      %115 = math.tanh %114 : vector<128x128xf32>
      %cst_67 = arith.constant 1.000000e+00 : f32
      %116 = vector.broadcast %cst_67 : f32 to vector<128x128xf32>
      %117 = arith.subf %116, %110 : vector<128x128xf32>
      %118 = arith.mulf %117, %115 : vector<128x128xf32>
      %119 = arith.mulf %110, %33 : vector<128x128xf32>
      %120 = arith.addf %118, %119 : vector<128x128xf32>
      %cst_68 = arith.constant 0.000000e+00 : f32
      %121 = vector.broadcast %cst_68 : f32 to vector<128x128xf32>
      %122 = arith.maximumf %120, %121 : vector<128x128xf32>
      %c0_69 = arith.constant 0 : index
      %c0_70 = arith.constant 0 : index
      %123 = vector.load %arg30[%c0_69, %c0_70] : memref<128x128xf32, #tpu.memory_space<vmem>>, vector<128x128xf32>
      tpu.vector_store %arg30[%c0_69, %c0_70], %122 {strides = array<i32>} : memref<128x128xf32, #tpu.memory_space<vmem>>, vector<128x128xf32>,
    } else {
    }
    %c0_i32_8 = arith.constant 0 : i32
    %7 = arith.cmpi sgt, %arg0, %c0_i32_8 : i32
    %8 = arith.extui %7 : i1 to i32
    %c0_i32_9 = arith.constant 0 : i32
    %9 = arith.cmpi ne, %8, %c0_i32_9 : i32
    scf.if %9 {
      %c0_10 = arith.constant 0 : index
      %c0_11 = arith.constant 0 : index
      %c0_12 = arith.constant 0 : index
      %10 = vector.load %arg21[%c0_10, %c0_11, %c0_12] : memref<1x128x1xf32, #tpu.memory_space<vmem>>, vector<1x128x1xf32>
      %11 = vector.shape_cast %10 : vector<1x128x1xf32> to vector<128x1xf32>
      %c0_13 = arith.constant 0 : index
      %c0_14 = arith.constant 0 : index
      %c0_15 = arith.constant 0 : index
      %12 = vector.load %arg22[%c0_13, %c0_14, %c0_15] : memref<1x128x1xf32, #tpu.memory_space<vmem>>, vector<1x128x1xf32>
      %13 = vector.shape_cast %12 : vector<1x128x1xf32> to vector<128x1xf32>
      %c0_16 = arith.constant 0 : index
      %c0_17 = arith.constant 0 : index
      %c0_18 = arith.constant 0 : index
      %14 = vector.load %arg23[%c0_16, %c0_17, %c0_18] : memref<1x1x1xf32, #tpu.memory_space<vmem>>, vector<1x1x1xf32>
      %15 = vector.shape_cast %14 : vector<1x1x1xf32> to vector<1x1xf32>
      %c0_19 = arith.constant 0 : index
      %c0_20 = arith.constant 0 : index
      %c0_21 = arith.constant 0 : index
      %16 = vector.load %arg24[%c0_19, %c0_20, %c0_21] : memref<1x128x128xf32, #tpu.memory_space<vmem>>, vector<1x128x128xf32>
      %17 = vector.shape_cast %16 : vector<1x128x128xf32> to vector<128x128xf32>
      %c0_22 = arith.constant 0 : index
      %c0_23 = arith.constant 0 : index
      %c0_24 = arith.constant 0 : index
      %18 = vector.load %arg25[%c0_22, %c0_23, %c0_24] : memref<1x1x128xf32, #tpu.memory_space<vmem>>, vector<1x1x128xf32>
      %19 = vector.shape_cast %18 : vector<1x1x128xf32> to vector<1x128xf32>
      %c0_25 = arith.constant 0 : index
      %c0_26 = arith.constant 0 : index
      %c0_27 = arith.constant 0 : index
      %20 = vector.load %arg26[%c0_25, %c0_26, %c0_27] : memref<1x128x384xf32, #tpu.memory_space<vmem>>, vector<1x128x384xf32>
      %21 = vector.shape_cast %20 : vector<1x128x384xf32> to vector<128x384xf32>
      %c0_28 = arith.constant 0 : index
      %c0_29 = arith.constant 0 : index
      %c0_30 = arith.constant 0 : index
      %22 = vector.load %arg27[%c0_28, %c0_29, %c0_30] : memref<1x128x384xf32, #tpu.memory_space<vmem>>, vector<1x128x384xf32>
      %23 = vector.shape_cast %22 : vector<1x128x384xf32> to vector<128x384xf32>
      %c0_31 = arith.constant 0 : index
      %c0_32 = arith.constant 0 : index
      %c0_33 = arith.constant 0 : index
      %24 = vector.load %arg28[%c0_31, %c0_32, %c0_33] : memref<1x1x384xf32, #tpu.memory_space<vmem>>, vector<1x1x384xf32>
      %25 = vector.shape_cast %24 : vector<1x1x384xf32> to vector<1x384xf32>
      %c0_34 = arith.constant 0 : index
      %c0_35 = arith.constant 0 : index
      %c0_36 = arith.constant 0 : index
      %26 = vector.load %arg29[%c0_34, %c0_35, %c0_36] : memref<1x1x384xf32, #tpu.memory_space<vmem>>, vector<1x1x384xf32>
      %27 = vector.shape_cast %26 : vector<1x1x384xf32> to vector<1x384xf32>
      %c0_37 = arith.constant 0 : index
      %c0_38 = arith.constant 0 : index
      %28 = vector.load %arg30[%c0_37, %c0_38] : memref<128x128xf32, #tpu.memory_space<vmem>>, vector<128x128xf32>
      %cst = arith.constant dense<0.000000e+00> : vector<128x128xf32>
      %29 = tpu.matmul %28, %17, %cst {dimension_numbers = #tpu.dot_dimension_numbers<[1], [0], [0], [1], [0, 0, 1, 1], [], []>} : vector<128x128xf32>, vector<128x128xf32>, vector<128x128xf32> -> vector<128x128xf32>
      %30 = vector.broadcast %19 : vector<1x128xf32> to vector<128x128xf32>
      %31 = arith.addf %29, %30 : vector<128x128xf32>
      %32 = arith.truncf %28 : vector<128x128xf32> to vector<128x128xbf16>
      %cst_39 = arith.constant dense<0.000000e+00> : vector<256x128xf32>
      %33 = tpu.matmul %1, %32, %cst_39 {dimension_numbers = #tpu.dot_dimension_numbers<[1], [0], [0], [1], [0, 0, 1, 1], [], []>} : vector<256x128xbf16>, vector<128x128xbf16>, vector<256x128xf32> -> vector<256x128xf32>
      %34 = tpu.concatenate %28, %31 in 1 : vector<128x128xf32>, vector<128x128xf32> -> vector<128x256xf32>
      %35 = arith.truncf %34 : vector<128x256xf32> to vector<128x256xbf16>
      %cst_40 = arith.constant dense<0.000000e+00> : vector<256x256xf32>
      %36 = tpu.matmul %0, %35, %cst_40 {dimension_numbers = #tpu.dot_dimension_numbers<[1], [0], [0], [1], [0, 0, 1, 1], [], []>} : vector<256x128xbf16>, vector<128x256xbf16>, vector<256x256xf32> -> vector<256x256xf32>
      %37 = vector.extract_strided_slice %36 {offsets = [0, 0], sizes = [256, 128], strides = [1, 1]} : vector<256x256xf32> to vector<256x128xf32>
      %38 = vector.extract_strided_slice %36 {offsets = [0, 128], sizes = [256, 128], strides = [1, 1]} : vector<256x256xf32> to vector<256x128xf32>
      %cst_41 = arith.constant dense<0.000000e+00> : vector<256x1xf32>
      %39 = tpu.matmul %33, %11, %cst_41 {dimension_numbers = #tpu.dot_dimension_numbers<[1], [0], [0], [1], [0, 0, 1, 1], [], []>} : vector<256x128xf32>, vector<128x1xf32>, vector<256x1xf32> -> vector<256x1xf32>
      %cst_42 = arith.constant dense<0.000000e+00> : vector<256x1xf32>
      %40 = tpu.matmul %37, %13, %cst_42 {dimension_numbers = #tpu.dot_dimension_numbers<[1], [0], [0], [1], [0, 0, 1, 1], [], []>} : vector<256x128xf32>, vector<128x1xf32>, vector<256x1xf32> -> vector<256x1xf32>
      %41 = arith.addf %39, %40 : vector<256x1xf32>
      %42 = vector.broadcast %15 : vector<1x1xf32> to vector<256x1xf32>
      %43 = arith.addf %41, %42 : vector<256x1xf32>
      %cst_43 = arith.constant 0.000000e+00 : f32
      %44 = vector.broadcast %cst_43 : f32 to vector<256x1xf32>
      %45 = arith.cmpf ogt, %43, %44 : vector<256x1xf32>
      %cst_44 = arith.constant 0.00999999977 : f32
      %46 = vector.broadcast %cst_44 : f32 to vector<256x1xf32>
      %47 = arith.mulf %46, %43 : vector<256x1xf32>
      %48 = arith.select %45, %43, %47 : vector<256x1xi1>, vector<256x1xf32>
      %49 = vector.broadcast %48 : vector<256x1xf32> to vector<256x128xf32>
      %50 = arith.addf %49, %3 : vector<256x128xf32>
      %cst_45 = arith.constant dense<0xFF800000> : vector<128xf32>
      %51 = vector.multi_reduction <maximumf>, %50, %cst_45 [0] : vector<256x128xf32> to vector<128xf32>
      %52 = vector.shape_cast %51 : vector<128xf32> to vector<1x128xf32>
      %53 = vector.shape_cast %52 : vector<1x128xf32> to vector<1x128xf32>
      %54 = vector.broadcast %53 : vector<1x128xf32> to vector<8x128xf32>
      %55 = tpu.transpose %54, [1, 0] : vector<8x128xf32> -> vector<128x8xf32>
      %56 = vector.extract_strided_slice %55 {offsets = [0, 0], sizes = [128, 1], strides = [1, 1]} : vector<128x8xf32> to vector<128x1xf32>
      %57 = arith.truncf %56 : vector<128x1xf32> to vector<128x1xbf16>
      %cst_46 = arith.constant dense<0.000000e+00> : vector<256x1xf32>
      %58 = tpu.matmul %1, %57, %cst_46 {dimension_numbers = #tpu.dot_dimension_numbers<[1], [0], [0], [1], [0, 0, 1, 1], [], []>} : vector<256x128xbf16>, vector<128x1xbf16>, vector<256x1xf32> -> vector<256x1xf32>
      %59 = arith.subf %48, %58 : vector<256x1xf32>
      %60 = math.exp %59 : vector<256x1xf32>
      %61 = vector.broadcast %60 : vector<256x1xf32> to vector<256x128xf32>
      %62 = arith.mulf %61, %38 : vector<256x128xf32>
      %cst_47 = arith.constant dense<0.000000e+00> : vector<128x128xf32>
      %63 = tpu.matmul %2, %62, %cst_47 {dimension_numbers = #tpu.dot_dimension_numbers<[1], [0], [0], [1], [0, 0, 1, 1], [], []>} : vector<128x256xf32>, vector<256x128xf32>, vector<128x128xf32> -> vector<128x128xf32>
      %cst_48 = arith.constant dense<0.000000e+00> : vector<128x1xf32>
      %64 = tpu.matmul %2, %60, %cst_48 {dimension_numbers = #tpu.dot_dimension_numbers<[1], [0], [0], [1], [0, 0, 1, 1], [], []>} : vector<128x256xf32>, vector<256x1xf32>, vector<128x1xf32> -> vector<128x1xf32>
      %cst_49 = arith.constant 1.000000e-30 : f32
      %65 = vector.broadcast %cst_49 : f32 to vector<128x1xf32>
      %66 = arith.maximumf %64, %65 : vector<128x1xf32>
      %67 = vector.broadcast %66 : vector<128x1xf32> to vector<128x128xf32>
      %68 = arith.divf %63, %67 : vector<128x128xf32>
      %cst_50 = arith.constant 0.000000e+00 : f32
      %69 = vector.broadcast %cst_50 : f32 to vector<128x128xf32>
      %70 = arith.cmpf ogt, %68, %69 : vector<128x128xf32>
      %cst_51 = arith.constant 0.000000e+00 : f32
      %71 = vector.broadcast %cst_51 : f32 to vector<128x128xf32>
      %72 = arith.minimumf %68, %71 : vector<128x128xf32>
      %73 = math.exp %72 : vector<128x128xf32>
      %cst_52 = arith.constant 1.000000e+00 : f32
      %74 = vector.broadcast %cst_52 : f32 to vector<128x128xf32>
      %75 = arith.subf %73, %74 : vector<128x128xf32>
      %76 = arith.select %70, %68, %75 : vector<128x128xi1>, vector<128x128xf32>
      %cst_53 = arith.constant dense<0.000000e+00> : vector<128x384xf32>
      %77 = tpu.matmul %76, %21, %cst_53 {dimension_numbers = #tpu.dot_dimension_numbers<[1], [0], [0], [1], [0, 0, 1, 1], [], []>} : vector<128x128xf32>, vector<128x384xf32>, vector<128x384xf32> -> vector<128x384xf32>
      %78 = vector.broadcast %25 : vector<1x384xf32> to vector<128x384xf32>
      %79 = arith.addf %77, %78 : vector<128x384xf32>
      %cst_54 = arith.constant dense<0.000000e+00> : vector<128x384xf32>
      %80 = tpu.matmul %28, %23, %cst_54 {dimension_numbers = #tpu.dot_dimension_numbers<[1], [0], [0], [1], [0, 0, 1, 1], [], []>} : vector<128x128xf32>, vector<128x384xf32>, vector<128x384xf32> -> vector<128x384xf32>
      %81 = vector.broadcast %27 : vector<1x384xf32> to vector<128x384xf32>
      %82 = arith.addf %80, %81 : vector<128x384xf32>
      %83 = vector.extract_strided_slice %79 {offsets = [0, 0], sizes = [128, 128], strides = [1, 1]} : vector<128x384xf32> to vector<128x128xf32>
      %84 = vector.extract_strided_slice %82 {offsets = [0, 0], sizes = [128, 128], strides = [1, 1]} : vector<128x384xf32> to vector<128x128xf32>
      %85 = arith.addf %83, %84 : vector<128x128xf32>
      %86 = arith.negf %85 : vector<128x128xf32>
      %87 = math.exp %86 : vector<128x128xf32>
      %cst_55 = arith.constant 1.000000e+00 : f32
      %88 = vector.broadcast %cst_55 : f32 to vector<128x128xf32>
      %89 = arith.addf %88, %87 : vector<128x128xf32>
      %90 = arith.divf %88, %89 : vector<128x128xf32>
      %91 = vector.extract_strided_slice %79 {offsets = [0, 128], sizes = [128, 128], strides = [1, 1]} : vector<128x384xf32> to vector<128x128xf32>
      %92 = vector.extract_strided_slice %82 {offsets = [0, 128], sizes = [128, 128], strides = [1, 1]} : vector<128x384xf32> to vector<128x128xf32>
      %93 = arith.addf %91, %92 : vector<128x128xf32>
      %94 = arith.negf %93 : vector<128x128xf32>
      %95 = math.exp %94 : vector<128x128xf32>
      %cst_56 = arith.constant 1.000000e+00 : f32
      %96 = vector.broadcast %cst_56 : f32 to vector<128x128xf32>
      %97 = arith.addf %96, %95 : vector<128x128xf32>
      %98 = arith.divf %96, %97 : vector<128x128xf32>
      %99 = vector.extract_strided_slice %79 {offsets = [0, 256], sizes = [128, 128], strides = [1, 1]} : vector<128x384xf32> to vector<128x128xf32>
      %100 = vector.extract_strided_slice %82 {offsets = [0, 256], sizes = [128, 128], strides = [1, 1]} : vector<128x384xf32> to vector<128x128xf32>
      %101 = arith.mulf %90, %100 : vector<128x128xf32>
      %102 = arith.addf %99, %101 : vector<128x128xf32>
      %103 = math.tanh %102 : vector<128x128xf32>
      %cst_57 = arith.constant 1.000000e+00 : f32
      %104 = vector.broadcast %cst_57 : f32 to vector<128x128xf32>
      %105 = arith.subf %104, %98 : vector<128x128xf32>
      %106 = arith.mulf %105, %103 : vector<128x128xf32>
      %107 = arith.mulf %98, %28 : vector<128x128xf32>
      %108 = arith.addf %106, %107 : vector<128x128xf32>
      %cst_58 = arith.constant 0.000000e+00 : f32
      %109 = vector.broadcast %cst_58 : f32 to vector<128x128xf32>
      %110 = arith.maximumf %108, %109 : vector<128x128xf32>
      %c0_59 = arith.constant 0 : index
      %c0_60 = arith.constant 0 : index
      %111 = vector.load %arg30[%c0_59, %c0_60] : memref<128x128xf32, #tpu.memory_space<vmem>>, vector<128x128xf32>
      tpu.vector_store %arg30[%c0_59, %c0_60], %110 {strides = array<i32>} : memref<128x128xf32, #tpu.memory_space<vmem>>, vector<128x128xf32>,
    } else {
    }
    return
  }
  func.func @transform_0(%arg0: i32) -> (i32, i32) {
    %c0_i32 = arith.constant 0 : i32
    %c0_i32_0 = arith.constant 0 : i32
    %c0_i32_1 = arith.constant 0 : i32
    return %c0_i32, %c0_i32_0 : i32, i32
  }
  func.func @transform_1(%arg0: i32) -> (i32, i32) {
    %c0_i32 = arith.constant 0 : i32
    %c0_i32_0 = arith.constant 0 : i32
    %c0_i32_1 = arith.constant 0 : i32
    return %c0_i32, %c0_i32_0 : i32, i32
  }
  func.func @transform_2(%arg0: i32) -> (i32, i32) {
    %c0_i32 = arith.constant 0 : i32
    %c0_i32_0 = arith.constant 0 : i32
    %c0_i32_1 = arith.constant 0 : i32
    return %c0_i32, %c0_i32_0 : i32, i32
  }
  func.func @transform_3(%arg0: i32) -> (i32, i32) {
    %c0_i32 = arith.constant 0 : i32
    %c0_i32_0 = arith.constant 0 : i32
    %c0_i32_1 = arith.constant 0 : i32
    return %c0_i32, %c0_i32_0 : i32, i32
  }
  func.func @transform_4(%arg0: i32) -> (i32, i32) {
    %c0_i32 = arith.constant 0 : i32
    %c0_i32_0 = arith.constant 0 : i32
    %c0_i32_1 = arith.constant 0 : i32
    return %c0_i32, %c0_i32_0 : i32, i32
  }
  func.func @transform_5(%arg0: i32) -> (i32, i32) {
    %c0_i32 = arith.constant 0 : i32
    %c0_i32_0 = arith.constant 0 : i32
    %c0_i32_1 = arith.constant 0 : i32
    return %c0_i32, %c0_i32_0 : i32, i32
  }
  func.func @transform_6(%arg0: i32) -> (i32, i32) {
    %c0_i32 = arith.constant 0 : i32
    %c0_i32_0 = arith.constant 0 : i32
    %c0_i32_1 = arith.constant 0 : i32
    return %c0_i32, %c0_i32_0 : i32, i32
  }
  func.func @transform_7(%arg0: i32) -> (i32, i32) {
    %c0_i32 = arith.constant 0 : i32
    %c0_i32_0 = arith.constant 0 : i32
    %c0_i32_1 = arith.constant 0 : i32
    return %c0_i32, %c0_i32_0 : i32, i32
  }
  func.func @transform_8(%arg0: i32) -> (i32, i32) {
    %c0_i32 = arith.constant 0 : i32
    %c0_i32_0 = arith.constant 0 : i32
    %c0_i32_1 = arith.constant 0 : i32
    return %c0_i32, %c0_i32_0 : i32, i32
  }
  func.func @transform_9(%arg0: i32) -> (i32, i32) {
    %c0_i32 = arith.constant 0 : i32
    %c0_i32_0 = arith.constant 0 : i32
    %c0_i32_1 = arith.constant 0 : i32
    return %c0_i32, %c0_i32_0 : i32, i32
  }
  func.func @transform_10(%arg0: i32) -> (i32, i32) {
    %c0_i32 = arith.constant 0 : i32
    %c0_i32_0 = arith.constant 0 : i32
    %c0_i32_1 = arith.constant 0 : i32
    return %c0_i32, %c0_i32_0 : i32, i32
  }
  func.func @transform_11(%arg0: i32) -> (i32, i32) {
    %c0_i32 = arith.constant 0 : i32
    %c0_i32_0 = arith.constant 0 : i32
    %c0_i32_1 = arith.constant 0 : i32
    return %c0_i32, %c0_i32_0 : i32, i32
  }
  func.func @transform_12(%arg0: i32) -> (i32, i32) {
    %c0_i32 = arith.constant 0 : i32
    %c0_i32_0 = arith.constant 0 : i32
    %c0_i32_1 = arith.constant 0 : i32
    return %c0_i32, %c0_i32_0 : i32, i32
  }
  func.func @transform_13(%arg0: i32) -> (i32, i32) {
    %c0_i32 = arith.constant 0 : i32
    %c0_i32_0 = arith.constant 0 : i32
    %c0_i32_1 = arith.constant 0 : i32
    return %c0_i32, %c0_i32_0 : i32, i32
  }
  func.func @transform_14(%arg0: i32) -> (i32, i32) {
    %c0_i32 = arith.constant 0 : i32
    %c0_i32_0 = arith.constant 0 : i32
    %c0_i32_1 = arith.constant 0 : i32
    return %c0_i32, %c0_i32_0 : i32, i32
  }
  func.func @transform_15(%arg0: i32) -> (i32, i32) {
    %c0_i32 = arith.constant 0 : i32
    %c0_i32_0 = arith.constant 0 : i32
    %c0_i32_1 = arith.constant 0 : i32
    return %c0_i32, %c0_i32_0 : i32, i32
  }
  func.func @transform_16(%arg0: i32) -> (i32, i32) {
    %c0_i32 = arith.constant 0 : i32
    %c0_i32_0 = arith.constant 0 : i32
    %c0_i32_1 = arith.constant 0 : i32
    return %c0_i32, %c0_i32_0 : i32, i32
  }
  func.func @transform_17(%arg0: i32) -> (i32, i32) {
    %c0_i32 = arith.constant 0 : i32
    %c0_i32_0 = arith.constant 0 : i32
    %c0_i32_1 = arith.constant 0 : i32
    return %c0_i32, %c0_i32_0 : i32, i32
  }
  func.func @transform_18(%arg0: i32) -> (i32, i32) {
    %c0_i32 = arith.constant 0 : i32
    %c0_i32_0 = arith.constant 0 : i32
    %c0_i32_1 = arith.constant 0 : i32
    return %c0_i32, %c0_i32_0 : i32, i32
  }
  func.func @transform_19(%arg0: i32) -> (i32, i32) {
    %c0_i32 = arith.constant 0 : i32
    %c0_i32_0 = arith.constant 0 : i32
    %c0_i32_1 = arith.constant 0 : i32
    return %c0_i32, %c0_i32_0 : i32, i32
  }
  func.func @transform_20(%arg0: i32) -> (i32, i32, i32) {
    %c1_i32 = arith.constant 1 : i32
    %0 = arith.subi %arg0, %c1_i32 : i32
    %c0_i32 = arith.constant 0 : i32
    %1 = arith.maxsi %0, %c0_i32 : i32
    %c0_i32_0 = arith.constant 0 : i32
    %c0_i32_1 = arith.constant 0 : i32
    %c0_i32_2 = arith.constant 0 : i32
    return %1, %c0_i32_0, %c0_i32_1 : i32, i32, i32
  }
  func.func @transform_21(%arg0: i32) -> (i32, i32, i32) {
    %c1_i32 = arith.constant 1 : i32
    %0 = arith.subi %arg0, %c1_i32 : i32
    %c0_i32 = arith.constant 0 : i32
    %1 = arith.maxsi %0, %c0_i32 : i32
    %c0_i32_0 = arith.constant 0 : i32
    %c0_i32_1 = arith.constant 0 : i32
    %c0_i32_2 = arith.constant 0 : i32
    return %1, %c0_i32_0, %c0_i32_1 : i32, i32, i32
  }
  func.func @transform_22(%arg0: i32) -> (i32, i32, i32) {
    %c1_i32 = arith.constant 1 : i32
    %0 = arith.subi %arg0, %c1_i32 : i32
    %c0_i32 = arith.constant 0 : i32
    %1 = arith.maxsi %0, %c0_i32 : i32
    %c0_i32_0 = arith.constant 0 : i32
    %c0_i32_1 = arith.constant 0 : i32
    %c0_i32_2 = arith.constant 0 : i32
    return %1, %c0_i32_0, %c0_i32_1 : i32, i32, i32
  }
  func.func @transform_23(%arg0: i32) -> (i32, i32, i32) {
    %c1_i32 = arith.constant 1 : i32
    %0 = arith.subi %arg0, %c1_i32 : i32
    %c0_i32 = arith.constant 0 : i32
    %1 = arith.maxsi %0, %c0_i32 : i32
    %c0_i32_0 = arith.constant 0 : i32
    %c0_i32_1 = arith.constant 0 : i32
    %c0_i32_2 = arith.constant 0 : i32
    return %1, %c0_i32_0, %c0_i32_1 : i32, i32, i32
  }
  func.func @transform_24(%arg0: i32) -> (i32, i32, i32) {
    %c1_i32 = arith.constant 1 : i32
    %0 = arith.subi %arg0, %c1_i32 : i32
    %c0_i32 = arith.constant 0 : i32
    %1 = arith.maxsi %0, %c0_i32 : i32
    %c0_i32_0 = arith.constant 0 : i32
    %c0_i32_1 = arith.constant 0 : i32
    %c0_i32_2 = arith.constant 0 : i32
    return %1, %c0_i32_0, %c0_i32_1 : i32, i32, i32
  }
  func.func @transform_25(%arg0: i32) -> (i32, i32, i32) {
    %c1_i32 = arith.constant 1 : i32
    %0 = arith.subi %arg0, %c1_i32 : i32
    %c0_i32 = arith.constant 0 : i32
    %1 = arith.maxsi %0, %c0_i32 : i32
    %c0_i32_0 = arith.constant 0 : i32
    %c0_i32_1 = arith.constant 0 : i32
    %c0_i32_2 = arith.constant 0 : i32
    return %1, %c0_i32_0, %c0_i32_1 : i32, i32, i32
  }
  func.func @transform_26(%arg0: i32) -> (i32, i32, i32) {
    %c1_i32 = arith.constant 1 : i32
    %0 = arith.subi %arg0, %c1_i32 : i32
    %c0_i32 = arith.constant 0 : i32
    %1 = arith.maxsi %0, %c0_i32 : i32
    %c0_i32_0 = arith.constant 0 : i32
    %c0_i32_1 = arith.constant 0 : i32
    %c0_i32_2 = arith.constant 0 : i32
    return %1, %c0_i32_0, %c0_i32_1 : i32, i32, i32
  }
  func.func @transform_27(%arg0: i32) -> (i32, i32, i32) {
    %c1_i32 = arith.constant 1 : i32
    %0 = arith.subi %arg0, %c1_i32 : i32
    %c0_i32 = arith.constant 0 : i32
    %1 = arith.maxsi %0, %c0_i32 : i32
    %c0_i32_0 = arith.constant 0 : i32
    %c0_i32_1 = arith.constant 0 : i32
    %c0_i32_2 = arith.constant 0 : i32
    return %1, %c0_i32_0, %c0_i32_1 : i32, i32, i32
  }
  func.func @transform_28(%arg0: i32) -> (i32, i32, i32) {
    %c1_i32 = arith.constant 1 : i32
    %0 = arith.subi %arg0, %c1_i32 : i32
    %c0_i32 = arith.constant 0 : i32
    %1 = arith.maxsi %0, %c0_i32 : i32
    %c0_i32_0 = arith.constant 0 : i32
    %c0_i32_1 = arith.constant 0 : i32
    %c0_i32_2 = arith.constant 0 : i32
    return %1, %c0_i32_0, %c0_i32_1 : i32, i32, i32
  }
  func.func @transform_29(%arg0: i32) -> (i32, i32) {
    %c0_i32 = arith.constant 0 : i32
    %c0_i32_0 = arith.constant 0 : i32
    %c0_i32_1 = arith.constant 0 : i32
    return %c0_i32, %c0_i32_0 : i32, i32
  }
}

</mosaic_0001>

<llo_original>
// kernel: tpu_custom_call.1
$region0: #{tpu_custom_call.1}
  #allocation0 [shape = 'u32[]', space=smem, size = 0x4, offset = 0x4, fixed_abs, tag = 'smem constant byte address 0x4 - core index']
  #allocation1 [shape = 'u32[144,128]{1,0:T(1,128)}', space=vmem, size = 0x12000, scoped, tag = 'internal scratch']
  #allocation2 [shape = 'f32[1,1]{1,0:T(1,128)S(1)}', space=vmem, size = 0x200, scoped, tag = 'scoped memory for tpu_custom_call.1']
  %s0 = inlined_call_operand.smem [shape: u32[30], index: -1, kind: input, shape index: {}]
  %s1 = sld [smem:[%s0]]
  %s2 = scalar_lea.smem %s0, 1
  %s3 = sld [smem:[%s2]]
  %s4 = scalar_lea.smem %s0, 2
  %s5 = sld [smem:[%s4]]
  %s6 = scalar_lea.smem %s0, 3
  %s7 = sld [smem:[%s6]]
  %s8 = scalar_lea.smem %s0, 4
  %s9 = sld [smem:[%s8]]
  %s10 = scalar_lea.smem %s0, 5
  %s11 = sld [smem:[%s10]]
  %s12 = scalar_lea.smem %s0, 6
  %s13 = sld [smem:[%s12]]
  %s14 = scalar_lea.smem %s0, 7
  %s15 = sld [smem:[%s14]]
  %s16 = scalar_lea.smem %s0, 8
  %s17 = sld [smem:[%s16]]
  %s18 = scalar_lea.smem %s0, 9
  %s19 = sld [smem:[%s18]]
  %s20 = scalar_lea.smem %s0, 10
  %s21 = sld [smem:[%s20]]
  %s22 = scalar_lea.smem %s0, 11
  %s23 = sld [smem:[%s22]]
  %s24 = scalar_lea.smem %s0, 12
  %s25 = sld [smem:[%s24]]
  %s26 = scalar_lea.smem %s0, 13
  %s27 = sld [smem:[%s26]]
  %s28 = scalar_lea.smem %s0, 14
  %s29 = sld [smem:[%s28]]
  %s30 = scalar_lea.smem %s0, 15
  %s31 = sld [smem:[%s30]]
  %s32 = scalar_lea.smem %s0, 16
  %s33 = sld [smem:[%s32]]
  %s34 = scalar_lea.smem %s0, 17
  %s35 = sld [smem:[%s34]]
  %s36 = scalar_lea.smem %s0, 18
  %s37 = sld [smem:[%s36]]
  %s38 = scalar_lea.smem %s0, 19
  %s39 = sld [smem:[%s38]]
  %s40 = scalar_lea.smem %s0, 20
  %s41 = sld [smem:[%s40]]
  %s42 = scalar_lea.smem %s0, 21
  %s43 = sld [smem:[%s42]]
  %s44 = scalar_lea.smem %s0, 22
  %s45 = sld [smem:[%s44]]
  %s46 = scalar_lea.smem %s0, 23
  %s47 = sld [smem:[%s46]]
  %s48 = scalar_lea.smem %s0, 24
  %s49 = sld [smem:[%s48]]
  %s50 = scalar_lea.smem %s0, 25
  %s51 = sld [smem:[%s50]]
  %s52 = scalar_lea.smem %s0, 26
  %s53 = sld [smem:[%s52]]
  %s54 = scalar_lea.smem %s0, 27
  %s55 = sld [smem:[%s54]]
  %s56 = scalar_lea.smem %s0, 28
  %s57 = sld [smem:[%s56]]
  %s58 = scalar_lea.smem %s0, 29
  %s59 = sld [smem:[%s58]]
  %s60 = sld [smem:[#allocation0]]
  $region217: #{tpu_custom_call.1} parent=0
    _
  %s62 = ssub.s32 1, %s60
  %s63 = scalar_select 0, %s62, %s60
  %v64 = vstv %s27
  %65 = vst [vmem:[#allocation2] sm:$0x1] %v64
  $region1: #{tpu_custom_call.1} parent=0
    #allocation3 [shape = 'u8[65536]{0}', space=vmem, size = 0x10000, scoped, tag = 'input window, operand 3, single buffered']
    #allocation4 [shape = 's32[2]{0}', space=sflag, size = 0x8, scoped, tag = 'scoped memory for tpu_custom_call.1']
    #allocation5 [shape = 's32[2]{0}', space=sflag, size = 0x8, scoped, tag = 'scoped memory for tpu_custom_call.1']
    #allocation6 [shape = 'u8[131072]{0}', space=vmem, size = 0x20000, scoped, tag = 'input window, operand 4, single buffered']
    #allocation7 [shape = 's32[1]{0}', space=sflag, size = 0x4, scoped, tag = 'scoped memory for tpu_custom_call.1']
    #allocation8 [shape = 'u8[131072]{0}', space=vmem, size = 0x20000, scoped, tag = 'input window, operand 5, single buffered']
    #allocation9 [shape = 'u8[512]{0}', space=vmem, size = 0x400, scoped, tag = 'input window, operand 7, single buffered']
    #allocation10 [shape = 's32[1]{0}', space=sflag, size = 0x4, scoped, tag = 'scoped memory for tpu_custom_call.1']
    #allocation11 [shape = 'u8[16384]{0}', space=vmem, size = 0x4000, scoped, tag = 'input window, operand 8, single buffered']
    #allocation12 [shape = 'u8[8192]{0}', space=vmem, size = 0x2000, scoped, tag = 'input window, operand 9, single buffered']
    #allocation13 [shape = 's32[1]{0}', space=sflag, size = 0x4, scoped, tag = 'scoped memory for tpu_custom_call.1']
    #allocation14 [shape = 'u8[512]{0}', space=vmem, size = 0x400, scoped, tag = 'input window, operand 10, single buffered']
    #allocation15 [shape = 'u8[65536]{0}', space=vmem, size = 0x10000, scoped, tag = 'input window, operand 14, single buffered']
    #allocation16 [shape = 's32[1]{0}', space=sflag, size = 0x4, scoped, tag = 'scoped memory for tpu_custom_call.1']
    #allocation17 [shape = 'u8[512]{0}', space=vmem, size = 0x400, scoped, tag = 'input window, operand 15, single buffered']
    #allocation18 [shape = 'u8[196608]{0}', space=vmem, size = 0x30000, scoped, tag = 'input window, operand 17, single buffered']
    #allocation19 [shape = 's32[1]{0}', space=sflag, size = 0x4, scoped, tag = 'scoped memory for tpu_custom_call.1']
    #allocation20 [shape = 'u8[1536]{0}', space=vmem, size = 0x800, scoped, tag = 'input window, operand 18, single buffered']
    #allocation21 [shape = 'u8[1536]{0}', space=vmem, size = 0x800, scoped, tag = 'input window, operand 19, single buffered']
    #allocation22 [shape = 's32[1]{0}', space=sflag, size = 0x4, scoped, tag = 'scoped memory for tpu_custom_call.1']
    #allocation23 [shape = 'u8[131072]{0}', space=vmem, size = 0x20000, scoped, tag = 'input window, operand 23']
    #allocation24 [shape = 'u8[1024]{0}', space=vmem, size = 0x400, scoped, tag = 'input window, operand 24']
    #allocation25 [shape = 'u8[393216]{0}', space=vmem, size = 0x60000, scoped, tag = 'input window, operand 26']
    #allocation26 [shape = 'u8[65536]{0}', space=vmem, size = 0x10000, scoped, tag = 'output window, operand 0, single buffered']
    %66 = vsyncpa [#allocation4], 0
    %67 = vsyncpa [#allocation7], 0
    %68 = vsyncpa [#allocation10], 0
    %69 = vsyncpa [#allocation13], 0
    %70 = vsyncpa [#allocation16], 0
    %71 = vsyncpa [#allocation19], 0
    %72 = vsyncpa [#allocation22], 0
    %73 = vsyncpa [#allocation5], 0
    loop: start=0, step=1, limit=5
    $region2: #{tpu_custom_call.1} parent=1 // loop_pre_header
      _
    $region3: #{tpu_custom_call.1} parent=1 // loop_header
      %s75 = sphi 0, %s79
      %p76 = scmp.ge.s32.totalorder %s75, 5
      %s83 = sphi 0, %s83
      %s85 = sphi 0, %s83
      %s86 = sphi 0, %s85
      %s100 = sphi 0, %s86
      %s104 = sphi 0, %s104
      %s106 = sphi 0, %s104
      %s107 = sphi 0, %s106
      %s121 = sphi 0, %s107
      %s125 = sphi 0, %s125
      %s127 = sphi 0, %s125
      %s128 = sphi 0, %s127
      %s142 = sphi 0, %s128
      %s146 = sphi 0, %s146
      %s148 = sphi 0, %s146
      %s149 = sphi 0, %s148
      %s163 = sphi 0, %s149
      %s167 = sphi 0, %s167
      %s169 = sphi 0, %s167
      %s170 = sphi 0, %s169
      %s184 = sphi 0, %s170
      %s188 = sphi 0, %s188
      %s190 = sphi 0, %s188
      %s191 = sphi 0, %s190
      %s205 = sphi 0, %s191
      %s209 = sphi 0, %s209
      %s211 = sphi 0, %s209
      %s212 = sphi 0, %s211
      %s226 = sphi 0, %s212
      %s230 = sphi 0, %s230
      %s232 = sphi 0, %s230
      %s233 = sphi 0, %s232
      %s247 = sphi 0, %s233
      %s251 = sphi 0, %s251
      %s253 = sphi 0, %s251
      %s254 = sphi 0, %s253
      %s268 = sphi 0, %s254
      %s272 = sphi 0, %s272
      %s274 = sphi 0, %s272
      %s275 = sphi 0, %s274
      %s289 = sphi 0, %s275
      %s293 = sphi 0, %s293
      %s295 = sphi 0, %s293
      %s296 = sphi 0, %s295
      %s310 = sphi 0, %s296
      %s314 = sphi 0, %s314
      %s316 = sphi 0, %s314
      %s317 = sphi 0, %s316
      %s331 = sphi 0, %s317
      %s335 = sphi 0, %s335
      %s337 = sphi 0, %s335
      %s338 = sphi 0, %s337
      %s352 = sphi 0, %s338
      %s356 = sphi 0, %s356
      %s358 = sphi 0, %s356
      %s359 = sphi 0, %s358
      %s373 = sphi 0, %s359
      %s377 = sphi 0, %s377
      %s379 = sphi 0, %s377
      %s380 = sphi 0, %s379
      %s394 = sphi 0, %s380
      %s398 = sphi 0, %s398
      %s400 = sphi 0, %s398
      %s401 = sphi 0, %s400
      %s415 = sphi 0, %s401
      %s419 = sphi 0, %s419
      %s421 = sphi 0, %s419
      %s422 = sphi 0, %s421
      %s436 = sphi 0, %s422
      %s440 = sphi 0, %s440
      %s442 = sphi 0, %s440
      %s443 = sphi 0, %s442
      %s457 = sphi 0, %s443
      %s461 = sphi 0, %s461
      %s463 = sphi 0, %s461
      %s464 = sphi 0, %s463
      %s478 = sphi 0, %s464
      %s482 = sphi 0, %s482
      %s484 = sphi 0, %s482
      %s485 = sphi 0, %s484
      %s499 = sphi 0, %s485
      %s511 = sphi 0, %s513
      %s514 = sphi 0, %s511
      %s515 = sphi 0, %s514
      %s531 = sphi 0, %s515
      %s543 = sphi 0, %s545
      %s546 = sphi 0, %s543
      %s547 = sphi 0, %s546
      %s563 = sphi 0, %s547
      %s575 = sphi 0, %s577
      %s578 = sphi 0, %s575
      %s579 = sphi 0, %s578
      %s595 = sphi 0, %s579
      %s607 = sphi 0, %s609
      %s610 = sphi 0, %s607
      %s611 = sphi 0, %s610
      %s627 = sphi 0, %s611
      %s639 = sphi 0, %s641
      %s642 = sphi 0, %s639
      %s643 = sphi 0, %s642
      %s659 = sphi 0, %s643
      %s671 = sphi 0, %s673
      %s674 = sphi 0, %s671
      %s675 = sphi 0, %s674
      %s691 = sphi 0, %s675
      %s703 = sphi 0, %s705
      %s706 = sphi 0, %s703
      %s707 = sphi 0, %s706
      %s723 = sphi 0, %s707
      %s735 = sphi 0, %s737
      %s738 = sphi 0, %s735
      %s739 = sphi 0, %s738
      %s755 = sphi 0, %s739
      %s767 = sphi 0, %s769
      %s770 = sphi 0, %s767
      %s771 = sphi 0, %s770
      %s787 = sphi 0, %s771
      %s791 = sphi 0, %s791
      %s793 = sphi 0, %s791
      %s794 = sphi 0, %s793
      %s808 = sphi 0, %s794
    $region4: #{tpu_custom_call.1} parent=1 // loop_header_branch
      %78 = sbr.rel (%p76) target = $region8
    $region5: #{tpu_custom_call.1} parent=1 // loop_body
      %s80 = ssub.s32 %s75, 1
      %s81 = ssub.s32 %s75, 2
      %s82 = sadd.s32 %s75, 1
      %s84 = sadd.s32 %s83, 1
      %p87 = scmp.eq.s32.totalorder %s75, 2
      %p88 = scmp.ne.s32.totalorder %s83, %s85
      %p89 = scmp.eq.s32.totalorder %s75, 0
      %p90 = por %p88, %p89
      %p91 = scmp.ne.s32.totalorder %s83, %s85
      %p92 = scmp.eq.s32.totalorder %s80, 2
      %p93 = por %p91, %p92
      %p94 = scmp.ne.s32.totalorder %s85, %s86
      %p95 = scmp.eq.s32.totalorder %s80, 0
      %p96 = por %p94, %p95
      %p97 = scmp.ne.s32.totalorder %s85, %s86
      %p98 = scmp.eq.s32.totalorder %s81, 2
      %p99 = por %p97, %p98
      %p101 = scmp.ne.s32.totalorder %s86, %s100
      %p102 = scmp.eq.s32.totalorder %s81, 0
      %p103 = por %p101, %p102
      %s105 = sadd.s32 %s104, 1
      %p108 = scmp.eq.s32.totalorder %s75, 2
      %p109 = scmp.ne.s32.totalorder %s104, %s106
      %p110 = scmp.eq.s32.totalorder %s75, 0
      %p111 = por %p109, %p110
      %p112 = scmp.ne.s32.totalorder %s104, %s106
      %p113 = scmp.eq.s32.totalorder %s80, 2
      %p114 = por %p112, %p113
      %p115 = scmp.ne.s32.totalorder %s106, %s107
      %p116 = scmp.eq.s32.totalorder %s80, 0
      %p117 = por %p115, %p116
      %p118 = scmp.ne.s32.totalorder %s106, %s107
      %p119 = scmp.eq.s32.totalorder %s81, 2
      %p120 = por %p118, %p119
      %p122 = scmp.ne.s32.totalorder %s107, %s121
      %p123 = scmp.eq.s32.totalorder %s81, 0
      %p124 = por %p122, %p123
      %s126 = sadd.s32 %s125, 1
      %p129 = scmp.eq.s32.totalorder %s75, 2
      %p130 = scmp.ne.s32.totalorder %s125, %s127
      %p131 = scmp.eq.s32.totalorder %s75, 0
      %p132 = por %p130, %p131
      %p133 = scmp.ne.s32.totalorder %s125, %s127
      %p134 = scmp.eq.s32.totalorder %s80, 2
      %p135 = por %p133, %p134
      %p136 = scmp.ne.s32.totalorder %s127, %s128
      %p137 = scmp.eq.s32.totalorder %s80, 0
      %p138 = por %p136, %p137
      %p139 = scmp.ne.s32.totalorder %s127, %s128
      %p140 = scmp.eq.s32.totalorder %s81, 2
      %p141 = por %p139, %p140
      %p143 = scmp.ne.s32.totalorder %s128, %s142
      %p144 = scmp.eq.s32.totalorder %s81, 0
      %p145 = por %p143, %p144
      %s147 = sadd.s32 %s146, 1
      %p150 = scmp.eq.s32.totalorder %s75, 2
      %p151 = scmp.ne.s32.totalorder %s146, %s148
      %p152 = scmp.eq.s32.totalorder %s75, 0
      %p153 = por %p151, %p152
      %p154 = scmp.ne.s32.totalorder %s146, %s148
      %p155 = scmp.eq.s32.totalorder %s80, 2
      %p156 = por %p154, %p155
      %p157 = scmp.ne.s32.totalorder %s148, %s149
      %p158 = scmp.eq.s32.totalorder %s80, 0
      %p159 = por %p157, %p158
      %p160 = scmp.ne.s32.totalorder %s148, %s149
      %p161 = scmp.eq.s32.totalorder %s81, 2
      %p162 = por %p160, %p161
      %p164 = scmp.ne.s32.totalorder %s149, %s163
      %p165 = scmp.eq.s32.totalorder %s81, 0
      %p166 = por %p164, %p165
      %s168 = sadd.s32 %s167, 1
      %p171 = scmp.eq.s32.totalorder %s75, 2
      %p172 = scmp.ne.s32.totalorder %s167, %s169
      %p173 = scmp.eq.s32.totalorder %s75, 0
      %p174 = por %p172, %p173
      %p175 = scmp.ne.s32.totalorder %s167, %s169
      %p176 = scmp.eq.s32.totalorder %s80, 2
      %p177 = por %p175, %p176
      %p178 = scmp.ne.s32.totalorder %s169, %s170
      %p179 = scmp.eq.s32.totalorder %s80, 0
      %p180 = por %p178, %p179
      %p181 = scmp.ne.s32.totalorder %s169, %s170
      %p182 = scmp.eq.s32.totalorder %s81, 2
      %p183 = por %p181, %p182
      %p185 = scmp.ne.s32.totalorder %s170, %s184
      %p186 = scmp.eq.s32.totalorder %s81, 0
      %p187 = por %p185, %p186
      %s189 = sadd.s32 %s188, 1
      %p192 = scmp.eq.s32.totalorder %s75, 2
      %p193 = scmp.ne.s32.totalorder %s188, %s190
      %p194 = scmp.eq.s32.totalorder %s75, 0
      %p195 = por %p193, %p194
      %p196 = scmp.ne.s32.totalorder %s188, %s190
      %p197 = scmp.eq.s32.totalorder %s80, 2
      %p198 = por %p196, %p197
      %p199 = scmp.ne.s32.totalorder %s190, %s191
      %p200 = scmp.eq.s32.totalorder %s80, 0
      %p201 = por %p199, %p200
      %p202 = scmp.ne.s32.totalorder %s190, %s191
      %p203 = scmp.eq.s32.totalorder %s81, 2
      %p204 = por %p202, %p203
      %p206 = scmp.ne.s32.totalorder %s191, %s205
      %p207 = scmp.eq.s32.totalorder %s81, 0
      %p208 = por %p206, %p207
      %s210 = sadd.s32 %s209, 1
      %p213 = scmp.eq.s32.totalorder %s75, 2
      %p214 = scmp.ne.s32.totalorder %s209, %s211
      %p215 = scmp.eq.s32.totalorder %s75, 0
      %p216 = por %p214, %p215
      %p217 = scmp.ne.s32.totalorder %s209, %s211
      %p218 = scmp.eq.s32.totalorder %s80, 2
      %p219 = por %p217, %p218
      %p220 = scmp.ne.s32.totalorder %s211, %s212
      %p221 = scmp.eq.s32.totalorder %s80, 0
      %p222 = por %p220, %p221
      %p223 = scmp.ne.s32.totalorder %s211, %s212
      %p224 = scmp.eq.s32.totalorder %s81, 2
      %p225 = por %p223, %p224
      %p227 = scmp.ne.s32.totalorder %s212, %s226
      %p228 = scmp.eq.s32.totalorder %s81, 0
      %p229 = por %p227, %p228
      %s231 = sadd.s32 %s230, 1
      %p234 = scmp.eq.s32.totalorder %s75, 2
      %p235 = scmp.ne.s32.totalorder %s230, %s232
      %p236 = scmp.eq.s32.totalorder %s75, 0
      %p237 = por %p235, %p236
      %p238 = scmp.ne.s32.totalorder %s230, %s232
      %p239 = scmp.eq.s32.totalorder %s80, 2
      %p240 = por %p238, %p239
      %p241 = scmp.ne.s32.totalorder %s232, %s233
      %p242 = scmp.eq.s32.totalorder %s80, 0
      %p243 = por %p241, %p242
      %p244 = scmp.ne.s32.totalorder %s232, %s233
      %p245 = scmp.eq.s32.totalorder %s81, 2
      %p246 = por %p244, %p245
      %p248 = scmp.ne.s32.totalorder %s233, %s247
      %p249 = scmp.eq.s32.totalorder %s81, 0
      %p250 = por %p248, %p249
      %s252 = sadd.s32 %s251, 1
      %p255 = scmp.eq.s32.totalorder %s75, 2
      %p256 = scmp.ne.s32.totalorder %s251, %s253
      %p257 = scmp.eq.s32.totalorder %s75, 0
      %p258 = por %p256, %p257
      %p259 = scmp.ne.s32.totalorder %s251, %s253
      %p260 = scmp.eq.s32.totalorder %s80, 2
      %p261 = por %p259, %p260
      %p262 = scmp.ne.s32.totalorder %s253, %s254
      %p263 = scmp.eq.s32.totalorder %s80, 0
      %p264 = por %p262, %p263
      %p265 = scmp.ne.s32.totalorder %s253, %s254
      %p266 = scmp.eq.s32.totalorder %s81, 2
      %p267 = por %p265, %p266
      %p269 = scmp.ne.s32.totalorder %s254, %s268
      %p270 = scmp.eq.s32.totalorder %s81, 0
      %p271 = por %p269, %p270
      %s273 = sadd.s32 %s272, 1
      %p276 = scmp.eq.s32.totalorder %s75, 2
      %p277 = scmp.ne.s32.totalorder %s272, %s274
      %p278 = scmp.eq.s32.totalorder %s75, 0
      %p279 = por %p277, %p278
      %p280 = scmp.ne.s32.totalorder %s272, %s274
      %p281 = scmp.eq.s32.totalorder %s80, 2
      %p282 = por %p280, %p281
      %p283 = scmp.ne.s32.totalorder %s274, %s275
      %p284 = scmp.eq.s32.totalorder %s80, 0
      %p285 = por %p283, %p284
      %p286 = scmp.ne.s32.totalorder %s274, %s275
      %p287 = scmp.eq.s32.totalorder %s81, 2
      %p288 = por %p286, %p287
      %p290 = scmp.ne.s32.totalorder %s275, %s289
      %p291 = scmp.eq.s32.totalorder %s81, 0
      %p292 = por %p290, %p291
      %s294 = sadd.s32 %s293, 1
      %p297 = scmp.eq.s32.totalorder %s75, 2
      %p298 = scmp.ne.s32.totalorder %s293, %s295
      %p299 = scmp.eq.s32.totalorder %s75, 0
      %p300 = por %p298, %p299
      %p301 = scmp.ne.s32.totalorder %s293, %s295
      %p302 = scmp.eq.s32.totalorder %s80, 2
      %p303 = por %p301, %p302
      %p304 = scmp.ne.s32.totalorder %s295, %s296
      %p305 = scmp.eq.s32.totalorder %s80, 0
      %p306 = por %p304, %p305
      %p307 = scmp.ne.s32.totalorder %s295, %s296
      %p308 = scmp.eq.s32.totalorder %s81, 2
      %p309 = por %p307, %p308
      %p311 = scmp.ne.s32.totalorder %s296, %s310
      %p312 = scmp.eq.s32.totalorder %s81, 0
      %p313 = por %p311, %p312
      %s315 = sadd.s32 %s314, 1
      %p318 = scmp.eq.s32.totalorder %s75, 2
      %p319 = scmp.ne.s32.totalorder %s314, %s316
      %p320 = scmp.eq.s32.totalorder %s75, 0
      %p321 = por %p319, %p320
      %p322 = scmp.ne.s32.totalorder %s314, %s316
      %p323 = scmp.eq.s32.totalorder %s80, 2
      %p324 = por %p322, %p323
      %p325 = scmp.ne.s32.totalorder %s316, %s317
      %p326 = scmp.eq.s32.totalorder %s80, 0
      %p327 = por %p325, %p326
      %p328 = scmp.ne.s32.totalorder %s316, %s317
      %p329 = scmp.eq.s32.totalorder %s81, 2
      %p330 = por %p328, %p329
      %p332 = scmp.ne.s32.totalorder %s317, %s331
      %p333 = scmp.eq.s32.totalorder %s81, 0
      %p334 = por %p332, %p333
      %s336 = sadd.s32 %s335, 1
      %p339 = scmp.eq.s32.totalorder %s75, 2
      %p340 = scmp.ne.s32.totalorder %s335, %s337
      %p341 = scmp.eq.s32.totalorder %s75, 0
      %p342 = por %p340, %p341
      %p343 = scmp.ne.s32.totalorder %s335, %s337
      %p344 = scmp.eq.s32.totalorder %s80, 2
      %p345 = por %p343, %p344
      %p346 = scmp.ne.s32.totalorder %s337, %s338
      %p347 = scmp.eq.s32.totalorder %s80, 0
      %p348 = por %p346, %p347
      %p349 = scmp.ne.s32.totalorder %s337, %s338
      %p350 = scmp.eq.s32.totalorder %s81, 2
      %p351 = por %p349, %p350
      %p353 = scmp.ne.s32.totalorder %s338, %s352
      %p354 = scmp.eq.s32.totalorder %s81, 0
      %p355 = por %p353, %p354
      %s357 = sadd.s32 %s356, 1
      %p360 = scmp.eq.s32.totalorder %s75, 2
      %p361 = scmp.ne.s32.totalorder %s356, %s358
      %p362 = scmp.eq.s32.totalorder %s75, 0
      %p363 = por %p361, %p362
      %p364 = scmp.ne.s32.totalorder %s356, %s358
      %p365 = scmp.eq.s32.totalorder %s80, 2
      %p366 = por %p364, %p365
      %p367 = scmp.ne.s32.totalorder %s358, %s359
      %p368 = scmp.eq.s32.totalorder %s80, 0
      %p369 = por %p367, %p368
      %p370 = scmp.ne.s32.totalorder %s358, %s359
      %p371 = scmp.eq.s32.totalorder %s81, 2
      %p372 = por %p370, %p371
      %p374 = scmp.ne.s32.totalorder %s359, %s373
      %p375 = scmp.eq.s32.totalorder %s81, 0
      %p376 = por %p374, %p375
      %s378 = sadd.s32 %s377, 1
      %p381 = scmp.eq.s32.totalorder %s75, 2
      %p382 = scmp.ne.s32.totalorder %s377, %s379
      %p383 = scmp.eq.s32.totalorder %s75, 0
      %p384 = por %p382, %p383
      %p385 = scmp.ne.s32.totalorder %s377, %s379
      %p386 = scmp.eq.s32.totalorder %s80, 2
      %p387 = por %p385, %p386
      %p388 = scmp.ne.s32.totalorder %s379, %s380
      %p389 = scmp.eq.s32.totalorder %s80, 0
      %p390 = por %p388, %p389
      %p391 = scmp.ne.s32.totalorder %s379, %s380
      %p392 = scmp.eq.s32.totalorder %s81, 2
      %p393 = por %p391, %p392
      %p395 = scmp.ne.s32.totalorder %s380, %s394
      %p396 = scmp.eq.s32.totalorder %s81, 0
      %p397 = por %p395, %p396
      %s399 = sadd.s32 %s398, 1
      %p402 = scmp.eq.s32.totalorder %s75, 2
      %p403 = scmp.ne.s32.totalorder %s398, %s400
      %p404 = scmp.eq.s32.totalorder %s75, 0
      %p405 = por %p403, %p404
      %p406 = scmp.ne.s32.totalorder %s398, %s400
      %p407 = scmp.eq.s32.totalorder %s80, 2
      %p408 = por %p406, %p407
      %p409 = scmp.ne.s32.totalorder %s400, %s401
      %p410 = scmp.eq.s32.totalorder %s80, 0
      %p411 = por %p409, %p410
      %p412 = scmp.ne.s32.totalorder %s400, %s401
      %p413 = scmp.eq.s32.totalorder %s81, 2
      %p414 = por %p412, %p413
      %p416 = scmp.ne.s32.totalorder %s401, %s415
      %p417 = scmp.eq.s32.totalorder %s81, 0
      %p418 = por %p416, %p417
      %s420 = sadd.s32 %s419, 1
      %p423 = scmp.eq.s32.totalorder %s75, 2
      %p424 = scmp.ne.s32.totalorder %s419, %s421
      %p425 = scmp.eq.s32.totalorder %s75, 0
      %p426 = por %p424, %p425
      %p427 = scmp.ne.s32.totalorder %s419, %s421
      %p428 = scmp.eq.s32.totalorder %s80, 2
      %p429 = por %p427, %p428
      %p430 = scmp.ne.s32.totalorder %s421, %s422
      %p431 = scmp.eq.s32.totalorder %s80, 0
      %p432 = por %p430, %p431
      %p433 = scmp.ne.s32.totalorder %s421, %s422
      %p434 = scmp.eq.s32.totalorder %s81, 2
      %p435 = por %p433, %p434
      %p437 = scmp.ne.s32.totalorder %s422, %s436
      %p438 = scmp.eq.s32.totalorder %s81, 0
      %p439 = por %p437, %p438
      %s441 = sadd.s32 %s440, 1
      %p444 = scmp.eq.s32.totalorder %s75, 2
      %p445 = scmp.ne.s32.totalorder %s440, %s442
      %p446 = scmp.eq.s32.totalorder %s75, 0
      %p447 = por %p445, %p446
      %p448 = scmp.ne.s32.totalorder %s440, %s442
      %p449 = scmp.eq.s32.totalorder %s80, 2
      %p450 = por %p448, %p449
      %p451 = scmp.ne.s32.totalorder %s442, %s443
      %p452 = scmp.eq.s32.totalorder %s80, 0
      %p453 = por %p451, %p452
      %p454 = scmp.ne.s32.totalorder %s442, %s443
      %p455 = scmp.eq.s32.totalorder %s81, 2
      %p456 = por %p454, %p455
      %p458 = scmp.ne.s32.totalorder %s443, %s457
      %p459 = scmp.eq.s32.totalorder %s81, 0
      %p460 = por %p458, %p459
      %s462 = sadd.s32 %s461, 1
      %p465 = scmp.eq.s32.totalorder %s75, 2
      %p466 = scmp.ne.s32.totalorder %s461, %s463
      %p467 = scmp.eq.s32.totalorder %s75, 0
      %p468 = por %p466, %p467
      %p469 = scmp.ne.s32.totalorder %s461, %s463
      %p470 = scmp.eq.s32.totalorder %s80, 2
      %p471 = por %p469, %p470
      %p472 = scmp.ne.s32.totalorder %s463, %s464
      %p473 = scmp.eq.s32.totalorder %s80, 0
      %p474 = por %p472, %p473
      %p475 = scmp.ne.s32.totalorder %s463, %s464
      %p476 = scmp.eq.s32.totalorder %s81, 2
      %p477 = por %p475, %p476
      %p479 = scmp.ne.s32.totalorder %s464, %s478
      %p480 = scmp.eq.s32.totalorder %s81, 0
      %p481 = por %p479, %p480
      %s483 = sadd.s32 %s482, 1
      %p486 = scmp.eq.s32.totalorder %s75, 2
      %p487 = scmp.ne.s32.totalorder %s482, %s484
      %p488 = scmp.eq.s32.totalorder %s75, 0
      %p489 = por %p487, %p488
      %p490 = scmp.ne.s32.totalorder %s482, %s484
      %p491 = scmp.eq.s32.totalorder %s80, 2
      %p492 = por %p490, %p491
      %p493 = scmp.ne.s32.totalorder %s484, %s485
      %p494 = scmp.eq.s32.totalorder %s80, 0
      %p495 = por %p493, %p494
      %p496 = scmp.ne.s32.totalorder %s484, %s485
      %p497 = scmp.eq.s32.totalorder %s81, 2
      %p498 = por %p496, %p497
      %p500 = scmp.ne.s32.totalorder %s485, %s499
      %p501 = scmp.eq.s32.totalorder %s81, 0
      %p502 = por %p500, %p501
      %s503 = ssub.s32 %s75, 1
      %p504 = scmp.gt.s32.totalorder %s503, 0
      %s505 = scalar_select %p504, %s503, 0
      %s506 = ssub.s32 %s82, 1
      %p507 = scmp.gt.s32.totalorder %s506, 0
      %s508 = scalar_select %p507, %s506, 0
      %s509 = ssub.s32 %s505, %s508
      %p510 = scmp.eq.s32.totalorder %s509, 0
      %s512 = sadd.s32 %s511, 1
      %s513 = scalar_select %p510, %s511, %s512
      %p516 = pneg %p510
      %p517 = scmp.eq.s32.totalorder %s75, 2
      %p518 = por %p516, %p517
      %p519 = scmp.ne.s32.totalorder %s511, %s514
      %p520 = scmp.eq.s32.totalorder %s75, 0
      %p521 = por %p519, %p520
      %p522 = scmp.ne.s32.totalorder %s511, %s514
      %p523 = scmp.eq.s32.totalorder %s80, 2
      %p524 = por %p522, %p523
      %p525 = scmp.ne.s32.totalorder %s514, %s515
      %p526 = scmp.eq.s32.totalorder %s80, 0
      %p527 = por %p525, %p526
      %p528 = scmp.ne.s32.totalorder %s514, %s515
      %p529 = scmp.eq.s32.totalorder %s81, 2
      %p530 = por %p528, %p529
      %p532 = scmp.ne.s32.totalorder %s515, %s531
      %p533 = scmp.eq.s32.totalorder %s81, 0
      %p534 = por %p532, %p533
      %s535 = ssub.s32 %s75, 1
      %p536 = scmp.gt.s32.totalorder %s535, 0
      %s537 = scalar_select %p536, %s535, 0
      %s538 = ssub.s32 %s82, 1
      %p539 = scmp.gt.s32.totalorder %s538, 0
      %s540 = scalar_select %p539, %s538, 0
      %s541 = ssub.s32 %s537, %s540
      %p542 = scmp.eq.s32.totalorder %s541, 0
      %s544 = sadd.s32 %s543, 1
      %s545 = scalar_select %p542, %s543, %s544
      %p548 = pneg %p542
      %p549 = scmp.eq.s32.totalorder %s75, 2
      %p550 = por %p548, %p549
      %p551 = scmp.ne.s32.totalorder %s543, %s546
      %p552 = scmp.eq.s32.totalorder %s75, 0
      %p553 = por %p551, %p552
      %p554 = scmp.ne.s32.totalorder %s543, %s546
      %p555 = scmp.eq.s32.totalorder %s80, 2
      %p556 = por %p554, %p555
      %p557 = scmp.ne.s32.totalorder %s546, %s547
      %p558 = scmp.eq.s32.totalorder %s80, 0
      %p559 = por %p557, %p558
      %p560 = scmp.ne.s32.totalorder %s546, %s547
      %p561 = scmp.eq.s32.totalorder %s81, 2
      %p562 = por %p560, %p561
      %p564 = scmp.ne.s32.totalorder %s547, %s563
      %p565 = scmp.eq.s32.totalorder %s81, 0
      %p566 = por %p564, %p565
      %s567 = ssub.s32 %s75, 1
      %p568 = scmp.gt.s32.totalorder %s567, 0
      %s569 = scalar_select %p568, %s567, 0
      %s570 = ssub.s32 %s82, 1
      %p571 = scmp.gt.s32.totalorder %s570, 0
      %s572 = scalar_select %p571, %s570, 0
      %s573 = ssub.s32 %s569, %s572
      %p574 = scmp.eq.s32.totalorder %s573, 0
      %s576 = sadd.s32 %s575, 1
      %s577 = scalar_select %p574, %s575, %s576
      %p580 = pneg %p574
      %p581 = scmp.eq.s32.totalorder %s75, 2
      %p582 = por %p580, %p581
      %p583 = scmp.ne.s32.totalorder %s575, %s578
      %p584 = scmp.eq.s32.totalorder %s75, 0
      %p585 = por %p583, %p584
      %p586 = scmp.ne.s32.totalorder %s575, %s578
      %p587 = scmp.eq.s32.totalorder %s80, 2
      %p588 = por %p586, %p587
      %p589 = scmp.ne.s32.totalorder %s578, %s579
      %p590 = scmp.eq.s32.totalorder %s80, 0
      %p591 = por %p589, %p590
      %p592 = scmp.ne.s32.totalorder %s578, %s579
      %p593 = scmp.eq.s32.totalorder %s81, 2
      %p594 = por %p592, %p593
      %p596 = scmp.ne.s32.totalorder %s579, %s595
      %p597 = scmp.eq.s32.totalorder %s81, 0
      %p598 = por %p596, %p597
      %s599 = ssub.s32 %s75, 1
      %p600 = scmp.gt.s32.totalorder %s599, 0
      %s601 = scalar_select %p600, %s599, 0
      %s602 = ssub.s32 %s82, 1
      %p603 = scmp.gt.s32.totalorder %s602, 0
      %s604 = scalar_select %p603, %s602, 0
      %s605 = ssub.s32 %s601, %s604
      %p606 = scmp.eq.s32.totalorder %s605, 0
      %s608 = sadd.s32 %s607, 1
      %s609 = scalar_select %p606, %s607, %s608
      %p612 = pneg %p606
      %p613 = scmp.eq.s32.totalorder %s75, 2
      %p614 = por %p612, %p613
      %p615 = scmp.ne.s32.totalorder %s607, %s610
      %p616 = scmp.eq.s32.totalorder %s75, 0
      %p617 = por %p615, %p616
      %p618 = scmp.ne.s32.totalorder %s607, %s610
      %p619 = scmp.eq.s32.totalorder %s80, 2
      %p620 = por %p618, %p619
      %p621 = scmp.ne.s32.totalorder %s610, %s611
      %p622 = scmp.eq.s32.totalorder %s80, 0
      %p623 = por %p621, %p622
      %p624 = scmp.ne.s32.totalorder %s610, %s611
      %p625 = scmp.eq.s32.totalorder %s81, 2
      %p626 = por %p624, %p625
      %p628 = scmp.ne.s32.totalorder %s611, %s627
      %p629 = scmp.eq.s32.totalorder %s81, 0
      %p630 = por %p628, %p629
      %s631 = ssub.s32 %s75, 1
      %p632 = scmp.gt.s32.totalorder %s631, 0
      %s633 = scalar_select %p632, %s631, 0
      %s634 = ssub.s32 %s82, 1
      %p635 = scmp.gt.s32.totalorder %s634, 0
      %s636 = scalar_select %p635, %s634, 0
      %s637 = ssub.s32 %s633, %s636
      %p638 = scmp.eq.s32.totalorder %s637, 0
      %s640 = sadd.s32 %s639, 1
      %s641 = scalar_select %p638, %s639, %s640
      %p644 = pneg %p638
      %p645 = scmp.eq.s32.totalorder %s75, 2
      %p646 = por %p644, %p645
      %p647 = scmp.ne.s32.totalorder %s639, %s642
      %p648 = scmp.eq.s32.totalorder %s75, 0
      %p649 = por %p647, %p648
      %p650 = scmp.ne.s32.totalorder %s639, %s642
      %p651 = scmp.eq.s32.totalorder %s80, 2
      %p652 = por %p650, %p651
      %p653 = scmp.ne.s32.totalorder %s642, %s643
      %p654 = scmp.eq.s32.totalorder %s80, 0
      %p655 = por %p653, %p654
      %p656 = scmp.ne.s32.totalorder %s642, %s643
      %p657 = scmp.eq.s32.totalorder %s81, 2
      %p658 = por %p656, %p657
      %p660 = scmp.ne.s32.totalorder %s643, %s659
      %p661 = scmp.eq.s32.totalorder %s81, 0
      %p662 = por %p660, %p661
      %s663 = ssub.s32 %s75, 1
      %p664 = scmp.gt.s32.totalorder %s663, 0
      %s665 = scalar_select %p664, %s663, 0
      %s666 = ssub.s32 %s82, 1
      %p667 = scmp.gt.s32.totalorder %s666, 0
      %s668 = scalar_select %p667, %s666, 0
      %s669 = ssub.s32 %s665, %s668
      %p670 = scmp.eq.s32.totalorder %s669, 0
      %s672 = sadd.s32 %s671, 1
      %s673 = scalar_select %p670, %s671, %s672
      %p676 = pneg %p670
      %p677 = scmp.eq.s32.totalorder %s75, 2
      %p678 = por %p676, %p677
      %p679 = scmp.ne.s32.totalorder %s671, %s674
      %p680 = scmp.eq.s32.totalorder %s75, 0
      %p681 = por %p679, %p680
      %p682 = scmp.ne.s32.totalorder %s671, %s674
      %p683 = scmp.eq.s32.totalorder %s80, 2
      %p684 = por %p682, %p683
      %p685 = scmp.ne.s32.totalorder %s674, %s675
      %p686 = scmp.eq.s32.totalorder %s80, 0
      %p687 = por %p685, %p686
      %p688 = scmp.ne.s32.totalorder %s674, %s675
      %p689 = scmp.eq.s32.totalorder %s81, 2
      %p690 = por %p688, %p689
      %p692 = scmp.ne.s32.totalorder %s675, %s691
      %p693 = scmp.eq.s32.totalorder %s81, 0
      %p694 = por %p692, %p693
      %s695 = ssub.s32 %s75, 1
      %p696 = scmp.gt.s32.totalorder %s695, 0
      %s697 = scalar_select %p696, %s695, 0
      %s698 = ssub.s32 %s82, 1
      %p699 = scmp.gt.s32.totalorder %s698, 0
      %s700 = scalar_select %p699, %s698, 0
      %s701 = ssub.s32 %s697, %s700
      %p702 = scmp.eq.s32.totalorder %s701, 0
      %s704 = sadd.s32 %s703, 1
      %s705 = scalar_select %p702, %s703, %s704
      %p708 = pneg %p702
      %p709 = scmp.eq.s32.totalorder %s75, 2
      %p710 = por %p708, %p709
      %p711 = scmp.ne.s32.totalorder %s703, %s706
      %p712 = scmp.eq.s32.totalorder %s75, 0
      %p713 = por %p711, %p712
      %p714 = scmp.ne.s32.totalorder %s703, %s706
      %p715 = scmp.eq.s32.totalorder %s80, 2
      %p716 = por %p714, %p715
      %p717 = scmp.ne.s32.totalorder %s706, %s707
      %p718 = scmp.eq.s32.totalorder %s80, 0
      %p719 = por %p717, %p718
      %p720 = scmp.ne.s32.totalorder %s706, %s707
      %p721 = scmp.eq.s32.totalorder %s81, 2
      %p722 = por %p720, %p721
      %p724 = scmp.ne.s32.totalorder %s707, %s723
      %p725 = scmp.eq.s32.totalorder %s81, 0
      %p726 = por %p724, %p725
      %s727 = ssub.s32 %s75, 1
      %p728 = scmp.gt.s32.totalorder %s727, 0
      %s729 = scalar_select %p728, %s727, 0
      %s730 = ssub.s32 %s82, 1
      %p731 = scmp.gt.s32.totalorder %s730, 0
      %s732 = scalar_select %p731, %s730, 0
      %s733 = ssub.s32 %s729, %s732
      %p734 = scmp.eq.s32.totalorder %s733, 0
      %s736 = sadd.s32 %s735, 1
      %s737 = scalar_select %p734, %s735, %s736
      %p740 = pneg %p734
      %p741 = scmp.eq.s32.totalorder %s75, 2
      %p742 = por %p740, %p741
      %p743 = scmp.ne.s32.totalorder %s735, %s738
      %p744 = scmp.eq.s32.totalorder %s75, 0
      %p745 = por %p743, %p744
      %p746 = scmp.ne.s32.totalorder %s735, %s738
      %p747 = scmp.eq.s32.totalorder %s80, 2
      %p748 = por %p746, %p747
      %p749 = scmp.ne.s32.totalorder %s738, %s739
      %p750 = scmp.eq.s32.totalorder %s80, 0
      %p751 = por %p749, %p750
      %p752 = scmp.ne.s32.totalorder %s738, %s739
      %p753 = scmp.eq.s32.totalorder %s81, 2
      %p754 = por %p752, %p753
      %p756 = scmp.ne.s32.totalorder %s739, %s755
      %p757 = scmp.eq.s32.totalorder %s81, 0
      %p758 = por %p756, %p757
      %s759 = ssub.s32 %s75, 1
      %p760 = scmp.gt.s32.totalorder %s759, 0
      %s761 = scalar_select %p760, %s759, 0
      %s762 = ssub.s32 %s82, 1
      %p763 = scmp.gt.s32.totalorder %s762, 0
      %s764 = scalar_select %p763, %s762, 0
      %s765 = ssub.s32 %s761, %s764
      %p766 = scmp.eq.s32.totalorder %s765, 0
      %s768 = sadd.s32 %s767, 1
      %s769 = scalar_select %p766, %s767, %s768
      %p772 = pneg %p766
      %p773 = scmp.eq.s32.totalorder %s75, 2
      %p774 = por %p772, %p773
      %p775 = scmp.ne.s32.totalorder %s767, %s770
      %p776 = scmp.eq.s32.totalorder %s75, 0
      %p777 = por %p775, %p776
      %p778 = scmp.ne.s32.totalorder %s767, %s770
      %p779 = scmp.eq.s32.totalorder %s80, 2
      %p780 = por %p778, %p779
      %p781 = scmp.ne.s32.totalorder %s770, %s771
      %p782 = scmp.eq.s32.totalorder %s80, 0
      %p783 = por %p781, %p782
      %p784 = scmp.ne.s32.totalorder %s770, %s771
      %p785 = scmp.eq.s32.totalorder %s81, 2
      %p786 = por %p784, %p785
      %p788 = scmp.ne.s32.totalorder %s771, %s787
      %p789 = scmp.eq.s32.totalorder %s81, 0
      %p790 = por %p788, %p789
      %s792 = sadd.s32 %s791, 1
      %p795 = scmp.eq.s32.totalorder %s75, 2
      %p796 = scmp.ne.s32.totalorder %s791, %s793
      %p797 = scmp.eq.s32.totalorder %s75, 0
      %p798 = por %p796, %p797
      %p799 = scmp.ne.s32.totalorder %s791, %s793
      %p800 = scmp.eq.s32.totalorder %s80, 2
      %p801 = por %p799, %p800
      %p802 = scmp.ne.s32.totalorder %s793, %s794
      %p803 = scmp.eq.s32.totalorder %s80, 0
      %p804 = por %p802, %p803
      %p805 = scmp.ne.s32.totalorder %s793, %s794
      %p806 = scmp.eq.s32.totalorder %s81, 2
      %p807 = por %p805, %p806
      %p809 = scmp.ne.s32.totalorder %s794, %s808
      %p810 = scmp.eq.s32.totalorder %s81, 0
      %p811 = por %p809, %p810
      %p812 = scmp.le.s32.totalorder 1, %s75
      %p813 = scmp.lt.s32.totalorder %s75, 4
      %p814 = pnand %p812, %p813
      %p815 = pneg %p814
      // Predicated region
      $region9: #{tpu_custom_call.1} parent=5 // pred_check
        _
      $region10: #{tpu_custom_call.1} parent=5 // pred_check_branch
        %817 = sbr.rel (%p814) target = $region12
      $region11: #{tpu_custom_call.1} parent=5 // pred_region
        %s818 = ssub.s32 %s75, 1
        // Predicated region
        $region13: #{tpu_custom_call.1} parent=11 // pred_check
          %p819 = pneg %p96
        $region14: #{tpu_custom_call.1} parent=11 // pred_check_branch
          %821 = sbr.rel (%p819) target = $region16
        $region15: #{tpu_custom_call.1} parent=11 // pred_region
          _
        $region16: #{tpu_custom_call.1} parent=11 // pred_fallthru
          _
        // Predicated region
        $region17: #{tpu_custom_call.1} parent=11 // pred_check
          %p822 = pneg %p117
        $region18: #{tpu_custom_call.1} parent=11 // pred_check_branch
          %824 = sbr.rel (%p822) target = $region20
        $region19: #{tpu_custom_call.1} parent=11 // pred_region
          _
        $region20: #{tpu_custom_call.1} parent=11 // pred_fallthru
          _
        // Predicated region
        $region21: #{tpu_custom_call.1} parent=11 // pred_check
          %p825 = pneg %p138
        $region22: #{tpu_custom_call.1} parent=11 // pred_check_branch
          %827 = sbr.rel (%p825) target = $region24
        $region23: #{tpu_custom_call.1} parent=11 // pred_region
          _
        $region24: #{tpu_custom_call.1} parent=11 // pred_fallthru
          _
        // Predicated region
        $region25: #{tpu_custom_call.1} parent=11 // pred_check
          %p828 = pneg %p159
        $region26: #{tpu_custom_call.1} parent=11 // pred_check_branch
          %830 = sbr.rel (%p828) target = $region28
        $region27: #{tpu_custom_call.1} parent=11 // pred_region
          %s832 = ssub.s32 2048, 2048
          %833 = vsyncadd [#allocation4], %s832
          %s834 = sshll.u32 [#allocation3], 4
          %s835 = int_to_ptr.vmem [resolvable:$true] %s834
          %840 = dma.hbm_to_vmem [thread:$0]  %s7, 2048, %s835, [#allocation4], 64, 64, 4
        $region28: #{tpu_custom_call.1} parent=11 // pred_fallthru
          _
        // Predicated region
        $region29: #{tpu_custom_call.1} parent=11 // pred_check
          %p841 = pneg %p180
        $region30: #{tpu_custom_call.1} parent=11 // pred_check_branch
          %843 = sbr.rel (%p841) target = $region32
        $region31: #{tpu_custom_call.1} parent=11 // pred_region
          %s845 = ssub.s32 4096, 4096
          %846 = vsyncadd [#allocation7], %s845
          %s847 = sshll.u32 [#allocation6], 4
          %s848 = int_to_ptr.vmem [resolvable:$true] %s847
          %853 = dma.hbm_to_vmem [thread:$0]  %s9, 4096, %s848, [#allocation7], 256, 256, 16
        $region32: #{tpu_custom_call.1} parent=11 // pred_fallthru
          _
        // Predicated region
        $region33: #{tpu_custom_call.1} parent=11 // pred_check
          %p854 = pneg %p201
        $region34: #{tpu_custom_call.1} parent=11 // pred_check_branch
          %856 = sbr.rel (%p854) target = $region36
        $region35: #{tpu_custom_call.1} parent=11 // pred_region
          %s858 = ssub.s32 4096, 4096
          %859 = vsyncadd [#allocation7], %s858
          %s860 = sshll.u32 [#allocation8], 4
          %s861 = int_to_ptr.vmem [resolvable:$true] %s860
          %866 = dma.hbm_to_vmem [thread:$0]  %s11, 4096, %s861, [#allocation7], 128, 128, 8
        $region36: #{tpu_custom_call.1} parent=11 // pred_fallthru
          _
        // Predicated region
        $region37: #{tpu_custom_call.1} parent=11 // pred_check
          %p867 = pneg %p222
        $region38: #{tpu_custom_call.1} parent=11 // pred_check_branch
          %869 = sbr.rel (%p867) target = $region40
        $region39: #{tpu_custom_call.1} parent=11 // pred_region
          _
        $region40: #{tpu_custom_call.1} parent=11 // pred_fallthru
          _
        // Predicated region
        $region41: #{tpu_custom_call.1} parent=11 // pred_check
          %p870 = pneg %p243
        $region42: #{tpu_custom_call.1} parent=11 // pred_check_branch
          %872 = sbr.rel (%p870) target = $region44
        $region43: #{tpu_custom_call.1} parent=11 // pred_region
          %s874 = ssub.s32 16, 16
          %875 = vsyncadd [#allocation10], %s874
          %s877 = sshll.u32 [#allocation9], 4
          %s878 = int_to_ptr.vmem [resolvable:$true] %s877
          %880 = dma.hbm_to_vmem [thread:$0]  %s15, 16, %s878, [#allocation10]
        $region44: #{tpu_custom_call.1} parent=11 // pred_fallthru
          _
        // Predicated region
        $region45: #{tpu_custom_call.1} parent=11 // pred_check
          %p881 = pneg %p264
        $region46: #{tpu_custom_call.1} parent=11 // pred_check_branch
          %883 = sbr.rel (%p881) target = $region48
        $region47: #{tpu_custom_call.1} parent=11 // pred_region
          %s885 = ssub.s32 512, 512
          %886 = vsyncadd [#allocation10], %s885
          %s887 = sshll.u32 [#allocation11], 4
          %s888 = int_to_ptr.vmem [resolvable:$true] %s887
          %893 = dma.hbm_to_vmem [thread:$0]  %s17, 512, %s888, [#allocation10], 128, 128, 8
        $region48: #{tpu_custom_call.1} parent=11 // pred_fallthru
          _
        // Predicated region
        $region49: #{tpu_custom_call.1} parent=11 // pred_check
          %p894 = pneg %p285
        $region50: #{tpu_custom_call.1} parent=11 // pred_check_branch
          %896 = sbr.rel (%p894) target = $region52
        $region51: #{tpu_custom_call.1} parent=11 // pred_region
          %s898 = ssub.s32 256, 256
          %899 = vsyncadd [#allocation13], %s898
          %s900 = sshll.u32 [#allocation12], 4
          %s901 = int_to_ptr.vmem [resolvable:$true] %s900
          %906 = dma.hbm_to_vmem [thread:$0]  %s19, 256, %s901, [#allocation13], 128, 128, 8
        $region52: #{tpu_custom_call.1} parent=11 // pred_fallthru
          _
        // Predicated region
        $region53: #{tpu_custom_call.1} parent=11 // pred_check
          %p907 = pneg %p306
        $region54: #{tpu_custom_call.1} parent=11 // pred_check_branch
          %909 = sbr.rel (%p907) target = $region56
        $region55: #{tpu_custom_call.1} parent=11 // pred_region
          %s911 = ssub.s32 16, 16
          %912 = vsyncadd [#allocation13], %s911
          %s914 = sshll.u32 [#allocation14], 4
          %s915 = int_to_ptr.vmem [resolvable:$true] %s914
          %917 = dma.hbm_to_vmem [thread:$0]  %s21, 16, %s915, [#allocation13]
        $region56: #{tpu_custom_call.1} parent=11 // pred_fallthru
          _
        // Predicated region
        $region57: #{tpu_custom_call.1} parent=11 // pred_check
          %p918 = pneg %p327
        $region58: #{tpu_custom_call.1} parent=11 // pred_check_branch
          %920 = sbr.rel (%p918) target = $region60
        $region59: #{tpu_custom_call.1} parent=11 // pred_region
          _
        $region60: #{tpu_custom_call.1} parent=11 // pred_fallthru
          _
        // Predicated region
        $region61: #{tpu_custom_call.1} parent=11 // pred_check
          %p921 = pneg %p348
        $region62: #{tpu_custom_call.1} parent=11 // pred_check_branch
          %923 = sbr.rel (%p921) target = $region64
        $region63: #{tpu_custom_call.1} parent=11 // pred_region
          _
        $region64: #{tpu_custom_call.1} parent=11 // pred_fallthru
          _
        // Predicated region
        $region65: #{tpu_custom_call.1} parent=11 // pred_check
          %p924 = pneg %p369
        $region66: #{tpu_custom_call.1} parent=11 // pred_check_branch
          %926 = sbr.rel (%p924) target = $region68
        $region67: #{tpu_custom_call.1} parent=11 // pred_region
          _
        $region68: #{tpu_custom_call.1} parent=11 // pred_fallthru
          _
        // Predicated region
        $region69: #{tpu_custom_call.1} parent=11 // pred_check
          %p927 = pneg %p390
        $region70: #{tpu_custom_call.1} parent=11 // pred_check_branch
          %929 = sbr.rel (%p927) target = $region72
        $region71: #{tpu_custom_call.1} parent=11 // pred_region
          %s931 = ssub.s32 2048, 2048
          %932 = vsyncadd [#allocation16], %s931
          %s933 = sshll.u32 [#allocation15], 4
          %s934 = int_to_ptr.vmem [resolvable:$true] %s933
          %939 = dma.hbm_to_vmem [thread:$0]  %s29, 2048, %s934, [#allocation16], 128, 128, 8
        $region72: #{tpu_custom_call.1} parent=11 // pred_fallthru
          _
        // Predicated region
        $region73: #{tpu_custom_call.1} parent=11 // pred_check
          %p940 = pneg %p411
        $region74: #{tpu_custom_call.1} parent=11 // pred_check_branch
          %942 = sbr.rel (%p940) target = $region76
        $region75: #{tpu_custom_call.1} parent=11 // pred_region
          %s944 = ssub.s32 16, 16
          %945 = vsyncadd [#allocation16], %s944
          %s947 = sshll.u32 [#allocation17], 4
          %s948 = int_to_ptr.vmem [resolvable:$true] %s947
          %950 = dma.hbm_to_vmem [thread:$0]  %s31, 16, %s948, [#allocation16]
        $region76: #{tpu_custom_call.1} parent=11 // pred_fallthru
          _
        // Predicated region
        $region77: #{tpu_custom_call.1} parent=11 // pred_check
          %p951 = pneg %p432
        $region78: #{tpu_custom_call.1} parent=11 // pred_check_branch
          %953 = sbr.rel (%p951) target = $region80
        $region79: #{tpu_custom_call.1} parent=11 // pred_region
          _
        $region80: #{tpu_custom_call.1} parent=11 // pred_fallthru
          _
        // Predicated region
        $region81: #{tpu_custom_call.1} parent=11 // pred_check
          %p954 = pneg %p453
        $region82: #{tpu_custom_call.1} parent=11 // pred_check_branch
          %956 = sbr.rel (%p954) target = $region84
        $region83: #{tpu_custom_call.1} parent=11 // pred_region
          %s958 = ssub.s32 6144, 6144
          %959 = vsyncadd [#allocation19], %s958
          %s960 = sshll.u32 [#allocation18], 4
          %s961 = int_to_ptr.vmem [resolvable:$true] %s960
          %966 = dma.hbm_to_vmem [thread:$0]  %s35, 6144, %s961, [#allocation19], 384, 384, 24
        $region84: #{tpu_custom_call.1} parent=11 // pred_fallthru
          _
        // Predicated region
        $region85: #{tpu_custom_call.1} parent=11 // pred_check
          %p967 = pneg %p474
        $region86: #{tpu_custom_call.1} parent=11 // pred_check_branch
          %969 = sbr.rel (%p967) target = $region88
        $region87: #{tpu_custom_call.1} parent=11 // pred_region
          %s971 = ssub.s32 48, 48
          %972 = vsyncadd [#allocation19], %s971
          %s974 = sshll.u32 [#allocation20], 4
          %s975 = int_to_ptr.vmem [resolvable:$true] %s974
          %977 = dma.hbm_to_vmem [thread:$0]  %s37, 48, %s975, [#allocation19]
        $region88: #{tpu_custom_call.1} parent=11 // pred_fallthru
          _
        // Predicated region
        $region89: #{tpu_custom_call.1} parent=11 // pred_check
          %p978 = pneg %p495
        $region90: #{tpu_custom_call.1} parent=11 // pred_check_branch
          %980 = sbr.rel (%p978) target = $region92
        $region91: #{tpu_custom_call.1} parent=11 // pred_region
          %s982 = ssub.s32 48, 48
          %983 = vsyncadd [#allocation22], %s982
          %s985 = sshll.u32 [#allocation21], 4
          %s986 = int_to_ptr.vmem [resolvable:$true] %s985
          %988 = dma.hbm_to_vmem [thread:$0]  %s39, 48, %s986, [#allocation22]
        $region92: #{tpu_custom_call.1} parent=11 // pred_fallthru
          _
      $region12: #{tpu_custom_call.1} parent=5 // pred_fallthru
        _
      %p989 = scmp.lt.s32.totalorder %s75, 3
      // Predicated region
      $region93: #{tpu_custom_call.1} parent=5 // pred_check
        %p990 = pneg %p989
      $region94: #{tpu_custom_call.1} parent=5 // pred_check_branch
        %992 = sbr.rel (%p990) target = $region96
      $region95: #{tpu_custom_call.1} parent=5 // pred_region
        // Predicated region
        $region97: #{tpu_custom_call.1} parent=95 // pred_check
          %p993 = pneg %p521
        $region98: #{tpu_custom_call.1} parent=95 // pred_check_branch
          %995 = sbr.rel (%p993) target = $region100
        $region99: #{tpu_custom_call.1} parent=95 // pred_region
          %s996 = ssub.s32 %s75, 1
          %p997 = scmp.gt.s32.totalorder %s996, 0
          %s998 = scalar_select %p997, %s996, 0
          %p999 = scmp.lt.s32.totalorder %s998, 1
          %s1000 = scalar_select %p999, %s998, 1
          %s1001 = smul.addr %s1000, 16
          %s1002 = smul.addr %s1001, 8
          %s1003 = scalar_lea.vmem %s41, %s1002
          %s1004 = ssub.s32 %s75, 1
          %p1005 = scmp.gt.s32.totalorder %s1004, 0
          %s1006 = scalar_select %p1005, %s1004, 0
        $region100: #{tpu_custom_call.1} parent=95 // pred_fallthru
          _
        // Predicated region
        $region101: #{tpu_custom_call.1} parent=95 // pred_check
          %p1007 = pneg %p553
        $region102: #{tpu_custom_call.1} parent=95 // pred_check_branch
          %1009 = sbr.rel (%p1007) target = $region104
        $region103: #{tpu_custom_call.1} parent=95 // pred_region
          %s1010 = ssub.s32 %s75, 1
          %p1011 = scmp.gt.s32.totalorder %s1010, 0
          %s1012 = scalar_select %p1011, %s1010, 0
          %p1013 = scmp.lt.s32.totalorder %s1012, 1
          %s1014 = scalar_select %p1013, %s1012, 1
          %s1015 = smul.addr %s1014, 16
          %s1016 = smul.addr %s1015, 8
          %s1017 = scalar_lea.vmem %s43, %s1016
          %s1018 = ssub.s32 %s75, 1
          %p1019 = scmp.gt.s32.totalorder %s1018, 0
          %s1020 = scalar_select %p1019, %s1018, 0
        $region104: #{tpu_custom_call.1} parent=95 // pred_fallthru
          _
        // Predicated region
        $region105: #{tpu_custom_call.1} parent=95 // pred_check
          %p1021 = pneg %p585
        $region106: #{tpu_custom_call.1} parent=95 // pred_check_branch
          %1023 = sbr.rel (%p1021) target = $region108
        $region107: #{tpu_custom_call.1} parent=95 // pred_region
          %s1024 = ssub.s32 %s75, 1
          %p1025 = scmp.gt.s32.totalorder %s1024, 0
          %s1026 = scalar_select %p1025, %s1024, 0
          %p1027 = scmp.lt.s32.totalorder %s1026, 1
          %s1028 = scalar_select %p1027, %s1026, 1
          %s1029 = scalar_lea.vmem %s45, %s1028
          %s1030 = ssub.s32 %s75, 1
          %p1031 = scmp.gt.s32.totalorder %s1030, 0
          %s1032 = scalar_select %p1031, %s1030, 0
        $region108: #{tpu_custom_call.1} parent=95 // pred_fallthru
          _
        // Predicated region
        $region109: #{tpu_custom_call.1} parent=95 // pred_check
          %p1033 = pneg %p617
        $region110: #{tpu_custom_call.1} parent=95 // pred_check_branch
          %1035 = sbr.rel (%p1033) target = $region112
        $region111: #{tpu_custom_call.1} parent=95 // pred_region
          %s1036 = sand.u32 %s75, 1
          %s1037 = scalar_lea.sflag [#allocation4], %s1036
          %s1038 = sand.u32 %s607, 1
          %s1039 = smul.addr %s1038, 128
          %s1040 = scalar_lea.vmem [#allocation23], %s1039
          %s1041 = ssub.s32 %s75, 1
          %p1042 = scmp.gt.s32.totalorder %s1041, 0
          %s1043 = scalar_select %p1042, %s1041, 0
          %s1045 = ssub.s32 2048, 2048
          %1046 = vsyncadd %s1037, %s1045
          %s1047 = smul.addr %s1043, 16
          %s1048 = smul.addr %s1047, 128
          %s1049 = scalar_lea.hbm %s47, %s1048
          %s1050 = sshll.u32 %s1040, 4
          %s1051 = int_to_ptr.vmem [resolvable:$true] %s1050
          %1056 = dma.hbm_to_vmem [thread:$0]  %s1049, 2048, %s1051, %s1037, 128, 128, 8
        $region112: #{tpu_custom_call.1} parent=95 // pred_fallthru
          _
        // Predicated region
        $region113: #{tpu_custom_call.1} parent=95 // pred_check
          %p1057 = pneg %p649
        $region114: #{tpu_custom_call.1} parent=95 // pred_check_branch
          %1059 = sbr.rel (%p1057) target = $region116
        $region115: #{tpu_custom_call.1} parent=95 // pred_region
          %s1060 = sand.u32 %s75, 1
          %s1061 = scalar_lea.sflag [#allocation4], %s1060
          %s1062 = sand.u32 %s639, 1
          %s1063 = scalar_lea.vmem [#allocation24], %s1062
          %s1064 = ssub.s32 %s75, 1
          %p1065 = scmp.gt.s32.totalorder %s1064, 0
          %s1066 = scalar_select %p1065, %s1064, 0
          %s1068 = ssub.s32 16, 16
          %1069 = vsyncadd %s1061, %s1068
          %s1070 = smul.addr %s1066, 16
          %s1071 = scalar_lea.hbm %s49, %s1070
          %s1073 = sshll.u32 %s1063, 4
          %s1074 = int_to_ptr.vmem [resolvable:$true] %s1073
          %1076 = dma.hbm_to_vmem [thread:$0]  %s1071, 16, %s1074, %s1061
        $region116: #{tpu_custom_call.1} parent=95 // pred_fallthru
          _
        // Predicated region
        $region117: #{tpu_custom_call.1} parent=95 // pred_check
          %p1077 = pneg %p681
        $region118: #{tpu_custom_call.1} parent=95 // pred_check_branch
          %1079 = sbr.rel (%p1077) target = $region120
        $region119: #{tpu_custom_call.1} parent=95 // pred_region
          %s1080 = ssub.s32 %s75, 1
          %p1081 = scmp.gt.s32.totalorder %s1080, 0
          %s1082 = scalar_select %p1081, %s1080, 0
          %p1083 = scmp.lt.s32.totalorder %s1082, 1
          %s1084 = scalar_select %p1083, %s1082, 1
          %s1085 = smul.addr %s1084, 48
          %s1086 = smul.addr %s1085, 8
          %s1087 = scalar_lea.vmem %s51, %s1086
          %s1088 = ssub.s32 %s75, 1
          %p1089 = scmp.gt.s32.totalorder %s1088, 0
          %s1090 = scalar_select %p1089, %s1088, 0
        $region120: #{tpu_custom_call.1} parent=95 // pred_fallthru
          _
        // Predicated region
        $region121: #{tpu_custom_call.1} parent=95 // pred_check
          %p1091 = pneg %p713
        $region122: #{tpu_custom_call.1} parent=95 // pred_check_branch
          %1093 = sbr.rel (%p1091) target = $region124
        $region123: #{tpu_custom_call.1} parent=95 // pred_region
          %s1094 = sand.u32 %s75, 1
          %s1095 = scalar_lea.sflag [#allocation4], %s1094
          %s1096 = sand.u32 %s703, 1
          %s1097 = smul.addr %s1096, 384
          %s1098 = scalar_lea.vmem [#allocation25], %s1097
          %s1099 = ssub.s32 %s75, 1
          %p1100 = scmp.gt.s32.totalorder %s1099, 0
          %s1101 = scalar_select %p1100, %s1099, 0
          %s1103 = ssub.s32 6144, 6144
          %1104 = vsyncadd %s1095, %s1103
          %s1105 = smul.addr %s1101, 48
          %s1106 = smul.addr %s1105, 128
          %s1107 = scalar_lea.hbm %s53, %s1106
          %s1108 = sshll.u32 %s1098, 4
          %s1109 = int_to_ptr.vmem [resolvable:$true] %s1108
          %1114 = dma.hbm_to_vmem [thread:$0]  %s1107, 6144, %s1109, %s1095, 384, 384, 24
        $region124: #{tpu_custom_call.1} parent=95 // pred_fallthru
          _
        // Predicated region
        $region125: #{tpu_custom_call.1} parent=95 // pred_check
          %p1115 = pneg %p745
        $region126: #{tpu_custom_call.1} parent=95 // pred_check_branch
          %1117 = sbr.rel (%p1115) target = $region128
        $region127: #{tpu_custom_call.1} parent=95 // pred_region
          %s1118 = ssub.s32 %s75, 1
          %p1119 = scmp.gt.s32.totalorder %s1118, 0
          %s1120 = scalar_select %p1119, %s1118, 0
          %p1121 = scmp.lt.s32.totalorder %s1120, 1
          %s1122 = scalar_select %p1121, %s1120, 1
          %s1123 = smul.addr %s1122, 3
          %s1124 = scalar_lea.vmem %s55, %s1123
          %s1125 = ssub.s32 %s75, 1
          %p1126 = scmp.gt.s32.totalorder %s1125, 0
          %s1127 = scalar_select %p1126, %s1125, 0
        $region128: #{tpu_custom_call.1} parent=95 // pred_fallthru
          _
        // Predicated region
        $region129: #{tpu_custom_call.1} parent=95 // pred_check
          %p1128 = pneg %p777
        $region130: #{tpu_custom_call.1} parent=95 // pred_check_branch
          %1130 = sbr.rel (%p1128) target = $region132
        $region131: #{tpu_custom_call.1} parent=95 // pred_region
          %s1131 = ssub.s32 %s75, 1
          %p1132 = scmp.gt.s32.totalorder %s1131, 0
          %s1133 = scalar_select %p1132, %s1131, 0
          %p1134 = scmp.lt.s32.totalorder %s1133, 1
          %s1135 = scalar_select %p1134, %s1133, 1
          %s1136 = smul.addr %s1135, 3
          %s1137 = scalar_lea.vmem %s57, %s1136
          %s1138 = ssub.s32 %s75, 1
          %p1139 = scmp.gt.s32.totalorder %s1138, 0
          %s1140 = scalar_select %p1139, %s1138, 0
        $region132: #{tpu_custom_call.1} parent=95 // pred_fallthru
          _
      $region96: #{tpu_custom_call.1} parent=5 // pred_fallthru
        _
      %p1141 = scmp.le.s32.totalorder 1, %s75
      %p1142 = scmp.lt.s32.totalorder %s75, 4
      %p1143 = pnand %p1141, %p1142
      %p1144 = pneg %p1143
      // Predicated region
      $region133: #{tpu_custom_call.1} parent=5 // pred_check
        _
      $region134: #{tpu_custom_call.1} parent=5 // pred_check_branch
        %1146 = sbr.rel (%p1143) target = $region136
      $region135: #{tpu_custom_call.1} parent=5 // pred_region
        %s1147 = ssub.s32 %s75, 1
        // Predicated region
        $region137: #{tpu_custom_call.1} parent=135 // pred_check
          %p1148 = pneg %p159
        $region138: #{tpu_custom_call.1} parent=135 // pred_check_branch
          %1150 = sbr.rel (%p1148) target = $region140
        $region139: #{tpu_custom_call.1} parent=135 // pred_region
          %1151 = dma.done [#allocation4], 2048
        $region140: #{tpu_custom_call.1} parent=135 // pred_fallthru
          _
        // Predicated region
        $region141: #{tpu_custom_call.1} parent=135 // pred_check
          %p1152 = pneg %p180
        $region142: #{tpu_custom_call.1} parent=135 // pred_check_branch
          %1154 = sbr.rel (%p1152) target = $region144
        $region143: #{tpu_custom_call.1} parent=135 // pred_region
          %1155 = dma.done [#allocation7], 4096
        $region144: #{tpu_custom_call.1} parent=135 // pred_fallthru
          _
        // Predicated region
        $region145: #{tpu_custom_call.1} parent=135 // pred_check
          %p1156 = pneg %p201
        $region146: #{tpu_custom_call.1} parent=135 // pred_check_branch
          %1158 = sbr.rel (%p1156) target = $region148
        $region147: #{tpu_custom_call.1} parent=135 // pred_region
          %1159 = dma.done [#allocation7], 4096
        $region148: #{tpu_custom_call.1} parent=135 // pred_fallthru
          _
        // Predicated region
        $region149: #{tpu_custom_call.1} parent=135 // pred_check
          %p1160 = pneg %p243
        $region150: #{tpu_custom_call.1} parent=135 // pred_check_branch
          %1162 = sbr.rel (%p1160) target = $region152
        $region151: #{tpu_custom_call.1} parent=135 // pred_region
          %1163 = dma.done [#allocation10], 16
        $region152: #{tpu_custom_call.1} parent=135 // pred_fallthru
          _
        // Predicated region
        $region153: #{tpu_custom_call.1} parent=135 // pred_check
          %p1164 = pneg %p264
        $region154: #{tpu_custom_call.1} parent=135 // pred_check_branch
          %1166 = sbr.rel (%p1164) target = $region156
        $region155: #{tpu_custom_call.1} parent=135 // pred_region
          %1167 = dma.done [#allocation10], 512
        $region156: #{tpu_custom_call.1} parent=135 // pred_fallthru
          _
        // Predicated region
        $region157: #{tpu_custom_call.1} parent=135 // pred_check
          %p1168 = pneg %p285
        $region158: #{tpu_custom_call.1} parent=135 // pred_check_branch
          %1170 = sbr.rel (%p1168) target = $region160
        $region159: #{tpu_custom_call.1} parent=135 // pred_region
          %1171 = dma.done [#allocation13], 256
        $region160: #{tpu_custom_call.1} parent=135 // pred_fallthru
          _
        // Predicated region
        $region161: #{tpu_custom_call.1} parent=135 // pred_check
          %p1172 = pneg %p306
        $region162: #{tpu_custom_call.1} parent=135 // pred_check_branch
          %1174 = sbr.rel (%p1172) target = $region164
        $region163: #{tpu_custom_call.1} parent=135 // pred_region
          %1175 = dma.done [#allocation13], 16
        $region164: #{tpu_custom_call.1} parent=135 // pred_fallthru
          _
        // Predicated region
        $region165: #{tpu_custom_call.1} parent=135 // pred_check
          %p1176 = pneg %p390
        $region166: #{tpu_custom_call.1} parent=135 // pred_check_branch
          %1178 = sbr.rel (%p1176) target = $region168
        $region167: #{tpu_custom_call.1} parent=135 // pred_region
          %1179 = dma.done [#allocation16], 2048
        $region168: #{tpu_custom_call.1} parent=135 // pred_fallthru
          _
        // Predicated region
        $region169: #{tpu_custom_call.1} parent=135 // pred_check
          %p1180 = pneg %p411
        $region170: #{tpu_custom_call.1} parent=135 // pred_check_branch
          %1182 = sbr.rel (%p1180) target = $region172
        $region171: #{tpu_custom_call.1} parent=135 // pred_region
          %1183 = dma.done [#allocation16], 16
        $region172: #{tpu_custom_call.1} parent=135 // pred_fallthru
          _
        // Predicated region
        $region173: #{tpu_custom_call.1} parent=135 // pred_check
          %p1184 = pneg %p453
        $region174: #{tpu_custom_call.1} parent=135 // pred_check_branch
          %1186 = sbr.rel (%p1184) target = $region176
        $region175: #{tpu_custom_call.1} parent=135 // pred_region
          %1187 = dma.done [#allocation19], 6144
        $region176: #{tpu_custom_call.1} parent=135 // pred_fallthru
          _
        // Predicated region
        $region177: #{tpu_custom_call.1} parent=135 // pred_check
          %p1188 = pneg %p474
        $region178: #{tpu_custom_call.1} parent=135 // pred_check_branch
          %1190 = sbr.rel (%p1188) target = $region180
        $region179: #{tpu_custom_call.1} parent=135 // pred_region
          %1191 = dma.done [#allocation19], 48
        $region180: #{tpu_custom_call.1} parent=135 // pred_fallthru
          _
        // Predicated region
        $region181: #{tpu_custom_call.1} parent=135 // pred_check
          %p1192 = pneg %p495
        $region182: #{tpu_custom_call.1} parent=135 // pred_check_branch
          %1194 = sbr.rel (%p1192) target = $region184
        $region183: #{tpu_custom_call.1} parent=135 // pred_region
          %1195 = dma.done [#allocation22], 48
        $region184: #{tpu_custom_call.1} parent=135 // pred_fallthru
          _
        %s1196 = sand.u32 %s80, 1
        %s1197 = scalar_lea.sflag [#allocation4], %s1196
        %s1198 = sand.u32 %s610, 1
        %s1199 = smul.addr %s1198, 128
        %s1200 = scalar_lea.vmem [#allocation23], %s1199
        // Predicated region
        $region185: #{tpu_custom_call.1} parent=135 // pred_check
          %p1201 = pneg %p623
        $region186: #{tpu_custom_call.1} parent=135 // pred_check_branch
          %1203 = sbr.rel (%p1201) target = $region188
        $region187: #{tpu_custom_call.1} parent=135 // pred_region
          %1204 = dma.done %s1197, 2048
        $region188: #{tpu_custom_call.1} parent=135 // pred_fallthru
          _
        %s1205 = sand.u32 %s80, 1
        %s1206 = scalar_lea.sflag [#allocation4], %s1205
        %s1207 = sand.u32 %s642, 1
        %s1208 = scalar_lea.vmem [#allocation24], %s1207
        // Predicated region
        $region189: #{tpu_custom_call.1} parent=135 // pred_check
          %p1209 = pneg %p655
        $region190: #{tpu_custom_call.1} parent=135 // pred_check_branch
          %1211 = sbr.rel (%p1209) target = $region192
        $region191: #{tpu_custom_call.1} parent=135 // pred_region
          %1212 = dma.done %s1206, 16
        $region192: #{tpu_custom_call.1} parent=135 // pred_fallthru
          _
        %s1213 = sand.u32 %s80, 1
        %s1214 = scalar_lea.sflag [#allocation4], %s1213
        %s1215 = sand.u32 %s706, 1
        %s1216 = smul.addr %s1215, 384
        %s1217 = scalar_lea.vmem [#allocation25], %s1216
        // Predicated region
        $region193: #{tpu_custom_call.1} parent=135 // pred_check
          %p1218 = pneg %p719
        $region194: #{tpu_custom_call.1} parent=135 // pred_check_branch
          %1220 = sbr.rel (%p1218) target = $region196
        $region195: #{tpu_custom_call.1} parent=135 // pred_region
          %1221 = dma.done %s1214, 6144
        $region196: #{tpu_custom_call.1} parent=135 // pred_fallthru
          _
        %p1222 = pneg %p96
        %p1223 = pneg %p93
        %p1224 = pneg %p117
        %p1225 = pneg %p114
        %p1226 = pneg %p138
        %p1227 = pneg %p135
        %p1228 = pneg %p159
        %p1229 = pneg %p156
        %p1230 = pneg %p180
        %p1231 = pneg %p177
        %p1232 = pneg %p201
        %p1233 = pneg %p198
        %p1234 = pneg %p222
        %p1235 = pneg %p219
        %p1236 = pneg %p243
        %p1237 = pneg %p240
        %p1238 = pneg %p264
        %p1239 = pneg %p261
        %p1240 = pneg %p285
        %p1241 = pneg %p282
        %p1242 = pneg %p306
        %p1243 = pneg %p303
        %p1244 = pneg %p327
        %p1245 = pneg %p324
        %p1246 = pneg %p348
        %p1247 = pneg %p345
        %p1248 = pneg %p369
        %p1249 = pneg %p366
        %p1250 = pneg %p390
        %p1251 = pneg %p387
        %p1252 = pneg %p411
        %p1253 = pneg %p408
        %p1254 = pneg %p432
        %p1255 = pneg %p429
        %p1256 = pneg %p453
        %p1257 = pneg %p450
        %p1258 = pneg %p474
        %p1259 = pneg %p471
        %p1260 = pneg %p495
        %p1261 = pneg %p492
        %s1262 = ssub.s32 %s80, 1
        %p1263 = scmp.gt.s32.totalorder %s1262, 0
        %s1264 = scalar_select %p1263, %s1262, 0
        %p1265 = scmp.lt.s32.totalorder %s1264, 1
        %s1266 = scalar_select %p1265, %s1264, 1
        %s1267 = smul.addr %s1266, 16
        %s1268 = smul.addr %s1267, 8
        %s1269 = scalar_lea.vmem %s41, %s1268
        %p1270 = pneg %p527
        %p1271 = pneg %p524
        %s1272 = ssub.s32 %s80, 1
        %p1273 = scmp.gt.s32.totalorder %s1272, 0
        %s1274 = scalar_select %p1273, %s1272, 0
        %p1275 = scmp.lt.s32.totalorder %s1274, 1
        %s1276 = scalar_select %p1275, %s1274, 1
        %s1277 = smul.addr %s1276, 16
        %s1278 = smul.addr %s1277, 8
        %s1279 = scalar_lea.vmem %s43, %s1278
        %p1280 = pneg %p559
        %p1281 = pneg %p556
        %s1282 = ssub.s32 %s80, 1
        %p1283 = scmp.gt.s32.totalorder %s1282, 0
        %s1284 = scalar_select %p1283, %s1282, 0
        %p1285 = scmp.lt.s32.totalorder %s1284, 1
        %s1286 = scalar_select %p1285, %s1284, 1
        %s1287 = scalar_lea.vmem %s45, %s1286
        %p1288 = pneg %p591
        %p1289 = pneg %p588
        %s1290 = sand.u32 %s80, 1
        %s1291 = scalar_lea.sflag [#allocation4], %s1290
        %s1292 = sand.u32 %s610, 1
        %s1293 = smul.addr %s1292, 128
        %s1294 = scalar_lea.vmem [#allocation23], %s1293
        %p1295 = pneg %p623
        %p1296 = pneg %p620
        %s1297 = sand.u32 %s80, 1
        %s1298 = scalar_lea.sflag [#allocation4], %s1297
        %s1299 = sand.u32 %s642, 1
        %s1300 = scalar_lea.vmem [#allocation24], %s1299
        %p1301 = pneg %p655
        %p1302 = pneg %p652
        %s1303 = ssub.s32 %s80, 1
        %p1304 = scmp.gt.s32.totalorder %s1303, 0
        %s1305 = scalar_select %p1304, %s1303, 0
        %p1306 = scmp.lt.s32.totalorder %s1305, 1
        %s1307 = scalar_select %p1306, %s1305, 1
        %s1308 = smul.addr %s1307, 48
        %s1309 = smul.addr %s1308, 8
        %s1310 = scalar_lea.vmem %s51, %s1309
        %p1311 = pneg %p687
        %p1312 = pneg %p684
        %s1313 = sand.u32 %s80, 1
        %s1314 = scalar_lea.sflag [#allocation4], %s1313
        %s1315 = sand.u32 %s706, 1
        %s1316 = smul.addr %s1315, 384
        %s1317 = scalar_lea.vmem [#allocation25], %s1316
        %p1318 = pneg %p719
        %p1319 = pneg %p716
        %s1320 = ssub.s32 %s80, 1
        %p1321 = scmp.gt.s32.totalorder %s1320, 0
        %s1322 = scalar_select %p1321, %s1320, 0
        %p1323 = scmp.lt.s32.totalorder %s1322, 1
        %s1324 = scalar_select %p1323, %s1322, 1
        %s1325 = smul.addr %s1324, 3
        %s1326 = scalar_lea.vmem %s55, %s1325
        %p1327 = pneg %p751
        %p1328 = pneg %p748
        %s1329 = ssub.s32 %s80, 1
        %p1330 = scmp.gt.s32.totalorder %s1329, 0
        %s1331 = scalar_select %p1330, %s1329, 0
        %p1332 = scmp.lt.s32.totalorder %s1331, 1
        %s1333 = scalar_select %p1332, %s1331, 1
        %s1334 = smul.addr %s1333, 3
        %s1335 = scalar_lea.vmem %s57, %s1334
        %p1336 = pneg %p783
        %p1337 = pneg %p780
        %p1338 = pneg %p804
        %p1339 = pneg %p801
        %s1340 = ssub.s32 %s80, 1
        %p1341 = scmp.gt.s32.totalorder %s1340, 0
        %s1342 = scalar_select %p1341, %s1340, 0
        %p1343 = scmp.lt.s32.totalorder %s1342, 1
        %s1344 = scalar_select %p1343, %s1342, 1
        %s1345 = smul.addr %s1344, 16
        %s1346 = smul.addr %s1345, 8
        %s1347 = scalar_lea.vmem %s41, %s1346
        %s1348 = ssub.s32 %s80, 1
        %p1349 = scmp.gt.s32.totalorder %s1348, 0
        %s1350 = scalar_select %p1349, %s1348, 0
        %s1351 = ssub.s32 %s80, 1
        %p1352 = scmp.gt.s32.totalorder %s1351, 0
        %s1353 = scalar_select %p1352, %s1351, 0
        %p1354 = scmp.lt.s32.totalorder %s1353, 1
        %s1355 = scalar_select %p1354, %s1353, 1
        %s1356 = smul.addr %s1355, 16
        %s1357 = smul.addr %s1356, 8
        %s1358 = scalar_lea.vmem %s43, %s1357
        %s1359 = ssub.s32 %s80, 1
        %p1360 = scmp.gt.s32.totalorder %s1359, 0
        %s1361 = scalar_select %p1360, %s1359, 0
        %s1362 = ssub.s32 %s80, 1
        %p1363 = scmp.gt.s32.totalorder %s1362, 0
        %s1364 = scalar_select %p1363, %s1362, 0
        %p1365 = scmp.lt.s32.totalorder %s1364, 1
        %s1366 = scalar_select %p1365, %s1364, 1
        %s1367 = scalar_lea.vmem %s45, %s1366
        %s1368 = ssub.s32 %s80, 1
        %p1369 = scmp.gt.s32.totalorder %s1368, 0
        %s1370 = scalar_select %p1369, %s1368, 0
        %s1371 = ssub.s32 %s80, 1
        %p1372 = scmp.gt.s32.totalorder %s1371, 0
        %s1373 = scalar_select %p1372, %s1371, 0
        %s1374 = ssub.s32 %s80, 1
        %p1375 = scmp.gt.s32.totalorder %s1374, 0
        %s1376 = scalar_select %p1375, %s1374, 0
        %s1377 = ssub.s32 %s80, 1
        %p1378 = scmp.gt.s32.totalorder %s1377, 0
        %s1379 = scalar_select %p1378, %s1377, 0
        %p1380 = scmp.lt.s32.totalorder %s1379, 1
        %s1381 = scalar_select %p1380, %s1379, 1
        %s1382 = smul.addr %s1381, 48
        %s1383 = smul.addr %s1382, 8
        %s1384 = scalar_lea.vmem %s51, %s1383
        %s1385 = ssub.s32 %s80, 1
        %p1386 = scmp.gt.s32.totalorder %s1385, 0
        %s1387 = scalar_select %p1386, %s1385, 0
        %s1388 = ssub.s32 %s80, 1
        %p1389 = scmp.gt.s32.totalorder %s1388, 0
        %s1390 = scalar_select %p1389, %s1388, 0
        %s1391 = ssub.s32 %s80, 1
        %p1392 = scmp.gt.s32.totalorder %s1391, 0
        %s1393 = scalar_select %p1392, %s1391, 0
        %p1394 = scmp.lt.s32.totalorder %s1393, 1
        %s1395 = scalar_select %p1394, %s1393, 1
        %s1396 = smul.addr %s1395, 3
        %s1397 = scalar_lea.vmem %s55, %s1396
        %s1398 = ssub.s32 %s80, 1
        %p1399 = scmp.gt.s32.totalorder %s1398, 0
        %s1400 = scalar_select %p1399, %s1398, 0
        %s1401 = ssub.s32 %s80, 1
        %p1402 = scmp.gt.s32.totalorder %s1401, 0
        %s1403 = scalar_select %p1402, %s1401, 0
        %p1404 = scmp.lt.s32.totalorder %s1403, 1
        %s1405 = scalar_select %p1404, %s1403, 1
        %s1406 = smul.addr %s1405, 3
        %s1407 = scalar_lea.vmem %s57, %s1406
        %s1408 = ssub.s32 %s80, 1
        %p1409 = scmp.gt.s32.totalorder %s1408, 0
        %s1410 = scalar_select %p1409, %s1408, 0
        %v1412 = vld [vmem:[%s5] sm:$0xf]
        %v1413 = vld [vmem:[%s5 + $0x4] sm:$0xf]
        %v1414 = vld [vmem:[%s5 + $0x8] sm:$0xf]
        %v1415 = vld [vmem:[%s5 + $0xc] sm:$0xf]
        %v1416 = vld [vmem:[%s5 + $0x10] sm:$0xf]
        %v1417 = vld [vmem:[%s5 + $0x14] sm:$0xf]
        %v1418 = vld [vmem:[%s5 + $0x18] sm:$0xf]
        %v1419 = vld [vmem:[%s5 + $0x1c] sm:$0xf]
        %v1420 = vld [vmem:[%s5 + $0x20] sm:$0xf]
        %v1421 = vld [vmem:[%s5 + $0x24] sm:$0xf]
        %v1422 = vld [vmem:[%s5 + $0x28] sm:$0xf]
        %v1423 = vld [vmem:[%s5 + $0x2c] sm:$0xf]
        %v1424 = vld [vmem:[%s5 + $0x30] sm:$0xf]
        %v1425 = vld [vmem:[%s5 + $0x34] sm:$0xf]
        %v1426 = vld [vmem:[%s5 + $0x38] sm:$0xf]
        %v1427 = vld [vmem:[%s5 + $0x3c] sm:$0xf]
        %v1428 = vld [vmem:[%s5 + $0x40] sm:$0xf]
        %v1429 = vld [vmem:[%s5 + $0x44] sm:$0xf]
        %v1430 = vld [vmem:[%s5 + $0x48] sm:$0xf]
        %v1431 = vld [vmem:[%s5 + $0x4c] sm:$0xf]
        %v1432 = vld [vmem:[%s5 + $0x50] sm:$0xf]
        %v1433 = vld [vmem:[%s5 + $0x54] sm:$0xf]
        %v1434 = vld [vmem:[%s5 + $0x58] sm:$0xf]
        %v1435 = vld [vmem:[%s5 + $0x5c] sm:$0xf]
        %v1436 = vld [vmem:[%s5 + $0x60] sm:$0xf]
        %v1437 = vld [vmem:[%s5 + $0x64] sm:$0xf]
        %v1438 = vld [vmem:[%s5 + $0x68] sm:$0xf]
        %v1439 = vld [vmem:[%s5 + $0x6c] sm:$0xf]
        %v1440 = vld [vmem:[%s5 + $0x70] sm:$0xf]
        %v1441 = vld [vmem:[%s5 + $0x74] sm:$0xf]
        %v1442 = vld [vmem:[%s5 + $0x78] sm:$0xf]
        %v1443 = vld [vmem:[%s5 + $0x7c] sm:$0xf]
        %v1444 = vld [vmem:[#allocation3] sm:$0xf]
        %v1445 = vld [vmem:[#allocation3 + $0x4] sm:$0xf]
        %v1446 = vld [vmem:[#allocation3 + $0x8] sm:$0xf]
        %v1447 = vld [vmem:[#allocation3 + $0xc] sm:$0xf]
        %v1448 = vld [vmem:[#allocation3 + $0x10] sm:$0xf]
        %v1449 = vld [vmem:[#allocation3 + $0x14] sm:$0xf]
        %v1450 = vld [vmem:[#allocation3 + $0x18] sm:$0xf]
        %v1451 = vld [vmem:[#allocation3 + $0x1c] sm:$0xf]
        %v1452 = vld [vmem:[#allocation3 + $0x20] sm:$0xf]
        %v1453 = vld [vmem:[#allocation3 + $0x24] sm:$0xf]
        %v1454 = vld [vmem:[#allocation3 + $0x28] sm:$0xf]
        %v1455 = vld [vmem:[#allocation3 + $0x2c] sm:$0xf]
        %v1456 = vld [vmem:[#allocation3 + $0x30] sm:$0xf]
        %v1457 = vld [vmem:[#allocation3 + $0x34] sm:$0xf]
        %v1458 = vld [vmem:[#allocation3 + $0x38] sm:$0xf]
        %v1459 = vld [vmem:[#allocation3 + $0x3c] sm:$0xf]
        %v1460 = vld [vmem:[#allocation3 + $0x40] sm:$0xf]
        %v1461 = vld [vmem:[#allocation3 + $0x44] sm:$0xf]
        %v1462 = vld [vmem:[#allocation3 + $0x48] sm:$0xf]
        %v1463 = vld [vmem:[#allocation3 + $0x4c] sm:$0xf]
        %v1464 = vld [vmem:[#allocation3 + $0x50] sm:$0xf]
        %v1465 = vld [vmem:[#allocation3 + $0x54] sm:$0xf]
        %v1466 = vld [vmem:[#allocation3 + $0x58] sm:$0xf]
        %v1467 = vld [vmem:[#allocation3 + $0x5c] sm:$0xf]
        %v1468 = vld [vmem:[#allocation3 + $0x60] sm:$0xf]
        %v1469 = vld [vmem:[#allocation3 + $0x64] sm:$0xf]
        %v1470 = vld [vmem:[#allocation3 + $0x68] sm:$0xf]
        %v1471 = vld [vmem:[#allocation3 + $0x6c] sm:$0xf]
        %v1472 = vld [vmem:[#allocation3 + $0x70] sm:$0xf]
        %v1473 = vld [vmem:[#allocation3 + $0x74] sm:$0xf]
        %v1474 = vld [vmem:[#allocation3 + $0x78] sm:$0xf]
        %v1475 = vld [vmem:[#allocation3 + $0x7c] sm:$0xf]
        %v1476 = vld [vmem:[#allocation6] sm:$0xff]
        %v1477 = vld [vmem:[#allocation6 + $0x8] sm:$0xff]
        %v1478 = vld [vmem:[#allocation6 + $0x10] sm:$0xff]
        %v1479 = vld [vmem:[#allocation6 + $0x18] sm:$0xff]
        %v1480 = vld [vmem:[#allocation6 + $0x20] sm:$0xff]
        %v1481 = vld [vmem:[#allocation6 + $0x28] sm:$0xff]
        %v1482 = vld [vmem:[#allocation6 + $0x30] sm:$0xff]
        %v1483 = vld [vmem:[#allocation6 + $0x38] sm:$0xff]
        %v1484 = vld [vmem:[#allocation6 + $0x40] sm:$0xff]
        %v1485 = vld [vmem:[#allocation6 + $0x48] sm:$0xff]
        %v1486 = vld [vmem:[#allocation6 + $0x50] sm:$0xff]
        %v1487 = vld [vmem:[#allocation6 + $0x58] sm:$0xff]
        %v1488 = vld [vmem:[#allocation6 + $0x60] sm:$0xff]
        %v1489 = vld [vmem:[#allocation6 + $0x68] sm:$0xff]
        %v1490 = vld [vmem:[#allocation6 + $0x70] sm:$0xff]
        %v1491 = vld [vmem:[#allocation6 + $0x78] sm:$0xff]
        %v1492 = vld [vmem:[#allocation6 + $0x80] sm:$0xff]
        %v1493 = vld [vmem:[#allocation6 + $0x88] sm:$0xff]
        %v1494 = vld [vmem:[#allocation6 + $0x90] sm:$0xff]
        %v1495 = vld [vmem:[#allocation6 + $0x98] sm:$0xff]
        %v1496 = vld [vmem:[#allocation6 + $0xa0] sm:$0xff]
        %v1497 = vld [vmem:[#allocation6 + $0xa8] sm:$0xff]
        %v1498 = vld [vmem:[#allocation6 + $0xb0] sm:$0xff]
        %v1499 = vld [vmem:[#allocation6 + $0xb8] sm:$0xff]
        %v1500 = vld [vmem:[#allocation6 + $0xc0] sm:$0xff]
        %v1501 = vld [vmem:[#allocation6 + $0xc8] sm:$0xff]
        %v1502 = vld [vmem:[#allocation6 + $0xd0] sm:$0xff]
        %v1503 = vld [vmem:[#allocation6 + $0xd8] sm:$0xff]
        %v1504 = vld [vmem:[#allocation6 + $0xe0] sm:$0xff]
        %v1505 = vld [vmem:[#allocation6 + $0xe8] sm:$0xff]
        %v1506 = vld [vmem:[#allocation6 + $0xf0] sm:$0xff]
        %v1507 = vld [vmem:[#allocation6 + $0xf8] sm:$0xff]
        %v1508 = vld [vmem:[#allocation8] sm:$0xff]
        %v1509 = vld [vmem:[#allocation8 + $0x8] sm:$0xff]
        %v1510 = vld [vmem:[#allocation8 + $0x10] sm:$0xff]
        %v1511 = vld [vmem:[#allocation8 + $0x18] sm:$0xff]
        %v1512 = vld [vmem:[#allocation8 + $0x20] sm:$0xff]
        %v1513 = vld [vmem:[#allocation8 + $0x28] sm:$0xff]
        %v1514 = vld [vmem:[#allocation8 + $0x30] sm:$0xff]
        %v1515 = vld [vmem:[#allocation8 + $0x38] sm:$0xff]
        %v1516 = vld [vmem:[#allocation8 + $0x40] sm:$0xff]
        %v1517 = vld [vmem:[#allocation8 + $0x48] sm:$0xff]
        %v1518 = vld [vmem:[#allocation8 + $0x50] sm:$0xff]
        %v1519 = vld [vmem:[#allocation8 + $0x58] sm:$0xff]
        %v1520 = vld [vmem:[#allocation8 + $0x60] sm:$0xff]
        %v1521 = vld [vmem:[#allocation8 + $0x68] sm:$0xff]
        %v1522 = vld [vmem:[#allocation8 + $0x70] sm:$0xff]
        %v1523 = vld [vmem:[#allocation8 + $0x78] sm:$0xff]
        %v1524 = vld [vmem:[#allocation8 + $0x80] sm:$0xff]
        %v1525 = vld [vmem:[#allocation8 + $0x88] sm:$0xff]
        %v1526 = vld [vmem:[#allocation8 + $0x90] sm:$0xff]
        %v1527 = vld [vmem:[#allocation8 + $0x98] sm:$0xff]
        %v1528 = vld [vmem:[#allocation8 + $0xa0] sm:$0xff]
        %v1529 = vld [vmem:[#allocation8 + $0xa8] sm:$0xff]
        %v1530 = vld [vmem:[#allocation8 + $0xb0] sm:$0xff]
        %v1531 = vld [vmem:[#allocation8 + $0xb8] sm:$0xff]
        %v1532 = vld [vmem:[#allocation8 + $0xc0] sm:$0xff]
        %v1533 = vld [vmem:[#allocation8 + $0xc8] sm:$0xff]
        %v1534 = vld [vmem:[#allocation8 + $0xd0] sm:$0xff]
        %v1535 = vld [vmem:[#allocation8 + $0xd8] sm:$0xff]
        %v1536 = vld [vmem:[#allocation8 + $0xe0] sm:$0xff]
        %v1537 = vld [vmem:[#allocation8 + $0xe8] sm:$0xff]
        %v1538 = vld [vmem:[#allocation8 + $0xf0] sm:$0xff]
        %v1539 = vld [vmem:[#allocation8 + $0xf8] sm:$0xff]
        %p1540 = scmp.eq.s32.totalorder %s80, 0
        // Predicated region
        $region197: #{tpu_custom_call.1} parent=135 // pred_check
          %p1541 = pneg %p1540
        $region198: #{tpu_custom_call.1} parent=135 // pred_check_branch
          %1543 = sbr.rel (%p1541) target = $region200
        $region199: #{tpu_custom_call.1} parent=135 // pred_region
          %v1544 = vld [vmem:[%s13] sm:$0xff]
          %v1545 = vld [vmem:[%s13 + $0x8] sm:$0xff]
          %v1546 = vld [vmem:[%s13 + $0x10] sm:$0xff]
          %v1547 = vld [vmem:[%s13 + $0x18] sm:$0xff]
          %v1548 = vld [vmem:[#allocation9] sm:$0x1]
          %v1549 = vld [vmem:[#allocation11] sm:$0xff]
          %v1550 = vld [vmem:[#allocation11 + $0x8] sm:$0xff]
          %v1551 = vld [vmem:[#allocation11 + $0x10] sm:$0xff]
          %v1552 = vld [vmem:[#allocation11 + $0x18] sm:$0xff]
          %v1553 = vld [vmem:[#allocation12] sm:$0xff]
          %v1554 = vld [vmem:[#allocation12 + $0x8] sm:$0xff]
          %v1555 = vld [vmem:[#allocation14] sm:$0x1]
          %v1556 = vld [vmem:[%s23] sm:$0xff]
          %v1557 = vld [vmem:[%s23 + $0x8] sm:$0xff]
          %v1558 = vld [vmem:[%s23 + $0x10] sm:$0xff]
          %v1559 = vld [vmem:[%s23 + $0x18] sm:$0xff]
          %v1560 = vld [vmem:[%s23 + $0x20] sm:$0xff]
          %v1561 = vld [vmem:[%s23 + $0x28] sm:$0xff]
          %v1562 = vld [vmem:[%s23 + $0x30] sm:$0xff]
          %v1563 = vld [vmem:[%s23 + $0x38] sm:$0xff]
          %v1564 = vld [vmem:[%s23 + $0x40] sm:$0xff]
          %v1565 = vld [vmem:[%s23 + $0x48] sm:$0xff]
          %v1566 = vld [vmem:[%s23 + $0x50] sm:$0xff]
          %v1567 = vld [vmem:[%s23 + $0x58] sm:$0xff]
          %v1568 = vld [vmem:[%s23 + $0x60] sm:$0xff]
          %v1569 = vld [vmem:[%s23 + $0x68] sm:$0xff]
          %v1570 = vld [vmem:[%s23 + $0x70] sm:$0xff]
          %v1571 = vld [vmem:[%s23 + $0x78] sm:$0xff]
          %v1572 = vld [vmem:[%s25] sm:$0xff]
          %v1573 = vld [vmem:[%s25 + $0x8] sm:$0xff]
          %v1574 = vld [vmem:[%s25 + $0x10] sm:$0xff]
          %v1575 = vld [vmem:[%s25 + $0x18] sm:$0xff]
          %v1576 = vld [vmem:[%s25 + $0x20] sm:$0xff]
          %v1577 = vld [vmem:[%s25 + $0x28] sm:$0xff]
          %v1578 = vld [vmem:[%s25 + $0x30] sm:$0xff]
          %v1579 = vld [vmem:[%s25 + $0x38] sm:$0xff]
          %v1580 = vld [vmem:[%s25 + $0x40] sm:$0xff]
          %v1581 = vld [vmem:[%s25 + $0x48] sm:$0xff]
          %v1582 = vld [vmem:[%s25 + $0x50] sm:$0xff]
          %v1583 = vld [vmem:[%s25 + $0x58] sm:$0xff]
          %v1584 = vld [vmem:[%s25 + $0x60] sm:$0xff]
          %v1585 = vld [vmem:[%s25 + $0x68] sm:$0xff]
          %v1586 = vld [vmem:[%s25 + $0x70] sm:$0xff]
          %v1587 = vld [vmem:[%s25 + $0x78] sm:$0xff]
          %v1588 = vld [vmem:[#allocation2] sm:$0x1]
          %v1589 = vld [vmem:[#allocation15] sm:$0xff]
          %v1590 = vld [vmem:[#allocation15 + $0x8] sm:$0xff]
          %v1591 = vld [vmem:[#allocation15 + $0x10] sm:$0xff]
          %v1592 = vld [vmem:[#allocation15 + $0x18] sm:$0xff]
          %v1593 = vld [vmem:[#allocation15 + $0x20] sm:$0xff]
          %v1594 = vld [vmem:[#allocation15 + $0x28] sm:$0xff]
          %v1595 = vld [vmem:[#allocation15 + $0x30] sm:$0xff]
          %v1596 = vld [vmem:[#allocation15 + $0x38] sm:$0xff]
          %v1597 = vld [vmem:[#allocation15 + $0x40] sm:$0xff]
          %v1598 = vld [vmem:[#allocation15 + $0x48] sm:$0xff]
          %v1599 = vld [vmem:[#allocation15 + $0x50] sm:$0xff]
          %v1600 = vld [vmem:[#allocation15 + $0x58] sm:$0xff]
          %v1601 = vld [vmem:[#allocation15 + $0x60] sm:$0xff]
          %v1602 = vld [vmem:[#allocation15 + $0x68] sm:$0xff]
          %v1603 = vld [vmem:[#allocation15 + $0x70] sm:$0xff]
          %v1604 = vld [vmem:[#allocation15 + $0x78] sm:$0xff]
          %v1605 = vld [vmem:[#allocation17] sm:$0x1]
          %v1606 = vld [vmem:[%s33] sm:$0xff]
          %v1607 = vld [vmem:[%s33 + $0x8] sm:$0xff]
          %v1608 = vld [vmem:[%s33 + $0x10] sm:$0xff]
          %v1609 = vld [vmem:[%s33 + $0x18] sm:$0xff]
          %v1610 = vld [vmem:[%s33 + $0x20] sm:$0xff]
          %v1611 = vld [vmem:[%s33 + $0x28] sm:$0xff]
          %v1612 = vld [vmem:[%s33 + $0x30] sm:$0xff]
          %v1613 = vld [vmem:[%s33 + $0x38] sm:$0xff]
          %v1614 = vld [vmem:[%s33 + $0x40] sm:$0xff]
          %v1615 = vld [vmem:[%s33 + $0x48] sm:$0xff]
          %v1616 = vld [vmem:[%s33 + $0x50] sm:$0xff]
          %v1617 = vld [vmem:[%s33 + $0x58] sm:$0xff]
          %v1618 = vld [vmem:[%s33 + $0x60] sm:$0xff]
          %v1619 = vld [vmem:[%s33 + $0x68] sm:$0xff]
          %v1620 = vld [vmem:[%s33 + $0x70] sm:$0xff]
          %v1621 = vld [vmem:[%s33 + $0x78] sm:$0xff]
          %v1622 = vld [vmem:[%s33 + $0x80] sm:$0xff]
          %v1623 = vld [vmem:[%s33 + $0x88] sm:$0xff]
          %v1624 = vld [vmem:[%s33 + $0x90] sm:$0xff]
          %v1625 = vld [vmem:[%s33 + $0x98] sm:$0xff]
          %v1626 = vld [vmem:[%s33 + $0xa0] sm:$0xff]
          %v1627 = vld [vmem:[%s33 + $0xa8] sm:$0xff]
          %v1628 = vld [vmem:[%s33 + $0xb0] sm:$0xff]
          %v1629 = vld [vmem:[%s33 + $0xb8] sm:$0xff]
          %v1630 = vld [vmem:[%s33 + $0xc0] sm:$0xff]
          %v1631 = vld [vmem:[%s33 + $0xc8] sm:$0xff]
          %v1632 = vld [vmem:[%s33 + $0xd0] sm:$0xff]
          %v1633 = vld [vmem:[%s33 + $0xd8] sm:$0xff]
          %v1634 = vld [vmem:[%s33 + $0xe0] sm:$0xff]
          %v1635 = vld [vmem:[%s33 + $0xe8] sm:$0xff]
          %v1636 = vld [vmem:[%s33 + $0xf0] sm:$0xff]
          %v1637 = vld [vmem:[%s33 + $0xf8] sm:$0xff]
          %v1638 = vld [vmem:[%s33 + $0x100] sm:$0xff]
          %v1639 = vld [vmem:[%s33 + $0x108] sm:$0xff]
          %v1640 = vld [vmem:[%s33 + $0x110] sm:$0xff]
          %v1641 = vld [vmem:[%s33 + $0x118] sm:$0xff]
          %v1642 = vld [vmem:[%s33 + $0x120] sm:$0xff]
          %v1643 = vld [vmem:[%s33 + $0x128] sm:$0xff]
          %v1644 = vld [vmem:[%s33 + $0x130] sm:$0xff]
          %v1645 = vld [vmem:[%s33 + $0x138] sm:$0xff]
          %v1646 = vld [vmem:[%s33 + $0x140] sm:$0xff]
          %v1647 = vld [vmem:[%s33 + $0x148] sm:$0xff]
          %v1648 = vld [vmem:[%s33 + $0x150] sm:$0xff]
          %v1649 = vld [vmem:[%s33 + $0x158] sm:$0xff]
          %v1650 = vld [vmem:[%s33 + $0x160] sm:$0xff]
          %v1651 = vld [vmem:[%s33 + $0x168] sm:$0xff]
          %v1652 = vld [vmem:[%s33 + $0x170] sm:$0xff]
          %v1653 = vld [vmem:[%s33 + $0x178] sm:$0xff]
          %v1654 = vld [vmem:[#allocation18] sm:$0xff]
          %v1655 = vld [vmem:[#allocation18 + $0x8] sm:$0xff]
          %v1656 = vld [vmem:[#allocation18 + $0x10] sm:$0xff]
          %v1657 = vld [vmem:[#allocation18 + $0x18] sm:$0xff]
          %v1658 = vld [vmem:[#allocation18 + $0x20] sm:$0xff]
          %v1659 = vld [vmem:[#allocation18 + $0x28] sm:$0xff]
          %v1660 = vld [vmem:[#allocation18 + $0x30] sm:$0xff]
          %v1661 = vld [vmem:[#allocation18 + $0x38] sm:$0xff]
          %v1662 = vld [vmem:[#allocation18 + $0x40] sm:$0xff]
          %v1663 = vld [vmem:[#allocation18 + $0x48] sm:$0xff]
          %v1664 = vld [vmem:[#allocation18 + $0x50] sm:$0xff]
          %v1665 = vld [vmem:[#allocation18 + $0x58] sm:$0xff]
          %v1666 = vld [vmem:[#allocation18 + $0x60] sm:$0xff]
          %v1667 = vld [vmem:[#allocation18 + $0x68] sm:$0xff]
          %v1668 = vld [vmem:[#allocation18 + $0x70] sm:$0xff]
          %v1669 = vld [vmem:[#allocation18 + $0x78] sm:$0xff]
          %v1670 = vld [vmem:[#allocation18 + $0x80] sm:$0xff]
          %v1671 = vld [vmem:[#allocation18 + $0x88] sm:$0xff]
          %v1672 = vld [vmem:[#allocation18 + $0x90] sm:$0xff]
          %v1673 = vld [vmem:[#allocation18 + $0x98] sm:$0xff]
          %v1674 = vld [vmem:[#allocation18 + $0xa0] sm:$0xff]
          %v1675 = vld [vmem:[#allocation18 + $0xa8] sm:$0xff]
          %v1676 = vld [vmem:[#allocation18 + $0xb0] sm:$0xff]
          %v1677 = vld [vmem:[#allocation18 + $0xb8] sm:$0xff]
          %v1678 = vld [vmem:[#allocation18 + $0xc0] sm:$0xff]
          %v1679 = vld [vmem:[#allocation18 + $0xc8] sm:$0xff]
          %v1680 = vld [vmem:[#allocation18 + $0xd0] sm:$0xff]
          %v1681 = vld [vmem:[#allocation18 + $0xd8] sm:$0xff]
          %v1682 = vld [vmem:[#allocation18 + $0xe0] sm:$0xff]
          %v1683 = vld [vmem:[#allocation18 + $0xe8] sm:$0xff]
          %v1684 = vld [vmem:[#allocation18 + $0xf0] sm:$0xff]
          %v1685 = vld [vmem:[#allocation18 + $0xf8] sm:$0xff]
          %v1686 = vld [vmem:[#allocation18 + $0x100] sm:$0xff]
          %v1687 = vld [vmem:[#allocation18 + $0x108] sm:$0xff]
          %v1688 = vld [vmem:[#allocation18 + $0x110] sm:$0xff]
          %v1689 = vld [vmem:[#allocation18 + $0x118] sm:$0xff]
          %v1690 = vld [vmem:[#allocation18 + $0x120] sm:$0xff]
          %v1691 = vld [vmem:[#allocation18 + $0x128] sm:$0xff]
          %v1692 = vld [vmem:[#allocation18 + $0x130] sm:$0xff]
          %v1693 = vld [vmem:[#allocation18 + $0x138] sm:$0xff]
          %v1694 = vld [vmem:[#allocation18 + $0x140] sm:$0xff]
          %v1695 = vld [vmem:[#allocation18 + $0x148] sm:$0xff]
          %v1696 = vld [vmem:[#allocation18 + $0x150] sm:$0xff]
          %v1697 = vld [vmem:[#allocation18 + $0x158] sm:$0xff]
          %v1698 = vld [vmem:[#allocation18 + $0x160] sm:$0xff]
          %v1699 = vld [vmem:[#allocation18 + $0x168] sm:$0xff]
          %v1700 = vld [vmem:[#allocation18 + $0x170] sm:$0xff]
          %v1701 = vld [vmem:[#allocation18 + $0x178] sm:$0xff]
          %v1702 = vld [vmem:[#allocation20] sm:$0x7]
          %v1703 = vld [vmem:[#allocation21] sm:$0x7]
          %v1704 = vld [vmem:[%s1] sm:$0xff]
          %v1705 = vld [vmem:[%s1 + $0x8] sm:$0xff]
          %v1706 = vld [vmem:[%s1 + $0x10] sm:$0xff]
          %v1707 = vld [vmem:[%s1 + $0x18] sm:$0xff]
          %v1708 = vld [vmem:[%s1 + $0x20] sm:$0xff]
          %v1709 = vld [vmem:[%s1 + $0x28] sm:$0xff]
          %v1710 = vld [vmem:[%s1 + $0x30] sm:$0xff]
          %v1711 = vld [vmem:[%s1 + $0x38] sm:$0xff]
          %v1712 = vld [vmem:[%s1 + $0x40] sm:$0xff]
          %v1713 = vld [vmem:[%s1 + $0x48] sm:$0xff]
          %v1714 = vld [vmem:[%s1 + $0x50] sm:$0xff]
          %v1715 = vld [vmem:[%s1 + $0x58] sm:$0xff]
          %v1716 = vld [vmem:[%s1 + $0x60] sm:$0xff]
          %v1717 = vld [vmem:[%s1 + $0x68] sm:$0xff]
          %v1718 = vld [vmem:[%s1 + $0x70] sm:$0xff]
          %v1719 = vld [vmem:[%s1 + $0x78] sm:$0xff]
          %v1720 = vld [vmem:[%s3] sm:$0xff]
          %v1721 = vld [vmem:[%s3 + $0x8] sm:$0xff]
          %v1722 = vld [vmem:[%s3 + $0x10] sm:$0xff]
          %v1723 = vld [vmem:[%s3 + $0x18] sm:$0xff]
          %v1724 = vld [vmem:[%s3 + $0x20] sm:$0xff]
          %v1725 = vld [vmem:[%s3 + $0x28] sm:$0xff]
          %v1726 = vld [vmem:[%s3 + $0x30] sm:$0xff]
          %v1727 = vld [vmem:[%s3 + $0x38] sm:$0xff]
          %v1728 = vld [vmem:[%s3 + $0x40] sm:$0xff]
          %v1729 = vld [vmem:[%s3 + $0x48] sm:$0xff]
          %v1730 = vld [vmem:[%s3 + $0x50] sm:$0xff]
          %v1731 = vld [vmem:[%s3 + $0x58] sm:$0xff]
          %v1732 = vld [vmem:[%s3 + $0x60] sm:$0xff]
          %v1733 = vld [vmem:[%s3 + $0x68] sm:$0xff]
          %v1734 = vld [vmem:[%s3 + $0x70] sm:$0xff]
          %v1735 = vld [vmem:[%s3 + $0x78] sm:$0xff]
          %v1736 = vld [vmem:[%s3 + $0x80] sm:$0xff]
          %v1737 = vld [vmem:[%s3 + $0x88] sm:$0xff]
          %v1738 = vld [vmem:[%s3 + $0x90] sm:$0xff]
          %v1739 = vld [vmem:[%s3 + $0x98] sm:$0xff]
          %v1740 = vld [vmem:[%s3 + $0xa0] sm:$0xff]
          %v1741 = vld [vmem:[%s3 + $0xa8] sm:$0xff]
          %v1742 = vld [vmem:[%s3 + $0xb0] sm:$0xff]
          %v1743 = vld [vmem:[%s3 + $0xb8] sm:$0xff]
          %v1744 = vld [vmem:[%s3 + $0xc0] sm:$0xff]
          %v1745 = vld [vmem:[%s3 + $0xc8] sm:$0xff]
          %v1746 = vld [vmem:[%s3 + $0xd0] sm:$0xff]
          %v1747 = vld [vmem:[%s3 + $0xd8] sm:$0xff]
          %v1748 = vld [vmem:[%s3 + $0xe0] sm:$0xff]
          %v1749 = vld [vmem:[%s3 + $0xe8] sm:$0xff]
          %v1750 = vld [vmem:[%s3 + $0xf0] sm:$0xff]
          %v1751 = vld [vmem:[%s3 + $0xf8] sm:$0xff]
          %v1753 = vlaneseq
          %v1754 = vshrl.u32 %v1753, 7
          %v1755 = vsub.s32 0, %v1754
          %v1756 = vrot.slane %v1548, %v1755
          %vm1758 = vcmask 261120
          %v1760 = vsel %vm1758, %v1704, 0
          %v1763 = vsel %vm1758, %v1705, 0
          %v1766 = vsel %vm1758, %v1706, 0
          %v1769 = vsel %vm1758, %v1707, 0
          %v1772 = vsel %vm1758, %v1708, 0
          %v1775 = vsel %vm1758, %v1709, 0
          %v1778 = vsel %vm1758, %v1710, 0
          %v1781 = vsel %vm1758, %v1711, 0
          %v1784 = vsel %vm1758, %v1712, 0
          %v1787 = vsel %vm1758, %v1713, 0
          %v1790 = vsel %vm1758, %v1714, 0
          %v1793 = vsel %vm1758, %v1715, 0
          %v1796 = vsel %vm1758, %v1716, 0
          %v1799 = vsel %vm1758, %v1717, 0
          %v1802 = vsel %vm1758, %v1718, 0
          %v1805 = vsel %vm1758, %v1719, 0
          %1807 = vmatprep.subr.mxu0 0.0
          %1808 = vmatpush1.msra.mxu0 %v1544
          %1809 = vmatprep.subr.mxu0 0.0
          %1810 = vmatpush1.msra.mxu0 %v1545
          %1811 = vmatprep.subr.mxu0 0.0
          %1812 = vmatpush1.msra.mxu0 %v1546
          %1813 = vmatprep.subr.mxu0 0.0
          %1814 = vmatpush1.msra.mxu0 %v1547
          %1815 = vmatprep.subr.mxu0 0.0
          %1816 = vmatpush1.msra.mxu0 0.0
          %1817 = vmatprep.subr.mxu0 0.0
          %1818 = vmatpush1.msra.mxu0 0.0
          %1819 = vmatprep.subr.mxu0 0.0
          %1820 = vmatpush1.msra.mxu0 0.0
          %1821 = vmatprep.subr.mxu0 0.0
          %1822 = vmatpush1.msra.mxu0 0.0
          %1823 = vmatprep.subr.mxu0 0.0
          %1824 = vmatpush1.msra.mxu0 0.0
          %1825 = vmatprep.subr.mxu0 0.0
          %1826 = vmatpush1.msra.mxu0 0.0
          %1827 = vmatprep.subr.mxu0 0.0
          %1828 = vmatpush1.msra.mxu0 0.0
          %1829 = vmatprep.subr.mxu0 0.0
          %1830 = vmatpush1.msra.mxu0 0.0
          %1831 = vmatprep.subr.mxu0 0.0
          %1832 = vmatpush1.msra.mxu0 0.0
          %1833 = vmatprep.subr.mxu0 0.0
          %1834 = vmatpush1.msra.mxu0 0.0
          %1835 = vmatprep.subr.mxu0 0.0
          %1836 = vmatpush1.msra.mxu0 0.0
          %1837 = vmatprep.subr.mxu0 0.0
          %1838 = vmatpush1.msra.mxu0 0.0
          %1839 = vmatprep.subr.mxu0 0.0
          %1840 = vmatpush1.msra.mxu0 0.0
          %1841 = vmatprep.subr.mxu0 0.0
          %1842 = vmatpush1.msra.mxu0 0.0
          %1843 = vmatprep.subr.mxu0 0.0
          %1844 = vmatpush1.msra.mxu0 0.0
          %1845 = vmatprep.subr.mxu0 0.0
          %1846 = vmatpush1.msra.mxu0 0.0
          %1847 = vmatprep.subr.mxu0 0.0
          %1848 = vmatpush1.msra.mxu0 0.0
          %1849 = vmatprep.subr.mxu0 0.0
          %1850 = vmatpush1.msra.mxu0 0.0
          %1851 = vmatprep.subr.mxu0 0.0
          %1852 = vmatpush1.msra.mxu0 0.0
          %1853 = vmatprep.subr.mxu0 0.0
          %1854 = vmatpush1.msra.mxu0 0.0
          %1855 = vmatprep.subr.mxu0 0.0
          %1856 = vmatpush1.msra.mxu0 0.0
          %1857 = vmatprep.subr.mxu0 0.0
          %1858 = vmatpush1.msra.mxu0 0.0
          %1859 = vmatprep.subr.mxu0 0.0
          %1860 = vmatpush1.msra.mxu0 0.0
          %1861 = vmatprep.subr.mxu0 0.0
          %1862 = vmatpush1.msra.mxu0 0.0
          %1863 = vmatprep.subr.mxu0 0.0
          %1864 = vmatpush1.msra.mxu0 0.0
          %1865 = vmatprep.subr.mxu0 0.0
          %1866 = vmatpush1.msra.mxu0 0.0
          %1867 = vmatprep.subr.mxu0 0.0
          %1868 = vmatpush1.msra.mxu0 0.0
          %1869 = vmatprep.subr.mxu0 0.0
          %1870 = vmatpush1.msra.mxu0 0.0
          %1871 = vmatprep.mubr.f32.mxu0 0.0
          %1872 = vmatmul.mubr.f32.gmra.mrb[0].mxu0 %v1760
          %v1873 = vpop.f32.mrb[0].mxu0
          %v1874 = vadd.f32 %v1756, %v1873
          %v1875 = vpop.f32.mrb[0].mxu0
          %1876 = vmatprep.mubr.f32.mxu0 0.0
          %1877 = vmatmul.mubr.f32.gmra.mrb[0].mxu0 %v1763
          %v1878 = vpop.f32.mrb[0].mxu0
          %v1879 = vadd.f32 %v1756, %v1878
          %v1880 = vpop.f32.mrb[0].mxu0
          %1881 = vmatprep.mubr.f32.mxu0 0.0
          %1882 = vmatmul.mubr.f32.gmra.mrb[0].mxu0 %v1766
          %v1883 = vpop.f32.mrb[0].mxu0
          %v1884 = vadd.f32 %v1756, %v1883
          %v1885 = vpop.f32.mrb[0].mxu0
          %1886 = vmatprep.mubr.f32.mxu0 0.0
          %1887 = vmatmul.mubr.f32.gmra.mrb[0].mxu0 %v1769
          %v1888 = vpop.f32.mrb[0].mxu0
          %v1889 = vadd.f32 %v1756, %v1888
          %v1890 = vpop.f32.mrb[0].mxu0
          %1891 = vmatprep.mubr.f32.mxu0 0.0
          %1892 = vmatmul.mubr.f32.gmra.mrb[0].mxu0 %v1772
          %v1893 = vpop.f32.mrb[0].mxu0
          %v1894 = vadd.f32 %v1756, %v1893
          %v1895 = vpop.f32.mrb[0].mxu0
          %1896 = vmatprep.mubr.f32.mxu0 0.0
          %1897 = vmatmul.mubr.f32.gmra.mrb[0].mxu0 %v1775
          %v1898 = vpop.f32.mrb[0].mxu0
          %v1899 = vadd.f32 %v1756, %v1898
          %v1900 = vpop.f32.mrb[0].mxu0
          %1901 = vmatprep.mubr.f32.mxu0 0.0
          %1902 = vmatmul.mubr.f32.gmra.mrb[0].mxu0 %v1778
          %v1903 = vpop.f32.mrb[0].mxu0
          %v1904 = vadd.f32 %v1756, %v1903
          %v1905 = vpop.f32.mrb[0].mxu0
          %1906 = vmatprep.mubr.f32.mxu0 0.0
          %1907 = vmatmul.mubr.f32.gmra.mrb[0].mxu0 %v1781
          %v1908 = vpop.f32.mrb[0].mxu0
          %v1909 = vadd.f32 %v1756, %v1908
          %v1910 = vpop.f32.mrb[0].mxu0
          %1911 = vmatprep.mubr.f32.mxu0 0.0
          %1912 = vmatmul.mubr.f32.gmra.mrb[0].mxu0 %v1784
          %v1913 = vpop.f32.mrb[0].mxu0
          %v1914 = vadd.f32 %v1756, %v1913
          %v1915 = vpop.f32.mrb[0].mxu0
          %1916 = vmatprep.mubr.f32.mxu0 0.0
          %1917 = vmatmul.mubr.f32.gmra.mrb[0].mxu0 %v1787
          %v1918 = vpop.f32.mrb[0].mxu0
          %v1919 = vadd.f32 %v1756, %v1918
          %v1920 = vpop.f32.mrb[0].mxu0
          %1921 = vmatprep.mubr.f32.mxu0 0.0
          %1922 = vmatmul.mubr.f32.gmra.mrb[0].mxu0 %v1790
          %v1923 = vpop.f32.mrb[0].mxu0
          %v1924 = vadd.f32 %v1756, %v1923
          %v1925 = vpop.f32.mrb[0].mxu0
          %1926 = vmatprep.mubr.f32.mxu0 0.0
          %1927 = vmatmul.mubr.f32.gmra.mrb[0].mxu0 %v1793
          %v1928 = vpop.f32.mrb[0].mxu0
          %v1929 = vadd.f32 %v1756, %v1928
          %v1930 = vpop.f32.mrb[0].mxu0
          %1931 = vmatprep.mubr.f32.mxu0 0.0
          %1932 = vmatmul.mubr.f32.gmra.mrb[0].mxu0 %v1796
          %v1933 = vpop.f32.mrb[0].mxu0
          %v1934 = vadd.f32 %v1756, %v1933
          %v1935 = vpop.f32.mrb[0].mxu0
          %1936 = vmatprep.mubr.f32.mxu0 0.0
          %1937 = vmatmul.mubr.f32.gmra.mrb[0].mxu0 %v1799
          %v1938 = vpop.f32.mrb[0].mxu0
          %v1939 = vadd.f32 %v1756, %v1938
          %v1940 = vpop.f32.mrb[0].mxu0
          %1941 = vmatprep.mubr.f32.mxu0 0.0
          %1942 = vmatmul.mubr.f32.gmra.mrb[0].mxu0 %v1802
          %v1943 = vpop.f32.mrb[0].mxu0
          %v1944 = vadd.f32 %v1756, %v1943
          %v1945 = vpop.f32.mrb[0].mxu0
          %1946 = vmatprep.mubr.f32.mxu0 0.0
          %1947 = vmatmul.mubr.f32.gmra.mrb[0].mxu0 %v1805
          %v1948 = vpop.f32.mrb[0].mxu0
          %v1949 = vadd.f32 %v1756, %v1948
          %v1950 = vpop.f32.mrb[0].mxu0
          %1951 = vdwg.mxu0
          %vm1952 = vcmp.gt.f32.partialorder %v1874, 0.0
          %vm1953 = vcmp.gt.f32.partialorder %v1879, 0.0
          %vm1954 = vcmp.gt.f32.partialorder %v1884, 0.0
          %vm1955 = vcmp.gt.f32.partialorder %v1889, 0.0
          %vm1956 = vcmp.gt.f32.partialorder %v1894, 0.0
          %vm1957 = vcmp.gt.f32.partialorder %v1899, 0.0
          %vm1958 = vcmp.gt.f32.partialorder %v1904, 0.0
          %vm1959 = vcmp.gt.f32.partialorder %v1909, 0.0
          %vm1960 = vcmp.gt.f32.partialorder %v1914, 0.0
          %vm1961 = vcmp.gt.f32.partialorder %v1919, 0.0
          %vm1962 = vcmp.gt.f32.partialorder %v1924, 0.0
          %vm1963 = vcmp.gt.f32.partialorder %v1929, 0.0
          %vm1964 = vcmp.gt.f32.partialorder %v1934, 0.0
          %vm1965 = vcmp.gt.f32.partialorder %v1939, 0.0
          %vm1966 = vcmp.gt.f32.partialorder %v1944, 0.0
          %vm1967 = vcmp.gt.f32.partialorder %v1949, 0.0
          %v1968 = vmul.f32 %v1874, 0.01
          %v1969 = vmul.f32 %v1879, 0.01
          %v1970 = vmul.f32 %v1884, 0.01
          %v1971 = vmul.f32 %v1889, 0.01
          %v1972 = vmul.f32 %v1894, 0.01
          %v1973 = vmul.f32 %v1899, 0.01
          %v1974 = vmul.f32 %v1904, 0.01
          %v1975 = vmul.f32 %v1909, 0.01
          %v1976 = vmul.f32 %v1914, 0.01
          %v1977 = vmul.f32 %v1919, 0.01
          %v1978 = vmul.f32 %v1924, 0.01
          %v1979 = vmul.f32 %v1929, 0.01
          %v1980 = vmul.f32 %v1934, 0.01
          %v1981 = vmul.f32 %v1939, 0.01
          %v1982 = vmul.f32 %v1944, 0.01
          %v1983 = vmul.f32 %v1949, 0.01
          %v1984 = vsel %vm1952, %v1874, %v1968
          %v1985 = vsel %vm1953, %v1879, %v1969
          %v1986 = vsel %vm1954, %v1884, %v1970
          %v1987 = vsel %vm1955, %v1889, %v1971
          %v1988 = vsel %vm1956, %v1894, %v1972
          %v1989 = vsel %vm1957, %v1899, %v1973
          %v1990 = vsel %vm1958, %v1904, %v1974
          %v1991 = vsel %vm1959, %v1909, %v1975
          %v1992 = vsel %vm1960, %v1914, %v1976
          %v1993 = vsel %vm1961, %v1919, %v1977
          %v1994 = vsel %vm1962, %v1924, %v1978
          %v1995 = vsel %vm1963, %v1929, %v1979
          %v1996 = vsel %vm1964, %v1934, %v1980
          %v1997 = vsel %vm1965, %v1939, %v1981
          %v1998 = vsel %vm1966, %v1944, %v1982
          %v1999 = vsel %vm1967, %v1949, %v1983
          %v2000 = vpack.c.bf16 %v1705, %v1704
          %v2001 = vpack.c.bf16 %v1707, %v1706
          %v2002 = vpack.c.bf16 %v1709, %v1708
          %v2003 = vpack.c.bf16 %v1711, %v1710
          %v2004 = vpack.c.bf16 %v1713, %v1712
          %v2005 = vpack.c.bf16 %v1715, %v1714
          %v2006 = vpack.c.bf16 %v1717, %v1716
          %v2007 = vpack.c.bf16 %v1719, %v1718
          %v2040 = vunpack.c.l.b16 %v1412
          %v2041 = vunpack.c.l.b16 %v1413
          %v2042 = vunpack.c.l.b16 %v1414
          %v2043 = vunpack.c.l.b16 %v1415
          %v2044 = vunpack.c.l.b16 %v1416
          %v2045 = vunpack.c.l.b16 %v1417
          %v2046 = vunpack.c.l.b16 %v1418
          %v2047 = vunpack.c.l.b16 %v1419
          %v2048 = vunpack.c.l.b16 %v1420
          %v2049 = vunpack.c.l.b16 %v1421
          %v2050 = vunpack.c.l.b16 %v1422
          %v2051 = vunpack.c.l.b16 %v1423
          %v2052 = vunpack.c.l.b16 %v1424
          %v2053 = vunpack.c.l.b16 %v1425
          %v2054 = vunpack.c.l.b16 %v1426
          %v2055 = vunpack.c.l.b16 %v1427
          %v2056 = vunpack.c.l.b16 %v1428
          %v2057 = vunpack.c.l.b16 %v1429
          %v2058 = vunpack.c.l.b16 %v1430
          %v2059 = vunpack.c.l.b16 %v1431
          %v2060 = vunpack.c.l.b16 %v1432
          %v2061 = vunpack.c.l.b16 %v1433
          %v2062 = vunpack.c.l.b16 %v1434
          %v2063 = vunpack.c.l.b16 %v1435
          %v2064 = vunpack.c.l.b16 %v1436
          %v2065 = vunpack.c.l.b16 %v1437
          %v2066 = vunpack.c.l.b16 %v1438
          %v2067 = vunpack.c.l.b16 %v1439
          %v2068 = vunpack.c.l.b16 %v1440
          %v2069 = vunpack.c.l.b16 %v1441
          %v2070 = vunpack.c.l.b16 %v1442
          %v2071 = vunpack.c.l.b16 %v1443
          %v2072 = vpack.c.b16 %v2041, %v2040
          %v2073 = vpack.c.b16 %v2043, %v2042
          %v2074 = vpack.c.b16 %v2045, %v2044
          %v2075 = vpack.c.b16 %v2047, %v2046
          %v2076 = vpack.c.b16 %v2049, %v2048
          %v2077 = vpack.c.b16 %v2051, %v2050
          %v2078 = vpack.c.b16 %v2053, %v2052
          %v2079 = vpack.c.b16 %v2055, %v2054
          %v2080 = vpack.c.b16 %v2057, %v2056
          %v2081 = vpack.c.b16 %v2059, %v2058
          %v2082 = vpack.c.b16 %v2061, %v2060
          %v2083 = vpack.c.b16 %v2063, %v2062
          %v2084 = vpack.c.b16 %v2065, %v2064
          %v2085 = vpack.c.b16 %v2067, %v2066
          %v2086 = vpack.c.b16 %v2069, %v2068
          %v2087 = vpack.c.b16 %v2071, %v2070
          %2104 = vmatprep.subr.bf16.mxu0 0
          %2105 = vmatpush1.bf16.msra.mxu0 %v2000
          %2106 = vmatprep.subr.bf16.mxu0 0
          %2107 = vmatpush1.bf16.msra.mxu0 %v2001
          %2108 = vmatprep.subr.bf16.mxu0 0
          %2109 = vmatpush1.bf16.msra.mxu0 %v2002
          %2110 = vmatprep.subr.bf16.mxu0 0
          %2111 = vmatpush1.bf16.msra.mxu0 %v2003
          %2112 = vmatprep.subr.bf16.mxu0 0
          %2113 = vmatpush1.bf16.msra.mxu0 %v2004
          %2114 = vmatprep.subr.bf16.mxu0 0
          %2115 = vmatpush1.bf16.msra.mxu0 %v2005
          %2116 = vmatprep.subr.bf16.mxu0 0
          %2117 = vmatpush1.bf16.msra.mxu0 %v2006
          %2118 = vmatprep.subr.bf16.mxu0 0
          %2119 = vmatpush1.bf16.msra.mxu0 %v2007
          %2120 = vmatprep.subr.bf16.mxu0 0
          %2121 = vmatpush1.bf16.msra.mxu0 0
          %2122 = vmatprep.subr.bf16.mxu0 0
          %2123 = vmatpush1.bf16.msra.mxu0 0
          %2124 = vmatprep.subr.bf16.mxu0 0
          %2125 = vmatpush1.bf16.msra.mxu0 0
          %2126 = vmatprep.subr.bf16.mxu0 0
          %2127 = vmatpush1.bf16.msra.mxu0 0
          %2128 = vmatprep.subr.bf16.mxu0 0
          %2129 = vmatpush1.bf16.msra.mxu0 0
          %2130 = vmatprep.subr.bf16.mxu0 0
          %2131 = vmatpush1.bf16.msra.mxu0 0
          %2132 = vmatprep.subr.bf16.mxu0 0
          %2133 = vmatpush1.bf16.msra.mxu0 0
          %2134 = vmatprep.subr.bf16.mxu0 0
          %2135 = vmatpush1.bf16.msra.mxu0 0
          %2136 = vmatprep.mubr.bf16.mxu0 0
          %2137 = vmatmul.mubr.bf16.gmra.mrb[0].mxu0 %v2072
          %v2138 = vpop.f32.mrb[0].mxu0
          %v2139 = vadd.f32 0.0, %v2138
          %v2140 = vpop.f32.mrb[0].mxu0
          %v2141 = vpop.f32.mrb[0].mxu0
          %v2142 = vadd.f32 0.0, %v2141
          %v2143 = vpop.f32.mrb[0].mxu0
          %2144 = vmatprep.mubr.bf16.mxu0 0
          %2145 = vmatmul.mubr.bf16.gmra.mrb[0].mxu0 %v2073
          %v2146 = vpop.f32.mrb[0].mxu0
          %v2147 = vadd.f32 0.0, %v2146
          %v2148 = vpop.f32.mrb[0].mxu0
          %v2149 = vpop.f32.mrb[0].mxu0
          %v2150 = vadd.f32 0.0, %v2149
          %v2151 = vpop.f32.mrb[0].mxu0
          %2152 = vmatprep.mubr.bf16.mxu0 0
          %2153 = vmatmul.mubr.bf16.gmra.mrb[0].mxu0 %v2074
          %v2154 = vpop.f32.mrb[0].mxu0
          %v2155 = vadd.f32 0.0, %v2154
          %v2156 = vpop.f32.mrb[0].mxu0
          %v2157 = vpop.f32.mrb[0].mxu0
          %v2158 = vadd.f32 0.0, %v2157
          %v2159 = vpop.f32.mrb[0].mxu0
          %2160 = vmatprep.mubr.bf16.mxu0 0
          %2161 = vmatmul.mubr.bf16.gmra.mrb[0].mxu0 %v2075
          %v2162 = vpop.f32.mrb[0].mxu0
          %v2163 = vadd.f32 0.0, %v2162
          %v2164 = vpop.f32.mrb[0].mxu0
          %v2165 = vpop.f32.mrb[0].mxu0
          %v2166 = vadd.f32 0.0, %v2165
          %v2167 = vpop.f32.mrb[0].mxu0
          %2168 = vmatprep.mubr.bf16.mxu0 0
          %2169 = vmatmul.mubr.bf16.gmra.mrb[0].mxu0 %v2076
          %v2170 = vpop.f32.mrb[0].mxu0
          %v2171 = vadd.f32 0.0, %v2170
          %v2172 = vpop.f32.mrb[0].mxu0
          %v2173 = vpop.f32.mrb[0].mxu0
          %v2174 = vadd.f32 0.0, %v2173
          %v2175 = vpop.f32.mrb[0].mxu0
          %2176 = vmatprep.mubr.bf16.mxu0 0
          %2177 = vmatmul.mubr.bf16.gmra.mrb[0].mxu0 %v2077
          %v2178 = vpop.f32.mrb[0].mxu0
          %v2179 = vadd.f32 0.0, %v2178
          %v2180 = vpop.f32.mrb[0].mxu0
          %v2181 = vpop.f32.mrb[0].mxu0
          %v2182 = vadd.f32 0.0, %v2181
          %v2183 = vpop.f32.mrb[0].mxu0
          %2184 = vmatprep.mubr.bf16.mxu0 0
          %2185 = vmatmul.mubr.bf16.gmra.mrb[0].mxu0 %v2078
          %v2186 = vpop.f32.mrb[0].mxu0
          %v2187 = vadd.f32 0.0, %v2186
          %v2188 = vpop.f32.mrb[0].mxu0
          %v2189 = vpop.f32.mrb[0].mxu0
          %v2190 = vadd.f32 0.0, %v2189
          %v2191 = vpop.f32.mrb[0].mxu0
          %2192 = vmatprep.mubr.bf16.mxu0 0
          %2193 = vmatmul.mubr.bf16.gmra.mrb[0].mxu0 %v2079
          %v2194 = vpop.f32.mrb[0].mxu0
          %v2195 = vadd.f32 0.0, %v2194
          %v2196 = vpop.f32.mrb[0].mxu0
          %v2197 = vpop.f32.mrb[0].mxu0
          %v2198 = vadd.f32 0.0, %v2197
          %v2199 = vpop.f32.mrb[0].mxu0
          %2200 = vmatprep.mubr.bf16.mxu0 0
          %2201 = vmatmul.mubr.bf16.gmra.mrb[0].mxu0 %v2080
          %v2202 = vpop.f32.mrb[0].mxu0
          %v2203 = vadd.f32 0.0, %v2202
          %v2204 = vpop.f32.mrb[0].mxu0
          %v2205 = vpop.f32.mrb[0].mxu0
          %v2206 = vadd.f32 0.0, %v2205
          %v2207 = vpop.f32.mrb[0].mxu0
          %2208 = vmatprep.mubr.bf16.mxu0 0
          %2209 = vmatmul.mubr.bf16.gmra.mrb[0].mxu0 %v2081
          %v2210 = vpop.f32.mrb[0].mxu0
          %v2211 = vadd.f32 0.0, %v2210
          %v2212 = vpop.f32.mrb[0].mxu0
          %v2213 = vpop.f32.mrb[0].mxu0
          %v2214 = vadd.f32 0.0, %v2213
          %v2215 = vpop.f32.mrb[0].mxu0
          %2216 = vmatprep.mubr.bf16.mxu0 0
          %2217 = vmatmul.mubr.bf16.gmra.mrb[0].mxu0 %v2082
          %v2218 = vpop.f32.mrb[0].mxu0
          %v2219 = vadd.f32 0.0, %v2218
          %v2220 = vpop.f32.mrb[0].mxu0
          %v2221 = vpop.f32.mrb[0].mxu0
          %v2222 = vadd.f32 0.0, %v2221
          %v2223 = vpop.f32.mrb[0].mxu0
          %2224 = vmatprep.mubr.bf16.mxu0 0
          %2225 = vmatmul.mubr.bf16.gmra.mrb[0].mxu0 %v2083
          %v2226 = vpop.f32.mrb[0].mxu0
          %v2227 = vadd.f32 0.0, %v2226
          %v2228 = vpop.f32.mrb[0].mxu0
          %v2229 = vpop.f32.mrb[0].mxu0
          %v2230 = vadd.f32 0.0, %v2229
          %v2231 = vpop.f32.mrb[0].mxu0
          %2232 = vmatprep.mubr.bf16.mxu0 0
          %2233 = vmatmul.mubr.bf16.gmra.mrb[0].mxu0 %v2084
          %v2234 = vpop.f32.mrb[0].mxu0
          %v2235 = vadd.f32 0.0, %v2234
          %v2236 = vpop.f32.mrb[0].mxu0
          %v2237 = vpop.f32.mrb[0].mxu0
          %v2238 = vadd.f32 0.0, %v2237
          %v2239 = vpop.f32.mrb[0].mxu0
          %2240 = vmatprep.mubr.bf16.mxu0 0
          %2241 = vmatmul.mubr.bf16.gmra.mrb[0].mxu0 %v2085
          %v2242 = vpop.f32.mrb[0].mxu0
          %v2243 = vadd.f32 0.0, %v2242
          %v2244 = vpop.f32.mrb[0].mxu0
          %v2245 = vpop.f32.mrb[0].mxu0
          %v2246 = vadd.f32 0.0, %v2245
          %v2247 = vpop.f32.mrb[0].mxu0
          %2248 = vmatprep.mubr.bf16.mxu0 0
          %2249 = vmatmul.mubr.bf16.gmra.mrb[0].mxu0 %v2086
          %v2250 = vpop.f32.mrb[0].mxu0
          %v2251 = vadd.f32 0.0, %v2250
          %v2252 = vpop.f32.mrb[0].mxu0
          %v2253 = vpop.f32.mrb[0].mxu0
          %v2254 = vadd.f32 0.0, %v2253
          %v2255 = vpop.f32.mrb[0].mxu0
          %2256 = vmatprep.mubr.bf16.mxu0 0
          %2257 = vmatmul.mubr.bf16.gmra.mrb[0].mxu0 %v2087
          %v2258 = vpop.f32.mrb[0].mxu0
          %v2259 = vadd.f32 0.0, %v2258
          %v2260 = vpop.f32.mrb[0].mxu0
          %v2261 = vpop.f32.mrb[0].mxu0
          %v2262 = vadd.f32 0.0, %v2261
          %v2263 = vpop.f32.mrb[0].mxu0
          %2264 = vdwg.mxu0
          %vm2265 = vcmask 130048
          %v2267 = vsel %vm2265, %v1720, 0
          %v2270 = vsel %vm2265, %v1721, 0
          %v2273 = vsel %vm2265, %v1722, 0
          %v2276 = vsel %vm2265, %v1723, 0
          %v2279 = vsel %vm2265, %v1724, 0
          %v2282 = vsel %vm2265, %v1725, 0
          %v2285 = vsel %vm2265, %v1726, 0
          %v2288 = vsel %vm2265, %v1727, 0
          %v2291 = vsel %vm2265, %v1728, 0
          %v2294 = vsel %vm2265, %v1729, 0
          %v2297 = vsel %vm2265, %v1730, 0
          %v2300 = vsel %vm2265, %v1731, 0
          %v2303 = vsel %vm2265, %v1732, 0
          %v2306 = vsel %vm2265, %v1733, 0
          %v2309 = vsel %vm2265, %v1734, 0
          %v2312 = vsel %vm2265, %v1735, 0
          %v2315 = vsel %vm2265, %v1736, 0
          %v2318 = vsel %vm2265, %v1737, 0
          %v2321 = vsel %vm2265, %v1738, 0
          %v2324 = vsel %vm2265, %v1739, 0
          %v2327 = vsel %vm2265, %v1740, 0
          %v2330 = vsel %vm2265, %v1741, 0
          %v2333 = vsel %vm2265, %v1742, 0
          %v2336 = vsel %vm2265, %v1743, 0
          %v2339 = vsel %vm2265, %v1744, 0
          %v2342 = vsel %vm2265, %v1745, 0
          %v2345 = vsel %vm2265, %v1746, 0
          %v2348 = vsel %vm2265, %v1747, 0
          %v2351 = vsel %vm2265, %v1748, 0
          %v2354 = vsel %vm2265, %v1749, 0
          %v2357 = vsel %vm2265, %v1750, 0
          %v2360 = vsel %vm2265, %v1751, 0
          %2362 = vmatprep.subr.mxu0 0.0
          %2363 = vmatpush1.msra.mxu0 %v1553
          %2364 = vmatprep.subr.mxu0 0.0
          %2365 = vmatpush1.msra.mxu0 %v1554
          %2366 = vmatprep.subr.mxu0 0.0
          %2367 = vmatpush1.msra.mxu0 0.0
          %2368 = vmatprep.subr.mxu0 0.0
          %2369 = vmatpush1.msra.mxu0 0.0
          %2370 = vmatprep.subr.mxu0 0.0
          %2371 = vmatpush1.msra.mxu0 0.0
          %2372 = vmatprep.subr.mxu0 0.0
          %2373 = vmatpush1.msra.mxu0 0.0
          %2374 = vmatprep.subr.mxu0 0.0
          %2375 = vmatpush1.msra.mxu0 0.0
          %2376 = vmatprep.subr.mxu0 0.0
          %2377 = vmatpush1.msra.mxu0 0.0
          %2378 = vmatprep.subr.mxu0 0.0
          %2379 = vmatpush1.msra.mxu0 0.0
          %2380 = vmatprep.subr.mxu0 0.0
          %2381 = vmatpush1.msra.mxu0 0.0
          %2382 = vmatprep.subr.mxu0 0.0
          %2383 = vmatpush1.msra.mxu0 0.0
          %2384 = vmatprep.subr.mxu0 0.0
          %2385 = vmatpush1.msra.mxu0 0.0
          %2386 = vmatprep.subr.mxu0 0.0
          %2387 = vmatpush1.msra.mxu0 0.0
          %2388 = vmatprep.subr.mxu0 0.0
          %2389 = vmatpush1.msra.mxu0 0.0
          %2390 = vmatprep.subr.mxu0 0.0
          %2391 = vmatpush1.msra.mxu0 0.0
          %2392 = vmatprep.subr.mxu0 0.0
          %2393 = vmatpush1.msra.mxu0 0.0
          %2394 = vmatprep.subr.mxu0 0.0
          %2395 = vmatpush1.msra.mxu0 0.0
          %2396 = vmatprep.subr.mxu0 0.0
          %2397 = vmatpush1.msra.mxu0 0.0
          %2398 = vmatprep.subr.mxu0 0.0
          %2399 = vmatpush1.msra.mxu0 0.0
          %2400 = vmatprep.subr.mxu0 0.0
          %2401 = vmatpush1.msra.mxu0 0.0
          %2402 = vmatprep.subr.mxu0 0.0
          %2403 = vmatpush1.msra.mxu0 0.0
          %2404 = vmatprep.subr.mxu0 0.0
          %2405 = vmatpush1.msra.mxu0 0.0
          %2406 = vmatprep.subr.mxu0 0.0
          %2407 = vmatpush1.msra.mxu0 0.0
          %2408 = vmatprep.subr.mxu0 0.0
          %2409 = vmatpush1.msra.mxu0 0.0
          %2410 = vmatprep.subr.mxu0 0.0
          %2411 = vmatpush1.msra.mxu0 0.0
          %2412 = vmatprep.subr.mxu0 0.0
          %2413 = vmatpush1.msra.mxu0 0.0
          %2414 = vmatprep.subr.mxu0 0.0
          %2415 = vmatpush1.msra.mxu0 0.0
          %2416 = vmatprep.subr.mxu0 0.0
          %2417 = vmatpush1.msra.mxu0 0.0
          %2418 = vmatprep.subr.mxu0 0.0
          %2419 = vmatpush1.msra.mxu0 0.0
          %2420 = vmatprep.subr.mxu0 0.0
          %2421 = vmatpush1.msra.mxu0 0.0
          %2422 = vmatprep.subr.mxu0 0.0
          %2423 = vmatpush1.msra.mxu0 0.0
          %2424 = vmatprep.subr.mxu0 0.0
          %2425 = vmatpush1.msra.mxu0 0.0
          %2426 = vmatprep.mubr.f32.mxu0 0.0
          %2427 = vmatmul.mubr.f32.gmra.mrb[0].mxu0 %v2267
          %v2428 = vpop.f32.mrb[0].mxu0
          %v2429 = vadd.f32 0.0, %v2428
          %v2430 = vpop.f32.mrb[0].mxu0
          %2431 = vmatprep.mubr.f32.mxu0 0.0
          %2432 = vmatmul.mubr.f32.gmra.mrb[0].mxu0 %v2270
          %v2433 = vpop.f32.mrb[0].mxu0
          %v2434 = vadd.f32 0.0, %v2433
          %v2435 = vpop.f32.mrb[0].mxu0
          %2436 = vmatprep.mubr.f32.mxu0 0.0
          %2437 = vmatmul.mubr.f32.gmra.mrb[0].mxu0 %v2273
          %v2438 = vpop.f32.mrb[0].mxu0
          %v2439 = vadd.f32 0.0, %v2438
          %v2440 = vpop.f32.mrb[0].mxu0
          %2441 = vmatprep.mubr.f32.mxu0 0.0
          %2442 = vmatmul.mubr.f32.gmra.mrb[0].mxu0 %v2276
          %v2443 = vpop.f32.mrb[0].mxu0
          %v2444 = vadd.f32 0.0, %v2443
          %v2445 = vpop.f32.mrb[0].mxu0
          %2446 = vmatprep.mubr.f32.mxu0 0.0
          %2447 = vmatmul.mubr.f32.gmra.mrb[0].mxu0 %v2279
          %v2448 = vpop.f32.mrb[0].mxu0
          %v2449 = vadd.f32 0.0, %v2448
          %v2450 = vpop.f32.mrb[0].mxu0
          %2451 = vmatprep.mubr.f32.mxu0 0.0
          %2452 = vmatmul.mubr.f32.gmra.mrb[0].mxu0 %v2282
          %v2453 = vpop.f32.mrb[0].mxu0
          %v2454 = vadd.f32 0.0, %v2453
          %v2455 = vpop.f32.mrb[0].mxu0
          %2456 = vmatprep.mubr.f32.mxu0 0.0
          %2457 = vmatmul.mubr.f32.gmra.mrb[0].mxu0 %v2285
          %v2458 = vpop.f32.mrb[0].mxu0
          %v2459 = vadd.f32 0.0, %v2458
          %v2460 = vpop.f32.mrb[0].mxu0
          %2461 = vmatprep.mubr.f32.mxu0 0.0
          %2462 = vmatmul.mubr.f32.gmra.mrb[0].mxu0 %v2288
          %v2463 = vpop.f32.mrb[0].mxu0
          %v2464 = vadd.f32 0.0, %v2463
          %v2465 = vpop.f32.mrb[0].mxu0
          %2466 = vmatprep.mubr.f32.mxu0 0.0
          %2467 = vmatmul.mubr.f32.gmra.mrb[0].mxu0 %v2291
          %v2468 = vpop.f32.mrb[0].mxu0
          %v2469 = vadd.f32 0.0, %v2468
          %v2470 = vpop.f32.mrb[0].mxu0
          %2471 = vmatprep.mubr.f32.mxu0 0.0
          %2472 = vmatmul.mubr.f32.gmra.mrb[0].mxu0 %v2294
          %v2473 = vpop.f32.mrb[0].mxu0
          %v2474 = vadd.f32 0.0, %v2473
          %v2475 = vpop.f32.mrb[0].mxu0
          %2476 = vmatprep.mubr.f32.mxu0 0.0
          %2477 = vmatmul.mubr.f32.gmra.mrb[0].mxu0 %v2297
          %v2478 = vpop.f32.mrb[0].mxu0
          %v2479 = vadd.f32 0.0, %v2478
          %v2480 = vpop.f32.mrb[0].mxu0
          %2481 = vmatprep.mubr.f32.mxu0 0.0
          %2482 = vmatmul.mubr.f32.gmra.mrb[0].mxu0 %v2300
          %v2483 = vpop.f32.mrb[0].mxu0
          %v2484 = vadd.f32 0.0, %v2483
          %v2485 = vpop.f32.mrb[0].mxu0
          %2486 = vmatprep.mubr.f32.mxu0 0.0
          %2487 = vmatmul.mubr.f32.gmra.mrb[0].mxu0 %v2303
          %v2488 = vpop.f32.mrb[0].mxu0
          %v2489 = vadd.f32 0.0, %v2488
          %v2490 = vpop.f32.mrb[0].mxu0
          %2491 = vmatprep.mubr.f32.mxu0 0.0
          %2492 = vmatmul.mubr.f32.gmra.mrb[0].mxu0 %v2306
          %v2493 = vpop.f32.mrb[0].mxu0
          %v2494 = vadd.f32 0.0, %v2493
          %v2495 = vpop.f32.mrb[0].mxu0
          %2496 = vmatprep.mubr.f32.mxu0 0.0
          %2497 = vmatmul.mubr.f32.gmra.mrb[0].mxu0 %v2309
          %v2498 = vpop.f32.mrb[0].mxu0
          %v2499 = vadd.f32 0.0, %v2498
          %v2500 = vpop.f32.mrb[0].mxu0
          %2501 = vmatprep.mubr.f32.mxu0 0.0
          %2502 = vmatmul.mubr.f32.gmra.mrb[0].mxu0 %v2312
          %v2503 = vpop.f32.mrb[0].mxu0
          %v2504 = vadd.f32 0.0, %v2503
          %v2505 = vpop.f32.mrb[0].mxu0
          %2506 = vmatprep.mubr.f32.mxu0 0.0
          %2507 = vmatmul.mubr.f32.gmra.mrb[0].mxu0 %v2315
          %v2508 = vpop.f32.mrb[0].mxu0
          %v2509 = vadd.f32 0.0, %v2508
          %v2510 = vpop.f32.mrb[0].mxu0
          %2511 = vmatprep.mubr.f32.mxu0 0.0
          %2512 = vmatmul.mubr.f32.gmra.mrb[0].mxu0 %v2318
          %v2513 = vpop.f32.mrb[0].mxu0
          %v2514 = vadd.f32 0.0, %v2513
          %v2515 = vpop.f32.mrb[0].mxu0
          %2516 = vmatprep.mubr.f32.mxu0 0.0
          %2517 = vmatmul.mubr.f32.gmra.mrb[0].mxu0 %v2321
          %v2518 = vpop.f32.mrb[0].mxu0
          %v2519 = vadd.f32 0.0, %v2518
          %v2520 = vpop.f32.mrb[0].mxu0
          %2521 = vmatprep.mubr.f32.mxu0 0.0
          %2522 = vmatmul.mubr.f32.gmra.mrb[0].mxu0 %v2324
          %v2523 = vpop.f32.mrb[0].mxu0
          %v2524 = vadd.f32 0.0, %v2523
          %v2525 = vpop.f32.mrb[0].mxu0
          %2526 = vmatprep.mubr.f32.mxu0 0.0
          %2527 = vmatmul.mubr.f32.gmra.mrb[0].mxu0 %v2327
          %v2528 = vpop.f32.mrb[0].mxu0
          %v2529 = vadd.f32 0.0, %v2528
          %v2530 = vpop.f32.mrb[0].mxu0
          %2531 = vmatprep.mubr.f32.mxu0 0.0
          %2532 = vmatmul.mubr.f32.gmra.mrb[0].mxu0 %v2330
          %v2533 = vpop.f32.mrb[0].mxu0
          %v2534 = vadd.f32 0.0, %v2533
          %v2535 = vpop.f32.mrb[0].mxu0
          %2536 = vmatprep.mubr.f32.mxu0 0.0
          %2537 = vmatmul.mubr.f32.gmra.mrb[0].mxu0 %v2333
          %v2538 = vpop.f32.mrb[0].mxu0
          %v2539 = vadd.f32 0.0, %v2538
          %v2540 = vpop.f32.mrb[0].mxu0
          %2541 = vmatprep.mubr.f32.mxu0 0.0
          %2542 = vmatmul.mubr.f32.gmra.mrb[0].mxu0 %v2336
          %v2543 = vpop.f32.mrb[0].mxu0
          %v2544 = vadd.f32 0.0, %v2543
          %v2545 = vpop.f32.mrb[0].mxu0
          %2546 = vmatprep.mubr.f32.mxu0 0.0
          %2547 = vmatmul.mubr.f32.gmra.mrb[0].mxu0 %v2339
          %v2548 = vpop.f32.mrb[0].mxu0
          %v2549 = vadd.f32 0.0, %v2548
          %v2550 = vpop.f32.mrb[0].mxu0
          %2551 = vmatprep.mubr.f32.mxu0 0.0
          %2552 = vmatmul.mubr.f32.gmra.mrb[0].mxu0 %v2342
          %v2553 = vpop.f32.mrb[0].mxu0
          %v2554 = vadd.f32 0.0, %v2553
          %v2555 = vpop.f32.mrb[0].mxu0
          %2556 = vmatprep.mubr.f32.mxu0 0.0
          %2557 = vmatmul.mubr.f32.gmra.mrb[0].mxu0 %v2345
          %v2558 = vpop.f32.mrb[0].mxu0
          %v2559 = vadd.f32 0.0, %v2558
          %v2560 = vpop.f32.mrb[0].mxu0
          %2561 = vmatprep.mubr.f32.mxu0 0.0
          %2562 = vmatmul.mubr.f32.gmra.mrb[0].mxu0 %v2348
          %v2563 = vpop.f32.mrb[0].mxu0
          %v2564 = vadd.f32 0.0, %v2563
          %v2565 = vpop.f32.mrb[0].mxu0
          %2566 = vmatprep.mubr.f32.mxu0 0.0
          %2567 = vmatmul.mubr.f32.gmra.mrb[0].mxu0 %v2351
          %v2568 = vpop.f32.mrb[0].mxu0
          %v2569 = vadd.f32 0.0, %v2568
          %v2570 = vpop.f32.mrb[0].mxu0
          %2571 = vmatprep.mubr.f32.mxu0 0.0
          %2572 = vmatmul.mubr.f32.gmra.mrb[0].mxu0 %v2354
          %v2573 = vpop.f32.mrb[0].mxu0
          %v2574 = vadd.f32 0.0, %v2573
          %v2575 = vpop.f32.mrb[0].mxu0
          %2576 = vmatprep.mubr.f32.mxu0 0.0
          %2577 = vmatmul.mubr.f32.gmra.mrb[0].mxu0 %v2357
          %v2578 = vpop.f32.mrb[0].mxu0
          %v2579 = vadd.f32 0.0, %v2578
          %v2580 = vpop.f32.mrb[0].mxu0
          %2581 = vmatprep.mubr.f32.mxu0 0.0
          %2582 = vmatmul.mubr.f32.gmra.mrb[0].mxu0 %v2360
          %v2583 = vpop.f32.mrb[0].mxu0
          %v2584 = vadd.f32 0.0, %v2583
          %v2585 = vpop.f32.mrb[0].mxu0
          %2586 = vdwg.mxu0
          %v2588 = vsel %vm1758, %v2139, 0
          %v2591 = vsel %vm1758, %v2142, 0
          %v2594 = vsel %vm1758, %v2147, 0
          %v2597 = vsel %vm1758, %v2150, 0
          %v2600 = vsel %vm1758, %v2155, 0
          %v2603 = vsel %vm1758, %v2158, 0
          %v2606 = vsel %vm1758, %v2163, 0
          %v2609 = vsel %vm1758, %v2166, 0
          %v2612 = vsel %vm1758, %v2171, 0
          %v2615 = vsel %vm1758, %v2174, 0
          %v2618 = vsel %vm1758, %v2179, 0
          %v2621 = vsel %vm1758, %v2182, 0
          %v2624 = vsel %vm1758, %v2187, 0
          %v2627 = vsel %vm1758, %v2190, 0
          %v2630 = vsel %vm1758, %v2195, 0
          %v2633 = vsel %vm1758, %v2198, 0
          %v2636 = vsel %vm1758, %v2203, 0
          %v2639 = vsel %vm1758, %v2206, 0
          %v2642 = vsel %vm1758, %v2211, 0
          %v2645 = vsel %vm1758, %v2214, 0
          %v2648 = vsel %vm1758, %v2219, 0
          %v2651 = vsel %vm1758, %v2222, 0
          %v2654 = vsel %vm1758, %v2227, 0
          %v2657 = vsel %vm1758, %v2230, 0
          %v2660 = vsel %vm1758, %v2235, 0
          %v2663 = vsel %vm1758, %v2238, 0
          %v2666 = vsel %vm1758, %v2243, 0
          %v2669 = vsel %vm1758, %v2246, 0
          %v2672 = vsel %vm1758, %v2251, 0
          %v2675 = vsel %vm1758, %v2254, 0
          %v2678 = vsel %vm1758, %v2259, 0
          %v2681 = vsel %vm1758, %v2262, 0
          %2683 = vmatprep.subr.mxu0 0.0
          %2684 = vmatpush1.msra.mxu0 %v1549
          %2685 = vmatprep.subr.mxu0 0.0
          %2686 = vmatpush1.msra.mxu0 %v1550
          %2687 = vmatprep.subr.mxu0 0.0
          %2688 = vmatpush1.msra.mxu0 %v1551
          %2689 = vmatprep.subr.mxu0 0.0
          %2690 = vmatpush1.msra.mxu0 %v1552
          %2691 = vmatprep.subr.mxu0 0.0
          %2692 = vmatpush1.msra.mxu0 0.0
          %2693 = vmatprep.subr.mxu0 0.0
          %2694 = vmatpush1.msra.mxu0 0.0
          %2695 = vmatprep.subr.mxu0 0.0
          %2696 = vmatpush1.msra.mxu0 0.0
          %2697 = vmatprep.subr.mxu0 0.0
          %2698 = vmatpush1.msra.mxu0 0.0
          %2699 = vmatprep.subr.mxu0 0.0
          %2700 = vmatpush1.msra.mxu0 0.0
          %2701 = vmatprep.subr.mxu0 0.0
          %2702 = vmatpush1.msra.mxu0 0.0
          %2703 = vmatprep.subr.mxu0 0.0
          %2704 = vmatpush1.msra.mxu0 0.0
          %2705 = vmatprep.subr.mxu0 0.0
          %2706 = vmatpush1.msra.mxu0 0.0
          %2707 = vmatprep.subr.mxu0 0.0
          %2708 = vmatpush1.msra.mxu0 0.0
          %2709 = vmatprep.subr.mxu0 0.0
          %2710 = vmatpush1.msra.mxu0 0.0
          %2711 = vmatprep.subr.mxu0 0.0
          %2712 = vmatpush1.msra.mxu0 0.0
          %2713 = vmatprep.subr.mxu0 0.0
          %2714 = vmatpush1.msra.mxu0 0.0
          %2715 = vmatprep.subr.mxu0 0.0
          %2716 = vmatpush1.msra.mxu0 0.0
          %2717 = vmatprep.subr.mxu0 0.0
          %2718 = vmatpush1.msra.mxu0 0.0
          %2719 = vmatprep.subr.mxu0 0.0
          %2720 = vmatpush1.msra.mxu0 0.0
          %2721 = vmatprep.subr.mxu0 0.0
          %2722 = vmatpush1.msra.mxu0 0.0
          %2723 = vmatprep.subr.mxu0 0.0
          %2724 = vmatpush1.msra.mxu0 0.0
          %2725 = vmatprep.subr.mxu0 0.0
          %2726 = vmatpush1.msra.mxu0 0.0
          %2727 = vmatprep.subr.mxu0 0.0
          %2728 = vmatpush1.msra.mxu0 0.0
          %2729 = vmatprep.subr.mxu0 0.0
          %2730 = vmatpush1.msra.mxu0 0.0
          %2731 = vmatprep.subr.mxu0 0.0
          %2732 = vmatpush1.msra.mxu0 0.0
          %2733 = vmatprep.subr.mxu0 0.0
          %2734 = vmatpush1.msra.mxu0 0.0
          %2735 = vmatprep.subr.mxu0 0.0
          %2736 = vmatpush1.msra.mxu0 0.0
          %2737 = vmatprep.subr.mxu0 0.0
          %2738 = vmatpush1.msra.mxu0 0.0
          %2739 = vmatprep.subr.mxu0 0.0
          %2740 = vmatpush1.msra.mxu0 0.0
          %2741 = vmatprep.subr.mxu0 0.0
          %2742 = vmatpush1.msra.mxu0 0.0
          %2743 = vmatprep.subr.mxu0 0.0
          %2744 = vmatpush1.msra.mxu0 0.0
          %2745 = vmatprep.subr.mxu0 0.0
          %2746 = vmatpush1.msra.mxu0 0.0
          %2747 = vmatprep.mubr.f32.mxu0 0.0
          %2748 = vmatmul.mubr.f32.gmra.mrb[0].mxu0 %v2588
          %v2749 = vpop.f32.mrb[0].mxu0
          %v2750 = vadd.f32 %v2429, %v2749
          %v2751 = vpop.f32.mrb[0].mxu0
          %2752 = vmatprep.mubr.f32.mxu0 0.0
          %2753 = vmatmul.mubr.f32.gmra.mrb[0].mxu0 %v2591
          %v2754 = vpop.f32.mrb[0].mxu0
          %v2755 = vadd.f32 %v2434, %v2754
          %v2756 = vpop.f32.mrb[0].mxu0
          %2757 = vmatprep.mubr.f32.mxu0 0.0
          %2758 = vmatmul.mubr.f32.gmra.mrb[0].mxu0 %v2594
          %v2759 = vpop.f32.mrb[0].mxu0
          %v2760 = vadd.f32 %v2439, %v2759
          %v2761 = vpop.f32.mrb[0].mxu0
          %2762 = vmatprep.mubr.f32.mxu0 0.0
          %2763 = vmatmul.mubr.f32.gmra.mrb[0].mxu0 %v2597
          %v2764 = vpop.f32.mrb[0].mxu0
          %v2765 = vadd.f32 %v2444, %v2764
          %v2766 = vpop.f32.mrb[0].mxu0
          %2767 = vmatprep.mubr.f32.mxu0 0.0
          %2768 = vmatmul.mubr.f32.gmra.mrb[0].mxu0 %v2600
          %v2769 = vpop.f32.mrb[0].mxu0
          %v2770 = vadd.f32 %v2449, %v2769
          %v2771 = vpop.f32.mrb[0].mxu0
          %2772 = vmatprep.mubr.f32.mxu0 0.0
          %2773 = vmatmul.mubr.f32.gmra.mrb[0].mxu0 %v2603
          %v2774 = vpop.f32.mrb[0].mxu0
          %v2775 = vadd.f32 %v2454, %v2774
          %v2776 = vpop.f32.mrb[0].mxu0
          %2777 = vmatprep.mubr.f32.mxu0 0.0
          %2778 = vmatmul.mubr.f32.gmra.mrb[0].mxu0 %v2606
          %v2779 = vpop.f32.mrb[0].mxu0
          %v2780 = vadd.f32 %v2459, %v2779
          %v2781 = vpop.f32.mrb[0].mxu0
          %2782 = vmatprep.mubr.f32.mxu0 0.0
          %2783 = vmatmul.mubr.f32.gmra.mrb[0].mxu0 %v2609
          %v2784 = vpop.f32.mrb[0].mxu0
          %v2785 = vadd.f32 %v2464, %v2784
          %v2786 = vpop.f32.mrb[0].mxu0
          %2787 = vmatprep.mubr.f32.mxu0 0.0
          %2788 = vmatmul.mubr.f32.gmra.mrb[0].mxu0 %v2612
          %v2789 = vpop.f32.mrb[0].mxu0
          %v2790 = vadd.f32 %v2469, %v2789
          %v2791 = vpop.f32.mrb[0].mxu0
          %2792 = vmatprep.mubr.f32.mxu0 0.0
          %2793 = vmatmul.mubr.f32.gmra.mrb[0].mxu0 %v2615
          %v2794 = vpop.f32.mrb[0].mxu0
          %v2795 = vadd.f32 %v2474, %v2794
          %v2796 = vpop.f32.mrb[0].mxu0
          %2797 = vmatprep.mubr.f32.mxu0 0.0
          %2798 = vmatmul.mubr.f32.gmra.mrb[0].mxu0 %v2618
          %v2799 = vpop.f32.mrb[0].mxu0
          %v2800 = vadd.f32 %v2479, %v2799
          %v2801 = vpop.f32.mrb[0].mxu0
          %2802 = vmatprep.mubr.f32.mxu0 0.0
          %2803 = vmatmul.mubr.f32.gmra.mrb[0].mxu0 %v2621
          %v2804 = vpop.f32.mrb[0].mxu0
          %v2805 = vadd.f32 %v2484, %v2804
          %v2806 = vpop.f32.mrb[0].mxu0
          %2807 = vmatprep.mubr.f32.mxu0 0.0
          %2808 = vmatmul.mubr.f32.gmra.mrb[0].mxu0 %v2624
          %v2809 = vpop.f32.mrb[0].mxu0
          %v2810 = vadd.f32 %v2489, %v2809
          %v2811 = vpop.f32.mrb[0].mxu0
          %2812 = vmatprep.mubr.f32.mxu0 0.0
          %2813 = vmatmul.mubr.f32.gmra.mrb[0].mxu0 %v2627
          %v2814 = vpop.f32.mrb[0].mxu0
          %v2815 = vadd.f32 %v2494, %v2814
          %v2816 = vpop.f32.mrb[0].mxu0
          %2817 = vmatprep.mubr.f32.mxu0 0.0
          %2818 = vmatmul.mubr.f32.gmra.mrb[0].mxu0 %v2630
          %v2819 = vpop.f32.mrb[0].mxu0
          %v2820 = vadd.f32 %v2499, %v2819
          %v2821 = vpop.f32.mrb[0].mxu0
          %2822 = vmatprep.mubr.f32.mxu0 0.0
          %2823 = vmatmul.mubr.f32.gmra.mrb[0].mxu0 %v2633
          %v2824 = vpop.f32.mrb[0].mxu0
          %v2825 = vadd.f32 %v2504, %v2824
          %v2826 = vpop.f32.mrb[0].mxu0
          %2827 = vmatprep.mubr.f32.mxu0 0.0
          %2828 = vmatmul.mubr.f32.gmra.mrb[0].mxu0 %v2636
          %v2829 = vpop.f32.mrb[0].mxu0
          %v2830 = vadd.f32 %v2509, %v2829
          %v2831 = vpop.f32.mrb[0].mxu0
          %2832 = vmatprep.mubr.f32.mxu0 0.0
          %2833 = vmatmul.mubr.f32.gmra.mrb[0].mxu0 %v2639
          %v2834 = vpop.f32.mrb[0].mxu0
          %v2835 = vadd.f32 %v2514, %v2834
          %v2836 = vpop.f32.mrb[0].mxu0
          %2837 = vmatprep.mubr.f32.mxu0 0.0
          %2838 = vmatmul.mubr.f32.gmra.mrb[0].mxu0 %v2642
          %v2839 = vpop.f32.mrb[0].mxu0
          %v2840 = vadd.f32 %v2519, %v2839
          %v2841 = vpop.f32.mrb[0].mxu0
          %2842 = vmatprep.mubr.f32.mxu0 0.0
          %2843 = vmatmul.mubr.f32.gmra.mrb[0].mxu0 %v2645
          %v2844 = vpop.f32.mrb[0].mxu0
          %v2845 = vadd.f32 %v2524, %v2844
          %v2846 = vpop.f32.mrb[0].mxu0
          %2847 = vmatprep.mubr.f32.mxu0 0.0
          %2848 = vmatmul.mubr.f32.gmra.mrb[0].mxu0 %v2648
          %v2849 = vpop.f32.mrb[0].mxu0
          %v2850 = vadd.f32 %v2529, %v2849
          %v2851 = vpop.f32.mrb[0].mxu0
          %2852 = vmatprep.mubr.f32.mxu0 0.0
          %2853 = vmatmul.mubr.f32.gmra.mrb[0].mxu0 %v2651
          %v2854 = vpop.f32.mrb[0].mxu0
          %v2855 = vadd.f32 %v2534, %v2854
          %v2856 = vpop.f32.mrb[0].mxu0
          %2857 = vmatprep.mubr.f32.mxu0 0.0
          %2858 = vmatmul.mubr.f32.gmra.mrb[0].mxu0 %v2654
          %v2859 = vpop.f32.mrb[0].mxu0
          %v2860 = vadd.f32 %v2539, %v2859
          %v2861 = vpop.f32.mrb[0].mxu0
          %2862 = vmatprep.mubr.f32.mxu0 0.0
          %2863 = vmatmul.mubr.f32.gmra.mrb[0].mxu0 %v2657
          %v2864 = vpop.f32.mrb[0].mxu0
          %v2865 = vadd.f32 %v2544, %v2864
          %v2866 = vpop.f32.mrb[0].mxu0
          %2867 = vmatprep.mubr.f32.mxu0 0.0
          %2868 = vmatmul.mubr.f32.gmra.mrb[0].mxu0 %v2660
          %v2869 = vpop.f32.mrb[0].mxu0
          %v2870 = vadd.f32 %v2549, %v2869
          %v2871 = vpop.f32.mrb[0].mxu0
          %2872 = vmatprep.mubr.f32.mxu0 0.0
          %2873 = vmatmul.mubr.f32.gmra.mrb[0].mxu0 %v2663
          %v2874 = vpop.f32.mrb[0].mxu0
          %v2875 = vadd.f32 %v2554, %v2874
          %v2876 = vpop.f32.mrb[0].mxu0
          %2877 = vmatprep.mubr.f32.mxu0 0.0
          %2878 = vmatmul.mubr.f32.gmra.mrb[0].mxu0 %v2666
          %v2879 = vpop.f32.mrb[0].mxu0
          %v2880 = vadd.f32 %v2559, %v2879
          %v2881 = vpop.f32.mrb[0].mxu0
          %2882 = vmatprep.mubr.f32.mxu0 0.0
          %2883 = vmatmul.mubr.f32.gmra.mrb[0].mxu0 %v2669
          %v2884 = vpop.f32.mrb[0].mxu0
          %v2885 = vadd.f32 %v2564, %v2884
          %v2886 = vpop.f32.mrb[0].mxu0
          %2887 = vmatprep.mubr.f32.mxu0 0.0
          %2888 = vmatmul.mubr.f32.gmra.mrb[0].mxu0 %v2672
          %v2889 = vpop.f32.mrb[0].mxu0
          %v2890 = vadd.f32 %v2569, %v2889
          %v2891 = vpop.f32.mrb[0].mxu0
          %2892 = vmatprep.mubr.f32.mxu0 0.0
          %2893 = vmatmul.mubr.f32.gmra.mrb[0].mxu0 %v2675
          %v2894 = vpop.f32.mrb[0].mxu0
          %v2895 = vadd.f32 %v2574, %v2894
          %v2896 = vpop.f32.mrb[0].mxu0
          %2897 = vmatprep.mubr.f32.mxu0 0.0
          %2898 = vmatmul.mubr.f32.gmra.mrb[0].mxu0 %v2678
          %v2899 = vpop.f32.mrb[0].mxu0
          %v2900 = vadd.f32 %v2579, %v2899
          %v2901 = vpop.f32.mrb[0].mxu0
          %2902 = vmatprep.mubr.f32.mxu0 0.0
          %2903 = vmatmul.mubr.f32.gmra.mrb[0].mxu0 %v2681
          %v2904 = vpop.f32.mrb[0].mxu0
          %v2905 = vadd.f32 %v2584, %v2904
          %v2906 = vpop.f32.mrb[0].mxu0
          %2907 = vdwg.mxu0
          %v2909 = vlaneseq
          %v2910 = vshrl.u32 %v2909, 7
          %v2911 = vsub.s32 0, %v2910
          %v2912 = vrot.slane %v1555, %v2911
          %v2914 = vadd.f32 %v2750, %v2912
          %v2915 = vadd.f32 %v2755, %v2912
          %v2916 = vadd.f32 %v2760, %v2912
          %v2917 = vadd.f32 %v2765, %v2912
          %v2918 = vadd.f32 %v2770, %v2912
          %v2919 = vadd.f32 %v2775, %v2912
          %v2920 = vadd.f32 %v2780, %v2912
          %v2921 = vadd.f32 %v2785, %v2912
          %v2922 = vadd.f32 %v2790, %v2912
          %v2923 = vadd.f32 %v2795, %v2912
          %v2924 = vadd.f32 %v2800, %v2912
          %v2925 = vadd.f32 %v2805, %v2912
          %v2926 = vadd.f32 %v2810, %v2912
          %v2927 = vadd.f32 %v2815, %v2912
          %v2928 = vadd.f32 %v2820, %v2912
          %v2929 = vadd.f32 %v2825, %v2912
          %v2930 = vadd.f32 %v2830, %v2912
          %v2931 = vadd.f32 %v2835, %v2912
          %v2932 = vadd.f32 %v2840, %v2912
          %v2933 = vadd.f32 %v2845, %v2912
          %v2934 = vadd.f32 %v2850, %v2912
          %v2935 = vadd.f32 %v2855, %v2912
          %v2936 = vadd.f32 %v2860, %v2912
          %v2937 = vadd.f32 %v2865, %v2912
          %v2938 = vadd.f32 %v2870, %v2912
          %v2939 = vadd.f32 %v2875, %v2912
          %v2940 = vadd.f32 %v2880, %v2912
          %v2941 = vadd.f32 %v2885, %v2912
          %v2942 = vadd.f32 %v2890, %v2912
          %v2943 = vadd.f32 %v2895, %v2912
          %v2944 = vadd.f32 %v2900, %v2912
          %v2945 = vadd.f32 %v2905, %v2912
          %vm2946 = vcmp.gt.f32.partialorder %v2914, 0.0
          %vm2947 = vcmp.gt.f32.partialorder %v2915, 0.0
          %vm2948 = vcmp.gt.f32.partialorder %v2916, 0.0
          %vm2949 = vcmp.gt.f32.partialorder %v2917, 0.0
          %vm2950 = vcmp.gt.f32.partialorder %v2918, 0.0
          %vm2951 = vcmp.gt.f32.partialorder %v2919, 0.0
          %vm2952 = vcmp.gt.f32.partialorder %v2920, 0.0
          %vm2953 = vcmp.gt.f32.partialorder %v2921, 0.0
          %vm2954 = vcmp.gt.f32.partialorder %v2922, 0.0
          %vm2955 = vcmp.gt.f32.partialorder %v2923, 0.0
          %vm2956 = vcmp.gt.f32.partialorder %v2924, 0.0
          %vm2957 = vcmp.gt.f32.partialorder %v2925, 0.0
          %vm2958 = vcmp.gt.f32.partialorder %v2926, 0.0
          %vm2959 = vcmp.gt.f32.partialorder %v2927, 0.0
          %vm2960 = vcmp.gt.f32.partialorder %v2928, 0.0
          %vm2961 = vcmp.gt.f32.partialorder %v2929, 0.0
          %vm2962 = vcmp.gt.f32.partialorder %v2930, 0.0
          %vm2963 = vcmp.gt.f32.partialorder %v2931, 0.0
          %vm2964 = vcmp.gt.f32.partialorder %v2932, 0.0
          %vm2965 = vcmp.gt.f32.partialorder %v2933, 0.0
          %vm2966 = vcmp.gt.f32.partialorder %v2934, 0.0
          %vm2967 = vcmp.gt.f32.partialorder %v2935, 0.0
          %vm2968 = vcmp.gt.f32.partialorder %v2936, 0.0
          %vm2969 = vcmp.gt.f32.partialorder %v2937, 0.0
          %vm2970 = vcmp.gt.f32.partialorder %v2938, 0.0
          %vm2971 = vcmp.gt.f32.partialorder %v2939, 0.0
          %vm2972 = vcmp.gt.f32.partialorder %v2940, 0.0
          %vm2973 = vcmp.gt.f32.partialorder %v2941, 0.0
          %vm2974 = vcmp.gt.f32.partialorder %v2942, 0.0
          %vm2975 = vcmp.gt.f32.partialorder %v2943, 0.0
          %vm2976 = vcmp.gt.f32.partialorder %v2944, 0.0
          %vm2977 = vcmp.gt.f32.partialorder %v2945, 0.0
          %v2978 = vmul.f32 %v2914, 0.01
          %v2979 = vmul.f32 %v2915, 0.01
          %v2980 = vmul.f32 %v2916, 0.01
          %v2981 = vmul.f32 %v2917, 0.01
          %v2982 = vmul.f32 %v2918, 0.01
          %v2983 = vmul.f32 %v2919, 0.01
          %v2984 = vmul.f32 %v2920, 0.01
          %v2985 = vmul.f32 %v2921, 0.01
          %v2986 = vmul.f32 %v2922, 0.01
          %v2987 = vmul.f32 %v2923, 0.01
          %v2988 = vmul.f32 %v2924, 0.01
          %v2989 = vmul.f32 %v2925, 0.01
          %v2990 = vmul.f32 %v2926, 0.01
          %v2991 = vmul.f32 %v2927, 0.01
          %v2992 = vmul.f32 %v2928, 0.01
          %v2993 = vmul.f32 %v2929, 0.01
          %v2994 = vmul.f32 %v2930, 0.01
          %v2995 = vmul.f32 %v2931, 0.01
          %v2996 = vmul.f32 %v2932, 0.01
          %v2997 = vmul.f32 %v2933, 0.01
          %v2998 = vmul.f32 %v2934, 0.01
          %v2999 = vmul.f32 %v2935, 0.01
          %v3000 = vmul.f32 %v2936, 0.01
          %v3001 = vmul.f32 %v2937, 0.01
          %v3002 = vmul.f32 %v2938, 0.01
          %v3003 = vmul.f32 %v2939, 0.01
          %v3004 = vmul.f32 %v2940, 0.01
          %v3005 = vmul.f32 %v2941, 0.01
          %v3006 = vmul.f32 %v2942, 0.01
          %v3007 = vmul.f32 %v2943, 0.01
          %v3008 = vmul.f32 %v2944, 0.01
          %v3009 = vmul.f32 %v2945, 0.01
          %v3010 = vsel %vm2946, %v2914, %v2978
          %v3011 = vsel %vm2947, %v2915, %v2979
          %v3012 = vsel %vm2948, %v2916, %v2980
          %v3013 = vsel %vm2949, %v2917, %v2981
          %v3014 = vsel %vm2950, %v2918, %v2982
          %v3015 = vsel %vm2951, %v2919, %v2983
          %v3016 = vsel %vm2952, %v2920, %v2984
          %v3017 = vsel %vm2953, %v2921, %v2985
          %v3018 = vsel %vm2954, %v2922, %v2986
          %v3019 = vsel %vm2955, %v2923, %v2987
          %v3020 = vsel %vm2956, %v2924, %v2988
          %v3021 = vsel %vm2957, %v2925, %v2989
          %v3022 = vsel %vm2958, %v2926, %v2990
          %v3023 = vsel %vm2959, %v2927, %v2991
          %v3024 = vsel %vm2960, %v2928, %v2992
          %v3025 = vsel %vm2961, %v2929, %v2993
          %v3026 = vsel %vm2962, %v2930, %v2994
          %v3027 = vsel %vm2963, %v2931, %v2995
          %v3028 = vsel %vm2964, %v2932, %v2996
          %v3029 = vsel %vm2965, %v2933, %v2997
          %v3030 = vsel %vm2966, %v2934, %v2998
          %v3031 = vsel %vm2967, %v2935, %v2999
          %v3032 = vsel %vm2968, %v2936, %v3000
          %v3033 = vsel %vm2969, %v2937, %v3001
          %v3034 = vsel %vm2970, %v2938, %v3002
          %v3035 = vsel %vm2971, %v2939, %v3003
          %v3036 = vsel %vm2972, %v2940, %v3004
          %v3037 = vsel %vm2973, %v2941, %v3005
          %v3038 = vsel %vm2974, %v2942, %v3006
          %v3039 = vsel %vm2975, %v2943, %v3007
          %v3040 = vsel %vm2976, %v2944, %v3008
          %v3041 = vsel %vm2977, %v2945, %v3009
          %v3042 = vpack.c.bf16 %v1985, %v1984
          %v3043 = vpack.c.bf16 %v1987, %v1986
          %v3044 = vpack.c.bf16 %v1989, %v1988
          %v3045 = vpack.c.bf16 %v1991, %v1990
          %v3046 = vpack.c.bf16 %v1993, %v1992
          %v3047 = vpack.c.bf16 %v1995, %v1994
          %v3048 = vpack.c.bf16 %v1997, %v1996
          %v3049 = vpack.c.bf16 %v1999, %v1998
          %v3082 = vunpack.c.l.b16 %v1444
          %v3083 = vunpack.c.l.b16 %v1445
          %v3084 = vunpack.c.l.b16 %v1446
          %v3085 = vunpack.c.l.b16 %v1447
          %v3086 = vunpack.c.l.b16 %v1448
          %v3087 = vunpack.c.l.b16 %v1449
          %v3088 = vunpack.c.l.b16 %v1450
          %v3089 = vunpack.c.l.b16 %v1451
          %v3090 = vunpack.c.l.b16 %v1452
          %v3091 = vunpack.c.l.b16 %v1453
          %v3092 = vunpack.c.l.b16 %v1454
          %v3093 = vunpack.c.l.b16 %v1455
          %v3094 = vunpack.c.l.b16 %v1456
          %v3095 = vunpack.c.l.b16 %v1457
          %v3096 = vunpack.c.l.b16 %v1458
          %v3097 = vunpack.c.l.b16 %v1459
          %v3098 = vunpack.c.l.b16 %v1460
          %v3099 = vunpack.c.l.b16 %v1461
          %v3100 = vunpack.c.l.b16 %v1462
          %v3101 = vunpack.c.l.b16 %v1463
          %v3102 = vunpack.c.l.b16 %v1464
          %v3103 = vunpack.c.l.b16 %v1465
          %v3104 = vunpack.c.l.b16 %v1466
          %v3105 = vunpack.c.l.b16 %v1467
          %v3106 = vunpack.c.l.b16 %v1468
          %v3107 = vunpack.c.l.b16 %v1469
          %v3108 = vunpack.c.l.b16 %v1470
          %v3109 = vunpack.c.l.b16 %v1471
          %v3110 = vunpack.c.l.b16 %v1472
          %v3111 = vunpack.c.l.b16 %v1473
          %v3112 = vunpack.c.l.b16 %v1474
          %v3113 = vunpack.c.l.b16 %v1475
          %v3114 = vpack.c.b16 %v3083, %v3082
          %v3115 = vpack.c.b16 %v3085, %v3084
          %v3116 = vpack.c.b16 %v3087, %v3086
          %v3117 = vpack.c.b16 %v3089, %v3088
          %v3118 = vpack.c.b16 %v3091, %v3090
          %v3119 = vpack.c.b16 %v3093, %v3092
          %v3120 = vpack.c.b16 %v3095, %v3094
          %v3121 = vpack.c.b16 %v3097, %v3096
          %v3122 = vpack.c.b16 %v3099, %v3098
          %v3123 = vpack.c.b16 %v3101, %v3100
          %v3124 = vpack.c.b16 %v3103, %v3102
          %v3125 = vpack.c.b16 %v3105, %v3104
          %v3126 = vpack.c.b16 %v3107, %v3106
          %v3127 = vpack.c.b16 %v3109, %v3108
          %v3128 = vpack.c.b16 %v3111, %v3110
          %v3129 = vpack.c.b16 %v3113, %v3112
          %3146 = vmatprep.subr.bf16.mxu0 0
          %3147 = vmatpush1.bf16.msra.mxu0 %v3042
          %3148 = vmatprep.subr.bf16.mxu0 0
          %3149 = vmatpush1.bf16.msra.mxu0 %v3043
          %3150 = vmatprep.subr.bf16.mxu0 0
          %3151 = vmatpush1.bf16.msra.mxu0 %v3044
          %3152 = vmatprep.subr.bf16.mxu0 0
          %3153 = vmatpush1.bf16.msra.mxu0 %v3045
          %3154 = vmatprep.subr.bf16.mxu0 0
          %3155 = vmatpush1.bf16.msra.mxu0 %v3046
          %3156 = vmatprep.subr.bf16.mxu0 0
          %3157 = vmatpush1.bf16.msra.mxu0 %v3047
          %3158 = vmatprep.subr.bf16.mxu0 0
          %3159 = vmatpush1.bf16.msra.mxu0 %v3048
          %3160 = vmatprep.subr.bf16.mxu0 0
          %3161 = vmatpush1.bf16.msra.mxu0 %v3049
          %3162 = vmatprep.subr.bf16.mxu0 0
          %3163 = vmatpush1.bf16.msra.mxu0 0
          %3164 = vmatprep.subr.bf16.mxu0 0
          %3165 = vmatpush1.bf16.msra.mxu0 0
          %3166 = vmatprep.subr.bf16.mxu0 0
          %3167 = vmatpush1.bf16.msra.mxu0 0
          %3168 = vmatprep.subr.bf16.mxu0 0
          %3169 = vmatpush1.bf16.msra.mxu0 0
          %3170 = vmatprep.subr.bf16.mxu0 0
          %3171 = vmatpush1.bf16.msra.mxu0 0
          %3172 = vmatprep.subr.bf16.mxu0 0
          %3173 = vmatpush1.bf16.msra.mxu0 0
          %3174 = vmatprep.subr.bf16.mxu0 0
          %3175 = vmatpush1.bf16.msra.mxu0 0
          %3176 = vmatprep.subr.bf16.mxu0 0
          %3177 = vmatpush1.bf16.msra.mxu0 0
          %3178 = vmatprep.mubr.bf16.mxu0 0
          %3179 = vmatmul.mubr.bf16.gmra.mrb[0].mxu0 %v3114
          %v3180 = vpop.f32.mrb[0].mxu0
          %v3181 = vadd.f32 0.0, %v3180
          %v3182 = vpop.f32.mrb[0].mxu0
          %v3183 = vpop.f32.mrb[0].mxu0
          %v3184 = vadd.f32 0.0, %v3183
          %v3185 = vpop.f32.mrb[0].mxu0
          %3186 = vmatprep.mubr.bf16.mxu0 0
          %3187 = vmatmul.mubr.bf16.gmra.mrb[0].mxu0 %v3115
          %v3188 = vpop.f32.mrb[0].mxu0
          %v3189 = vadd.f32 0.0, %v3188
          %v3190 = vpop.f32.mrb[0].mxu0
          %v3191 = vpop.f32.mrb[0].mxu0
          %v3192 = vadd.f32 0.0, %v3191
          %v3193 = vpop.f32.mrb[0].mxu0
          %3194 = vmatprep.mubr.bf16.mxu0 0
          %3195 = vmatmul.mubr.bf16.gmra.mrb[0].mxu0 %v3116
          %v3196 = vpop.f32.mrb[0].mxu0
          %v3197 = vadd.f32 0.0, %v3196
          %v3198 = vpop.f32.mrb[0].mxu0
          %v3199 = vpop.f32.mrb[0].mxu0
          %v3200 = vadd.f32 0.0, %v3199
          %v3201 = vpop.f32.mrb[0].mxu0
          %3202 = vmatprep.mubr.bf16.mxu0 0
          %3203 = vmatmul.mubr.bf16.gmra.mrb[0].mxu0 %v3117
          %v3204 = vpop.f32.mrb[0].mxu0
          %v3205 = vadd.f32 0.0, %v3204
          %v3206 = vpop.f32.mrb[0].mxu0
          %v3207 = vpop.f32.mrb[0].mxu0
          %v3208 = vadd.f32 0.0, %v3207
          %v3209 = vpop.f32.mrb[0].mxu0
          %3210 = vmatprep.mubr.bf16.mxu0 0
          %3211 = vmatmul.mubr.bf16.gmra.mrb[0].mxu0 %v3118
          %v3212 = vpop.f32.mrb[0].mxu0
          %v3213 = vadd.f32 0.0, %v3212
          %v3214 = vpop.f32.mrb[0].mxu0
          %v3215 = vpop.f32.mrb[0].mxu0
          %v3216 = vadd.f32 0.0, %v3215
          %v3217 = vpop.f32.mrb[0].mxu0
          %3218 = vmatprep.mubr.bf16.mxu0 0
          %3219 = vmatmul.mubr.bf16.gmra.mrb[0].mxu0 %v3119
          %v3220 = vpop.f32.mrb[0].mxu0
          %v3221 = vadd.f32 0.0, %v3220
          %v3222 = vpop.f32.mrb[0].mxu0
          %v3223 = vpop.f32.mrb[0].mxu0
          %v3224 = vadd.f32 0.0, %v3223
          %v3225 = vpop.f32.mrb[0].mxu0
          %3226 = vmatprep.mubr.bf16.mxu0 0
          %3227 = vmatmul.mubr.bf16.gmra.mrb[0].mxu0 %v3120
          %v3228 = vpop.f32.mrb[0].mxu0
          %v3229 = vadd.f32 0.0, %v3228
          %v3230 = vpop.f32.mrb[0].mxu0
          %v3231 = vpop.f32.mrb[0].mxu0
          %v3232 = vadd.f32 0.0, %v3231
          %v3233 = vpop.f32.mrb[0].mxu0
          %3234 = vmatprep.mubr.bf16.mxu0 0
          %3235 = vmatmul.mubr.bf16.gmra.mrb[0].mxu0 %v3121
          %v3236 = vpop.f32.mrb[0].mxu0
          %v3237 = vadd.f32 0.0, %v3236
          %v3238 = vpop.f32.mrb[0].mxu0
          %v3239 = vpop.f32.mrb[0].mxu0
          %v3240 = vadd.f32 0.0, %v3239
          %v3241 = vpop.f32.mrb[0].mxu0
          %3242 = vmatprep.mubr.bf16.mxu0 0
          %3243 = vmatmul.mubr.bf16.gmra.mrb[0].mxu0 %v3122
          %v3244 = vpop.f32.mrb[0].mxu0
          %v3245 = vadd.f32 0.0, %v3244
          %v3246 = vpop.f32.mrb[0].mxu0
          %v3247 = vpop.f32.mrb[0].mxu0
          %v3248 = vadd.f32 0.0, %v3247
          %v3249 = vpop.f32.mrb[0].mxu0
          %3250 = vmatprep.mubr.bf16.mxu0 0
          %3251 = vmatmul.mubr.bf16.gmra.mrb[0].mxu0 %v3123
          %v3252 = vpop.f32.mrb[0].mxu0
          %v3253 = vadd.f32 0.0, %v3252
          %v3254 = vpop.f32.mrb[0].mxu0
          %v3255 = vpop.f32.mrb[0].mxu0
          %v3256 = vadd.f32 0.0, %v3255
          %v3257 = vpop.f32.mrb[0].mxu0
          %3258 = vmatprep.mubr.bf16.mxu0 0
          %3259 = vmatmul.mubr.bf16.gmra.mrb[0].mxu0 %v3124
          %v3260 = vpop.f32.mrb[0].mxu0
          %v3261 = vadd.f32 0.0, %v3260
          %v3262 = vpop.f32.mrb[0].mxu0
          %v3263 = vpop.f32.mrb[0].mxu0
          %v3264 = vadd.f32 0.0, %v3263
          %v3265 = vpop.f32.mrb[0].mxu0
          %3266 = vmatprep.mubr.bf16.mxu0 0
          %3267 = vmatmul.mubr.bf16.gmra.mrb[0].mxu0 %v3125
          %v3268 = vpop.f32.mrb[0].mxu0
          %v3269 = vadd.f32 0.0, %v3268
          %v3270 = vpop.f32.mrb[0].mxu0
          %v3271 = vpop.f32.mrb[0].mxu0
          %v3272 = vadd.f32 0.0, %v3271
          %v3273 = vpop.f32.mrb[0].mxu0
          %3274 = vmatprep.mubr.bf16.mxu0 0
          %3275 = vmatmul.mubr.bf16.gmra.mrb[0].mxu0 %v3126
          %v3276 = vpop.f32.mrb[0].mxu0
          %v3277 = vadd.f32 0.0, %v3276
          %v3278 = vpop.f32.mrb[0].mxu0
          %v3279 = vpop.f32.mrb[0].mxu0
          %v3280 = vadd.f32 0.0, %v3279
          %v3281 = vpop.f32.mrb[0].mxu0
          %3282 = vmatprep.mubr.bf16.mxu0 0
          %3283 = vmatmul.mubr.bf16.gmra.mrb[0].mxu0 %v3127
          %v3284 = vpop.f32.mrb[0].mxu0
          %v3285 = vadd.f32 0.0, %v3284
          %v3286 = vpop.f32.mrb[0].mxu0
          %v3287 = vpop.f32.mrb[0].mxu0
          %v3288 = vadd.f32 0.0, %v3287
          %v3289 = vpop.f32.mrb[0].mxu0
          %3290 = vmatprep.mubr.bf16.mxu0 0
          %3291 = vmatmul.mubr.bf16.gmra.mrb[0].mxu0 %v3128
          %v3292 = vpop.f32.mrb[0].mxu0
          %v3293 = vadd.f32 0.0, %v3292
          %v3294 = vpop.f32.mrb[0].mxu0
          %v3295 = vpop.f32.mrb[0].mxu0
          %v3296 = vadd.f32 0.0, %v3295
          %v3297 = vpop.f32.mrb[0].mxu0
          %3298 = vmatprep.mubr.bf16.mxu0 0
          %3299 = vmatmul.mubr.bf16.gmra.mrb[0].mxu0 %v3129
          %v3300 = vpop.f32.mrb[0].mxu0
          %v3301 = vadd.f32 0.0, %v3300
          %v3302 = vpop.f32.mrb[0].mxu0
          %v3303 = vpop.f32.mrb[0].mxu0
          %v3304 = vadd.f32 0.0, %v3303
          %v3305 = vpop.f32.mrb[0].mxu0
          %3306 = vdwg.mxu0
          %3307 = vmatprep.subr.mxu0 0.0
          %3308 = vmatpush1.msra.mxu0 %v1572
          %3309 = vmatprep.subr.mxu0 0.0
          %3310 = vmatpush1.msra.mxu0 %v1573
          %3311 = vmatprep.subr.mxu0 0.0
          %3312 = vmatpush1.msra.mxu0 %v1574
          %3313 = vmatprep.subr.mxu0 0.0
          %3314 = vmatpush1.msra.mxu0 %v1575
          %3315 = vmatprep.subr.mxu0 0.0
          %3316 = vmatpush1.msra.mxu0 %v1576
          %3317 = vmatprep.subr.mxu0 0.0
          %3318 = vmatpush1.msra.mxu0 %v1577
          %3319 = vmatprep.subr.mxu0 0.0
          %3320 = vmatpush1.msra.mxu0 %v1578
          %3321 = vmatprep.subr.mxu0 0.0
          %3322 = vmatpush1.msra.mxu0 %v1579
          %3323 = vmatprep.subr.mxu0 0.0
          %3324 = vmatpush1.msra.mxu0 %v1580
          %3325 = vmatprep.subr.mxu0 0.0
          %3326 = vmatpush1.msra.mxu0 %v1581
          %3327 = vmatprep.subr.mxu0 0.0
          %3328 = vmatpush1.msra.mxu0 %v1582
          %3329 = vmatprep.subr.mxu0 0.0
          %3330 = vmatpush1.msra.mxu0 %v1583
          %3331 = vmatprep.subr.mxu0 0.0
          %3332 = vmatpush1.msra.mxu0 %v1584
          %3333 = vmatprep.subr.mxu0 0.0
          %3334 = vmatpush1.msra.mxu0 %v1585
          %3335 = vmatprep.subr.mxu0 0.0
          %3336 = vmatpush1.msra.mxu0 %v1586
          %3337 = vmatprep.subr.mxu0 0.0
          %3338 = vmatpush1.msra.mxu0 %v1587
          %3339 = vmatprep.subr.mxu0 0.0
          %3340 = vmatpush1.msra.mxu0 0.0
          %3341 = vmatprep.subr.mxu0 0.0
          %3342 = vmatpush1.msra.mxu0 0.0
          %3343 = vmatprep.subr.mxu0 0.0
          %3344 = vmatpush1.msra.mxu0 0.0
          %3345 = vmatprep.subr.mxu0 0.0
          %3346 = vmatpush1.msra.mxu0 0.0
          %3347 = vmatprep.subr.mxu0 0.0
          %3348 = vmatpush1.msra.mxu0 0.0
          %3349 = vmatprep.subr.mxu0 0.0
          %3350 = vmatpush1.msra.mxu0 0.0
          %3351 = vmatprep.subr.mxu0 0.0
          %3352 = vmatpush1.msra.mxu0 0.0
          %3353 = vmatprep.subr.mxu0 0.0
          %3354 = vmatpush1.msra.mxu0 0.0
          %3355 = vmatprep.subr.mxu0 0.0
          %3356 = vmatpush1.msra.mxu0 0.0
          %3357 = vmatprep.subr.mxu0 0.0
          %3358 = vmatpush1.msra.mxu0 0.0
          %3359 = vmatprep.subr.mxu0 0.0
          %3360 = vmatpush1.msra.mxu0 0.0
          %3361 = vmatprep.subr.mxu0 0.0
          %3362 = vmatpush1.msra.mxu0 0.0
          %3363 = vmatprep.subr.mxu0 0.0
          %3364 = vmatpush1.msra.mxu0 0.0
          %3365 = vmatprep.subr.mxu0 0.0
          %3366 = vmatpush1.msra.mxu0 0.0
          %3367 = vmatprep.subr.mxu0 0.0
          %3368 = vmatpush1.msra.mxu0 0.0
          %3369 = vmatprep.subr.mxu0 0.0
          %3370 = vmatpush1.msra.mxu0 0.0
          %3371 = vmatprep.mubr.f32.mxu0 0.0
          %3372 = vmatmul.mubr.f32.gmra.mrb[0].mxu0 %v3010
          %v3373 = vpop.f32.mrb[0].mxu0
          %v3374 = vadd.f32 0.0, %v3373
          %v3375 = vpop.f32.mrb[0].mxu0
          %3376 = vmatprep.mubr.f32.mxu0 0.0
          %3377 = vmatmul.mubr.f32.gmra.mrb[0].mxu0 %v3011
          %v3378 = vpop.f32.mrb[0].mxu0
          %v3379 = vadd.f32 0.0, %v3378
          %v3380 = vpop.f32.mrb[0].mxu0
          %3381 = vmatprep.mubr.f32.mxu0 0.0
          %3382 = vmatmul.mubr.f32.gmra.mrb[0].mxu0 %v3012
          %v3383 = vpop.f32.mrb[0].mxu0
          %v3384 = vadd.f32 0.0, %v3383
          %v3385 = vpop.f32.mrb[0].mxu0
          %3386 = vmatprep.mubr.f32.mxu0 0.0
          %3387 = vmatmul.mubr.f32.gmra.mrb[0].mxu0 %v3013
          %v3388 = vpop.f32.mrb[0].mxu0
          %v3389 = vadd.f32 0.0, %v3388
          %v3390 = vpop.f32.mrb[0].mxu0
          %3391 = vmatprep.mubr.f32.mxu0 0.0
          %3392 = vmatmul.mubr.f32.gmra.mrb[0].mxu0 %v3014
          %v3393 = vpop.f32.mrb[0].mxu0
          %v3394 = vadd.f32 0.0, %v3393
          %v3395 = vpop.f32.mrb[0].mxu0
          %3396 = vmatprep.mubr.f32.mxu0 0.0
          %3397 = vmatmul.mubr.f32.gmra.mrb[0].mxu0 %v3015
          %v3398 = vpop.f32.mrb[0].mxu0
          %v3399 = vadd.f32 0.0, %v3398
          %v3400 = vpop.f32.mrb[0].mxu0
          %3401 = vmatprep.mubr.f32.mxu0 0.0
          %3402 = vmatmul.mubr.f32.gmra.mrb[0].mxu0 %v3016
          %v3403 = vpop.f32.mrb[0].mxu0
          %v3404 = vadd.f32 0.0, %v3403
          %v3405 = vpop.f32.mrb[0].mxu0
          %3406 = vmatprep.mubr.f32.mxu0 0.0
          %3407 = vmatmul.mubr.f32.gmra.mrb[0].mxu0 %v3017
          %v3408 = vpop.f32.mrb[0].mxu0
          %v3409 = vadd.f32 0.0, %v3408
          %v3410 = vpop.f32.mrb[0].mxu0
          %3411 = vmatprep.mubr.f32.mxu0 0.0
          %3412 = vmatmul.mubr.f32.gmra.mrb[0].mxu0 %v3018
          %v3413 = vpop.f32.mrb[0].mxu0
          %v3414 = vadd.f32 0.0, %v3413
          %v3415 = vpop.f32.mrb[0].mxu0
          %3416 = vmatprep.mubr.f32.mxu0 0.0
          %3417 = vmatmul.mubr.f32.gmra.mrb[0].mxu0 %v3019
          %v3418 = vpop.f32.mrb[0].mxu0
          %v3419 = vadd.f32 0.0, %v3418
          %v3420 = vpop.f32.mrb[0].mxu0
          %3421 = vmatprep.mubr.f32.mxu0 0.0
          %3422 = vmatmul.mubr.f32.gmra.mrb[0].mxu0 %v3020
          %v3423 = vpop.f32.mrb[0].mxu0
          %v3424 = vadd.f32 0.0, %v3423
          %v3425 = vpop.f32.mrb[0].mxu0
          %3426 = vmatprep.mubr.f32.mxu0 0.0
          %3427 = vmatmul.mubr.f32.gmra.mrb[0].mxu0 %v3021
          %v3428 = vpop.f32.mrb[0].mxu0
          %v3429 = vadd.f32 0.0, %v3428
          %v3430 = vpop.f32.mrb[0].mxu0
          %3431 = vmatprep.mubr.f32.mxu0 0.0
          %3432 = vmatmul.mubr.f32.gmra.mrb[0].mxu0 %v3022
          %v3433 = vpop.f32.mrb[0].mxu0
          %v3434 = vadd.f32 0.0, %v3433
          %v3435 = vpop.f32.mrb[0].mxu0
          %3436 = vmatprep.mubr.f32.mxu0 0.0
          %3437 = vmatmul.mubr.f32.gmra.mrb[0].mxu0 %v3023
          %v3438 = vpop.f32.mrb[0].mxu0
          %v3439 = vadd.f32 0.0, %v3438
          %v3440 = vpop.f32.mrb[0].mxu0
          %3441 = vmatprep.mubr.f32.mxu0 0.0
          %3442 = vmatmul.mubr.f32.gmra.mrb[0].mxu0 %v3024
          %v3443 = vpop.f32.mrb[0].mxu0
          %v3444 = vadd.f32 0.0, %v3443
          %v3445 = vpop.f32.mrb[0].mxu0
          %3446 = vmatprep.mubr.f32.mxu0 0.0
          %3447 = vmatmul.mubr.f32.gmra.mrb[0].mxu0 %v3025
          %v3448 = vpop.f32.mrb[0].mxu0
          %v3449 = vadd.f32 0.0, %v3448
          %v3450 = vpop.f32.mrb[0].mxu0
          %3451 = vmatprep.mubr.f32.mxu0 0.0
          %3452 = vmatmul.mubr.f32.gmra.mrb[0].mxu0 %v3026
          %v3453 = vpop.f32.mrb[0].mxu0
          %v3454 = vadd.f32 0.0, %v3453
          %v3455 = vpop.f32.mrb[0].mxu0
          %3456 = vmatprep.mubr.f32.mxu0 0.0
          %3457 = vmatmul.mubr.f32.gmra.mrb[0].mxu0 %v3027
          %v3458 = vpop.f32.mrb[0].mxu0
          %v3459 = vadd.f32 0.0, %v3458
          %v3460 = vpop.f32.mrb[0].mxu0
          %3461 = vmatprep.mubr.f32.mxu0 0.0
          %3462 = vmatmul.mubr.f32.gmra.mrb[0].mxu0 %v3028
          %v3463 = vpop.f32.mrb[0].mxu0
          %v3464 = vadd.f32 0.0, %v3463
          %v3465 = vpop.f32.mrb[0].mxu0
          %3466 = vmatprep.mubr.f32.mxu0 0.0
          %3467 = vmatmul.mubr.f32.gmra.mrb[0].mxu0 %v3029
          %v3468 = vpop.f32.mrb[0].mxu0
          %v3469 = vadd.f32 0.0, %v3468
          %v3470 = vpop.f32.mrb[0].mxu0
          %3471 = vmatprep.mubr.f32.mxu0 0.0
          %3472 = vmatmul.mubr.f32.gmra.mrb[0].mxu0 %v3030
          %v3473 = vpop.f32.mrb[0].mxu0
          %v3474 = vadd.f32 0.0, %v3473
          %v3475 = vpop.f32.mrb[0].mxu0
          %3476 = vmatprep.mubr.f32.mxu0 0.0
          %3477 = vmatmul.mubr.f32.gmra.mrb[0].mxu0 %v3031
          %v3478 = vpop.f32.mrb[0].mxu0
          %v3479 = vadd.f32 0.0, %v3478
          %v3480 = vpop.f32.mrb[0].mxu0
          %3481 = vmatprep.mubr.f32.mxu0 0.0
          %3482 = vmatmul.mubr.f32.gmra.mrb[0].mxu0 %v3032
          %v3483 = vpop.f32.mrb[0].mxu0
          %v3484 = vadd.f32 0.0, %v3483
          %v3485 = vpop.f32.mrb[0].mxu0
          %3486 = vmatprep.mubr.f32.mxu0 0.0
          %3487 = vmatmul.mubr.f32.gmra.mrb[0].mxu0 %v3033
          %v3488 = vpop.f32.mrb[0].mxu0
          %v3489 = vadd.f32 0.0, %v3488
          %v3490 = vpop.f32.mrb[0].mxu0
          %3491 = vmatprep.mubr.f32.mxu0 0.0
          %3492 = vmatmul.mubr.f32.gmra.mrb[0].mxu0 %v3034
          %v3493 = vpop.f32.mrb[0].mxu0
          %v3494 = vadd.f32 0.0, %v3493
          %v3495 = vpop.f32.mrb[0].mxu0
          %3496 = vmatprep.mubr.f32.mxu0 0.0
          %3497 = vmatmul.mubr.f32.gmra.mrb[0].mxu0 %v3035
          %v3498 = vpop.f32.mrb[0].mxu0
          %v3499 = vadd.f32 0.0, %v3498
          %v3500 = vpop.f32.mrb[0].mxu0
          %3501 = vmatprep.mubr.f32.mxu0 0.0
          %3502 = vmatmul.mubr.f32.gmra.mrb[0].mxu0 %v3036
          %v3503 = vpop.f32.mrb[0].mxu0
          %v3504 = vadd.f32 0.0, %v3503
          %v3505 = vpop.f32.mrb[0].mxu0
          %3506 = vmatprep.mubr.f32.mxu0 0.0
          %3507 = vmatmul.mubr.f32.gmra.mrb[0].mxu0 %v3037
          %v3508 = vpop.f32.mrb[0].mxu0
          %v3509 = vadd.f32 0.0, %v3508
          %v3510 = vpop.f32.mrb[0].mxu0
          %3511 = vmatprep.mubr.f32.mxu0 0.0
          %3512 = vmatmul.mubr.f32.gmra.mrb[0].mxu0 %v3038
          %v3513 = vpop.f32.mrb[0].mxu0
          %v3514 = vadd.f32 0.0, %v3513
          %v3515 = vpop.f32.mrb[0].mxu0
          %3516 = vmatprep.mubr.f32.mxu0 0.0
          %3517 = vmatmul.mubr.f32.gmra.mrb[0].mxu0 %v3039
          %v3518 = vpop.f32.mrb[0].mxu0
          %v3519 = vadd.f32 0.0, %v3518
          %v3520 = vpop.f32.mrb[0].mxu0
          %3521 = vmatprep.mubr.f32.mxu0 0.0
          %3522 = vmatmul.mubr.f32.gmra.mrb[0].mxu0 %v3040
          %v3523 = vpop.f32.mrb[0].mxu0
          %v3524 = vadd.f32 0.0, %v3523
          %v3525 = vpop.f32.mrb[0].mxu0
          %3526 = vmatprep.mubr.f32.mxu0 0.0
          %3527 = vmatmul.mubr.f32.gmra.mrb[0].mxu0 %v3041
          %v3528 = vpop.f32.mrb[0].mxu0
          %v3529 = vadd.f32 0.0, %v3528
          %v3530 = vpop.f32.mrb[0].mxu0
          %3531 = vdwg.mxu0
          %3532 = vmatprep.subr.mxu0 0.0
          %3533 = vmatpush1.msra.mxu0 %v1556
          %3534 = vmatprep.subr.mxu0 0.0
          %3535 = vmatpush1.msra.mxu0 %v1557
          %3536 = vmatprep.subr.mxu0 0.0
          %3537 = vmatpush1.msra.mxu0 %v1558
          %3538 = vmatprep.subr.mxu0 0.0
          %3539 = vmatpush1.msra.mxu0 %v1559
          %3540 = vmatprep.subr.mxu0 0.0
          %3541 = vmatpush1.msra.mxu0 %v1560
          %3542 = vmatprep.subr.mxu0 0.0
          %3543 = vmatpush1.msra.mxu0 %v1561
          %3544 = vmatprep.subr.mxu0 0.0
          %3545 = vmatpush1.msra.mxu0 %v1562
          %3546 = vmatprep.subr.mxu0 0.0
          %3547 = vmatpush1.msra.mxu0 %v1563
          %3548 = vmatprep.subr.mxu0 0.0
          %3549 = vmatpush1.msra.mxu0 %v1564
          %3550 = vmatprep.subr.mxu0 0.0
          %3551 = vmatpush1.msra.mxu0 %v1565
          %3552 = vmatprep.subr.mxu0 0.0
          %3553 = vmatpush1.msra.mxu0 %v1566
          %3554 = vmatprep.subr.mxu0 0.0
          %3555 = vmatpush1.msra.mxu0 %v1567
          %3556 = vmatprep.subr.mxu0 0.0
          %3557 = vmatpush1.msra.mxu0 %v1568
          %3558 = vmatprep.subr.mxu0 0.0
          %3559 = vmatpush1.msra.mxu0 %v1569
          %3560 = vmatprep.subr.mxu0 0.0
          %3561 = vmatpush1.msra.mxu0 %v1570
          %3562 = vmatprep.subr.mxu0 0.0
          %3563 = vmatpush1.msra.mxu0 %v1571
          %3564 = vmatprep.subr.mxu0 0.0
          %3565 = vmatpush1.msra.mxu0 0.0
          %3566 = vmatprep.subr.mxu0 0.0
          %3567 = vmatpush1.msra.mxu0 0.0
          %3568 = vmatprep.subr.mxu0 0.0
          %3569 = vmatpush1.msra.mxu0 0.0
          %3570 = vmatprep.subr.mxu0 0.0
          %3571 = vmatpush1.msra.mxu0 0.0
          %3572 = vmatprep.subr.mxu0 0.0
          %3573 = vmatpush1.msra.mxu0 0.0
          %3574 = vmatprep.subr.mxu0 0.0
          %3575 = vmatpush1.msra.mxu0 0.0
          %3576 = vmatprep.subr.mxu0 0.0
          %3577 = vmatpush1.msra.mxu0 0.0
          %3578 = vmatprep.subr.mxu0 0.0
          %3579 = vmatpush1.msra.mxu0 0.0
          %3580 = vmatprep.subr.mxu0 0.0
          %3581 = vmatpush1.msra.mxu0 0.0
          %3582 = vmatprep.subr.mxu0 0.0
          %3583 = vmatpush1.msra.mxu0 0.0
          %3584 = vmatprep.subr.mxu0 0.0
          %3585 = vmatpush1.msra.mxu0 0.0
          %3586 = vmatprep.subr.mxu0 0.0
          %3587 = vmatpush1.msra.mxu0 0.0
          %3588 = vmatprep.subr.mxu0 0.0
          %3589 = vmatpush1.msra.mxu0 0.0
          %3590 = vmatprep.subr.mxu0 0.0
          %3591 = vmatpush1.msra.mxu0 0.0
          %3592 = vmatprep.subr.mxu0 0.0
          %3593 = vmatpush1.msra.mxu0 0.0
          %3594 = vmatprep.subr.mxu0 0.0
          %3595 = vmatpush1.msra.mxu0 0.0
          %3596 = vmatprep.mubr.f32.mxu0 0.0
          %3597 = vmatmul.mubr.f32.gmra.mrb[0].mxu0 %v3181
          %v3598 = vpop.f32.mrb[0].mxu0
          %v3599 = vadd.f32 %v3374, %v3598
          %v3600 = vpop.f32.mrb[0].mxu0
          %3601 = vmatprep.mubr.f32.mxu0 0.0
          %3602 = vmatmul.mubr.f32.gmra.mrb[0].mxu0 %v3184
          %v3603 = vpop.f32.mrb[0].mxu0
          %v3604 = vadd.f32 %v3379, %v3603
          %v3605 = vpop.f32.mrb[0].mxu0
          %3606 = vmatprep.mubr.f32.mxu0 0.0
          %3607 = vmatmul.mubr.f32.gmra.mrb[0].mxu0 %v3189
          %v3608 = vpop.f32.mrb[0].mxu0
          %v3609 = vadd.f32 %v3384, %v3608
          %v3610 = vpop.f32.mrb[0].mxu0
          %3611 = vmatprep.mubr.f32.mxu0 0.0
          %3612 = vmatmul.mubr.f32.gmra.mrb[0].mxu0 %v3192
          %v3613 = vpop.f32.mrb[0].mxu0
          %v3614 = vadd.f32 %v3389, %v3613
          %v3615 = vpop.f32.mrb[0].mxu0
          %3616 = vmatprep.mubr.f32.mxu0 0.0
          %3617 = vmatmul.mubr.f32.gmra.mrb[0].mxu0 %v3197
          %v3618 = vpop.f32.mrb[0].mxu0
          %v3619 = vadd.f32 %v3394, %v3618
          %v3620 = vpop.f32.mrb[0].mxu0
          %3621 = vmatprep.mubr.f32.mxu0 0.0
          %3622 = vmatmul.mubr.f32.gmra.mrb[0].mxu0 %v3200
          %v3623 = vpop.f32.mrb[0].mxu0
          %v3624 = vadd.f32 %v3399, %v3623
          %v3625 = vpop.f32.mrb[0].mxu0
          %3626 = vmatprep.mubr.f32.mxu0 0.0
          %3627 = vmatmul.mubr.f32.gmra.mrb[0].mxu0 %v3205
          %v3628 = vpop.f32.mrb[0].mxu0
          %v3629 = vadd.f32 %v3404, %v3628
          %v3630 = vpop.f32.mrb[0].mxu0
          %3631 = vmatprep.mubr.f32.mxu0 0.0
          %3632 = vmatmul.mubr.f32.gmra.mrb[0].mxu0 %v3208
          %v3633 = vpop.f32.mrb[0].mxu0
          %v3634 = vadd.f32 %v3409, %v3633
          %v3635 = vpop.f32.mrb[0].mxu0
          %3636 = vmatprep.mubr.f32.mxu0 0.0
          %3637 = vmatmul.mubr.f32.gmra.mrb[0].mxu0 %v3213
          %v3638 = vpop.f32.mrb[0].mxu0
          %v3639 = vadd.f32 %v3414, %v3638
          %v3640 = vpop.f32.mrb[0].mxu0
          %3641 = vmatprep.mubr.f32.mxu0 0.0
          %3642 = vmatmul.mubr.f32.gmra.mrb[0].mxu0 %v3216
          %v3643 = vpop.f32.mrb[0].mxu0
          %v3644 = vadd.f32 %v3419, %v3643
          %v3645 = vpop.f32.mrb[0].mxu0
          %3646 = vmatprep.mubr.f32.mxu0 0.0
          %3647 = vmatmul.mubr.f32.gmra.mrb[0].mxu0 %v3221
          %v3648 = vpop.f32.mrb[0].mxu0
          %v3649 = vadd.f32 %v3424, %v3648
          %v3650 = vpop.f32.mrb[0].mxu0
          %3651 = vmatprep.mubr.f32.mxu0 0.0
          %3652 = vmatmul.mubr.f32.gmra.mrb[0].mxu0 %v3224
          %v3653 = vpop.f32.mrb[0].mxu0
          %v3654 = vadd.f32 %v3429, %v3653
          %v3655 = vpop.f32.mrb[0].mxu0
          %3656 = vmatprep.mubr.f32.mxu0 0.0
          %3657 = vmatmul.mubr.f32.gmra.mrb[0].mxu0 %v3229
          %v3658 = vpop.f32.mrb[0].mxu0
          %v3659 = vadd.f32 %v3434, %v3658
          %v3660 = vpop.f32.mrb[0].mxu0
          %3661 = vmatprep.mubr.f32.mxu0 0.0
          %3662 = vmatmul.mubr.f32.gmra.mrb[0].mxu0 %v3232
          %v3663 = vpop.f32.mrb[0].mxu0
          %v3664 = vadd.f32 %v3439, %v3663
          %v3665 = vpop.f32.mrb[0].mxu0
          %3666 = vmatprep.mubr.f32.mxu0 0.0
          %3667 = vmatmul.mubr.f32.gmra.mrb[0].mxu0 %v3237
          %v3668 = vpop.f32.mrb[0].mxu0
          %v3669 = vadd.f32 %v3444, %v3668
          %v3670 = vpop.f32.mrb[0].mxu0
          %3671 = vmatprep.mubr.f32.mxu0 0.0
          %3672 = vmatmul.mubr.f32.gmra.mrb[0].mxu0 %v3240
          %v3673 = vpop.f32.mrb[0].mxu0
          %v3674 = vadd.f32 %v3449, %v3673
          %v3675 = vpop.f32.mrb[0].mxu0
          %3676 = vmatprep.mubr.f32.mxu0 0.0
          %3677 = vmatmul.mubr.f32.gmra.mrb[0].mxu0 %v3245
          %v3678 = vpop.f32.mrb[0].mxu0
          %v3679 = vadd.f32 %v3454, %v3678
          %v3680 = vpop.f32.mrb[0].mxu0
          %3681 = vmatprep.mubr.f32.mxu0 0.0
          %3682 = vmatmul.mubr.f32.gmra.mrb[0].mxu0 %v3248
          %v3683 = vpop.f32.mrb[0].mxu0
          %v3684 = vadd.f32 %v3459, %v3683
          %v3685 = vpop.f32.mrb[0].mxu0
          %3686 = vmatprep.mubr.f32.mxu0 0.0
          %3687 = vmatmul.mubr.f32.gmra.mrb[0].mxu0 %v3253
          %v3688 = vpop.f32.mrb[0].mxu0
          %v3689 = vadd.f32 %v3464, %v3688
          %v3690 = vpop.f32.mrb[0].mxu0
          %3691 = vmatprep.mubr.f32.mxu0 0.0
          %3692 = vmatmul.mubr.f32.gmra.mrb[0].mxu0 %v3256
          %v3693 = vpop.f32.mrb[0].mxu0
          %v3694 = vadd.f32 %v3469, %v3693
          %v3695 = vpop.f32.mrb[0].mxu0
          %3696 = vmatprep.mubr.f32.mxu0 0.0
          %3697 = vmatmul.mubr.f32.gmra.mrb[0].mxu0 %v3261
          %v3698 = vpop.f32.mrb[0].mxu0
          %v3699 = vadd.f32 %v3474, %v3698
          %v3700 = vpop.f32.mrb[0].mxu0
          %3701 = vmatprep.mubr.f32.mxu0 0.0
          %3702 = vmatmul.mubr.f32.gmra.mrb[0].mxu0 %v3264
          %v3703 = vpop.f32.mrb[0].mxu0
          %v3704 = vadd.f32 %v3479, %v3703
          %v3705 = vpop.f32.mrb[0].mxu0
          %3706 = vmatprep.mubr.f32.mxu0 0.0
          %3707 = vmatmul.mubr.f32.gmra.mrb[0].mxu0 %v3269
          %v3708 = vpop.f32.mrb[0].mxu0
          %v3709 = vadd.f32 %v3484, %v3708
          %v3710 = vpop.f32.mrb[0].mxu0
          %3711 = vmatprep.mubr.f32.mxu0 0.0
          %3712 = vmatmul.mubr.f32.gmra.mrb[0].mxu0 %v3272
          %v3713 = vpop.f32.mrb[0].mxu0
          %v3714 = vadd.f32 %v3489, %v3713
          %v3715 = vpop.f32.mrb[0].mxu0
          %3716 = vmatprep.mubr.f32.mxu0 0.0
          %3717 = vmatmul.mubr.f32.gmra.mrb[0].mxu0 %v3277
          %v3718 = vpop.f32.mrb[0].mxu0
          %v3719 = vadd.f32 %v3494, %v3718
          %v3720 = vpop.f32.mrb[0].mxu0
          %3721 = vmatprep.mubr.f32.mxu0 0.0
          %3722 = vmatmul.mubr.f32.gmra.mrb[0].mxu0 %v3280
          %v3723 = vpop.f32.mrb[0].mxu0
          %v3724 = vadd.f32 %v3499, %v3723
          %v3725 = vpop.f32.mrb[0].mxu0
          %3726 = vmatprep.mubr.f32.mxu0 0.0
          %3727 = vmatmul.mubr.f32.gmra.mrb[0].mxu0 %v3285
          %v3728 = vpop.f32.mrb[0].mxu0
          %v3729 = vadd.f32 %v3504, %v3728
          %v3730 = vpop.f32.mrb[0].mxu0
          %3731 = vmatprep.mubr.f32.mxu0 0.0
          %3732 = vmatmul.mubr.f32.gmra.mrb[0].mxu0 %v3288
          %v3733 = vpop.f32.mrb[0].mxu0
          %v3734 = vadd.f32 %v3509, %v3733
          %v3735 = vpop.f32.mrb[0].mxu0
          %3736 = vmatprep.mubr.f32.mxu0 0.0
          %3737 = vmatmul.mubr.f32.gmra.mrb[0].mxu0 %v3293
          %v3738 = vpop.f32.mrb[0].mxu0
          %v3739 = vadd.f32 %v3514, %v3738
          %v3740 = vpop.f32.mrb[0].mxu0
          %3741 = vmatprep.mubr.f32.mxu0 0.0
          %3742 = vmatmul.mubr.f32.gmra.mrb[0].mxu0 %v3296
          %v3743 = vpop.f32.mrb[0].mxu0
          %v3744 = vadd.f32 %v3519, %v3743
          %v3745 = vpop.f32.mrb[0].mxu0
          %3746 = vmatprep.mubr.f32.mxu0 0.0
          %3747 = vmatmul.mubr.f32.gmra.mrb[0].mxu0 %v3301
          %v3748 = vpop.f32.mrb[0].mxu0
          %v3749 = vadd.f32 %v3524, %v3748
          %v3750 = vpop.f32.mrb[0].mxu0
          %3751 = vmatprep.mubr.f32.mxu0 0.0
          %3752 = vmatmul.mubr.f32.gmra.mrb[0].mxu0 %v3304
          %v3753 = vpop.f32.mrb[0].mxu0
          %v3754 = vadd.f32 %v3529, %v3753
          %v3755 = vpop.f32.mrb[0].mxu0
          %3756 = vdwg.mxu0
          %v3758 = vlaneseq
          %v3759 = vshrl.u32 %v3758, 7
          %v3760 = vsub.s32 0, %v3759
          %v3761 = vrot.slane %v1588, %v3760
          %v3763 = vadd.f32 %v3599, %v3761
          %v3764 = vadd.f32 %v3604, %v3761
          %v3765 = vadd.f32 %v3609, %v3761
          %v3766 = vadd.f32 %v3614, %v3761
          %v3767 = vadd.f32 %v3619, %v3761
          %v3768 = vadd.f32 %v3624, %v3761
          %v3769 = vadd.f32 %v3629, %v3761
          %v3770 = vadd.f32 %v3634, %v3761
          %v3771 = vadd.f32 %v3639, %v3761
          %v3772 = vadd.f32 %v3644, %v3761
          %v3773 = vadd.f32 %v3649, %v3761
          %v3774 = vadd.f32 %v3654, %v3761
          %v3775 = vadd.f32 %v3659, %v3761
          %v3776 = vadd.f32 %v3664, %v3761
          %v3777 = vadd.f32 %v3669, %v3761
          %v3778 = vadd.f32 %v3674, %v3761
          %v3779 = vadd.f32 %v3679, %v3761
          %v3780 = vadd.f32 %v3684, %v3761
          %v3781 = vadd.f32 %v3689, %v3761
          %v3782 = vadd.f32 %v3694, %v3761
          %v3783 = vadd.f32 %v3699, %v3761
          %v3784 = vadd.f32 %v3704, %v3761
          %v3785 = vadd.f32 %v3709, %v3761
          %v3786 = vadd.f32 %v3714, %v3761
          %v3787 = vadd.f32 %v3719, %v3761
          %v3788 = vadd.f32 %v3724, %v3761
          %v3789 = vadd.f32 %v3729, %v3761
          %v3790 = vadd.f32 %v3734, %v3761
          %v3791 = vadd.f32 %v3739, %v3761
          %v3792 = vadd.f32 %v3744, %v3761
          %v3793 = vadd.f32 %v3749, %v3761
          %v3794 = vadd.f32 %v3754, %v3761
          %vm3795 = vcmp.gt.f32.partialorder %v3763, 0.0
          %vm3796 = vcmp.gt.f32.partialorder %v3764, 0.0
          %vm3797 = vcmp.gt.f32.partialorder %v3765, 0.0
          %vm3798 = vcmp.gt.f32.partialorder %v3766, 0.0
          %vm3799 = vcmp.gt.f32.partialorder %v3767, 0.0
          %vm3800 = vcmp.gt.f32.partialorder %v3768, 0.0
          %vm3801 = vcmp.gt.f32.partialorder %v3769, 0.0
          %vm3802 = vcmp.gt.f32.partialorder %v3770, 0.0
          %vm3803 = vcmp.gt.f32.partialorder %v3771, 0.0
          %vm3804 = vcmp.gt.f32.partialorder %v3772, 0.0
          %vm3805 = vcmp.gt.f32.partialorder %v3773, 0.0
          %vm3806 = vcmp.gt.f32.partialorder %v3774, 0.0
          %vm3807 = vcmp.gt.f32.partialorder %v3775, 0.0
          %vm3808 = vcmp.gt.f32.partialorder %v3776, 0.0
          %vm3809 = vcmp.gt.f32.partialorder %v3777, 0.0
          %vm3810 = vcmp.gt.f32.partialorder %v3778, 0.0
          %vm3811 = vcmp.gt.f32.partialorder %v3779, 0.0
          %vm3812 = vcmp.gt.f32.partialorder %v3780, 0.0
          %vm3813 = vcmp.gt.f32.partialorder %v3781, 0.0
          %vm3814 = vcmp.gt.f32.partialorder %v3782, 0.0
          %vm3815 = vcmp.gt.f32.partialorder %v3783, 0.0
          %vm3816 = vcmp.gt.f32.partialorder %v3784, 0.0
          %vm3817 = vcmp.gt.f32.partialorder %v3785, 0.0
          %vm3818 = vcmp.gt.f32.partialorder %v3786, 0.0
          %vm3819 = vcmp.gt.f32.partialorder %v3787, 0.0
          %vm3820 = vcmp.gt.f32.partialorder %v3788, 0.0
          %vm3821 = vcmp.gt.f32.partialorder %v3789, 0.0
          %vm3822 = vcmp.gt.f32.partialorder %v3790, 0.0
          %vm3823 = vcmp.gt.f32.partialorder %v3791, 0.0
          %vm3824 = vcmp.gt.f32.partialorder %v3792, 0.0
          %vm3825 = vcmp.gt.f32.partialorder %v3793, 0.0
          %vm3826 = vcmp.gt.f32.partialorder %v3794, 0.0
          %v3827 = vmul.f32 %v3763, 0.01
          %v3828 = vmul.f32 %v3764, 0.01
          %v3829 = vmul.f32 %v3765, 0.01
          %v3830 = vmul.f32 %v3766, 0.01
          %v3831 = vmul.f32 %v3767, 0.01
          %v3832 = vmul.f32 %v3768, 0.01
          %v3833 = vmul.f32 %v3769, 0.01
          %v3834 = vmul.f32 %v3770, 0.01
          %v3835 = vmul.f32 %v3771, 0.01
          %v3836 = vmul.f32 %v3772, 0.01
          %v3837 = vmul.f32 %v3773, 0.01
          %v3838 = vmul.f32 %v3774, 0.01
          %v3839 = vmul.f32 %v3775, 0.01
          %v3840 = vmul.f32 %v3776, 0.01
          %v3841 = vmul.f32 %v3777, 0.01
          %v3842 = vmul.f32 %v3778, 0.01
          %v3843 = vmul.f32 %v3779, 0.01
          %v3844 = vmul.f32 %v3780, 0.01
          %v3845 = vmul.f32 %v3781, 0.01
          %v3846 = vmul.f32 %v3782, 0.01
          %v3847 = vmul.f32 %v3783, 0.01
          %v3848 = vmul.f32 %v3784, 0.01
          %v3849 = vmul.f32 %v3785, 0.01
          %v3850 = vmul.f32 %v3786, 0.01
          %v3851 = vmul.f32 %v3787, 0.01
          %v3852 = vmul.f32 %v3788, 0.01
          %v3853 = vmul.f32 %v3789, 0.01
          %v3854 = vmul.f32 %v3790, 0.01
          %v3855 = vmul.f32 %v3791, 0.01
          %v3856 = vmul.f32 %v3792, 0.01
          %v3857 = vmul.f32 %v3793, 0.01
          %v3858 = vmul.f32 %v3794, 0.01
          %v3859 = vsel %vm3795, %v3763, %v3827
          %v3860 = vsel %vm3796, %v3764, %v3828
          %v3861 = vsel %vm3797, %v3765, %v3829
          %v3862 = vsel %vm3798, %v3766, %v3830
          %v3863 = vsel %vm3799, %v3767, %v3831
          %v3864 = vsel %vm3800, %v3768, %v3832
          %v3865 = vsel %vm3801, %v3769, %v3833
          %v3866 = vsel %vm3802, %v3770, %v3834
          %v3867 = vsel %vm3803, %v3771, %v3835
          %v3868 = vsel %vm3804, %v3772, %v3836
          %v3869 = vsel %vm3805, %v3773, %v3837
          %v3870 = vsel %vm3806, %v3774, %v3838
          %v3871 = vsel %vm3807, %v3775, %v3839
          %v3872 = vsel %vm3808, %v3776, %v3840
          %v3873 = vsel %vm3809, %v3777, %v3841
          %v3874 = vsel %vm3810, %v3778, %v3842
          %v3875 = vsel %vm3811, %v3779, %v3843
          %v3876 = vsel %vm3812, %v3780, %v3844
          %v3877 = vsel %vm3813, %v3781, %v3845
          %v3878 = vsel %vm3814, %v3782, %v3846
          %v3879 = vsel %vm3815, %v3783, %v3847
          %v3880 = vsel %vm3816, %v3784, %v3848
          %v3881 = vsel %vm3817, %v3785, %v3849
          %v3882 = vsel %vm3818, %v3786, %v3850
          %v3883 = vsel %vm3819, %v3787, %v3851
          %v3884 = vsel %vm3820, %v3788, %v3852
          %v3885 = vsel %vm3821, %v3789, %v3853
          %v3886 = vsel %vm3822, %v3790, %v3854
          %v3887 = vsel %vm3823, %v3791, %v3855
          %v3888 = vsel %vm3824, %v3792, %v3856
          %v3889 = vsel %vm3825, %v3793, %v3857
          %v3890 = vsel %vm3826, %v3794, %v3858
          %3892 = vset.pattern.permute.xlu0 0
          %3893 = vperm.xlu0 %3892, %v3859
          %v3894 = vpop.permute.xlu0 %3893
          %3897 = vset.pattern.permute.xlu0 0
          %3898 = vperm.xlu0 %3897, %v3860
          %v3899 = vpop.permute.xlu0 %3898
          %3902 = vset.pattern.permute.xlu0 0
          %3903 = vperm.xlu0 %3902, %v3861
          %v3904 = vpop.permute.xlu0 %3903
          %3907 = vset.pattern.permute.xlu0 0
          %3908 = vperm.xlu0 %3907, %v3862
          %v3909 = vpop.permute.xlu0 %3908
          %3912 = vset.pattern.permute.xlu0 0
          %3913 = vperm.xlu0 %3912, %v3863
          %v3914 = vpop.permute.xlu0 %3913
          %3917 = vset.pattern.permute.xlu0 0
          %3918 = vperm.xlu0 %3917, %v3864
          %v3919 = vpop.permute.xlu0 %3918
          %3922 = vset.pattern.permute.xlu0 0
          %3923 = vperm.xlu0 %3922, %v3865
          %v3924 = vpop.permute.xlu0 %3923
          %3927 = vset.pattern.permute.xlu0 0
          %3928 = vperm.xlu0 %3927, %v3866
          %v3929 = vpop.permute.xlu0 %3928
          %3932 = vset.pattern.permute.xlu0 0
          %3933 = vperm.xlu0 %3932, %v3867
          %v3934 = vpop.permute.xlu0 %3933
          %3937 = vset.pattern.permute.xlu0 0
          %3938 = vperm.xlu0 %3937, %v3868
          %v3939 = vpop.permute.xlu0 %3938
          %3942 = vset.pattern.permute.xlu0 0
          %3943 = vperm.xlu0 %3942, %v3869
          %v3944 = vpop.permute.xlu0 %3943
          %3947 = vset.pattern.permute.xlu0 0
          %3948 = vperm.xlu0 %3947, %v3870
          %v3949 = vpop.permute.xlu0 %3948
          %3952 = vset.pattern.permute.xlu0 0
          %3953 = vperm.xlu0 %3952, %v3871
          %v3954 = vpop.permute.xlu0 %3953
          %3957 = vset.pattern.permute.xlu0 0
          %3958 = vperm.xlu0 %3957, %v3872
          %v3959 = vpop.permute.xlu0 %3958
          %3962 = vset.pattern.permute.xlu0 0
          %3963 = vperm.xlu0 %3962, %v3873
          %v3964 = vpop.permute.xlu0 %3963
          %3967 = vset.pattern.permute.xlu0 0
          %3968 = vperm.xlu0 %3967, %v3874
          %v3969 = vpop.permute.xlu0 %3968
          %3972 = vset.pattern.permute.xlu0 0
          %3973 = vperm.xlu0 %3972, %v3875
          %v3974 = vpop.permute.xlu0 %3973
          %3977 = vset.pattern.permute.xlu0 0
          %3978 = vperm.xlu0 %3977, %v3876
          %v3979 = vpop.permute.xlu0 %3978
          %3982 = vset.pattern.permute.xlu0 0
          %3983 = vperm.xlu0 %3982, %v3877
          %v3984 = vpop.permute.xlu0 %3983
          %3987 = vset.pattern.permute.xlu0 0
          %3988 = vperm.xlu0 %3987, %v3878
          %v3989 = vpop.permute.xlu0 %3988
          %3992 = vset.pattern.permute.xlu0 0
          %3993 = vperm.xlu0 %3992, %v3879
          %v3994 = vpop.permute.xlu0 %3993
          %3997 = vset.pattern.permute.xlu0 0
          %3998 = vperm.xlu0 %3997, %v3880
          %v3999 = vpop.permute.xlu0 %3998
          %4002 = vset.pattern.permute.xlu0 0
          %4003 = vperm.xlu0 %4002, %v3881
          %v4004 = vpop.permute.xlu0 %4003
          %4007 = vset.pattern.permute.xlu0 0
          %4008 = vperm.xlu0 %4007, %v3882
          %v4009 = vpop.permute.xlu0 %4008
          %4012 = vset.pattern.permute.xlu0 0
          %4013 = vperm.xlu0 %4012, %v3883
          %v4014 = vpop.permute.xlu0 %4013
          %4017 = vset.pattern.permute.xlu0 0
          %4018 = vperm.xlu0 %4017, %v3884
          %v4019 = vpop.permute.xlu0 %4018
          %4022 = vset.pattern.permute.xlu0 0
          %4023 = vperm.xlu0 %4022, %v3885
          %v4024 = vpop.permute.xlu0 %4023
          %4027 = vset.pattern.permute.xlu0 0
          %4028 = vperm.xlu0 %4027, %v3886
          %v4029 = vpop.permute.xlu0 %4028
          %4032 = vset.pattern.permute.xlu0 0
          %4033 = vperm.xlu0 %4032, %v3887
          %v4034 = vpop.permute.xlu0 %4033
          %4037 = vset.pattern.permute.xlu0 0
          %4038 = vperm.xlu0 %4037, %v3888
          %v4039 = vpop.permute.xlu0 %4038
          %4042 = vset.pattern.permute.xlu0 0
          %4043 = vperm.xlu0 %4042, %v3889
          %v4044 = vpop.permute.xlu0 %4043
          %4047 = vset.pattern.permute.xlu0 0
          %4048 = vperm.xlu0 %4047, %v3890
          %v4049 = vpop.permute.xlu0 %4048
          %v4051 = vadd.f32 %v3894, %v1508
          %v4052 = vadd.f32 %v3899, %v1509
          %v4053 = vadd.f32 %v3904, %v1510
          %v4054 = vadd.f32 %v3909, %v1511
          %v4055 = vadd.f32 %v3914, %v1512
          %v4056 = vadd.f32 %v3919, %v1513
          %v4057 = vadd.f32 %v3924, %v1514
          %v4058 = vadd.f32 %v3929, %v1515
          %v4059 = vadd.f32 %v3934, %v1516
          %v4060 = vadd.f32 %v3939, %v1517
          %v4061 = vadd.f32 %v3944, %v1518
          %v4062 = vadd.f32 %v3949, %v1519
          %v4063 = vadd.f32 %v3954, %v1520
          %v4064 = vadd.f32 %v3959, %v1521
          %v4065 = vadd.f32 %v3964, %v1522
          %v4066 = vadd.f32 %v3969, %v1523
          %v4067 = vadd.f32 %v3974, %v1524
          %v4068 = vadd.f32 %v3979, %v1525
          %v4069 = vadd.f32 %v3984, %v1526
          %v4070 = vadd.f32 %v3989, %v1527
          %v4071 = vadd.f32 %v3994, %v1528
          %v4072 = vadd.f32 %v3999, %v1529
          %v4073 = vadd.f32 %v4004, %v1530
          %v4074 = vadd.f32 %v4009, %v1531
          %v4075 = vadd.f32 %v4014, %v1532
          %v4076 = vadd.f32 %v4019, %v1533
          %v4077 = vadd.f32 %v4024, %v1534
          %v4078 = vadd.f32 %v4029, %v1535
          %v4079 = vadd.f32 %v4034, %v1536
          %v4080 = vadd.f32 %v4039, %v1537
          %v4081 = vadd.f32 %v4044, %v1538
          %v4082 = vadd.f32 %v4049, %v1539
          %v4083 = vmax.f32 %v4051, %v4055
          %v4084 = vmax.f32 %v4052, %v4056
          %v4085 = vmax.f32 %v4053, %v4057
          %v4086 = vmax.f32 %v4054, %v4058
          %v4087 = vmax.f32 %v4083, %v4059
          %v4088 = vmax.f32 %v4084, %v4060
          %v4089 = vmax.f32 %v4085, %v4061
          %v4090 = vmax.f32 %v4086, %v4062
          %v4091 = vmax.f32 %v4087, %v4063
          %v4092 = vmax.f32 %v4088, %v4064
          %v4093 = vmax.f32 %v4089, %v4065
          %v4094 = vmax.f32 %v4090, %v4066
          %v4095 = vmax.f32 %v4091, %v4067
          %v4096 = vmax.f32 %v4092, %v4068
          %v4097 = vmax.f32 %v4093, %v4069
          %v4098 = vmax.f32 %v4094, %v4070
          %v4099 = vmax.f32 %v4095, %v4071
          %v4100 = vmax.f32 %v4096, %v4072
          %v4101 = vmax.f32 %v4097, %v4073
          %v4102 = vmax.f32 %v4098, %v4074
          %v4103 = vmax.f32 %v4099, %v4075
          %v4104 = vmax.f32 %v4100, %v4076
          %v4105 = vmax.f32 %v4101, %v4077
          %v4106 = vmax.f32 %v4102, %v4078
          %v4107 = vmax.f32 %v4103, %v4079
          %v4108 = vmax.f32 %v4104, %v4080
          %v4109 = vmax.f32 %v4105, %v4081
          %v4110 = vmax.f32 %v4106, %v4082
          %v4111 = vmax.f32 %v4107, %v4108
          %v4112 = vmax.f32 %v4109, %v4110
          %v4113 = vmax.f32 %v4111, %v4112
          %v4114 = vrot.slane %v4113, 4
          %v4115 = vmax.f32 %v4113, %v4114
          %v4116 = vrot.slane %v4115, 2
          %v4117 = vmax.f32 %v4115, %v4116
          %v4118 = vrot.slane %v4117, 1
          %v4119 = vmax.f32 %v4117, %v4118
          %4120 = vxpose.xlu0.b32.start [1/16] %v4119, 128
          %4121 = vxpose.xlu0.b32.cont [2/16] 0.0, 128
          %4122 = vxpose.xlu0.b32.cont [3/16] 0.0, 128
          %4123 = vxpose.xlu0.b32.cont [4/16] 0.0, 128
          %4124 = vxpose.xlu0.b32.cont [5/16] 0.0, 128
          %4125 = vxpose.xlu0.b32.cont [6/16] 0.0, 128
          %4126 = vxpose.xlu0.b32.cont [7/16] 0.0, 128
          %4127 = vxpose.xlu0.b32.cont [8/16] 0.0, 128
          %4128 = vxpose.xlu0.b32.cont [9/16] 0.0, 128
          %4129 = vxpose.xlu0.b32.cont [10/16] 0.0, 128
          %4130 = vxpose.xlu0.b32.cont [11/16] 0.0, 128
          %4131 = vxpose.xlu0.b32.cont [12/16] 0.0, 128
          %4132 = vxpose.xlu0.b32.cont [13/16] 0.0, 128
          %4133 = vxpose.xlu0.b32.cont [14/16] 0.0, 128
          %4134 = vxpose.xlu0.b32.cont [15/16] 0.0, 128
          %4135 = vxpose.xlu0.b32.end [16/16] 0.0, 128
          %v4136 = vpop.trf.xlu0
          %v4137 = vpop.trf.xlu0
          %v4138 = vpop.trf.xlu0
          %v4139 = vpop.trf.xlu0
          %v4140 = vpop.trf.xlu0
          %v4141 = vpop.trf.xlu0
          %v4142 = vpop.trf.xlu0
          %v4143 = vpop.trf.xlu0
          %v4144 = vpop.trf.xlu0
          %v4145 = vpop.trf.xlu0
          %v4146 = vpop.trf.xlu0
          %v4147 = vpop.trf.xlu0
          %v4148 = vpop.trf.xlu0
          %v4149 = vpop.trf.xlu0
          %v4150 = vpop.trf.xlu0
          %v4151 = vpop.trf.xlu0
          %v4152 = vpack.c.bf16 %v4137, %v4136
          %v4153 = vpack.c.bf16 %v4139, %v4138
          %v4154 = vpack.c.bf16 %v4141, %v4140
          %v4155 = vpack.c.bf16 %v4143, %v4142
          %v4156 = vpack.c.bf16 %v4145, %v4144
          %v4157 = vpack.c.bf16 %v4147, %v4146
          %v4158 = vpack.c.bf16 %v4149, %v4148
          %v4159 = vpack.c.bf16 %v4151, %v4150
          %4160 = vmatprep.subr.bf16.mxu0 0
          %4161 = vmatpush1.bf16.msra.mxu0 %v4152
          %4162 = vmatprep.subr.bf16.mxu0 0
          %4163 = vmatpush1.bf16.msra.mxu0 %v4153
          %4164 = vmatprep.subr.bf16.mxu0 0
          %4165 = vmatpush1.bf16.msra.mxu0 %v4154
          %4166 = vmatprep.subr.bf16.mxu0 0
          %4167 = vmatpush1.bf16.msra.mxu0 %v4155
          %4168 = vmatprep.subr.bf16.mxu0 0
          %4169 = vmatpush1.bf16.msra.mxu0 %v4156
          %4170 = vmatprep.subr.bf16.mxu0 0
          %4171 = vmatpush1.bf16.msra.mxu0 %v4157
          %4172 = vmatprep.subr.bf16.mxu0 0
          %4173 = vmatpush1.bf16.msra.mxu0 %v4158
          %4174 = vmatprep.subr.bf16.mxu0 0
          %4175 = vmatpush1.bf16.msra.mxu0 %v4159
          %4176 = vmatprep.subr.bf16.mxu0 0
          %4177 = vmatpush1.bf16.msra.mxu0 0
          %4178 = vmatprep.subr.bf16.mxu0 0
          %4179 = vmatpush1.bf16.msra.mxu0 0
          %4180 = vmatprep.subr.bf16.mxu0 0
          %4181 = vmatpush1.bf16.msra.mxu0 0
          %4182 = vmatprep.subr.bf16.mxu0 0
          %4183 = vmatpush1.bf16.msra.mxu0 0
          %4184 = vmatprep.subr.bf16.mxu0 0
          %4185 = vmatpush1.bf16.msra.mxu0 0
          %4186 = vmatprep.subr.bf16.mxu0 0
          %4187 = vmatpush1.bf16.msra.mxu0 0
          %4188 = vmatprep.subr.bf16.mxu0 0
          %4189 = vmatpush1.bf16.msra.mxu0 0
          %4190 = vmatprep.subr.bf16.mxu0 0
          %4191 = vmatpush1.bf16.msra.mxu0 0
          %4192 = vmatprep.mubr.bf16.mxu0 0
          %4193 = vmatmul.mubr.bf16.gmra.mrb[0].mxu0 %v3114
          %v4194 = vpop.f32.mrb[0].mxu0
          %v4195 = vadd.f32 0.0, %v4194
          %v4196 = vpop.f32.mrb[0].mxu0
          %v4197 = vpop.f32.mrb[0].mxu0
          %v4198 = vadd.f32 0.0, %v4197
          %v4199 = vpop.f32.mrb[0].mxu0
          %4200 = vmatprep.mubr.bf16.mxu0 0
          %4201 = vmatmul.mubr.bf16.gmra.mrb[0].mxu0 %v3115
          %v4202 = vpop.f32.mrb[0].mxu0
          %v4203 = vadd.f32 0.0, %v4202
          %v4204 = vpop.f32.mrb[0].mxu0
          %v4205 = vpop.f32.mrb[0].mxu0
          %v4206 = vadd.f32 0.0, %v4205
          %v4207 = vpop.f32.mrb[0].mxu0
          %4208 = vmatprep.mubr.bf16.mxu0 0
          %4209 = vmatmul.mubr.bf16.gmra.mrb[0].mxu0 %v3116
          %v4210 = vpop.f32.mrb[0].mxu0
          %v4211 = vadd.f32 0.0, %v4210
          %v4212 = vpop.f32.mrb[0].mxu0
          %v4213 = vpop.f32.mrb[0].mxu0
          %v4214 = vadd.f32 0.0, %v4213
          %v4215 = vpop.f32.mrb[0].mxu0
          %4216 = vmatprep.mubr.bf16.mxu0 0
          %4217 = vmatmul.mubr.bf16.gmra.mrb[0].mxu0 %v3117
          %v4218 = vpop.f32.mrb[0].mxu0
          %v4219 = vadd.f32 0.0, %v4218
          %v4220 = vpop.f32.mrb[0].mxu0
          %v4221 = vpop.f32.mrb[0].mxu0
          %v4222 = vadd.f32 0.0, %v4221
          %v4223 = vpop.f32.mrb[0].mxu0
          %4224 = vmatprep.mubr.bf16.mxu0 0
          %4225 = vmatmul.mubr.bf16.gmra.mrb[0].mxu0 %v3118
          %v4226 = vpop.f32.mrb[0].mxu0
          %v4227 = vadd.f32 0.0, %v4226
          %v4228 = vpop.f32.mrb[0].mxu0
          %v4229 = vpop.f32.mrb[0].mxu0
          %v4230 = vadd.f32 0.0, %v4229
          %v4231 = vpop.f32.mrb[0].mxu0
          %4232 = vmatprep.mubr.bf16.mxu0 0
          %4233 = vmatmul.mubr.bf16.gmra.mrb[0].mxu0 %v3119
          %v4234 = vpop.f32.mrb[0].mxu0
          %v4235 = vadd.f32 0.0, %v4234
          %v4236 = vpop.f32.mrb[0].mxu0
          %v4237 = vpop.f32.mrb[0].mxu0
          %v4238 = vadd.f32 0.0, %v4237
          %v4239 = vpop.f32.mrb[0].mxu0
          %4240 = vmatprep.mubr.bf16.mxu0 0
          %4241 = vmatmul.mubr.bf16.gmra.mrb[0].mxu0 %v3120
          %v4242 = vpop.f32.mrb[0].mxu0
          %v4243 = vadd.f32 0.0, %v4242
          %v4244 = vpop.f32.mrb[0].mxu0
          %v4245 = vpop.f32.mrb[0].mxu0
          %v4246 = vadd.f32 0.0, %v4245
          %v4247 = vpop.f32.mrb[0].mxu0
          %4248 = vmatprep.mubr.bf16.mxu0 0
          %4249 = vmatmul.mubr.bf16.gmra.mrb[0].mxu0 %v3121
          %v4250 = vpop.f32.mrb[0].mxu0
          %v4251 = vadd.f32 0.0, %v4250
          %v4252 = vpop.f32.mrb[0].mxu0
          %v4253 = vpop.f32.mrb[0].mxu0
          %v4254 = vadd.f32 0.0, %v4253
          %v4255 = vpop.f32.mrb[0].mxu0
          %4256 = vmatprep.mubr.bf16.mxu0 0
          %4257 = vmatmul.mubr.bf16.gmra.mrb[0].mxu0 %v3122
          %v4258 = vpop.f32.mrb[0].mxu0
          %v4259 = vadd.f32 0.0, %v4258
          %v4260 = vpop.f32.mrb[0].mxu0
          %v4261 = vpop.f32.mrb[0].mxu0
          %v4262 = vadd.f32 0.0, %v4261
          %v4263 = vpop.f32.mrb[0].mxu0
          %4264 = vmatprep.mubr.bf16.mxu0 0
          %4265 = vmatmul.mubr.bf16.gmra.mrb[0].mxu0 %v3123
          %v4266 = vpop.f32.mrb[0].mxu0
          %v4267 = vadd.f32 0.0, %v4266
          %v4268 = vpop.f32.mrb[0].mxu0
          %v4269 = vpop.f32.mrb[0].mxu0
          %v4270 = vadd.f32 0.0, %v4269
          %v4271 = vpop.f32.mrb[0].mxu0
          %4272 = vmatprep.mubr.bf16.mxu0 0
          %4273 = vmatmul.mubr.bf16.gmra.mrb[0].mxu0 %v3124
          %v4274 = vpop.f32.mrb[0].mxu0
          %v4275 = vadd.f32 0.0, %v4274
          %v4276 = vpop.f32.mrb[0].mxu0
          %v4277 = vpop.f32.mrb[0].mxu0
          %v4278 = vadd.f32 0.0, %v4277
          %v4279 = vpop.f32.mrb[0].mxu0
          %4280 = vmatprep.mubr.bf16.mxu0 0
          %4281 = vmatmul.mubr.bf16.gmra.mrb[0].mxu0 %v3125
          %v4282 = vpop.f32.mrb[0].mxu0
          %v4283 = vadd.f32 0.0, %v4282
          %v4284 = vpop.f32.mrb[0].mxu0
          %v4285 = vpop.f32.mrb[0].mxu0
          %v4286 = vadd.f32 0.0, %v4285
          %v4287 = vpop.f32.mrb[0].mxu0
          %4288 = vmatprep.mubr.bf16.mxu0 0
          %4289 = vmatmul.mubr.bf16.gmra.mrb[0].mxu0 %v3126
          %v4290 = vpop.f32.mrb[0].mxu0
          %v4291 = vadd.f32 0.0, %v4290
          %v4292 = vpop.f32.mrb[0].mxu0
          %v4293 = vpop.f32.mrb[0].mxu0
          %v4294 = vadd.f32 0.0, %v4293
          %v4295 = vpop.f32.mrb[0].mxu0
          %4296 = vmatprep.mubr.bf16.mxu0 0
          %4297 = vmatmul.mubr.bf16.gmra.mrb[0].mxu0 %v3127
          %v4298 = vpop.f32.mrb[0].mxu0
          %v4299 = vadd.f32 0.0, %v4298
          %v4300 = vpop.f32.mrb[0].mxu0
          %v4301 = vpop.f32.mrb[0].mxu0
          %v4302 = vadd.f32 0.0, %v4301
          %v4303 = vpop.f32.mrb[0].mxu0
          %4304 = vmatprep.mubr.bf16.mxu0 0
          %4305 = vmatmul.mubr.bf16.gmra.mrb[0].mxu0 %v3128
          %v4306 = vpop.f32.mrb[0].mxu0
          %v4307 = vadd.f32 0.0, %v4306
          %v4308 = vpop.f32.mrb[0].mxu0
          %v4309 = vpop.f32.mrb[0].mxu0
          %v4310 = vadd.f32 0.0, %v4309
          %v4311 = vpop.f32.mrb[0].mxu0
          %4312 = vmatprep.mubr.bf16.mxu0 0
          %4313 = vmatmul.mubr.bf16.gmra.mrb[0].mxu0 %v3129
          %v4314 = vpop.f32.mrb[0].mxu0
          %v4315 = vadd.f32 0.0, %v4314
          %v4316 = vpop.f32.mrb[0].mxu0
          %v4317 = vpop.f32.mrb[0].mxu0
          %v4318 = vadd.f32 0.0, %v4317
          %v4319 = vpop.f32.mrb[0].mxu0
          %4320 = vdwg.mxu0
          %v4321 = vsub.f32 %v3859, %v4195
          %v4322 = vsub.f32 %v3860, %v4198
          %v4323 = vsub.f32 %v3861, %v4203
          %v4324 = vsub.f32 %v3862, %v4206
          %v4325 = vsub.f32 %v3863, %v4211
          %v4326 = vsub.f32 %v3864, %v4214
          %v4327 = vsub.f32 %v3865, %v4219
          %v4328 = vsub.f32 %v3866, %v4222
          %v4329 = vsub.f32 %v3867, %v4227
          %v4330 = vsub.f32 %v3868, %v4230
          %v4331 = vsub.f32 %v3869, %v4235
          %v4332 = vsub.f32 %v3870, %v4238
          %v4333 = vsub.f32 %v3871, %v4243
          %v4334 = vsub.f32 %v3872, %v4246
          %v4335 = vsub.f32 %v3873, %v4251
          %v4336 = vsub.f32 %v3874, %v4254
          %v4337 = vsub.f32 %v3875, %v4259
          %v4338 = vsub.f32 %v3876, %v4262
          %v4339 = vsub.f32 %v3877, %v4267
          %v4340 = vsub.f32 %v3878, %v4270
          %v4341 = vsub.f32 %v3879, %v4275
          %v4342 = vsub.f32 %v3880, %v4278
          %v4343 = vsub.f32 %v3881, %v4283
          %v4344 = vsub.f32 %v3882, %v4286
          %v4345 = vsub.f32 %v3883, %v4291
          %v4346 = vsub.f32 %v3884, %v4294
          %v4347 = vsub.f32 %v3885, %v4299
          %v4348 = vsub.f32 %v3886, %v4302
          %v4349 = vsub.f32 %v3887, %v4307
          %v4350 = vsub.f32 %v3888, %v4310
          %v4351 = vsub.f32 %v3889, %v4315
          %v4352 = vsub.f32 %v3890, %v4318
          %v4353 = vmul.f32 %v4321, 1.442695
          %v4354 = vpow.pop %v4353
          %v4355 = vmul.f32 %v4322, 1.442695
          %v4356 = vpow.pop %v4355
          %v4357 = vmul.f32 %v4323, 1.442695
          %v4358 = vpow.pop %v4357
          %v4359 = vmul.f32 %v4324, 1.442695
          %v4360 = vpow.pop %v4359
          %v4361 = vmul.f32 %v4325, 1.442695
          %v4362 = vpow.pop %v4361
          %v4363 = vmul.f32 %v4326, 1.442695
          %v4364 = vpow.pop %v4363
          %v4365 = vmul.f32 %v4327, 1.442695
          %v4366 = vpow.pop %v4365
          %v4367 = vmul.f32 %v4328, 1.442695
          %v4368 = vpow.pop %v4367
          %v4369 = vmul.f32 %v4329, 1.442695
          %v4370 = vpow.pop %v4369
          %v4371 = vmul.f32 %v4330, 1.442695
          %v4372 = vpow.pop %v4371
          %v4373 = vmul.f32 %v4331, 1.442695
          %v4374 = vpow.pop %v4373
          %v4375 = vmul.f32 %v4332, 1.442695
          %v4376 = vpow.pop %v4375
          %v4377 = vmul.f32 %v4333, 1.442695
          %v4378 = vpow.pop %v4377
          %v4379 = vmul.f32 %v4334, 1.442695
          %v4380 = vpow.pop %v4379
          %v4381 = vmul.f32 %v4335, 1.442695
          %v4382 = vpow.pop %v4381
          %v4383 = vmul.f32 %v4336, 1.442695
          %v4384 = vpow.pop %v4383
          %v4385 = vmul.f32 %v4337, 1.442695
          %v4386 = vpow.pop %v4385
          %v4387 = vmul.f32 %v4338, 1.442695
          %v4388 = vpow.pop %v4387
          %v4389 = vmul.f32 %v4339, 1.442695
          %v4390 = vpow.pop %v4389
          %v4391 = vmul.f32 %v4340, 1.442695
          %v4392 = vpow.pop %v4391
          %v4393 = vmul.f32 %v4341, 1.442695
          %v4394 = vpow.pop %v4393
          %v4395 = vmul.f32 %v4342, 1.442695
          %v4396 = vpow.pop %v4395
          %v4397 = vmul.f32 %v4343, 1.442695
          %v4398 = vpow.pop %v4397
          %v4399 = vmul.f32 %v4344, 1.442695
          %v4400 = vpow.pop %v4399
          %v4401 = vmul.f32 %v4345, 1.442695
          %v4402 = vpow.pop %v4401
          %v4403 = vmul.f32 %v4346, 1.442695
          %v4404 = vpow.pop %v4403
          %v4405 = vmul.f32 %v4347, 1.442695
          %v4406 = vpow.pop %v4405
          %v4407 = vmul.f32 %v4348, 1.442695
          %v4408 = vpow.pop %v4407
          %v4409 = vmul.f32 %v4349, 1.442695
          %v4410 = vpow.pop %v4409
          %v4411 = vmul.f32 %v4350, 1.442695
          %v4412 = vpow.pop %v4411
          %v4413 = vmul.f32 %v4351, 1.442695
          %v4414 = vpow.pop %v4413
          %v4415 = vmul.f32 %v4352, 1.442695
          %v4416 = vpow.pop %v4415
          %v4418 = vlaneseq
          %v4419 = vshrl.u32 %v4418, 7
          %v4420 = vsub.s32 0, %v4419
          %v4421 = vrot.slane %v1605, %v4420
          %4423 = vmatprep.subr.mxu0 0.0
          %4424 = vmatpush1.msra.mxu0 %v1589
          %4425 = vmatprep.subr.mxu0 0.0
          %4426 = vmatpush1.msra.mxu0 %v1590
          %4427 = vmatprep.subr.mxu0 0.0
          %4428 = vmatpush1.msra.mxu0 %v1591
          %4429 = vmatprep.subr.mxu0 0.0
          %4430 = vmatpush1.msra.mxu0 %v1592
          %4431 = vmatprep.subr.mxu0 0.0
          %4432 = vmatpush1.msra.mxu0 %v1593
          %4433 = vmatprep.subr.mxu0 0.0
          %4434 = vmatpush1.msra.mxu0 %v1594
          %4435 = vmatprep.subr.mxu0 0.0
          %4436 = vmatpush1.msra.mxu0 %v1595
          %4437 = vmatprep.subr.mxu0 0.0
          %4438 = vmatpush1.msra.mxu0 %v1596
          %4439 = vmatprep.subr.mxu0 0.0
          %4440 = vmatpush1.msra.mxu0 %v1597
          %4441 = vmatprep.subr.mxu0 0.0
          %4442 = vmatpush1.msra.mxu0 %v1598
          %4443 = vmatprep.subr.mxu0 0.0
          %4444 = vmatpush1.msra.mxu0 %v1599
          %4445 = vmatprep.subr.mxu0 0.0
          %4446 = vmatpush1.msra.mxu0 %v1600
          %4447 = vmatprep.subr.mxu0 0.0
          %4448 = vmatpush1.msra.mxu0 %v1601
          %4449 = vmatprep.subr.mxu0 0.0
          %4450 = vmatpush1.msra.mxu0 %v1602
          %4451 = vmatprep.subr.mxu0 0.0
          %4452 = vmatpush1.msra.mxu0 %v1603
          %4453 = vmatprep.subr.mxu0 0.0
          %4454 = vmatpush1.msra.mxu0 %v1604
          %4455 = vmatprep.subr.mxu0 0.0
          %4456 = vmatpush1.msra.mxu0 0.0
          %4457 = vmatprep.subr.mxu0 0.0
          %4458 = vmatpush1.msra.mxu0 0.0
          %4459 = vmatprep.subr.mxu0 0.0
          %4460 = vmatpush1.msra.mxu0 0.0
          %4461 = vmatprep.subr.mxu0 0.0
          %4462 = vmatpush1.msra.mxu0 0.0
          %4463 = vmatprep.subr.mxu0 0.0
          %4464 = vmatpush1.msra.mxu0 0.0
          %4465 = vmatprep.subr.mxu0 0.0
          %4466 = vmatpush1.msra.mxu0 0.0
          %4467 = vmatprep.subr.mxu0 0.0
          %4468 = vmatpush1.msra.mxu0 0.0
          %4469 = vmatprep.subr.mxu0 0.0
          %4470 = vmatpush1.msra.mxu0 0.0
          %4471 = vmatprep.subr.mxu0 0.0
          %4472 = vmatpush1.msra.mxu0 0.0
          %4473 = vmatprep.subr.mxu0 0.0
          %4474 = vmatpush1.msra.mxu0 0.0
          %4475 = vmatprep.subr.mxu0 0.0
          %4476 = vmatpush1.msra.mxu0 0.0
          %4477 = vmatprep.subr.mxu0 0.0
          %4478 = vmatpush1.msra.mxu0 0.0
          %4479 = vmatprep.subr.mxu0 0.0
          %4480 = vmatpush1.msra.mxu0 0.0
          %4481 = vmatprep.subr.mxu0 0.0
          %4482 = vmatpush1.msra.mxu0 0.0
          %4483 = vmatprep.subr.mxu0 0.0
          %4484 = vmatpush1.msra.mxu0 0.0
          %4485 = vmatprep.subr.mxu0 0.0
          %4486 = vmatpush1.msra.mxu0 0.0
          %4487 = vmatprep.mubr.f32.mxu0 0.0
          %4488 = vmatmul.mubr.f32.gmra.mrb[0].mxu0 %v3010
          %v4489 = vpop.f32.mrb[0].mxu0
          %v4490 = vadd.f32 %v4421, %v4489
          %v4491 = vpop.f32.mrb[0].mxu0
          %4492 = vmatprep.mubr.f32.mxu0 0.0
          %4493 = vmatmul.mubr.f32.gmra.mrb[0].mxu0 %v3011
          %v4494 = vpop.f32.mrb[0].mxu0
          %v4495 = vadd.f32 %v4421, %v4494
          %v4496 = vpop.f32.mrb[0].mxu0
          %4497 = vmatprep.mubr.f32.mxu0 0.0
          %4498 = vmatmul.mubr.f32.gmra.mrb[0].mxu0 %v3012
          %v4499 = vpop.f32.mrb[0].mxu0
          %v4500 = vadd.f32 %v4421, %v4499
          %v4501 = vpop.f32.mrb[0].mxu0
          %4502 = vmatprep.mubr.f32.mxu0 0.0
          %4503 = vmatmul.mubr.f32.gmra.mrb[0].mxu0 %v3013
          %v4504 = vpop.f32.mrb[0].mxu0
          %v4505 = vadd.f32 %v4421, %v4504
          %v4506 = vpop.f32.mrb[0].mxu0
          %4507 = vmatprep.mubr.f32.mxu0 0.0
          %4508 = vmatmul.mubr.f32.gmra.mrb[0].mxu0 %v3014
          %v4509 = vpop.f32.mrb[0].mxu0
          %v4510 = vadd.f32 %v4421, %v4509
          %v4511 = vpop.f32.mrb[0].mxu0
          %4512 = vmatprep.mubr.f32.mxu0 0.0
          %4513 = vmatmul.mubr.f32.gmra.mrb[0].mxu0 %v3015
          %v4514 = vpop.f32.mrb[0].mxu0
          %v4515 = vadd.f32 %v4421, %v4514
          %v4516 = vpop.f32.mrb[0].mxu0
          %4517 = vmatprep.mubr.f32.mxu0 0.0
          %4518 = vmatmul.mubr.f32.gmra.mrb[0].mxu0 %v3016
          %v4519 = vpop.f32.mrb[0].mxu0
          %v4520 = vadd.f32 %v4421, %v4519
          %v4521 = vpop.f32.mrb[0].mxu0
          %4522 = vmatprep.mubr.f32.mxu0 0.0
          %4523 = vmatmul.mubr.f32.gmra.mrb[0].mxu0 %v3017
          %v4524 = vpop.f32.mrb[0].mxu0
          %v4525 = vadd.f32 %v4421, %v4524
          %v4526 = vpop.f32.mrb[0].mxu0
          %4527 = vmatprep.mubr.f32.mxu0 0.0
          %4528 = vmatmul.mubr.f32.gmra.mrb[0].mxu0 %v3018
          %v4529 = vpop.f32.mrb[0].mxu0
          %v4530 = vadd.f32 %v4421, %v4529
          %v4531 = vpop.f32.mrb[0].mxu0
          %4532 = vmatprep.mubr.f32.mxu0 0.0
          %4533 = vmatmul.mubr.f32.gmra.mrb[0].mxu0 %v3019
          %v4534 = vpop.f32.mrb[0].mxu0
          %v4535 = vadd.f32 %v4421, %v4534
          %v4536 = vpop.f32.mrb[0].mxu0
          %4537 = vmatprep.mubr.f32.mxu0 0.0
          %4538 = vmatmul.mubr.f32.gmra.mrb[0].mxu0 %v3020
          %v4539 = vpop.f32.mrb[0].mxu0
          %v4540 = vadd.f32 %v4421, %v4539
          %v4541 = vpop.f32.mrb[0].mxu0
          %4542 = vmatprep.mubr.f32.mxu0 0.0
          %4543 = vmatmul.mubr.f32.gmra.mrb[0].mxu0 %v3021
          %v4544 = vpop.f32.mrb[0].mxu0
          %v4545 = vadd.f32 %v4421, %v4544
          %v4546 = vpop.f32.mrb[0].mxu0
          %4547 = vmatprep.mubr.f32.mxu0 0.0
          %4548 = vmatmul.mubr.f32.gmra.mrb[0].mxu0 %v3022
          %v4549 = vpop.f32.mrb[0].mxu0
          %v4550 = vadd.f32 %v4421, %v4549
          %v4551 = vpop.f32.mrb[0].mxu0
          %4552 = vmatprep.mubr.f32.mxu0 0.0
          %4553 = vmatmul.mubr.f32.gmra.mrb[0].mxu0 %v3023
          %v4554 = vpop.f32.mrb[0].mxu0
          %v4555 = vadd.f32 %v4421, %v4554
          %v4556 = vpop.f32.mrb[0].mxu0
          %4557 = vmatprep.mubr.f32.mxu0 0.0
          %4558 = vmatmul.mubr.f32.gmra.mrb[0].mxu0 %v3024
          %v4559 = vpop.f32.mrb[0].mxu0
          %v4560 = vadd.f32 %v4421, %v4559
          %v4561 = vpop.f32.mrb[0].mxu0
          %4562 = vmatprep.mubr.f32.mxu0 0.0
          %4563 = vmatmul.mubr.f32.gmra.mrb[0].mxu0 %v3025
          %v4564 = vpop.f32.mrb[0].mxu0
          %v4565 = vadd.f32 %v4421, %v4564
          %v4566 = vpop.f32.mrb[0].mxu0
          %4567 = vmatprep.mubr.f32.mxu0 0.0
          %4568 = vmatmul.mubr.f32.gmra.mrb[0].mxu0 %v3026
          %v4569 = vpop.f32.mrb[0].mxu0
          %v4570 = vadd.f32 %v4421, %v4569
          %v4571 = vpop.f32.mrb[0].mxu0
          %4572 = vmatprep.mubr.f32.mxu0 0.0
          %4573 = vmatmul.mubr.f32.gmra.mrb[0].mxu0 %v3027
          %v4574 = vpop.f32.mrb[0].mxu0
          %v4575 = vadd.f32 %v4421, %v4574
          %v4576 = vpop.f32.mrb[0].mxu0
          %4577 = vmatprep.mubr.f32.mxu0 0.0
          %4578 = vmatmul.mubr.f32.gmra.mrb[0].mxu0 %v3028
          %v4579 = vpop.f32.mrb[0].mxu0
          %v4580 = vadd.f32 %v4421, %v4579
          %v4581 = vpop.f32.mrb[0].mxu0
          %4582 = vmatprep.mubr.f32.mxu0 0.0
          %4583 = vmatmul.mubr.f32.gmra.mrb[0].mxu0 %v3029
          %v4584 = vpop.f32.mrb[0].mxu0
          %v4585 = vadd.f32 %v4421, %v4584
          %v4586 = vpop.f32.mrb[0].mxu0
          %4587 = vmatprep.mubr.f32.mxu0 0.0
          %4588 = vmatmul.mubr.f32.gmra.mrb[0].mxu0 %v3030
          %v4589 = vpop.f32.mrb[0].mxu0
          %v4590 = vadd.f32 %v4421, %v4589
          %v4591 = vpop.f32.mrb[0].mxu0
          %4592 = vmatprep.mubr.f32.mxu0 0.0
          %4593 = vmatmul.mubr.f32.gmra.mrb[0].mxu0 %v3031
          %v4594 = vpop.f32.mrb[0].mxu0
          %v4595 = vadd.f32 %v4421, %v4594
          %v4596 = vpop.f32.mrb[0].mxu0
          %4597 = vmatprep.mubr.f32.mxu0 0.0
          %4598 = vmatmul.mubr.f32.gmra.mrb[0].mxu0 %v3032
          %v4599 = vpop.f32.mrb[0].mxu0
          %v4600 = vadd.f32 %v4421, %v4599
          %v4601 = vpop.f32.mrb[0].mxu0
          %4602 = vmatprep.mubr.f32.mxu0 0.0
          %4603 = vmatmul.mubr.f32.gmra.mrb[0].mxu0 %v3033
          %v4604 = vpop.f32.mrb[0].mxu0
          %v4605 = vadd.f32 %v4421, %v4604
          %v4606 = vpop.f32.mrb[0].mxu0
          %4607 = vmatprep.mubr.f32.mxu0 0.0
          %4608 = vmatmul.mubr.f32.gmra.mrb[0].mxu0 %v3034
          %v4609 = vpop.f32.mrb[0].mxu0
          %v4610 = vadd.f32 %v4421, %v4609
          %v4611 = vpop.f32.mrb[0].mxu0
          %4612 = vmatprep.mubr.f32.mxu0 0.0
          %4613 = vmatmul.mubr.f32.gmra.mrb[0].mxu0 %v3035
          %v4614 = vpop.f32.mrb[0].mxu0
          %v4615 = vadd.f32 %v4421, %v4614
          %v4616 = vpop.f32.mrb[0].mxu0
          %4617 = vmatprep.mubr.f32.mxu0 0.0
          %4618 = vmatmul.mubr.f32.gmra.mrb[0].mxu0 %v3036
          %v4619 = vpop.f32.mrb[0].mxu0
          %v4620 = vadd.f32 %v4421, %v4619
          %v4621 = vpop.f32.mrb[0].mxu0
          %4622 = vmatprep.mubr.f32.mxu0 0.0
          %4623 = vmatmul.mubr.f32.gmra.mrb[0].mxu0 %v3037
          %v4624 = vpop.f32.mrb[0].mxu0
          %v4625 = vadd.f32 %v4421, %v4624
          %v4626 = vpop.f32.mrb[0].mxu0
          %4627 = vmatprep.mubr.f32.mxu0 0.0
          %4628 = vmatmul.mubr.f32.gmra.mrb[0].mxu0 %v3038
          %v4629 = vpop.f32.mrb[0].mxu0
          %v4630 = vadd.f32 %v4421, %v4629
          %v4631 = vpop.f32.mrb[0].mxu0
          %4632 = vmatprep.mubr.f32.mxu0 0.0
          %4633 = vmatmul.mubr.f32.gmra.mrb[0].mxu0 %v3039
          %v4634 = vpop.f32.mrb[0].mxu0
          %v4635 = vadd.f32 %v4421, %v4634
          %v4636 = vpop.f32.mrb[0].mxu0
          %4637 = vmatprep.mubr.f32.mxu0 0.0
          %4638 = vmatmul.mubr.f32.gmra.mrb[0].mxu0 %v3040
          %v4639 = vpop.f32.mrb[0].mxu0
          %v4640 = vadd.f32 %v4421, %v4639
          %v4641 = vpop.f32.mrb[0].mxu0
          %4642 = vmatprep.mubr.f32.mxu0 0.0
          %4643 = vmatmul.mubr.f32.gmra.mrb[0].mxu0 %v3041
          %v4644 = vpop.f32.mrb[0].mxu0
          %v4645 = vadd.f32 %v4421, %v4644
          %v4646 = vpop.f32.mrb[0].mxu0
          %4647 = vdwg.mxu0
          %4649 = vset.pattern.permute.xlu0 0
          %4650 = vperm.xlu0 %4649, %v4354
          %v4651 = vpop.permute.xlu0 %4650
          %4654 = vset.pattern.permute.xlu0 0
          %4655 = vperm.xlu0 %4654, %v4356
          %v4656 = vpop.permute.xlu0 %4655
          %4659 = vset.pattern.permute.xlu0 0
          %4660 = vperm.xlu0 %4659, %v4358
          %v4661 = vpop.permute.xlu0 %4660
          %4664 = vset.pattern.permute.xlu0 0
          %4665 = vperm.xlu0 %4664, %v4360
          %v4666 = vpop.permute.xlu0 %4665
          %4669 = vset.pattern.permute.xlu0 0
          %4670 = vperm.xlu0 %4669, %v4362
          %v4671 = vpop.permute.xlu0 %4670
          %4674 = vset.pattern.permute.xlu0 0
          %4675 = vperm.xlu0 %4674, %v4364
          %v4676 = vpop.permute.xlu0 %4675
          %4679 = vset.pattern.permute.xlu0 0
          %4680 = vperm.xlu0 %4679, %v4366
          %v4681 = vpop.permute.xlu0 %4680
          %4684 = vset.pattern.permute.xlu0 0
          %4685 = vperm.xlu0 %4684, %v4368
          %v4686 = vpop.permute.xlu0 %4685
          %4689 = vset.pattern.permute.xlu0 0
          %4690 = vperm.xlu0 %4689, %v4370
          %v4691 = vpop.permute.xlu0 %4690
          %4694 = vset.pattern.permute.xlu0 0
          %4695 = vperm.xlu0 %4694, %v4372
          %v4696 = vpop.permute.xlu0 %4695
          %4699 = vset.pattern.permute.xlu0 0
          %4700 = vperm.xlu0 %4699, %v4374
          %v4701 = vpop.permute.xlu0 %4700
          %4704 = vset.pattern.permute.xlu0 0
          %4705 = vperm.xlu0 %4704, %v4376
          %v4706 = vpop.permute.xlu0 %4705
          %4709 = vset.pattern.permute.xlu0 0
          %4710 = vperm.xlu0 %4709, %v4378
          %v4711 = vpop.permute.xlu0 %4710
          %4714 = vset.pattern.permute.xlu0 0
          %4715 = vperm.xlu0 %4714, %v4380
          %v4716 = vpop.permute.xlu0 %4715
          %4719 = vset.pattern.permute.xlu0 0
          %4720 = vperm.xlu0 %4719, %v4382
          %v4721 = vpop.permute.xlu0 %4720
          %4724 = vset.pattern.permute.xlu0 0
          %4725 = vperm.xlu0 %4724, %v4384
          %v4726 = vpop.permute.xlu0 %4725
          %4729 = vset.pattern.permute.xlu0 0
          %4730 = vperm.xlu0 %4729, %v4386
          %v4731 = vpop.permute.xlu0 %4730
          %4734 = vset.pattern.permute.xlu0 0
          %4735 = vperm.xlu0 %4734, %v4388
          %v4736 = vpop.permute.xlu0 %4735
          %4739 = vset.pattern.permute.xlu0 0
          %4740 = vperm.xlu0 %4739, %v4390
          %v4741 = vpop.permute.xlu0 %4740
          %4744 = vset.pattern.permute.xlu0 0
          %4745 = vperm.xlu0 %4744, %v4392
          %v4746 = vpop.permute.xlu0 %4745
          %4749 = vset.pattern.permute.xlu0 0
          %4750 = vperm.xlu0 %4749, %v4394
          %v4751 = vpop.permute.xlu0 %4750
          %4754 = vset.pattern.permute.xlu0 0
          %4755 = vperm.xlu0 %4754, %v4396
          %v4756 = vpop.permute.xlu0 %4755
          %4759 = vset.pattern.permute.xlu0 0
          %4760 = vperm.xlu0 %4759, %v4398
          %v4761 = vpop.permute.xlu0 %4760
          %4764 = vset.pattern.permute.xlu0 0
          %4765 = vperm.xlu0 %4764, %v4400
          %v4766 = vpop.permute.xlu0 %4765
          %4769 = vset.pattern.permute.xlu0 0
          %4770 = vperm.xlu0 %4769, %v4402
          %v4771 = vpop.permute.xlu0 %4770
          %4774 = vset.pattern.permute.xlu0 0
          %4775 = vperm.xlu0 %4774, %v4404
          %v4776 = vpop.permute.xlu0 %4775
          %4779 = vset.pattern.permute.xlu0 0
          %4780 = vperm.xlu0 %4779, %v4406
          %v4781 = vpop.permute.xlu0 %4780
          %4784 = vset.pattern.permute.xlu0 0
          %4785 = vperm.xlu0 %4784, %v4408
          %v4786 = vpop.permute.xlu0 %4785
          %4789 = vset.pattern.permute.xlu0 0
          %4790 = vperm.xlu0 %4789, %v4410
          %v4791 = vpop.permute.xlu0 %4790
          %4794 = vset.pattern.permute.xlu0 0
          %4795 = vperm.xlu0 %4794, %v4412
          %v4796 = vpop.permute.xlu0 %4795
          %4799 = vset.pattern.permute.xlu0 0
          %4800 = vperm.xlu0 %4799, %v4414
          %v4801 = vpop.permute.xlu0 %4800
          %4804 = vset.pattern.permute.xlu0 0
          %4805 = vperm.xlu0 %4804, %v4416
          %v4806 = vpop.permute.xlu0 %4805
          %v4808 = vmul.f32 %v4651, %v4490
          %v4809 = vmul.f32 %v4656, %v4495
          %v4810 = vmul.f32 %v4661, %v4500
          %v4811 = vmul.f32 %v4666, %v4505
          %v4812 = vmul.f32 %v4671, %v4510
          %v4813 = vmul.f32 %v4676, %v4515
          %v4814 = vmul.f32 %v4681, %v4520
          %v4815 = vmul.f32 %v4686, %v4525
          %v4816 = vmul.f32 %v4691, %v4530
          %v4817 = vmul.f32 %v4696, %v4535
          %v4818 = vmul.f32 %v4701, %v4540
          %v4819 = vmul.f32 %v4706, %v4545
          %v4820 = vmul.f32 %v4711, %v4550
          %v4821 = vmul.f32 %v4716, %v4555
          %v4822 = vmul.f32 %v4721, %v4560
          %v4823 = vmul.f32 %v4726, %v4565
          %v4824 = vmul.f32 %v4731, %v4570
          %v4825 = vmul.f32 %v4736, %v4575
          %v4826 = vmul.f32 %v4741, %v4580
          %v4827 = vmul.f32 %v4746, %v4585
          %v4828 = vmul.f32 %v4751, %v4590
          %v4829 = vmul.f32 %v4756, %v4595
          %v4830 = vmul.f32 %v4761, %v4600
          %v4831 = vmul.f32 %v4766, %v4605
          %v4832 = vmul.f32 %v4771, %v4610
          %v4833 = vmul.f32 %v4776, %v4615
          %v4834 = vmul.f32 %v4781, %v4620
          %v4835 = vmul.f32 %v4786, %v4625
          %v4836 = vmul.f32 %v4791, %v4630
          %v4837 = vmul.f32 %v4796, %v4635
          %v4838 = vmul.f32 %v4801, %v4640
          %v4839 = vmul.f32 %v4806, %v4645
          %4840 = vmatprep.subr.mxu0 0.0
          %4841 = vmatpush1.msra.mxu0 %v4808
          %4842 = vmatprep.subr.mxu0 0.0
          %4843 = vmatpush1.msra.mxu0 %v4809
          %4844 = vmatprep.subr.mxu0 0.0
          %4845 = vmatpush1.msra.mxu0 %v4810
          %4846 = vmatprep.subr.mxu0 0.0
          %4847 = vmatpush1.msra.mxu0 %v4811
          %4848 = vmatprep.subr.mxu0 0.0
          %4849 = vmatpush1.msra.mxu0 %v4812
          %4850 = vmatprep.subr.mxu0 0.0
          %4851 = vmatpush1.msra.mxu0 %v4813
          %4852 = vmatprep.subr.mxu0 0.0
          %4853 = vmatpush1.msra.mxu0 %v4814
          %4854 = vmatprep.subr.mxu0 0.0
          %4855 = vmatpush1.msra.mxu0 %v4815
          %4856 = vmatprep.subr.mxu0 0.0
          %4857 = vmatpush1.msra.mxu0 %v4816
          %4858 = vmatprep.subr.mxu0 0.0
          %4859 = vmatpush1.msra.mxu0 %v4817
          %4860 = vmatprep.subr.mxu0 0.0
          %4861 = vmatpush1.msra.mxu0 %v4818
          %4862 = vmatprep.subr.mxu0 0.0
          %4863 = vmatpush1.msra.mxu0 %v4819
          %4864 = vmatprep.subr.mxu0 0.0
          %4865 = vmatpush1.msra.mxu0 %v4820
          %4866 = vmatprep.subr.mxu0 0.0
          %4867 = vmatpush1.msra.mxu0 %v4821
          %4868 = vmatprep.subr.mxu0 0.0
          %4869 = vmatpush1.msra.mxu0 %v4822
          %4870 = vmatprep.subr.mxu0 0.0
          %4871 = vmatpush1.msra.mxu0 %v4823
          %4872 = vmatprep.subr.mxu0 0.0
          %4873 = vmatpush1.msra.mxu0 %v4824
          %4874 = vmatprep.subr.mxu0 0.0
          %4875 = vmatpush1.msra.mxu0 %v4825
          %4876 = vmatprep.subr.mxu0 0.0
          %4877 = vmatpush1.msra.mxu0 %v4826
          %4878 = vmatprep.subr.mxu0 0.0
          %4879 = vmatpush1.msra.mxu0 %v4827
          %4880 = vmatprep.subr.mxu0 0.0
          %4881 = vmatpush1.msra.mxu0 %v4828
          %4882 = vmatprep.subr.mxu0 0.0
          %4883 = vmatpush1.msra.mxu0 %v4829
          %4884 = vmatprep.subr.mxu0 0.0
          %4885 = vmatpush1.msra.mxu0 %v4830
          %4886 = vmatprep.subr.mxu0 0.0
          %4887 = vmatpush1.msra.mxu0 %v4831
          %4888 = vmatprep.subr.mxu0 0.0
          %4889 = vmatpush1.msra.mxu0 %v4832
          %4890 = vmatprep.subr.mxu0 0.0
          %4891 = vmatpush1.msra.mxu0 %v4833
          %4892 = vmatprep.subr.mxu0 0.0
          %4893 = vmatpush1.msra.mxu0 %v4834
          %4894 = vmatprep.subr.mxu0 0.0
          %4895 = vmatpush1.msra.mxu0 %v4835
          %4896 = vmatprep.subr.mxu0 0.0
          %4897 = vmatpush1.msra.mxu0 %v4836
          %4898 = vmatprep.subr.mxu0 0.0
          %4899 = vmatpush1.msra.mxu0 %v4837
          %4900 = vmatprep.subr.mxu0 0.0
          %4901 = vmatpush1.msra.mxu0 %v4838
          %4902 = vmatprep.subr.mxu0 0.0
          %4903 = vmatpush1.msra.mxu0 %v4839
          %4904 = vmatprep.mubr.f32.mxu0 %v1477
          %4905 = vmatmul.mubr.f32.gmra.mrb[0].mxu0 %v1476
          %v4906 = vpop.f32.mrb[0].mxu0
          %v4907 = vadd.f32 0.0, %v4906
          %v4908 = vpop.f32.mrb[0].mxu0
          %4909 = vmatprep.mubr.f32.mxu0 %v1479
          %4910 = vmatmul.mubr.f32.gmra.mrb[0].mxu0 %v1478
          %v4911 = vpop.f32.mrb[0].mxu0
          %v4912 = vadd.f32 0.0, %v4911
          %v4913 = vpop.f32.mrb[0].mxu0
          %4914 = vmatprep.mubr.f32.mxu0 %v1481
          %4915 = vmatmul.mubr.f32.gmra.mrb[0].mxu0 %v1480
          %v4916 = vpop.f32.mrb[0].mxu0
          %v4917 = vadd.f32 0.0, %v4916
          %v4918 = vpop.f32.mrb[0].mxu0
          %4919 = vmatprep.mubr.f32.mxu0 %v1483
          %4920 = vmatmul.mubr.f32.gmra.mrb[0].mxu0 %v1482
          %v4921 = vpop.f32.mrb[0].mxu0
          %v4922 = vadd.f32 0.0, %v4921
          %v4923 = vpop.f32.mrb[0].mxu0
          %4924 = vmatprep.mubr.f32.mxu0 %v1485
          %4925 = vmatmul.mubr.f32.gmra.mrb[0].mxu0 %v1484
          %v4926 = vpop.f32.mrb[0].mxu0
          %v4927 = vadd.f32 0.0, %v4926
          %v4928 = vpop.f32.mrb[0].mxu0
          %4929 = vmatprep.mubr.f32.mxu0 %v1487
          %4930 = vmatmul.mubr.f32.gmra.mrb[0].mxu0 %v1486
          %v4931 = vpop.f32.mrb[0].mxu0
          %v4932 = vadd.f32 0.0, %v4931
          %v4933 = vpop.f32.mrb[0].mxu0
          %4934 = vmatprep.mubr.f32.mxu0 %v1489
          %4935 = vmatmul.mubr.f32.gmra.mrb[0].mxu0 %v1488
          %v4936 = vpop.f32.mrb[0].mxu0
          %v4937 = vadd.f32 0.0, %v4936
          %v4938 = vpop.f32.mrb[0].mxu0
          %4939 = vmatprep.mubr.f32.mxu0 %v1491
          %4940 = vmatmul.mubr.f32.gmra.mrb[0].mxu0 %v1490
          %v4941 = vpop.f32.mrb[0].mxu0
          %v4942 = vadd.f32 0.0, %v4941
          %v4943 = vpop.f32.mrb[0].mxu0
          %4944 = vmatprep.mubr.f32.mxu0 %v1493
          %4945 = vmatmul.mubr.f32.gmra.mrb[0].mxu0 %v1492
          %v4946 = vpop.f32.mrb[0].mxu0
          %v4947 = vadd.f32 0.0, %v4946
          %v4948 = vpop.f32.mrb[0].mxu0
          %4949 = vmatprep.mubr.f32.mxu0 %v1495
          %4950 = vmatmul.mubr.f32.gmra.mrb[0].mxu0 %v1494
          %v4951 = vpop.f32.mrb[0].mxu0
          %v4952 = vadd.f32 0.0, %v4951
          %v4953 = vpop.f32.mrb[0].mxu0
          %4954 = vmatprep.mubr.f32.mxu0 %v1497
          %4955 = vmatmul.mubr.f32.gmra.mrb[0].mxu0 %v1496
          %v4956 = vpop.f32.mrb[0].mxu0
          %v4957 = vadd.f32 0.0, %v4956
          %v4958 = vpop.f32.mrb[0].mxu0
          %4959 = vmatprep.mubr.f32.mxu0 %v1499
          %4960 = vmatmul.mubr.f32.gmra.mrb[0].mxu0 %v1498
          %v4961 = vpop.f32.mrb[0].mxu0
          %v4962 = vadd.f32 0.0, %v4961
          %v4963 = vpop.f32.mrb[0].mxu0
          %4964 = vmatprep.mubr.f32.mxu0 %v1501
          %4965 = vmatmul.mubr.f32.gmra.mrb[0].mxu0 %v1500
          %v4966 = vpop.f32.mrb[0].mxu0
          %v4967 = vadd.f32 0.0, %v4966
          %v4968 = vpop.f32.mrb[0].mxu0
          %4969 = vmatprep.mubr.f32.mxu0 %v1503
          %4970 = vmatmul.mubr.f32.gmra.mrb[0].mxu0 %v1502
          %v4971 = vpop.f32.mrb[0].mxu0
          %v4972 = vadd.f32 0.0, %v4971
          %v4973 = vpop.f32.mrb[0].mxu0
          %4974 = vmatprep.mubr.f32.mxu0 %v1505
          %4975 = vmatmul.mubr.f32.gmra.mrb[0].mxu0 %v1504
          %v4976 = vpop.f32.mrb[0].mxu0
          %v4977 = vadd.f32 0.0, %v4976
          %v4978 = vpop.f32.mrb[0].mxu0
          %4979 = vmatprep.mubr.f32.mxu0 %v1507
          %4980 = vmatmul.mubr.f32.gmra.mrb[0].mxu0 %v1506
          %v4981 = vpop.f32.mrb[0].mxu0
          %v4982 = vadd.f32 0.0, %v4981
          %v4983 = vpop.f32.mrb[0].mxu0
          %4984 = vdwg.mxu0
          %4985 = vmatprep.subr.mxu0 0.0
          %4986 = vmatpush1.msra.mxu0 %v4354
          %4987 = vmatprep.subr.mxu0 0.0
          %4988 = vmatpush1.msra.mxu0 %v4356
          %4989 = vmatprep.subr.mxu0 0.0
          %4990 = vmatpush1.msra.mxu0 %v4358
          %4991 = vmatprep.subr.mxu0 0.0
          %4992 = vmatpush1.msra.mxu0 %v4360
          %4993 = vmatprep.subr.mxu0 0.0
          %4994 = vmatpush1.msra.mxu0 %v4362
          %4995 = vmatprep.subr.mxu0 0.0
          %4996 = vmatpush1.msra.mxu0 %v4364
          %4997 = vmatprep.subr.mxu0 0.0
          %4998 = vmatpush1.msra.mxu0 %v4366
          %4999 = vmatprep.subr.mxu0 0.0
          %5000 = vmatpush1.msra.mxu0 %v4368
          %5001 = vmatprep.subr.mxu0 0.0
          %5002 = vmatpush1.msra.mxu0 %v4370
          %5003 = vmatprep.subr.mxu0 0.0
          %5004 = vmatpush1.msra.mxu0 %v4372
          %5005 = vmatprep.subr.mxu0 0.0
          %5006 = vmatpush1.msra.mxu0 %v4374
          %5007 = vmatprep.subr.mxu0 0.0
          %5008 = vmatpush1.msra.mxu0 %v4376
          %5009 = vmatprep.subr.mxu0 0.0
          %5010 = vmatpush1.msra.mxu0 %v4378
          %5011 = vmatprep.subr.mxu0 0.0
          %5012 = vmatpush1.msra.mxu0 %v4380
          %5013 = vmatprep.subr.mxu0 0.0
          %5014 = vmatpush1.msra.mxu0 %v4382
          %5015 = vmatprep.subr.mxu0 0.0
          %5016 = vmatpush1.msra.mxu0 %v4384
          %5017 = vmatprep.subr.mxu0 0.0
          %5018 = vmatpush1.msra.mxu0 %v4386
          %5019 = vmatprep.subr.mxu0 0.0
          %5020 = vmatpush1.msra.mxu0 %v4388
          %5021 = vmatprep.subr.mxu0 0.0
          %5022 = vmatpush1.msra.mxu0 %v4390
          %5023 = vmatprep.subr.mxu0 0.0
          %5024 = vmatpush1.msra.mxu0 %v4392
          %5025 = vmatprep.subr.mxu0 0.0
          %5026 = vmatpush1.msra.mxu0 %v4394
          %5027 = vmatprep.subr.mxu0 0.0
          %5028 = vmatpush1.msra.mxu0 %v4396
          %5029 = vmatprep.subr.mxu0 0.0
          %5030 = vmatpush1.msra.mxu0 %v4398
          %5031 = vmatprep.subr.mxu0 0.0
          %5032 = vmatpush1.msra.mxu0 %v4400
          %5033 = vmatprep.subr.mxu0 0.0
          %5034 = vmatpush1.msra.mxu0 %v4402
          %5035 = vmatprep.subr.mxu0 0.0
          %5036 = vmatpush1.msra.mxu0 %v4404
          %5037 = vmatprep.subr.mxu0 0.0
          %5038 = vmatpush1.msra.mxu0 %v4406
          %5039 = vmatprep.subr.mxu0 0.0
          %5040 = vmatpush1.msra.mxu0 %v4408
          %5041 = vmatprep.subr.mxu0 0.0
          %5042 = vmatpush1.msra.mxu0 %v4410
          %5043 = vmatprep.subr.mxu0 0.0
          %5044 = vmatpush1.msra.mxu0 %v4412
          %5045 = vmatprep.subr.mxu0 0.0
          %5046 = vmatpush1.msra.mxu0 %v4414
          %5047 = vmatprep.subr.mxu0 0.0
          %5048 = vmatpush1.msra.mxu0 %v4416
          %5049 = vmatprep.mubr.f32.mxu0 %v1477
          %5050 = vmatmul.mubr.f32.gmra.mrb[0].mxu0 %v1476
          %v5051 = vpop.f32.mrb[0].mxu0
          %v5052 = vadd.f32 0.0, %v5051
          %v5053 = vpop.f32.mrb[0].mxu0
          %5054 = vmatprep.mubr.f32.mxu0 %v1479
          %5055 = vmatmul.mubr.f32.gmra.mrb[0].mxu0 %v1478
          %v5056 = vpop.f32.mrb[0].mxu0
          %v5057 = vadd.f32 0.0, %v5056
          %v5058 = vpop.f32.mrb[0].mxu0
          %5059 = vmatprep.mubr.f32.mxu0 %v1481
          %5060 = vmatmul.mubr.f32.gmra.mrb[0].mxu0 %v1480
          %v5061 = vpop.f32.mrb[0].mxu0
          %v5062 = vadd.f32 0.0, %v5061
          %v5063 = vpop.f32.mrb[0].mxu0
          %5064 = vmatprep.mubr.f32.mxu0 %v1483
          %5065 = vmatmul.mubr.f32.gmra.mrb[0].mxu0 %v1482
          %v5066 = vpop.f32.mrb[0].mxu0
          %v5067 = vadd.f32 0.0, %v5066
          %v5068 = vpop.f32.mrb[0].mxu0
          %5069 = vmatprep.mubr.f32.mxu0 %v1485
          %5070 = vmatmul.mubr.f32.gmra.mrb[0].mxu0 %v1484
          %v5071 = vpop.f32.mrb[0].mxu0
          %v5072 = vadd.f32 0.0, %v5071
          %v5073 = vpop.f32.mrb[0].mxu0
          %5074 = vmatprep.mubr.f32.mxu0 %v1487
          %5075 = vmatmul.mubr.f32.gmra.mrb[0].mxu0 %v1486
          %v5076 = vpop.f32.mrb[0].mxu0
          %v5077 = vadd.f32 0.0, %v5076
          %v5078 = vpop.f32.mrb[0].mxu0
          %5079 = vmatprep.mubr.f32.mxu0 %v1489
          %5080 = vmatmul.mubr.f32.gmra.mrb[0].mxu0 %v1488
          %v5081 = vpop.f32.mrb[0].mxu0
          %v5082 = vadd.f32 0.0, %v5081
          %v5083 = vpop.f32.mrb[0].mxu0
          %5084 = vmatprep.mubr.f32.mxu0 %v1491
          %5085 = vmatmul.mubr.f32.gmra.mrb[0].mxu0 %v1490
          %v5086 = vpop.f32.mrb[0].mxu0
          %v5087 = vadd.f32 0.0, %v5086
          %v5088 = vpop.f32.mrb[0].mxu0
          %5089 = vmatprep.mubr.f32.mxu0 %v1493
          %5090 = vmatmul.mubr.f32.gmra.mrb[0].mxu0 %v1492
          %v5091 = vpop.f32.mrb[0].mxu0
          %v5092 = vadd.f32 0.0, %v5091
          %v5093 = vpop.f32.mrb[0].mxu0
          %5094 = vmatprep.mubr.f32.mxu0 %v1495
          %5095 = vmatmul.mubr.f32.gmra.mrb[0].mxu0 %v1494
          %v5096 = vpop.f32.mrb[0].mxu0
          %v5097 = vadd.f32 0.0, %v5096
          %v5098 = vpop.f32.mrb[0].mxu0
          %5099 = vmatprep.mubr.f32.mxu0 %v1497
          %5100 = vmatmul.mubr.f32.gmra.mrb[0].mxu0 %v1496
          %v5101 = vpop.f32.mrb[0].mxu0
          %v5102 = vadd.f32 0.0, %v5101
          %v5103 = vpop.f32.mrb[0].mxu0
          %5104 = vmatprep.mubr.f32.mxu0 %v1499
          %5105 = vmatmul.mubr.f32.gmra.mrb[0].mxu0 %v1498
          %v5106 = vpop.f32.mrb[0].mxu0
          %v5107 = vadd.f32 0.0, %v5106
          %v5108 = vpop.f32.mrb[0].mxu0
          %5109 = vmatprep.mubr.f32.mxu0 %v1501
          %5110 = vmatmul.mubr.f32.gmra.mrb[0].mxu0 %v1500
          %v5111 = vpop.f32.mrb[0].mxu0
          %v5112 = vadd.f32 0.0, %v5111
          %v5113 = vpop.f32.mrb[0].mxu0
          %5114 = vmatprep.mubr.f32.mxu0 %v1503
          %5115 = vmatmul.mubr.f32.gmra.mrb[0].mxu0 %v1502
          %v5116 = vpop.f32.mrb[0].mxu0
          %v5117 = vadd.f32 0.0, %v5116
          %v5118 = vpop.f32.mrb[0].mxu0
          %5119 = vmatprep.mubr.f32.mxu0 %v1505
          %5120 = vmatmul.mubr.f32.gmra.mrb[0].mxu0 %v1504
          %v5121 = vpop.f32.mrb[0].mxu0
          %v5122 = vadd.f32 0.0, %v5121
          %v5123 = vpop.f32.mrb[0].mxu0
          %5124 = vmatprep.mubr.f32.mxu0 %v1507
          %5125 = vmatmul.mubr.f32.gmra.mrb[0].mxu0 %v1506
          %v5126 = vpop.f32.mrb[0].mxu0
          %v5127 = vadd.f32 0.0, %v5126
          %v5128 = vpop.f32.mrb[0].mxu0
          %5129 = vdwg.mxu0
          %v5130 = vmax.f32 %v5052, 1e-30
          %v5131 = vmax.f32 %v5057, 1e-30
          %v5132 = vmax.f32 %v5062, 1e-30
          %v5133 = vmax.f32 %v5067, 1e-30
          %v5134 = vmax.f32 %v5072, 1e-30
          %v5135 = vmax.f32 %v5077, 1e-30
          %v5136 = vmax.f32 %v5082, 1e-30
          %v5137 = vmax.f32 %v5087, 1e-30
          %v5138 = vmax.f32 %v5092, 1e-30
          %v5139 = vmax.f32 %v5097, 1e-30
          %v5140 = vmax.f32 %v5102, 1e-30
          %v5141 = vmax.f32 %v5107, 1e-30
          %v5142 = vmax.f32 %v5112, 1e-30
          %v5143 = vmax.f32 %v5117, 1e-30
          %v5144 = vmax.f32 %v5122, 1e-30
          %v5145 = vmax.f32 %v5127, 1e-30
          %5147 = vset.pattern.permute.xlu0 0
          %5148 = vperm.xlu0 %5147, %v5130
          %v5149 = vpop.permute.xlu0 %5148
          %5152 = vset.pattern.permute.xlu0 0
          %5153 = vperm.xlu0 %5152, %v5131
          %v5154 = vpop.permute.xlu0 %5153
          %5157 = vset.pattern.permute.xlu0 0
          %5158 = vperm.xlu0 %5157, %v5132
          %v5159 = vpop.permute.xlu0 %5158
          %5162 = vset.pattern.permute.xlu0 0
          %5163 = vperm.xlu0 %5162, %v5133
          %v5164 = vpop.permute.xlu0 %5163
          %5167 = vset.pattern.permute.xlu0 0
          %5168 = vperm.xlu0 %5167, %v5134
          %v5169 = vpop.permute.xlu0 %5168
          %5172 = vset.pattern.permute.xlu0 0
          %5173 = vperm.xlu0 %5172, %v5135
          %v5174 = vpop.permute.xlu0 %5173
          %5177 = vset.pattern.permute.xlu0 0
          %5178 = vperm.xlu0 %5177, %v5136
          %v5179 = vpop.permute.xlu0 %5178
          %5182 = vset.pattern.permute.xlu0 0
          %5183 = vperm.xlu0 %5182, %v5137
          %v5184 = vpop.permute.xlu0 %5183
          %5187 = vset.pattern.permute.xlu0 0
          %5188 = vperm.xlu0 %5187, %v5138
          %v5189 = vpop.permute.xlu0 %5188
          %5192 = vset.pattern.permute.xlu0 0
          %5193 = vperm.xlu0 %5192, %v5139
          %v5194 = vpop.permute.xlu0 %5193
          %5197 = vset.pattern.permute.xlu0 0
          %5198 = vperm.xlu0 %5197, %v5140
          %v5199 = vpop.permute.xlu0 %5198
          %5202 = vset.pattern.permute.xlu0 0
          %5203 = vperm.xlu0 %5202, %v5141
          %v5204 = vpop.permute.xlu0 %5203
          %5207 = vset.pattern.permute.xlu0 0
          %5208 = vperm.xlu0 %5207, %v5142
          %v5209 = vpop.permute.xlu0 %5208
          %5212 = vset.pattern.permute.xlu0 0
          %5213 = vperm.xlu0 %5212, %v5143
          %v5214 = vpop.permute.xlu0 %5213
          %5217 = vset.pattern.permute.xlu0 0
          %5218 = vperm.xlu0 %5217, %v5144
          %v5219 = vpop.permute.xlu0 %5218
          %5222 = vset.pattern.permute.xlu0 0
          %5223 = vperm.xlu0 %5222, %v5145
          %v5224 = vpop.permute.xlu0 %5223
          %v5226 = vrcp.pop %v5149
          %v5227 = vmul.f32 %v4907, %v5226
          %v5228 = vrcp.pop %v5154
          %v5229 = vmul.f32 %v4912, %v5228
          %v5230 = vrcp.pop %v5159
          %v5231 = vmul.f32 %v4917, %v5230
          %v5232 = vrcp.pop %v5164
          %v5233 = vmul.f32 %v4922, %v5232
          %v5234 = vrcp.pop %v5169
          %v5235 = vmul.f32 %v4927, %v5234
          %v5236 = vrcp.pop %v5174
          %v5237 = vmul.f32 %v4932, %v5236
          %v5238 = vrcp.pop %v5179
          %v5239 = vmul.f32 %v4937, %v5238
          %v5240 = vrcp.pop %v5184
          %v5241 = vmul.f32 %v4942, %v5240
          %v5242 = vrcp.pop %v5189
          %v5243 = vmul.f32 %v4947, %v5242
          %v5244 = vrcp.pop %v5194
          %v5245 = vmul.f32 %v4952, %v5244
          %v5246 = vrcp.pop %v5199
          %v5247 = vmul.f32 %v4957, %v5246
          %v5248 = vrcp.pop %v5204
          %v5249 = vmul.f32 %v4962, %v5248
          %v5250 = vrcp.pop %v5209
          %v5251 = vmul.f32 %v4967, %v5250
          %v5252 = vrcp.pop %v5214
          %v5253 = vmul.f32 %v4972, %v5252
          %v5254 = vrcp.pop %v5219
          %v5255 = vmul.f32 %v4977, %v5254
          %v5256 = vrcp.pop %v5224
          %v5257 = vmul.f32 %v4982, %v5256
          %vm5258 = vcmp.gt.f32.partialorder %v5227, 0.0
          %vm5259 = vcmp.gt.f32.partialorder %v5229, 0.0
          %vm5260 = vcmp.gt.f32.partialorder %v5231, 0.0
          %vm5261 = vcmp.gt.f32.partialorder %v5233, 0.0
          %vm5262 = vcmp.gt.f32.partialorder %v5235, 0.0
          %vm5263 = vcmp.gt.f32.partialorder %v5237, 0.0
          %vm5264 = vcmp.gt.f32.partialorder %v5239, 0.0
          %vm5265 = vcmp.gt.f32.partialorder %v5241, 0.0
          %vm5266 = vcmp.gt.f32.partialorder %v5243, 0.0
          %vm5267 = vcmp.gt.f32.partialorder %v5245, 0.0
          %vm5268 = vcmp.gt.f32.partialorder %v5247, 0.0
          %vm5269 = vcmp.gt.f32.partialorder %v5249, 0.0
          %vm5270 = vcmp.gt.f32.partialorder %v5251, 0.0
          %vm5271 = vcmp.gt.f32.partialorder %v5253, 0.0
          %vm5272 = vcmp.gt.f32.partialorder %v5255, 0.0
          %vm5273 = vcmp.gt.f32.partialorder %v5257, 0.0
          %v5274 = vmin.f32 %v5227, 0.0
          %v5275 = vmin.f32 %v5229, 0.0
          %v5276 = vmin.f32 %v5231, 0.0
          %v5277 = vmin.f32 %v5233, 0.0
          %v5278 = vmin.f32 %v5235, 0.0
          %v5279 = vmin.f32 %v5237, 0.0
          %v5280 = vmin.f32 %v5239, 0.0
          %v5281 = vmin.f32 %v5241, 0.0
          %v5282 = vmin.f32 %v5243, 0.0
          %v5283 = vmin.f32 %v5245, 0.0
          %v5284 = vmin.f32 %v5247, 0.0
          %v5285 = vmin.f32 %v5249, 0.0
          %v5286 = vmin.f32 %v5251, 0.0
          %v5287 = vmin.f32 %v5253, 0.0
          %v5288 = vmin.f32 %v5255, 0.0
          %v5289 = vmin.f32 %v5257, 0.0
          %v5290 = vmul.f32 %v5274, 1.442695
          %v5291 = vpow.pop %v5290
          %v5292 = vmul.f32 %v5275, 1.442695
          %v5293 = vpow.pop %v5292
          %v5294 = vmul.f32 %v5276, 1.442695
          %v5295 = vpow.pop %v5294
          %v5296 = vmul.f32 %v5277, 1.442695
          %v5297 = vpow.pop %v5296
          %v5298 = vmul.f32 %v5278, 1.442695
          %v5299 = vpow.pop %v5298
          %v5300 = vmul.f32 %v5279, 1.442695
          %v5301 = vpow.pop %v5300
          %v5302 = vmul.f32 %v5280, 1.442695
          %v5303 = vpow.pop %v5302
          %v5304 = vmul.f32 %v5281, 1.442695
          %v5305 = vpow.pop %v5304
          %v5306 = vmul.f32 %v5282, 1.442695
          %v5307 = vpow.pop %v5306
          %v5308 = vmul.f32 %v5283, 1.442695
          %v5309 = vpow.pop %v5308
          %v5310 = vmul.f32 %v5284, 1.442695
          %v5311 = vpow.pop %v5310
          %v5312 = vmul.f32 %v5285, 1.442695
          %v5313 = vpow.pop %v5312
          %v5314 = vmul.f32 %v5286, 1.442695
          %v5315 = vpow.pop %v5314
          %v5316 = vmul.f32 %v5287, 1.442695
          %v5317 = vpow.pop %v5316
          %v5318 = vmul.f32 %v5288, 1.442695
          %v5319 = vpow.pop %v5318
          %v5320 = vmul.f32 %v5289, 1.442695
          %v5321 = vpow.pop %v5320
          %v5322 = vsub.f32 %v5291, 1.0
          %v5323 = vsub.f32 %v5293, 1.0
          %v5324 = vsub.f32 %v5295, 1.0
          %v5325 = vsub.f32 %v5297, 1.0
          %v5326 = vsub.f32 %v5299, 1.0
          %v5327 = vsub.f32 %v5301, 1.0
          %v5328 = vsub.f32 %v5303, 1.0
          %v5329 = vsub.f32 %v5305, 1.0
          %v5330 = vsub.f32 %v5307, 1.0
          %v5331 = vsub.f32 %v5309, 1.0
          %v5332 = vsub.f32 %v5311, 1.0
          %v5333 = vsub.f32 %v5313, 1.0
          %v5334 = vsub.f32 %v5315, 1.0
          %v5335 = vsub.f32 %v5317, 1.0
          %v5336 = vsub.f32 %v5319, 1.0
          %v5337 = vsub.f32 %v5321, 1.0
          %v5338 = vsel %vm5258, %v5227, %v5322
          %v5339 = vsel %vm5259, %v5229, %v5323
          %v5340 = vsel %vm5260, %v5231, %v5324
          %v5341 = vsel %vm5261, %v5233, %v5325
          %v5342 = vsel %vm5262, %v5235, %v5326
          %v5343 = vsel %vm5263, %v5237, %v5327
          %v5344 = vsel %vm5264, %v5239, %v5328
          %v5345 = vsel %vm5265, %v5241, %v5329
          %v5346 = vsel %vm5266, %v5243, %v5330
          %v5347 = vsel %vm5267, %v5245, %v5331
          %v5348 = vsel %vm5268, %v5247, %v5332
          %v5349 = vsel %vm5269, %v5249, %v5333
          %v5350 = vsel %vm5270, %v5251, %v5334
          %v5351 = vsel %vm5271, %v5253, %v5335
          %v5352 = vsel %vm5272, %v5255, %v5336
          %v5353 = vsel %vm5273, %v5257, %v5337
          %v5355 = vlaneseq
          %v5356 = vshrl.u32 %v5355, 7
          %v5357 = vsub.s32 0, %v5356
          %v5358 = vrot.slane %v1702, %v5357
          %v5359 = vlaneseq
          %v5360 = vshrl.u32 %v5359, 7
          %v5361 = vsub.s32 1, %v5360
          %v5362 = vrot.slane %v1702, %v5361
          %v5363 = vlaneseq
          %v5364 = vshrl.u32 %v5363, 7
          %v5365 = vsub.s32 2, %v5364
          %v5366 = vrot.slane %v1702, %v5365
          %5370 = vmatprep.subr.mxu0 %v1607
          %5371 = vmatpush1.msra.mxu0 %v1606
          %5372 = vmatprep.subr.mxu0 %v1610
          %5373 = vmatpush1.msra.mxu0 %v1609
          %5374 = vmatprep.subr.mxu0 %v1613
          %5375 = vmatpush1.msra.mxu0 %v1612
          %5376 = vmatprep.subr.mxu0 %v1616
          %5377 = vmatpush1.msra.mxu0 %v1615
          %5378 = vmatprep.subr.mxu0 %v1619
          %5379 = vmatpush1.msra.mxu0 %v1618
          %5380 = vmatprep.subr.mxu0 %v1622
          %5381 = vmatpush1.msra.mxu0 %v1621
          %5382 = vmatprep.subr.mxu0 %v1625
          %5383 = vmatpush1.msra.mxu0 %v1624
          %5384 = vmatprep.subr.mxu0 %v1628
          %5385 = vmatpush1.msra.mxu0 %v1627
          %5386 = vmatprep.subr.mxu0 %v1631
          %5387 = vmatpush1.msra.mxu0 %v1630
          %5388 = vmatprep.subr.mxu0 %v1634
          %5389 = vmatpush1.msra.mxu0 %v1633
          %5390 = vmatprep.subr.mxu0 %v1637
          %5391 = vmatpush1.msra.mxu0 %v1636
          %5392 = vmatprep.subr.mxu0 %v1640
          %5393 = vmatpush1.msra.mxu0 %v1639
          %5394 = vmatprep.subr.mxu0 %v1643
          %5395 = vmatpush1.msra.mxu0 %v1642
          %5396 = vmatprep.subr.mxu0 %v1646
          %5397 = vmatpush1.msra.mxu0 %v1645
          %5398 = vmatprep.subr.mxu0 %v1649
          %5399 = vmatpush1.msra.mxu0 %v1648
          %5400 = vmatprep.subr.mxu0 %v1652
          %5401 = vmatpush1.msra.mxu0 %v1651
          %5402 = vmatprep.subr.mxu0 0.0
          %5403 = vmatpush1.msra.mxu0 0.0
          %5404 = vmatprep.subr.mxu0 0.0
          %5405 = vmatpush1.msra.mxu0 0.0
          %5406 = vmatprep.subr.mxu0 0.0
          %5407 = vmatpush1.msra.mxu0 0.0
          %5408 = vmatprep.subr.mxu0 0.0
          %5409 = vmatpush1.msra.mxu0 0.0
          %5410 = vmatprep.subr.mxu0 0.0
          %5411 = vmatpush1.msra.mxu0 0.0
          %5412 = vmatprep.subr.mxu0 0.0
          %5413 = vmatpush1.msra.mxu0 0.0
          %5414 = vmatprep.subr.mxu0 0.0
          %5415 = vmatpush1.msra.mxu0 0.0
          %5416 = vmatprep.subr.mxu0 0.0
          %5417 = vmatpush1.msra.mxu0 0.0
          %5418 = vmatprep.subr.mxu0 0.0
          %5419 = vmatpush1.msra.mxu0 0.0
          %5420 = vmatprep.subr.mxu0 0.0
          %5421 = vmatpush1.msra.mxu0 0.0
          %5422 = vmatprep.subr.mxu0 0.0
          %5423 = vmatpush1.msra.mxu0 0.0
          %5424 = vmatprep.subr.mxu0 0.0
          %5425 = vmatpush1.msra.mxu0 0.0
          %5426 = vmatprep.subr.mxu0 0.0
          %5427 = vmatpush1.msra.mxu0 0.0
          %5428 = vmatprep.subr.mxu0 0.0
          %5429 = vmatpush1.msra.mxu0 0.0
          %5430 = vmatprep.subr.mxu0 0.0
          %5431 = vmatpush1.msra.mxu0 0.0
          %5432 = vmatprep.subr.mxu0 0.0
          %5433 = vmatpush1.msra.mxu0 0.0
          %5434 = vmatprep.mubr.f32.mxu0 0.0
          %5435 = vmatmul.mubr.f32.gmra.mrb[0].mxu0 %v5338
          %v5436 = vpop.f32.mrb[0].mxu0
          %v5437 = vadd.f32 %v5358, %v5436
          %v5438 = vpop.f32.mrb[0].mxu0
          %v5439 = vadd.f32 %v5362, %v5438
          %5440 = vmatprep.mubr.f32.mxu0 0.0
          %5441 = vmatmul.mubr.f32.gmra.mrb[0].mxu0 %v5339
          %v5442 = vpop.f32.mrb[0].mxu0
          %v5443 = vadd.f32 %v5358, %v5442
          %v5444 = vpop.f32.mrb[0].mxu0
          %v5445 = vadd.f32 %v5362, %v5444
          %5446 = vmatprep.mubr.f32.mxu0 0.0
          %5447 = vmatmul.mubr.f32.gmra.mrb[0].mxu0 %v5340
          %v5448 = vpop.f32.mrb[0].mxu0
          %v5449 = vadd.f32 %v5358, %v5448
          %v5450 = vpop.f32.mrb[0].mxu0
          %v5451 = vadd.f32 %v5362, %v5450
          %5452 = vmatprep.mubr.f32.mxu0 0.0
          %5453 = vmatmul.mubr.f32.gmra.mrb[0].mxu0 %v5341
          %v5454 = vpop.f32.mrb[0].mxu0
          %v5455 = vadd.f32 %v5358, %v5454
          %v5456 = vpop.f32.mrb[0].mxu0
          %v5457 = vadd.f32 %v5362, %v5456
          %5458 = vmatprep.mubr.f32.mxu0 0.0
          %5459 = vmatmul.mubr.f32.gmra.mrb[0].mxu0 %v5342
          %v5460 = vpop.f32.mrb[0].mxu0
          %v5461 = vadd.f32 %v5358, %v5460
          %v5462 = vpop.f32.mrb[0].mxu0
          %v5463 = vadd.f32 %v5362, %v5462
          %5464 = vmatprep.mubr.f32.mxu0 0.0
          %5465 = vmatmul.mubr.f32.gmra.mrb[0].mxu0 %v5343
          %v5466 = vpop.f32.mrb[0].mxu0
          %v5467 = vadd.f32 %v5358, %v5466
          %v5468 = vpop.f32.mrb[0].mxu0
          %v5469 = vadd.f32 %v5362, %v5468
          %5470 = vmatprep.mubr.f32.mxu0 0.0
          %5471 = vmatmul.mubr.f32.gmra.mrb[0].mxu0 %v5344
          %v5472 = vpop.f32.mrb[0].mxu0
          %v5473 = vadd.f32 %v5358, %v5472
          %v5474 = vpop.f32.mrb[0].mxu0
          %v5475 = vadd.f32 %v5362, %v5474
          %5476 = vmatprep.mubr.f32.mxu0 0.0
          %5477 = vmatmul.mubr.f32.gmra.mrb[0].mxu0 %v5345
          %v5478 = vpop.f32.mrb[0].mxu0
          %v5479 = vadd.f32 %v5358, %v5478
          %v5480 = vpop.f32.mrb[0].mxu0
          %v5481 = vadd.f32 %v5362, %v5480
          %5482 = vmatprep.mubr.f32.mxu0 0.0
          %5483 = vmatmul.mubr.f32.gmra.mrb[0].mxu0 %v5346
          %v5484 = vpop.f32.mrb[0].mxu0
          %v5485 = vadd.f32 %v5358, %v5484
          %v5486 = vpop.f32.mrb[0].mxu0
          %v5487 = vadd.f32 %v5362, %v5486
          %5488 = vmatprep.mubr.f32.mxu0 0.0
          %5489 = vmatmul.mubr.f32.gmra.mrb[0].mxu0 %v5347
          %v5490 = vpop.f32.mrb[0].mxu0
          %v5491 = vadd.f32 %v5358, %v5490
          %v5492 = vpop.f32.mrb[0].mxu0
          %v5493 = vadd.f32 %v5362, %v5492
          %5494 = vmatprep.mubr.f32.mxu0 0.0
          %5495 = vmatmul.mubr.f32.gmra.mrb[0].mxu0 %v5348
          %v5496 = vpop.f32.mrb[0].mxu0
          %v5497 = vadd.f32 %v5358, %v5496
          %v5498 = vpop.f32.mrb[0].mxu0
          %v5499 = vadd.f32 %v5362, %v5498
          %5500 = vmatprep.mubr.f32.mxu0 0.0
          %5501 = vmatmul.mubr.f32.gmra.mrb[0].mxu0 %v5349
          %v5502 = vpop.f32.mrb[0].mxu0
          %v5503 = vadd.f32 %v5358, %v5502
          %v5504 = vpop.f32.mrb[0].mxu0
          %v5505 = vadd.f32 %v5362, %v5504
          %5506 = vmatprep.mubr.f32.mxu0 0.0
          %5507 = vmatmul.mubr.f32.gmra.mrb[0].mxu0 %v5350
          %v5508 = vpop.f32.mrb[0].mxu0
          %v5509 = vadd.f32 %v5358, %v5508
          %v5510 = vpop.f32.mrb[0].mxu0
          %v5511 = vadd.f32 %v5362, %v5510
          %5512 = vmatprep.mubr.f32.mxu0 0.0
          %5513 = vmatmul.mubr.f32.gmra.mrb[0].mxu0 %v5351
          %v5514 = vpop.f32.mrb[0].mxu0
          %v5515 = vadd.f32 %v5358, %v5514
          %v5516 = vpop.f32.mrb[0].mxu0
          %v5517 = vadd.f32 %v5362, %v5516
          %5518 = vmatprep.mubr.f32.mxu0 0.0
          %5519 = vmatmul.mubr.f32.gmra.mrb[0].mxu0 %v5352
          %v5520 = vpop.f32.mrb[0].mxu0
          %v5521 = vadd.f32 %v5358, %v5520
          %v5522 = vpop.f32.mrb[0].mxu0
          %v5523 = vadd.f32 %v5362, %v5522
          %5524 = vmatprep.mubr.f32.mxu0 0.0
          %5525 = vmatmul.mubr.f32.gmra.mrb[0].mxu0 %v5353
          %v5526 = vpop.f32.mrb[0].mxu0
          %v5527 = vadd.f32 %v5358, %v5526
          %v5528 = vpop.f32.mrb[0].mxu0
          %v5529 = vadd.f32 %v5362, %v5528
          %5530 = vdwg.mxu0
          %5531 = vmatprep.subr.mxu0 0.0
          %5532 = vmatpush1.msra.mxu0 %v1608
          %5533 = vmatprep.subr.mxu0 0.0
          %5534 = vmatpush1.msra.mxu0 %v1611
          %5535 = vmatprep.subr.mxu0 0.0
          %5536 = vmatpush1.msra.mxu0 %v1614
          %5537 = vmatprep.subr.mxu0 0.0
          %5538 = vmatpush1.msra.mxu0 %v1617
          %5539 = vmatprep.subr.mxu0 0.0
          %5540 = vmatpush1.msra.mxu0 %v1620
          %5541 = vmatprep.subr.mxu0 0.0
          %5542 = vmatpush1.msra.mxu0 %v1623
          %5543 = vmatprep.subr.mxu0 0.0
          %5544 = vmatpush1.msra.mxu0 %v1626
          %5545 = vmatprep.subr.mxu0 0.0
          %5546 = vmatpush1.msra.mxu0 %v1629
          %5547 = vmatprep.subr.mxu0 0.0
          %5548 = vmatpush1.msra.mxu0 %v1632
          %5549 = vmatprep.subr.mxu0 0.0
          %5550 = vmatpush1.msra.mxu0 %v1635
          %5551 = vmatprep.subr.mxu0 0.0
          %5552 = vmatpush1.msra.mxu0 %v1638
          %5553 = vmatprep.subr.mxu0 0.0
          %5554 = vmatpush1.msra.mxu0 %v1641
          %5555 = vmatprep.subr.mxu0 0.0
          %5556 = vmatpush1.msra.mxu0 %v1644
          %5557 = vmatprep.subr.mxu0 0.0
          %5558 = vmatpush1.msra.mxu0 %v1647
          %5559 = vmatprep.subr.mxu0 0.0
          %5560 = vmatpush1.msra.mxu0 %v1650
          %5561 = vmatprep.subr.mxu0 0.0
          %5562 = vmatpush1.msra.mxu0 %v1653
          %5563 = vmatprep.subr.mxu0 0.0
          %5564 = vmatpush1.msra.mxu0 0.0
          %5565 = vmatprep.subr.mxu0 0.0
          %5566 = vmatpush1.msra.mxu0 0.0
          %5567 = vmatprep.subr.mxu0 0.0
          %5568 = vmatpush1.msra.mxu0 0.0
          %5569 = vmatprep.subr.mxu0 0.0
          %5570 = vmatpush1.msra.mxu0 0.0
          %5571 = vmatprep.subr.mxu0 0.0
          %5572 = vmatpush1.msra.mxu0 0.0
          %5573 = vmatprep.subr.mxu0 0.0
          %5574 = vmatpush1.msra.mxu0 0.0
          %5575 = vmatprep.subr.mxu0 0.0
          %5576 = vmatpush1.msra.mxu0 0.0
          %5577 = vmatprep.subr.mxu0 0.0
          %5578 = vmatpush1.msra.mxu0 0.0
          %5579 = vmatprep.subr.mxu0 0.0
          %5580 = vmatpush1.msra.mxu0 0.0
          %5581 = vmatprep.subr.mxu0 0.0
          %5582 = vmatpush1.msra.mxu0 0.0
          %5583 = vmatprep.subr.mxu0 0.0
          %5584 = vmatpush1.msra.mxu0 0.0
          %5585 = vmatprep.subr.mxu0 0.0
          %5586 = vmatpush1.msra.mxu0 0.0
          %5587 = vmatprep.subr.mxu0 0.0
          %5588 = vmatpush1.msra.mxu0 0.0
          %5589 = vmatprep.subr.mxu0 0.0
          %5590 = vmatpush1.msra.mxu0 0.0
          %5591 = vmatprep.subr.mxu0 0.0
          %5592 = vmatpush1.msra.mxu0 0.0
          %5593 = vmatprep.subr.mxu0 0.0
          %5594 = vmatpush1.msra.mxu0 0.0
          %5595 = vmatprep.mubr.f32.mxu0 0.0
          %5596 = vmatmul.mubr.f32.gmra.mrb[0].mxu0 %v5338
          %v5597 = vpop.f32.mrb[0].mxu0
          %v5598 = vadd.f32 %v5366, %v5597
          %v5599 = vpop.f32.mrb[0].mxu0
          %5600 = vmatprep.mubr.f32.mxu0 0.0
          %5601 = vmatmul.mubr.f32.gmra.mrb[0].mxu0 %v5339
          %v5602 = vpop.f32.mrb[0].mxu0
          %v5603 = vadd.f32 %v5366, %v5602
          %v5604 = vpop.f32.mrb[0].mxu0
          %5605 = vmatprep.mubr.f32.mxu0 0.0
          %5606 = vmatmul.mubr.f32.gmra.mrb[0].mxu0 %v5340
          %v5607 = vpop.f32.mrb[0].mxu0
          %v5608 = vadd.f32 %v5366, %v5607
          %v5609 = vpop.f32.mrb[0].mxu0
          %5610 = vmatprep.mubr.f32.mxu0 0.0
          %5611 = vmatmul.mubr.f32.gmra.mrb[0].mxu0 %v5341
          %v5612 = vpop.f32.mrb[0].mxu0
          %v5613 = vadd.f32 %v5366, %v5612
          %v5614 = vpop.f32.mrb[0].mxu0
          %5615 = vmatprep.mubr.f32.mxu0 0.0
          %5616 = vmatmul.mubr.f32.gmra.mrb[0].mxu0 %v5342
          %v5617 = vpop.f32.mrb[0].mxu0
          %v5618 = vadd.f32 %v5366, %v5617
          %v5619 = vpop.f32.mrb[0].mxu0
          %5620 = vmatprep.mubr.f32.mxu0 0.0
          %5621 = vmatmul.mubr.f32.gmra.mrb[0].mxu0 %v5343
          %v5622 = vpop.f32.mrb[0].mxu0
          %v5623 = vadd.f32 %v5366, %v5622
          %v5624 = vpop.f32.mrb[0].mxu0
          %5625 = vmatprep.mubr.f32.mxu0 0.0
          %5626 = vmatmul.mubr.f32.gmra.mrb[0].mxu0 %v5344
          %v5627 = vpop.f32.mrb[0].mxu0
          %v5628 = vadd.f32 %v5366, %v5627
          %v5629 = vpop.f32.mrb[0].mxu0
          %5630 = vmatprep.mubr.f32.mxu0 0.0
          %5631 = vmatmul.mubr.f32.gmra.mrb[0].mxu0 %v5345
          %v5632 = vpop.f32.mrb[0].mxu0
          %v5633 = vadd.f32 %v5366, %v5632
          %v5634 = vpop.f32.mrb[0].mxu0
          %5635 = vmatprep.mubr.f32.mxu0 0.0
          %5636 = vmatmul.mubr.f32.gmra.mrb[0].mxu0 %v5346
          %v5637 = vpop.f32.mrb[0].mxu0
          %v5638 = vadd.f32 %v5366, %v5637
          %v5639 = vpop.f32.mrb[0].mxu0
          %5640 = vmatprep.mubr.f32.mxu0 0.0
          %5641 = vmatmul.mubr.f32.gmra.mrb[0].mxu0 %v5347
          %v5642 = vpop.f32.mrb[0].mxu0
          %v5643 = vadd.f32 %v5366, %v5642
          %v5644 = vpop.f32.mrb[0].mxu0
          %5645 = vmatprep.mubr.f32.mxu0 0.0
          %5646 = vmatmul.mubr.f32.gmra.mrb[0].mxu0 %v5348
          %v5647 = vpop.f32.mrb[0].mxu0
          %v5648 = vadd.f32 %v5366, %v5647
          %v5649 = vpop.f32.mrb[0].mxu0
          %5650 = vmatprep.mubr.f32.mxu0 0.0
          %5651 = vmatmul.mubr.f32.gmra.mrb[0].mxu0 %v5349
          %v5652 = vpop.f32.mrb[0].mxu0
          %v5653 = vadd.f32 %v5366, %v5652
          %v5654 = vpop.f32.mrb[0].mxu0
          %5655 = vmatprep.mubr.f32.mxu0 0.0
          %5656 = vmatmul.mubr.f32.gmra.mrb[0].mxu0 %v5350
          %v5657 = vpop.f32.mrb[0].mxu0
          %v5658 = vadd.f32 %v5366, %v5657
          %v5659 = vpop.f32.mrb[0].mxu0
          %5660 = vmatprep.mubr.f32.mxu0 0.0
          %5661 = vmatmul.mubr.f32.gmra.mrb[0].mxu0 %v5351
          %v5662 = vpop.f32.mrb[0].mxu0
          %v5663 = vadd.f32 %v5366, %v5662
          %v5664 = vpop.f32.mrb[0].mxu0
          %5665 = vmatprep.mubr.f32.mxu0 0.0
          %5666 = vmatmul.mubr.f32.gmra.mrb[0].mxu0 %v5352
          %v5667 = vpop.f32.mrb[0].mxu0
          %v5668 = vadd.f32 %v5366, %v5667
          %v5669 = vpop.f32.mrb[0].mxu0
          %5670 = vmatprep.mubr.f32.mxu0 0.0
          %5671 = vmatmul.mubr.f32.gmra.mrb[0].mxu0 %v5353
          %v5672 = vpop.f32.mrb[0].mxu0
          %v5673 = vadd.f32 %v5366, %v5672
          %v5674 = vpop.f32.mrb[0].mxu0
          %5675 = vdwg.mxu0
          %v5677 = vlaneseq
          %v5678 = vshrl.u32 %v5677, 7
          %v5679 = vsub.s32 0, %v5678
          %v5680 = vrot.slane %v1703, %v5679
          %v5681 = vlaneseq
          %v5682 = vshrl.u32 %v5681, 7
          %v5683 = vsub.s32 1, %v5682
          %v5684 = vrot.slane %v1703, %v5683
          %v5685 = vlaneseq
          %v5686 = vshrl.u32 %v5685, 7
          %v5687 = vsub.s32 2, %v5686
          %v5688 = vrot.slane %v1703, %v5687
          %5692 = vmatprep.subr.mxu0 %v1655
          %5693 = vmatpush1.msra.mxu0 %v1654
          %5694 = vmatprep.subr.mxu0 %v1658
          %5695 = vmatpush1.msra.mxu0 %v1657
          %5696 = vmatprep.subr.mxu0 %v1661
          %5697 = vmatpush1.msra.mxu0 %v1660
          %5698 = vmatprep.subr.mxu0 %v1664
          %5699 = vmatpush1.msra.mxu0 %v1663
          %5700 = vmatprep.subr.mxu0 %v1667
          %5701 = vmatpush1.msra.mxu0 %v1666
          %5702 = vmatprep.subr.mxu0 %v1670
          %5703 = vmatpush1.msra.mxu0 %v1669
          %5704 = vmatprep.subr.mxu0 %v1673
          %5705 = vmatpush1.msra.mxu0 %v1672
          %5706 = vmatprep.subr.mxu0 %v1676
          %5707 = vmatpush1.msra.mxu0 %v1675
          %5708 = vmatprep.subr.mxu0 %v1679
          %5709 = vmatpush1.msra.mxu0 %v1678
          %5710 = vmatprep.subr.mxu0 %v1682
          %5711 = vmatpush1.msra.mxu0 %v1681
          %5712 = vmatprep.subr.mxu0 %v1685
          %5713 = vmatpush1.msra.mxu0 %v1684
          %5714 = vmatprep.subr.mxu0 %v1688
          %5715 = vmatpush1.msra.mxu0 %v1687
          %5716 = vmatprep.subr.mxu0 %v1691
          %5717 = vmatpush1.msra.mxu0 %v1690
          %5718 = vmatprep.subr.mxu0 %v1694
          %5719 = vmatpush1.msra.mxu0 %v1693
          %5720 = vmatprep.subr.mxu0 %v1697
          %5721 = vmatpush1.msra.mxu0 %v1696
          %5722 = vmatprep.subr.mxu0 %v1700
          %5723 = vmatpush1.msra.mxu0 %v1699
          %5724 = vmatprep.subr.mxu0 0.0
          %5725 = vmatpush1.msra.mxu0 0.0
          %5726 = vmatprep.subr.mxu0 0.0
          %5727 = vmatpush1.msra.mxu0 0.0
          %5728 = vmatprep.subr.mxu0 0.0
          %5729 = vmatpush1.msra.mxu0 0.0
          %5730 = vmatprep.subr.mxu0 0.0
          %5731 = vmatpush1.msra.mxu0 0.0
          %5732 = vmatprep.subr.mxu0 0.0
          %5733 = vmatpush1.msra.mxu0 0.0
          %5734 = vmatprep.subr.mxu0 0.0
          %5735 = vmatpush1.msra.mxu0 0.0
          %5736 = vmatprep.subr.mxu0 0.0
          %5737 = vmatpush1.msra.mxu0 0.0
          %5738 = vmatprep.subr.mxu0 0.0
          %5739 = vmatpush1.msra.mxu0 0.0
          %5740 = vmatprep.subr.mxu0 0.0
          %5741 = vmatpush1.msra.mxu0 0.0
          %5742 = vmatprep.subr.mxu0 0.0
          %5743 = vmatpush1.msra.mxu0 0.0
          %5744 = vmatprep.subr.mxu0 0.0
          %5745 = vmatpush1.msra.mxu0 0.0
          %5746 = vmatprep.subr.mxu0 0.0
          %5747 = vmatpush1.msra.mxu0 0.0
          %5748 = vmatprep.subr.mxu0 0.0
          %5749 = vmatpush1.msra.mxu0 0.0
          %5750 = vmatprep.subr.mxu0 0.0
          %5751 = vmatpush1.msra.mxu0 0.0
          %5752 = vmatprep.subr.mxu0 0.0
          %5753 = vmatpush1.msra.mxu0 0.0
          %5754 = vmatprep.subr.mxu0 0.0
          %5755 = vmatpush1.msra.mxu0 0.0
          %5756 = vmatprep.mubr.f32.mxu0 0.0
          %5757 = vmatmul.mubr.f32.gmra.mrb[0].mxu0 %v1984
          %v5758 = vpop.f32.mrb[0].mxu0
          %v5759 = vadd.f32 %v5680, %v5758
          %v5760 = vpop.f32.mrb[0].mxu0
          %v5761 = vadd.f32 %v5684, %v5760
          %5762 = vmatprep.mubr.f32.mxu0 0.0
          %5763 = vmatmul.mubr.f32.gmra.mrb[0].mxu0 %v1985
          %v5764 = vpop.f32.mrb[0].mxu0
          %v5765 = vadd.f32 %v5680, %v5764
          %v5766 = vpop.f32.mrb[0].mxu0
          %v5767 = vadd.f32 %v5684, %v5766
          %5768 = vmatprep.mubr.f32.mxu0 0.0
          %5769 = vmatmul.mubr.f32.gmra.mrb[0].mxu0 %v1986
          %v5770 = vpop.f32.mrb[0].mxu0
          %v5771 = vadd.f32 %v5680, %v5770
          %v5772 = vpop.f32.mrb[0].mxu0
          %v5773 = vadd.f32 %v5684, %v5772
          %5774 = vmatprep.mubr.f32.mxu0 0.0
          %5775 = vmatmul.mubr.f32.gmra.mrb[0].mxu0 %v1987
          %v5776 = vpop.f32.mrb[0].mxu0
          %v5777 = vadd.f32 %v5680, %v5776
          %v5778 = vpop.f32.mrb[0].mxu0
          %v5779 = vadd.f32 %v5684, %v5778
          %5780 = vmatprep.mubr.f32.mxu0 0.0
          %5781 = vmatmul.mubr.f32.gmra.mrb[0].mxu0 %v1988
          %v5782 = vpop.f32.mrb[0].mxu0
          %v5783 = vadd.f32 %v5680, %v5782
          %v5784 = vpop.f32.mrb[0].mxu0
          %v5785 = vadd.f32 %v5684, %v5784
          %5786 = vmatprep.mubr.f32.mxu0 0.0
          %5787 = vmatmul.mubr.f32.gmra.mrb[0].mxu0 %v1989
          %v5788 = vpop.f32.mrb[0].mxu0
          %v5789 = vadd.f32 %v5680, %v5788
          %v5790 = vpop.f32.mrb[0].mxu0
          %v5791 = vadd.f32 %v5684, %v5790
          %5792 = vmatprep.mubr.f32.mxu0 0.0
          %5793 = vmatmul.mubr.f32.gmra.mrb[0].mxu0 %v1990
          %v5794 = vpop.f32.mrb[0].mxu0
          %v5795 = vadd.f32 %v5680, %v5794
          %v5796 = vpop.f32.mrb[0].mxu0
          %v5797 = vadd.f32 %v5684, %v5796
          %5798 = vmatprep.mubr.f32.mxu0 0.0
          %5799 = vmatmul.mubr.f32.gmra.mrb[0].mxu0 %v1991
          %v5800 = vpop.f32.mrb[0].mxu0
          %v5801 = vadd.f32 %v5680, %v5800
          %v5802 = vpop.f32.mrb[0].mxu0
          %v5803 = vadd.f32 %v5684, %v5802
          %5804 = vmatprep.mubr.f32.mxu0 0.0
          %5805 = vmatmul.mubr.f32.gmra.mrb[0].mxu0 %v1992
          %v5806 = vpop.f32.mrb[0].mxu0
          %v5807 = vadd.f32 %v5680, %v5806
          %v5808 = vpop.f32.mrb[0].mxu0
          %v5809 = vadd.f32 %v5684, %v5808
          %5810 = vmatprep.mubr.f32.mxu0 0.0
          %5811 = vmatmul.mubr.f32.gmra.mrb[0].mxu0 %v1993
          %v5812 = vpop.f32.mrb[0].mxu0
          %v5813 = vadd.f32 %v5680, %v5812
          %v5814 = vpop.f32.mrb[0].mxu0
          %v5815 = vadd.f32 %v5684, %v5814
          %5816 = vmatprep.mubr.f32.mxu0 0.0
          %5817 = vmatmul.mubr.f32.gmra.mrb[0].mxu0 %v1994
          %v5818 = vpop.f32.mrb[0].mxu0
          %v5819 = vadd.f32 %v5680, %v5818
          %v5820 = vpop.f32.mrb[0].mxu0
          %v5821 = vadd.f32 %v5684, %v5820
          %5822 = vmatprep.mubr.f32.mxu0 0.0
          %5823 = vmatmul.mubr.f32.gmra.mrb[0].mxu0 %v1995
          %v5824 = vpop.f32.mrb[0].mxu0
          %v5825 = vadd.f32 %v5680, %v5824
          %v5826 = vpop.f32.mrb[0].mxu0
          %v5827 = vadd.f32 %v5684, %v5826
          %5828 = vmatprep.mubr.f32.mxu0 0.0
          %5829 = vmatmul.mubr.f32.gmra.mrb[0].mxu0 %v1996
          %v5830 = vpop.f32.mrb[0].mxu0
          %v5831 = vadd.f32 %v5680, %v5830
          %v5832 = vpop.f32.mrb[0].mxu0
          %v5833 = vadd.f32 %v5684, %v5832
          %5834 = vmatprep.mubr.f32.mxu0 0.0
          %5835 = vmatmul.mubr.f32.gmra.mrb[0].mxu0 %v1997
          %v5836 = vpop.f32.mrb[0].mxu0
          %v5837 = vadd.f32 %v5680, %v5836
          %v5838 = vpop.f32.mrb[0].mxu0
          %v5839 = vadd.f32 %v5684, %v5838
          %5840 = vmatprep.mubr.f32.mxu0 0.0
          %5841 = vmatmul.mubr.f32.gmra.mrb[0].mxu0 %v1998
          %v5842 = vpop.f32.mrb[0].mxu0
          %v5843 = vadd.f32 %v5680, %v5842
          %v5844 = vpop.f32.mrb[0].mxu0
          %v5845 = vadd.f32 %v5684, %v5844
          %5846 = vmatprep.mubr.f32.mxu0 0.0
          %5847 = vmatmul.mubr.f32.gmra.mrb[0].mxu0 %v1999
          %v5848 = vpop.f32.mrb[0].mxu0
          %v5849 = vadd.f32 %v5680, %v5848
          %v5850 = vpop.f32.mrb[0].mxu0
          %v5851 = vadd.f32 %v5684, %v5850
          %5852 = vdwg.mxu0
          %5853 = vmatprep.subr.mxu0 0.0
          %5854 = vmatpush1.msra.mxu0 %v1656
          %5855 = vmatprep.subr.mxu0 0.0
          %5856 = vmatpush1.msra.mxu0 %v1659
          %5857 = vmatprep.subr.mxu0 0.0
          %5858 = vmatpush1.msra.mxu0 %v1662
          %5859 = vmatprep.subr.mxu0 0.0
          %5860 = vmatpush1.msra.mxu0 %v1665
          %5861 = vmatprep.subr.mxu0 0.0
          %5862 = vmatpush1.msra.mxu0 %v1668
          %5863 = vmatprep.subr.mxu0 0.0
          %5864 = vmatpush1.msra.mxu0 %v1671
          %5865 = vmatprep.subr.mxu0 0.0
          %5866 = vmatpush1.msra.mxu0 %v1674
          %5867 = vmatprep.subr.mxu0 0.0
          %5868 = vmatpush1.msra.mxu0 %v1677
          %5869 = vmatprep.subr.mxu0 0.0
          %5870 = vmatpush1.msra.mxu0 %v1680
          %5871 = vmatprep.subr.mxu0 0.0
          %5872 = vmatpush1.msra.mxu0 %v1683
          %5873 = vmatprep.subr.mxu0 0.0
          %5874 = vmatpush1.msra.mxu0 %v1686
          %5875 = vmatprep.subr.mxu0 0.0
          %5876 = vmatpush1.msra.mxu0 %v1689
          %5877 = vmatprep.subr.mxu0 0.0
          %5878 = vmatpush1.msra.mxu0 %v1692
          %5879 = vmatprep.subr.mxu0 0.0
          %5880 = vmatpush1.msra.mxu0 %v1695
          %5881 = vmatprep.subr.mxu0 0.0
          %5882 = vmatpush1.msra.mxu0 %v1698
          %5883 = vmatprep.subr.mxu0 0.0
          %5884 = vmatpush1.msra.mxu0 %v1701
          %5885 = vmatprep.subr.mxu0 0.0
          %5886 = vmatpush1.msra.mxu0 0.0
          %5887 = vmatprep.subr.mxu0 0.0
          %5888 = vmatpush1.msra.mxu0 0.0
          %5889 = vmatprep.subr.mxu0 0.0
          %5890 = vmatpush1.msra.mxu0 0.0
          %5891 = vmatprep.subr.mxu0 0.0
          %5892 = vmatpush1.msra.mxu0 0.0
          %5893 = vmatprep.subr.mxu0 0.0
          %5894 = vmatpush1.msra.mxu0 0.0
          %5895 = vmatprep.subr.mxu0 0.0
          %5896 = vmatpush1.msra.mxu0 0.0
          %5897 = vmatprep.subr.mxu0 0.0
          %5898 = vmatpush1.msra.mxu0 0.0
          %5899 = vmatprep.subr.mxu0 0.0
          %5900 = vmatpush1.msra.mxu0 0.0
          %5901 = vmatprep.subr.mxu0 0.0
          %5902 = vmatpush1.msra.mxu0 0.0
          %5903 = vmatprep.subr.mxu0 0.0
          %5904 = vmatpush1.msra.mxu0 0.0
          %5905 = vmatprep.subr.mxu0 0.0
          %5906 = vmatpush1.msra.mxu0 0.0
          %5907 = vmatprep.subr.mxu0 0.0
          %5908 = vmatpush1.msra.mxu0 0.0
          %5909 = vmatprep.subr.mxu0 0.0
          %5910 = vmatpush1.msra.mxu0 0.0
          %5911 = vmatprep.subr.mxu0 0.0
          %5912 = vmatpush1.msra.mxu0 0.0
          %5913 = vmatprep.subr.mxu0 0.0
          %5914 = vmatpush1.msra.mxu0 0.0
          %5915 = vmatprep.subr.mxu0 0.0
          %5916 = vmatpush1.msra.mxu0 0.0
          %5917 = vmatprep.mubr.f32.mxu0 0.0
          %5918 = vmatmul.mubr.f32.gmra.mrb[0].mxu0 %v1984
          %v5919 = vpop.f32.mrb[0].mxu0
          %v5920 = vadd.f32 %v5688, %v5919
          %v5921 = vpop.f32.mrb[0].mxu0
          %5922 = vmatprep.mubr.f32.mxu0 0.0
          %5923 = vmatmul.mubr.f32.gmra.mrb[0].mxu0 %v1985
          %v5924 = vpop.f32.mrb[0].mxu0
          %v5925 = vadd.f32 %v5688, %v5924
          %v5926 = vpop.f32.mrb[0].mxu0
          %5927 = vmatprep.mubr.f32.mxu0 0.0
          %5928 = vmatmul.mubr.f32.gmra.mrb[0].mxu0 %v1986
          %v5929 = vpop.f32.mrb[0].mxu0
          %v5930 = vadd.f32 %v5688, %v5929
          %v5931 = vpop.f32.mrb[0].mxu0
          %5932 = vmatprep.mubr.f32.mxu0 0.0
          %5933 = vmatmul.mubr.f32.gmra.mrb[0].mxu0 %v1987
          %v5934 = vpop.f32.mrb[0].mxu0
          %v5935 = vadd.f32 %v5688, %v5934
          %v5936 = vpop.f32.mrb[0].mxu0
          %5937 = vmatprep.mubr.f32.mxu0 0.0
          %5938 = vmatmul.mubr.f32.gmra.mrb[0].mxu0 %v1988
          %v5939 = vpop.f32.mrb[0].mxu0
          %v5940 = vadd.f32 %v5688, %v5939
          %v5941 = vpop.f32.mrb[0].mxu0
          %5942 = vmatprep.mubr.f32.mxu0 0.0
          %5943 = vmatmul.mubr.f32.gmra.mrb[0].mxu0 %v1989
          %v5944 = vpop.f32.mrb[0].mxu0
          %v5945 = vadd.f32 %v5688, %v5944
          %v5946 = vpop.f32.mrb[0].mxu0
          %5947 = vmatprep.mubr.f32.mxu0 0.0
          %5948 = vmatmul.mubr.f32.gmra.mrb[0].mxu0 %v1990
          %v5949 = vpop.f32.mrb[0].mxu0
          %v5950 = vadd.f32 %v5688, %v5949
          %v5951 = vpop.f32.mrb[0].mxu0
          %5952 = vmatprep.mubr.f32.mxu0 0.0
          %5953 = vmatmul.mubr.f32.gmra.mrb[0].mxu0 %v1991
          %v5954 = vpop.f32.mrb[0].mxu0
          %v5955 = vadd.f32 %v5688, %v5954
          %v5956 = vpop.f32.mrb[0].mxu0
          %5957 = vmatprep.mubr.f32.mxu0 0.0
          %5958 = vmatmul.mubr.f32.gmra.mrb[0].mxu0 %v1992
          %v5959 = vpop.f32.mrb[0].mxu0
          %v5960 = vadd.f32 %v5688, %v5959
          %v5961 = vpop.f32.mrb[0].mxu0
          %5962 = vmatprep.mubr.f32.mxu0 0.0
          %5963 = vmatmul.mubr.f32.gmra.mrb[0].mxu0 %v1993
          %v5964 = vpop.f32.mrb[0].mxu0
          %v5965 = vadd.f32 %v5688, %v5964
          %v5966 = vpop.f32.mrb[0].mxu0
          %5967 = vmatprep.mubr.f32.mxu0 0.0
          %5968 = vmatmul.mubr.f32.gmra.mrb[0].mxu0 %v1994
          %v5969 = vpop.f32.mrb[0].mxu0
          %v5970 = vadd.f32 %v5688, %v5969
          %v5971 = vpop.f32.mrb[0].mxu0
          %5972 = vmatprep.mubr.f32.mxu0 0.0
          %5973 = vmatmul.mubr.f32.gmra.mrb[0].mxu0 %v1995
          %v5974 = vpop.f32.mrb[0].mxu0
          %v5975 = vadd.f32 %v5688, %v5974
          %v5976 = vpop.f32.mrb[0].mxu0
          %5977 = vmatprep.mubr.f32.mxu0 0.0
          %5978 = vmatmul.mubr.f32.gmra.mrb[0].mxu0 %v1996
          %v5979 = vpop.f32.mrb[0].mxu0
          %v5980 = vadd.f32 %v5688, %v5979
          %v5981 = vpop.f32.mrb[0].mxu0
          %5982 = vmatprep.mubr.f32.mxu0 0.0
          %5983 = vmatmul.mubr.f32.gmra.mrb[0].mxu0 %v1997
          %v5984 = vpop.f32.mrb[0].mxu0
          %v5985 = vadd.f32 %v5688, %v5984
          %v5986 = vpop.f32.mrb[0].mxu0
          %5987 = vmatprep.mubr.f32.mxu0 0.0
          %5988 = vmatmul.mubr.f32.gmra.mrb[0].mxu0 %v1998
          %v5989 = vpop.f32.mrb[0].mxu0
          %v5990 = vadd.f32 %v5688, %v5989
          %v5991 = vpop.f32.mrb[0].mxu0
          %5992 = vmatprep.mubr.f32.mxu0 0.0
          %5993 = vmatmul.mubr.f32.gmra.mrb[0].mxu0 %v1999
          %v5994 = vpop.f32.mrb[0].mxu0
          %v5995 = vadd.f32 %v5688, %v5994
          %v5996 = vpop.f32.mrb[0].mxu0
          %5997 = vdwg.mxu0
          %v5998 = vadd.f32 %v5437, %v5759
          %v5999 = vadd.f32 %v5443, %v5765
          %v6000 = vadd.f32 %v5449, %v5771
          %v6001 = vadd.f32 %v5455, %v5777
          %v6002 = vadd.f32 %v5461, %v5783
          %v6003 = vadd.f32 %v5467, %v5789
          %v6004 = vadd.f32 %v5473, %v5795
          %v6005 = vadd.f32 %v5479, %v5801
          %v6006 = vadd.f32 %v5485, %v5807
          %v6007 = vadd.f32 %v5491, %v5813
          %v6008 = vadd.f32 %v5497, %v5819
          %v6009 = vadd.f32 %v5503, %v5825
          %v6010 = vadd.f32 %v5509, %v5831
          %v6011 = vadd.f32 %v5515, %v5837
          %v6012 = vadd.f32 %v5521, %v5843
          %v6013 = vadd.f32 %v5527, %v5849
          %v6014 = vxor.u32 %v5998, 2147483648
          %v6015 = vxor.u32 %v5999, 2147483648
          %v6016 = vxor.u32 %v6000, 2147483648
          %v6017 = vxor.u32 %v6001, 2147483648
          %v6018 = vxor.u32 %v6002, 2147483648
          %v6019 = vxor.u32 %v6003, 2147483648
          %v6020 = vxor.u32 %v6004, 2147483648
          %v6021 = vxor.u32 %v6005, 2147483648
          %v6022 = vxor.u32 %v6006, 2147483648
          %v6023 = vxor.u32 %v6007, 2147483648
          %v6024 = vxor.u32 %v6008, 2147483648
          %v6025 = vxor.u32 %v6009, 2147483648
          %v6026 = vxor.u32 %v6010, 2147483648
          %v6027 = vxor.u32 %v6011, 2147483648
          %v6028 = vxor.u32 %v6012, 2147483648
          %v6029 = vxor.u32 %v6013, 2147483648
          %v6030 = vmul.f32 %v6014, 1.442695
          %v6031 = vpow.pop %v6030
          %v6032 = vmul.f32 %v6015, 1.442695
          %v6033 = vpow.pop %v6032
          %v6034 = vmul.f32 %v6016, 1.442695
          %v6035 = vpow.pop %v6034
          %v6036 = vmul.f32 %v6017, 1.442695
          %v6037 = vpow.pop %v6036
          %v6038 = vmul.f32 %v6018, 1.442695
          %v6039 = vpow.pop %v6038
          %v6040 = vmul.f32 %v6019, 1.442695
          %v6041 = vpow.pop %v6040
          %v6042 = vmul.f32 %v6020, 1.442695
          %v6043 = vpow.pop %v6042
          %v6044 = vmul.f32 %v6021, 1.442695
          %v6045 = vpow.pop %v6044
          %v6046 = vmul.f32 %v6022, 1.442695
          %v6047 = vpow.pop %v6046
          %v6048 = vmul.f32 %v6023, 1.442695
          %v6049 = vpow.pop %v6048
          %v6050 = vmul.f32 %v6024, 1.442695
          %v6051 = vpow.pop %v6050
          %v6052 = vmul.f32 %v6025, 1.442695
          %v6053 = vpow.pop %v6052
          %v6054 = vmul.f32 %v6026, 1.442695
          %v6055 = vpow.pop %v6054
          %v6056 = vmul.f32 %v6027, 1.442695
          %v6057 = vpow.pop %v6056
          %v6058 = vmul.f32 %v6028, 1.442695
          %v6059 = vpow.pop %v6058
          %v6060 = vmul.f32 %v6029, 1.442695
          %v6061 = vpow.pop %v6060
          %v6062 = vadd.f32 %v6031, 1.0
          %v6063 = vadd.f32 %v6033, 1.0
          %v6064 = vadd.f32 %v6035, 1.0
          %v6065 = vadd.f32 %v6037, 1.0
          %v6066 = vadd.f32 %v6039, 1.0
          %v6067 = vadd.f32 %v6041, 1.0
          %v6068 = vadd.f32 %v6043, 1.0
          %v6069 = vadd.f32 %v6045, 1.0
          %v6070 = vadd.f32 %v6047, 1.0
          %v6071 = vadd.f32 %v6049, 1.0
          %v6072 = vadd.f32 %v6051, 1.0
          %v6073 = vadd.f32 %v6053, 1.0
          %v6074 = vadd.f32 %v6055, 1.0
          %v6075 = vadd.f32 %v6057, 1.0
          %v6076 = vadd.f32 %v6059, 1.0
          %v6077 = vadd.f32 %v6061, 1.0
          %v6078 = vrcp.pop %v6062
          %v6079 = vmul.f32 1.0, %v6078
          %v6080 = vrcp.pop %v6063
          %v6081 = vmul.f32 1.0, %v6080
          %v6082 = vrcp.pop %v6064
          %v6083 = vmul.f32 1.0, %v6082
          %v6084 = vrcp.pop %v6065
          %v6085 = vmul.f32 1.0, %v6084
          %v6086 = vrcp.pop %v6066
          %v6087 = vmul.f32 1.0, %v6086
          %v6088 = vrcp.pop %v6067
          %v6089 = vmul.f32 1.0, %v6088
          %v6090 = vrcp.pop %v6068
          %v6091 = vmul.f32 1.0, %v6090
          %v6092 = vrcp.pop %v6069
          %v6093 = vmul.f32 1.0, %v6092
          %v6094 = vrcp.pop %v6070
          %v6095 = vmul.f32 1.0, %v6094
          %v6096 = vrcp.pop %v6071
          %v6097 = vmul.f32 1.0, %v6096
          %v6098 = vrcp.pop %v6072
          %v6099 = vmul.f32 1.0, %v6098
          %v6100 = vrcp.pop %v6073
          %v6101 = vmul.f32 1.0, %v6100
          %v6102 = vrcp.pop %v6074
          %v6103 = vmul.f32 1.0, %v6102
          %v6104 = vrcp.pop %v6075
          %v6105 = vmul.f32 1.0, %v6104
          %v6106 = vrcp.pop %v6076
          %v6107 = vmul.f32 1.0, %v6106
          %v6108 = vrcp.pop %v6077
          %v6109 = vmul.f32 1.0, %v6108
          %v6110 = vadd.f32 %v5439, %v5761
          %v6111 = vadd.f32 %v5445, %v5767
          %v6112 = vadd.f32 %v5451, %v5773
          %v6113 = vadd.f32 %v5457, %v5779
          %v6114 = vadd.f32 %v5463, %v5785
          %v6115 = vadd.f32 %v5469, %v5791
          %v6116 = vadd.f32 %v5475, %v5797
          %v6117 = vadd.f32 %v5481, %v5803
          %v6118 = vadd.f32 %v5487, %v5809
          %v6119 = vadd.f32 %v5493, %v5815
          %v6120 = vadd.f32 %v5499, %v5821
          %v6121 = vadd.f32 %v5505, %v5827
          %v6122 = vadd.f32 %v5511, %v5833
          %v6123 = vadd.f32 %v5517, %v5839
          %v6124 = vadd.f32 %v5523, %v5845
          %v6125 = vadd.f32 %v5529, %v5851
          %v6126 = vxor.u32 %v6110, 2147483648
          %v6127 = vxor.u32 %v6111, 2147483648
          %v6128 = vxor.u32 %v6112, 2147483648
          %v6129 = vxor.u32 %v6113, 2147483648
          %v6130 = vxor.u32 %v6114, 2147483648
          %v6131 = vxor.u32 %v6115, 2147483648
          %v6132 = vxor.u32 %v6116, 2147483648
          %v6133 = vxor.u32 %v6117, 2147483648
          %v6134 = vxor.u32 %v6118, 2147483648
          %v6135 = vxor.u32 %v6119, 2147483648
          %v6136 = vxor.u32 %v6120, 2147483648
          %v6137 = vxor.u32 %v6121, 2147483648
          %v6138 = vxor.u32 %v6122, 2147483648
          %v6139 = vxor.u32 %v6123, 2147483648
          %v6140 = vxor.u32 %v6124, 2147483648
          %v6141 = vxor.u32 %v6125, 2147483648
          %v6142 = vmul.f32 %v6126, 1.442695
          %v6143 = vpow.pop %v6142
          %v6144 = vmul.f32 %v6127, 1.442695
          %v6145 = vpow.pop %v6144
          %v6146 = vmul.f32 %v6128, 1.442695
          %v6147 = vpow.pop %v6146
          %v6148 = vmul.f32 %v6129, 1.442695
          %v6149 = vpow.pop %v6148
          %v6150 = vmul.f32 %v6130, 1.442695
          %v6151 = vpow.pop %v6150
          %v6152 = vmul.f32 %v6131, 1.442695
          %v6153 = vpow.pop %v6152
          %v6154 = vmul.f32 %v6132, 1.442695
          %v6155 = vpow.pop %v6154
          %v6156 = vmul.f32 %v6133, 1.442695
          %v6157 = vpow.pop %v6156
          %v6158 = vmul.f32 %v6134, 1.442695
          %v6159 = vpow.pop %v6158
          %v6160 = vmul.f32 %v6135, 1.442695
          %v6161 = vpow.pop %v6160
          %v6162 = vmul.f32 %v6136, 1.442695
          %v6163 = vpow.pop %v6162
          %v6164 = vmul.f32 %v6137, 1.442695
          %v6165 = vpow.pop %v6164
          %v6166 = vmul.f32 %v6138, 1.442695
          %v6167 = vpow.pop %v6166
          %v6168 = vmul.f32 %v6139, 1.442695
          %v6169 = vpow.pop %v6168
          %v6170 = vmul.f32 %v6140, 1.442695
          %v6171 = vpow.pop %v6170
          %v6172 = vmul.f32 %v6141, 1.442695
          %v6173 = vpow.pop %v6172
          %v6174 = vadd.f32 %v6143, 1.0
          %v6175 = vadd.f32 %v6145, 1.0
          %v6176 = vadd.f32 %v6147, 1.0
          %v6177 = vadd.f32 %v6149, 1.0
          %v6178 = vadd.f32 %v6151, 1.0
          %v6179 = vadd.f32 %v6153, 1.0
          %v6180 = vadd.f32 %v6155, 1.0
          %v6181 = vadd.f32 %v6157, 1.0
          %v6182 = vadd.f32 %v6159, 1.0
          %v6183 = vadd.f32 %v6161, 1.0
          %v6184 = vadd.f32 %v6163, 1.0
          %v6185 = vadd.f32 %v6165, 1.0
          %v6186 = vadd.f32 %v6167, 1.0
          %v6187 = vadd.f32 %v6169, 1.0
          %v6188 = vadd.f32 %v6171, 1.0
          %v6189 = vadd.f32 %v6173, 1.0
          %v6190 = vrcp.pop %v6174
          %v6191 = vmul.f32 1.0, %v6190
          %v6192 = vrcp.pop %v6175
          %v6193 = vmul.f32 1.0, %v6192
          %v6194 = vrcp.pop %v6176
          %v6195 = vmul.f32 1.0, %v6194
          %v6196 = vrcp.pop %v6177
          %v6197 = vmul.f32 1.0, %v6196
          %v6198 = vrcp.pop %v6178
          %v6199 = vmul.f32 1.0, %v6198
          %v6200 = vrcp.pop %v6179
          %v6201 = vmul.f32 1.0, %v6200
          %v6202 = vrcp.pop %v6180
          %v6203 = vmul.f32 1.0, %v6202
          %v6204 = vrcp.pop %v6181
          %v6205 = vmul.f32 1.0, %v6204
          %v6206 = vrcp.pop %v6182
          %v6207 = vmul.f32 1.0, %v6206
          %v6208 = vrcp.pop %v6183
          %v6209 = vmul.f32 1.0, %v6208
          %v6210 = vrcp.pop %v6184
          %v6211 = vmul.f32 1.0, %v6210
          %v6212 = vrcp.pop %v6185
          %v6213 = vmul.f32 1.0, %v6212
          %v6214 = vrcp.pop %v6186
          %v6215 = vmul.f32 1.0, %v6214
          %v6216 = vrcp.pop %v6187
          %v6217 = vmul.f32 1.0, %v6216
          %v6218 = vrcp.pop %v6188
          %v6219 = vmul.f32 1.0, %v6218
          %v6220 = vrcp.pop %v6189
          %v6221 = vmul.f32 1.0, %v6220
          %v6222 = vmul.f32 %v6079, %v5920
          %v6223 = vmul.f32 %v6081, %v5925
          %v6224 = vmul.f32 %v6083, %v5930
          %v6225 = vmul.f32 %v6085, %v5935
          %v6226 = vmul.f32 %v6087, %v5940
          %v6227 = vmul.f32 %v6089, %v5945
          %v6228 = vmul.f32 %v6091, %v5950
          %v6229 = vmul.f32 %v6093, %v5955
          %v6230 = vmul.f32 %v6095, %v5960
          %v6231 = vmul.f32 %v6097, %v5965
          %v6232 = vmul.f32 %v6099, %v5970
          %v6233 = vmul.f32 %v6101, %v5975
          %v6234 = vmul.f32 %v6103, %v5980
          %v6235 = vmul.f32 %v6105, %v5985
          %v6236 = vmul.f32 %v6107, %v5990
          %v6237 = vmul.f32 %v6109, %v5995
          %v6238 = vadd.f32 %v5598, %v6222
          %v6239 = vadd.f32 %v5603, %v6223
          %v6240 = vadd.f32 %v5608, %v6224
          %v6241 = vadd.f32 %v5613, %v6225
          %v6242 = vadd.f32 %v5618, %v6226
          %v6243 = vadd.f32 %v5623, %v6227
          %v6244 = vadd.f32 %v5628, %v6228
          %v6245 = vadd.f32 %v5633, %v6229
          %v6246 = vadd.f32 %v5638, %v6230
          %v6247 = vadd.f32 %v5643, %v6231
          %v6248 = vadd.f32 %v5648, %v6232
          %v6249 = vadd.f32 %v5653, %v6233
          %v6250 = vadd.f32 %v5658, %v6234
          %v6251 = vadd.f32 %v5663, %v6235
          %v6252 = vadd.f32 %v5668, %v6236
          %v6253 = vadd.f32 %v5673, %v6237
          %v6254 = vtanh.pop %v6238
          %v6255 = vtanh.pop %v6239
          %v6256 = vtanh.pop %v6240
          %v6257 = vtanh.pop %v6241
          %v6258 = vtanh.pop %v6242
          %v6259 = vtanh.pop %v6243
          %v6260 = vtanh.pop %v6244
          %v6261 = vtanh.pop %v6245
          %v6262 = vtanh.pop %v6246
          %v6263 = vtanh.pop %v6247
          %v6264 = vtanh.pop %v6248
          %v6265 = vtanh.pop %v6249
          %v6266 = vtanh.pop %v6250
          %v6267 = vtanh.pop %v6251
          %v6268 = vtanh.pop %v6252
          %v6269 = vtanh.pop %v6253
          %v6270 = vsub.f32 1.0, %v6191
          %v6271 = vsub.f32 1.0, %v6193
          %v6272 = vsub.f32 1.0, %v6195
          %v6273 = vsub.f32 1.0, %v6197
          %v6274 = vsub.f32 1.0, %v6199
          %v6275 = vsub.f32 1.0, %v6201
          %v6276 = vsub.f32 1.0, %v6203
          %v6277 = vsub.f32 1.0, %v6205
          %v6278 = vsub.f32 1.0, %v6207
          %v6279 = vsub.f32 1.0, %v6209
          %v6280 = vsub.f32 1.0, %v6211
          %v6281 = vsub.f32 1.0, %v6213
          %v6282 = vsub.f32 1.0, %v6215
          %v6283 = vsub.f32 1.0, %v6217
          %v6284 = vsub.f32 1.0, %v6219
          %v6285 = vsub.f32 1.0, %v6221
          %v6286 = vmul.f32 %v6270, %v6254
          %v6287 = vmul.f32 %v6271, %v6255
          %v6288 = vmul.f32 %v6272, %v6256
          %v6289 = vmul.f32 %v6273, %v6257
          %v6290 = vmul.f32 %v6274, %v6258
          %v6291 = vmul.f32 %v6275, %v6259
          %v6292 = vmul.f32 %v6276, %v6260
          %v6293 = vmul.f32 %v6277, %v6261
          %v6294 = vmul.f32 %v6278, %v6262
          %v6295 = vmul.f32 %v6279, %v6263
          %v6296 = vmul.f32 %v6280, %v6264
          %v6297 = vmul.f32 %v6281, %v6265
          %v6298 = vmul.f32 %v6282, %v6266
          %v6299 = vmul.f32 %v6283, %v6267
          %v6300 = vmul.f32 %v6284, %v6268
          %v6301 = vmul.f32 %v6285, %v6269
          %v6302 = vmul.f32 %v6191, %v1984
          %v6303 = vmul.f32 %v6193, %v1985
          %v6304 = vmul.f32 %v6195, %v1986
          %v6305 = vmul.f32 %v6197, %v1987
          %v6306 = vmul.f32 %v6199, %v1988
          %v6307 = vmul.f32 %v6201, %v1989
          %v6308 = vmul.f32 %v6203, %v1990
          %v6309 = vmul.f32 %v6205, %v1991
          %v6310 = vmul.f32 %v6207, %v1992
          %v6311 = vmul.f32 %v6209, %v1993
          %v6312 = vmul.f32 %v6211, %v1994
          %v6313 = vmul.f32 %v6213, %v1995
          %v6314 = vmul.f32 %v6215, %v1996
          %v6315 = vmul.f32 %v6217, %v1997
          %v6316 = vmul.f32 %v6219, %v1998
          %v6317 = vmul.f32 %v6221, %v1999
          %v6318 = vadd.f32 %v6286, %v6302
          %v6319 = vadd.f32 %v6287, %v6303
          %v6320 = vadd.f32 %v6288, %v6304
          %v6321 = vadd.f32 %v6289, %v6305
          %v6322 = vadd.f32 %v6290, %v6306
          %v6323 = vadd.f32 %v6291, %v6307
          %v6324 = vadd.f32 %v6292, %v6308
          %v6325 = vadd.f32 %v6293, %v6309
          %v6326 = vadd.f32 %v6294, %v6310
          %v6327 = vadd.f32 %v6295, %v6311
          %v6328 = vadd.f32 %v6296, %v6312
          %v6329 = vadd.f32 %v6297, %v6313
          %v6330 = vadd.f32 %v6298, %v6314
          %v6331 = vadd.f32 %v6299, %v6315
          %v6332 = vadd.f32 %v6300, %v6316
          %v6333 = vadd.f32 %v6301, %v6317
          %v6334 = vmax.f32 %v6318, 0.0
          %v6335 = vmax.f32 %v6319, 0.0
          %v6336 = vmax.f32 %v6320, 0.0
          %v6337 = vmax.f32 %v6321, 0.0
          %v6338 = vmax.f32 %v6322, 0.0
          %v6339 = vmax.f32 %v6323, 0.0
          %v6340 = vmax.f32 %v6324, 0.0
          %v6341 = vmax.f32 %v6325, 0.0
          %v6342 = vmax.f32 %v6326, 0.0
          %v6343 = vmax.f32 %v6327, 0.0
          %v6344 = vmax.f32 %v6328, 0.0
          %v6345 = vmax.f32 %v6329, 0.0
          %v6346 = vmax.f32 %v6330, 0.0
          %v6347 = vmax.f32 %v6331, 0.0
          %v6348 = vmax.f32 %v6332, 0.0
          %v6349 = vmax.f32 %v6333, 0.0
          %6350 = vst [vmem:[#allocation26] sm:$0xff] %v6334
          %6351 = vst [vmem:[#allocation26 + $0x8] sm:$0xff] %v6335
          %6352 = vst [vmem:[#allocation26 + $0x10] sm:$0xff] %v6336
          %6353 = vst [vmem:[#allocation26 + $0x18] sm:$0xff] %v6337
          %6354 = vst [vmem:[#allocation26 + $0x20] sm:$0xff] %v6338
          %6355 = vst [vmem:[#allocation26 + $0x28] sm:$0xff] %v6339
          %6356 = vst [vmem:[#allocation26 + $0x30] sm:$0xff] %v6340
          %6357 = vst [vmem:[#allocation26 + $0x38] sm:$0xff] %v6341
          %6358 = vst [vmem:[#allocation26 + $0x40] sm:$0xff] %v6342
          %6359 = vst [vmem:[#allocation26 + $0x48] sm:$0xff] %v6343
          %6360 = vst [vmem:[#allocation26 + $0x50] sm:$0xff] %v6344
          %6361 = vst [vmem:[#allocation26 + $0x58] sm:$0xff] %v6345
          %6362 = vst [vmem:[#allocation26 + $0x60] sm:$0xff] %v6346
          %6363 = vst [vmem:[#allocation26 + $0x68] sm:$0xff] %v6347
          %6364 = vst [vmem:[#allocation26 + $0x70] sm:$0xff] %v6348
          %6365 = vst [vmem:[#allocation26 + $0x78] sm:$0xff] %v6349
        $region200: #{tpu_custom_call.1} parent=135 // pred_fallthru
          _
        %p6366 = scmp.gt.s32.totalorder %s80, 0
        // Predicated region
        $region201: #{tpu_custom_call.1} parent=135 // pred_check
          %p6367 = pneg %p6366
        $region202: #{tpu_custom_call.1} parent=135 // pred_check_branch
          %6369 = sbr.rel (%p6367) target = $region204
        $region203: #{tpu_custom_call.1} parent=135 // pred_region
          %v6370 = vld [vmem:[%s1347] sm:$0xff]
          %v6371 = vld [vmem:[%s1347 + $0x8] sm:$0xff]
          %v6372 = vld [vmem:[%s1347 + $0x10] sm:$0xff]
          %v6373 = vld [vmem:[%s1347 + $0x18] sm:$0xff]
          %v6374 = vld [vmem:[%s1347 + $0x20] sm:$0xff]
          %v6375 = vld [vmem:[%s1347 + $0x28] sm:$0xff]
          %v6376 = vld [vmem:[%s1347 + $0x30] sm:$0xff]
          %v6377 = vld [vmem:[%s1347 + $0x38] sm:$0xff]
          %v6378 = vld [vmem:[%s1347 + $0x40] sm:$0xff]
          %v6379 = vld [vmem:[%s1347 + $0x48] sm:$0xff]
          %v6380 = vld [vmem:[%s1347 + $0x50] sm:$0xff]
          %v6381 = vld [vmem:[%s1347 + $0x58] sm:$0xff]
          %v6382 = vld [vmem:[%s1347 + $0x60] sm:$0xff]
          %v6383 = vld [vmem:[%s1347 + $0x68] sm:$0xff]
          %v6384 = vld [vmem:[%s1347 + $0x70] sm:$0xff]
          %v6385 = vld [vmem:[%s1347 + $0x78] sm:$0xff]
          %v6386 = vld [vmem:[%s1358] sm:$0xff]
          %v6387 = vld [vmem:[%s1358 + $0x8] sm:$0xff]
          %v6388 = vld [vmem:[%s1358 + $0x10] sm:$0xff]
          %v6389 = vld [vmem:[%s1358 + $0x18] sm:$0xff]
          %v6390 = vld [vmem:[%s1358 + $0x20] sm:$0xff]
          %v6391 = vld [vmem:[%s1358 + $0x28] sm:$0xff]
          %v6392 = vld [vmem:[%s1358 + $0x30] sm:$0xff]
          %v6393 = vld [vmem:[%s1358 + $0x38] sm:$0xff]
          %v6394 = vld [vmem:[%s1358 + $0x40] sm:$0xff]
          %v6395 = vld [vmem:[%s1358 + $0x48] sm:$0xff]
          %v6396 = vld [vmem:[%s1358 + $0x50] sm:$0xff]
          %v6397 = vld [vmem:[%s1358 + $0x58] sm:$0xff]
          %v6398 = vld [vmem:[%s1358 + $0x60] sm:$0xff]
          %v6399 = vld [vmem:[%s1358 + $0x68] sm:$0xff]
          %v6400 = vld [vmem:[%s1358 + $0x70] sm:$0xff]
          %v6401 = vld [vmem:[%s1358 + $0x78] sm:$0xff]
          %v6402 = vld [vmem:[%s1367] sm:$0x1]
          %v6403 = vld [vmem:[%s1200] sm:$0xff]
          %v6404 = vld [vmem:[%s1200 + $0x8] sm:$0xff]
          %v6405 = vld [vmem:[%s1200 + $0x10] sm:$0xff]
          %v6406 = vld [vmem:[%s1200 + $0x18] sm:$0xff]
          %v6407 = vld [vmem:[%s1200 + $0x20] sm:$0xff]
          %v6408 = vld [vmem:[%s1200 + $0x28] sm:$0xff]
          %v6409 = vld [vmem:[%s1200 + $0x30] sm:$0xff]
          %v6410 = vld [vmem:[%s1200 + $0x38] sm:$0xff]
          %v6411 = vld [vmem:[%s1200 + $0x40] sm:$0xff]
          %v6412 = vld [vmem:[%s1200 + $0x48] sm:$0xff]
          %v6413 = vld [vmem:[%s1200 + $0x50] sm:$0xff]
          %v6414 = vld [vmem:[%s1200 + $0x58] sm:$0xff]
          %v6415 = vld [vmem:[%s1200 + $0x60] sm:$0xff]
          %v6416 = vld [vmem:[%s1200 + $0x68] sm:$0xff]
          %v6417 = vld [vmem:[%s1200 + $0x70] sm:$0xff]
          %v6418 = vld [vmem:[%s1200 + $0x78] sm:$0xff]
          %v6419 = vld [vmem:[%s1208] sm:$0x1]
          %v6420 = vld [vmem:[%s1384] sm:$0xff]
          %v6421 = vld [vmem:[%s1384 + $0x8] sm:$0xff]
          %v6422 = vld [vmem:[%s1384 + $0x10] sm:$0xff]
          %v6423 = vld [vmem:[%s1384 + $0x18] sm:$0xff]
          %v6424 = vld [vmem:[%s1384 + $0x20] sm:$0xff]
          %v6425 = vld [vmem:[%s1384 + $0x28] sm:$0xff]
          %v6426 = vld [vmem:[%s1384 + $0x30] sm:$0xff]
          %v6427 = vld [vmem:[%s1384 + $0x38] sm:$0xff]
          %v6428 = vld [vmem:[%s1384 + $0x40] sm:$0xff]
          %v6429 = vld [vmem:[%s1384 + $0x48] sm:$0xff]
          %v6430 = vld [vmem:[%s1384 + $0x50] sm:$0xff]
          %v6431 = vld [vmem:[%s1384 + $0x58] sm:$0xff]
          %v6432 = vld [vmem:[%s1384 + $0x60] sm:$0xff]
          %v6433 = vld [vmem:[%s1384 + $0x68] sm:$0xff]
          %v6434 = vld [vmem:[%s1384 + $0x70] sm:$0xff]
          %v6435 = vld [vmem:[%s1384 + $0x78] sm:$0xff]
          %v6436 = vld [vmem:[%s1384 + $0x80] sm:$0xff]
          %v6437 = vld [vmem:[%s1384 + $0x88] sm:$0xff]
          %v6438 = vld [vmem:[%s1384 + $0x90] sm:$0xff]
          %v6439 = vld [vmem:[%s1384 + $0x98] sm:$0xff]
          %v6440 = vld [vmem:[%s1384 + $0xa0] sm:$0xff]
          %v6441 = vld [vmem:[%s1384 + $0xa8] sm:$0xff]
          %v6442 = vld [vmem:[%s1384 + $0xb0] sm:$0xff]
          %v6443 = vld [vmem:[%s1384 + $0xb8] sm:$0xff]
          %v6444 = vld [vmem:[%s1384 + $0xc0] sm:$0xff]
          %v6445 = vld [vmem:[%s1384 + $0xc8] sm:$0xff]
          %v6446 = vld [vmem:[%s1384 + $0xd0] sm:$0xff]
          %v6447 = vld [vmem:[%s1384 + $0xd8] sm:$0xff]
          %v6448 = vld [vmem:[%s1384 + $0xe0] sm:$0xff]
          %v6449 = vld [vmem:[%s1384 + $0xe8] sm:$0xff]
          %v6450 = vld [vmem:[%s1384 + $0xf0] sm:$0xff]
          %v6451 = vld [vmem:[%s1384 + $0xf8] sm:$0xff]
          %v6452 = vld [vmem:[%s1384 + $0x100] sm:$0xff]
          %v6453 = vld [vmem:[%s1384 + $0x108] sm:$0xff]
          %v6454 = vld [vmem:[%s1384 + $0x110] sm:$0xff]
          %v6455 = vld [vmem:[%s1384 + $0x118] sm:$0xff]
          %v6456 = vld [vmem:[%s1384 + $0x120] sm:$0xff]
          %v6457 = vld [vmem:[%s1384 + $0x128] sm:$0xff]
          %v6458 = vld [vmem:[%s1384 + $0x130] sm:$0xff]
          %v6459 = vld [vmem:[%s1384 + $0x138] sm:$0xff]
          %v6460 = vld [vmem:[%s1384 + $0x140] sm:$0xff]
          %v6461 = vld [vmem:[%s1384 + $0x148] sm:$0xff]
          %v6462 = vld [vmem:[%s1384 + $0x150] sm:$0xff]
          %v6463 = vld [vmem:[%s1384 + $0x158] sm:$0xff]
          %v6464 = vld [vmem:[%s1384 + $0x160] sm:$0xff]
          %v6465 = vld [vmem:[%s1384 + $0x168] sm:$0xff]
          %v6466 = vld [vmem:[%s1384 + $0x170] sm:$0xff]
          %v6467 = vld [vmem:[%s1384 + $0x178] sm:$0xff]
          %v6468 = vld [vmem:[%s1217] sm:$0xff]
          %v6469 = vld [vmem:[%s1217 + $0x8] sm:$0xff]
          %v6470 = vld [vmem:[%s1217 + $0x10] sm:$0xff]
          %v6471 = vld [vmem:[%s1217 + $0x18] sm:$0xff]
          %v6472 = vld [vmem:[%s1217 + $0x20] sm:$0xff]
          %v6473 = vld [vmem:[%s1217 + $0x28] sm:$0xff]
          %v6474 = vld [vmem:[%s1217 + $0x30] sm:$0xff]
          %v6475 = vld [vmem:[%s1217 + $0x38] sm:$0xff]
          %v6476 = vld [vmem:[%s1217 + $0x40] sm:$0xff]
          %v6477 = vld [vmem:[%s1217 + $0x48] sm:$0xff]
          %v6478 = vld [vmem:[%s1217 + $0x50] sm:$0xff]
          %v6479 = vld [vmem:[%s1217 + $0x58] sm:$0xff]
          %v6480 = vld [vmem:[%s1217 + $0x60] sm:$0xff]
          %v6481 = vld [vmem:[%s1217 + $0x68] sm:$0xff]
          %v6482 = vld [vmem:[%s1217 + $0x70] sm:$0xff]
          %v6483 = vld [vmem:[%s1217 + $0x78] sm:$0xff]
          %v6484 = vld [vmem:[%s1217 + $0x80] sm:$0xff]
          %v6485 = vld [vmem:[%s1217 + $0x88] sm:$0xff]
          %v6486 = vld [vmem:[%s1217 + $0x90] sm:$0xff]
          %v6487 = vld [vmem:[%s1217 + $0x98] sm:$0xff]
          %v6488 = vld [vmem:[%s1217 + $0xa0] sm:$0xff]
          %v6489 = vld [vmem:[%s1217 + $0xa8] sm:$0xff]
          %v6490 = vld [vmem:[%s1217 + $0xb0] sm:$0xff]
          %v6491 = vld [vmem:[%s1217 + $0xb8] sm:$0xff]
          %v6492 = vld [vmem:[%s1217 + $0xc0] sm:$0xff]
          %v6493 = vld [vmem:[%s1217 + $0xc8] sm:$0xff]
          %v6494 = vld [vmem:[%s1217 + $0xd0] sm:$0xff]
          %v6495 = vld [vmem:[%s1217 + $0xd8] sm:$0xff]
          %v6496 = vld [vmem:[%s1217 + $0xe0] sm:$0xff]
          %v6497 = vld [vmem:[%s1217 + $0xe8] sm:$0xff]
          %v6498 = vld [vmem:[%s1217 + $0xf0] sm:$0xff]
          %v6499 = vld [vmem:[%s1217 + $0xf8] sm:$0xff]
          %v6500 = vld [vmem:[%s1217 + $0x100] sm:$0xff]
          %v6501 = vld [vmem:[%s1217 + $0x108] sm:$0xff]
          %v6502 = vld [vmem:[%s1217 + $0x110] sm:$0xff]
          %v6503 = vld [vmem:[%s1217 + $0x118] sm:$0xff]
          %v6504 = vld [vmem:[%s1217 + $0x120] sm:$0xff]
          %v6505 = vld [vmem:[%s1217 + $0x128] sm:$0xff]
          %v6506 = vld [vmem:[%s1217 + $0x130] sm:$0xff]
          %v6507 = vld [vmem:[%s1217 + $0x138] sm:$0xff]
          %v6508 = vld [vmem:[%s1217 + $0x140] sm:$0xff]
          %v6509 = vld [vmem:[%s1217 + $0x148] sm:$0xff]
          %v6510 = vld [vmem:[%s1217 + $0x150] sm:$0xff]
          %v6511 = vld [vmem:[%s1217 + $0x158] sm:$0xff]
          %v6512 = vld [vmem:[%s1217 + $0x160] sm:$0xff]
          %v6513 = vld [vmem:[%s1217 + $0x168] sm:$0xff]
          %v6514 = vld [vmem:[%s1217 + $0x170] sm:$0xff]
          %v6515 = vld [vmem:[%s1217 + $0x178] sm:$0xff]
          %v6516 = vld [vmem:[%s1397] sm:$0x7]
          %v6517 = vld [vmem:[%s1407] sm:$0x7]
          %v6518 = vld [vmem:[#allocation26] sm:$0xff]
          %v6519 = vld [vmem:[#allocation26 + $0x8] sm:$0xff]
          %v6520 = vld [vmem:[#allocation26 + $0x10] sm:$0xff]
          %v6521 = vld [vmem:[#allocation26 + $0x18] sm:$0xff]
          %v6522 = vld [vmem:[#allocation26 + $0x20] sm:$0xff]
          %v6523 = vld [vmem:[#allocation26 + $0x28] sm:$0xff]
          %v6524 = vld [vmem:[#allocation26 + $0x30] sm:$0xff]
          %v6525 = vld [vmem:[#allocation26 + $0x38] sm:$0xff]
          %v6526 = vld [vmem:[#allocation26 + $0x40] sm:$0xff]
          %v6527 = vld [vmem:[#allocation26 + $0x48] sm:$0xff]
          %v6528 = vld [vmem:[#allocation26 + $0x50] sm:$0xff]
          %v6529 = vld [vmem:[#allocation26 + $0x58] sm:$0xff]
          %v6530 = vld [vmem:[#allocation26 + $0x60] sm:$0xff]
          %v6531 = vld [vmem:[#allocation26 + $0x68] sm:$0xff]
          %v6532 = vld [vmem:[#allocation26 + $0x70] sm:$0xff]
          %v6533 = vld [vmem:[#allocation26 + $0x78] sm:$0xff]
          %v6535 = vlaneseq
          %v6536 = vshrl.u32 %v6535, 7
          %v6537 = vsub.s32 0, %v6536
          %v6538 = vrot.slane %v6419, %v6537
          %6540 = vmatprep.subr.mxu0 0.0
          %6541 = vmatpush1.msra.mxu0 %v6403
          %6542 = vmatprep.subr.mxu0 0.0
          %6543 = vmatpush1.msra.mxu0 %v6404
          %6544 = vmatprep.subr.mxu0 0.0
          %6545 = vmatpush1.msra.mxu0 %v6405
          %6546 = vmatprep.subr.mxu0 0.0
          %6547 = vmatpush1.msra.mxu0 %v6406
          %6548 = vmatprep.subr.mxu0 0.0
          %6549 = vmatpush1.msra.mxu0 %v6407
          %6550 = vmatprep.subr.mxu0 0.0
          %6551 = vmatpush1.msra.mxu0 %v6408
          %6552 = vmatprep.subr.mxu0 0.0
          %6553 = vmatpush1.msra.mxu0 %v6409
          %6554 = vmatprep.subr.mxu0 0.0
          %6555 = vmatpush1.msra.mxu0 %v6410
          %6556 = vmatprep.subr.mxu0 0.0
          %6557 = vmatpush1.msra.mxu0 %v6411
          %6558 = vmatprep.subr.mxu0 0.0
          %6559 = vmatpush1.msra.mxu0 %v6412
          %6560 = vmatprep.subr.mxu0 0.0
          %6561 = vmatpush1.msra.mxu0 %v6413
          %6562 = vmatprep.subr.mxu0 0.0
          %6563 = vmatpush1.msra.mxu0 %v6414
          %6564 = vmatprep.subr.mxu0 0.0
          %6565 = vmatpush1.msra.mxu0 %v6415
          %6566 = vmatprep.subr.mxu0 0.0
          %6567 = vmatpush1.msra.mxu0 %v6416
          %6568 = vmatprep.subr.mxu0 0.0
          %6569 = vmatpush1.msra.mxu0 %v6417
          %6570 = vmatprep.subr.mxu0 0.0
          %6571 = vmatpush1.msra.mxu0 %v6418
          %6572 = vmatprep.subr.mxu0 0.0
          %6573 = vmatpush1.msra.mxu0 0.0
          %6574 = vmatprep.subr.mxu0 0.0
          %6575 = vmatpush1.msra.mxu0 0.0
          %6576 = vmatprep.subr.mxu0 0.0
          %6577 = vmatpush1.msra.mxu0 0.0
          %6578 = vmatprep.subr.mxu0 0.0
          %6579 = vmatpush1.msra.mxu0 0.0
          %6580 = vmatprep.subr.mxu0 0.0
          %6581 = vmatpush1.msra.mxu0 0.0
          %6582 = vmatprep.subr.mxu0 0.0
          %6583 = vmatpush1.msra.mxu0 0.0
          %6584 = vmatprep.subr.mxu0 0.0
          %6585 = vmatpush1.msra.mxu0 0.0
          %6586 = vmatprep.subr.mxu0 0.0
          %6587 = vmatpush1.msra.mxu0 0.0
          %6588 = vmatprep.subr.mxu0 0.0
          %6589 = vmatpush1.msra.mxu0 0.0
          %6590 = vmatprep.subr.mxu0 0.0
          %6591 = vmatpush1.msra.mxu0 0.0
          %6592 = vmatprep.subr.mxu0 0.0
          %6593 = vmatpush1.msra.mxu0 0.0
          %6594 = vmatprep.subr.mxu0 0.0
          %6595 = vmatpush1.msra.mxu0 0.0
          %6596 = vmatprep.subr.mxu0 0.0
          %6597 = vmatpush1.msra.mxu0 0.0
          %6598 = vmatprep.subr.mxu0 0.0
          %6599 = vmatpush1.msra.mxu0 0.0
          %6600 = vmatprep.subr.mxu0 0.0
          %6601 = vmatpush1.msra.mxu0 0.0
          %6602 = vmatprep.subr.mxu0 0.0
          %6603 = vmatpush1.msra.mxu0 0.0
          %6604 = vmatprep.mubr.f32.mxu0 0.0
          %6605 = vmatmul.mubr.f32.gmra.mrb[0].mxu0 %v6518
          %v6606 = vpop.f32.mrb[0].mxu0
          %v6607 = vadd.f32 %v6538, %v6606
          %v6608 = vpop.f32.mrb[0].mxu0
          %6609 = vmatprep.mubr.f32.mxu0 0.0
          %6610 = vmatmul.mubr.f32.gmra.mrb[0].mxu0 %v6519
          %v6611 = vpop.f32.mrb[0].mxu0
          %v6612 = vadd.f32 %v6538, %v6611
          %v6613 = vpop.f32.mrb[0].mxu0
          %6614 = vmatprep.mubr.f32.mxu0 0.0
          %6615 = vmatmul.mubr.f32.gmra.mrb[0].mxu0 %v6520
          %v6616 = vpop.f32.mrb[0].mxu0
          %v6617 = vadd.f32 %v6538, %v6616
          %v6618 = vpop.f32.mrb[0].mxu0
          %6619 = vmatprep.mubr.f32.mxu0 0.0
          %6620 = vmatmul.mubr.f32.gmra.mrb[0].mxu0 %v6521
          %v6621 = vpop.f32.mrb[0].mxu0
          %v6622 = vadd.f32 %v6538, %v6621
          %v6623 = vpop.f32.mrb[0].mxu0
          %6624 = vmatprep.mubr.f32.mxu0 0.0
          %6625 = vmatmul.mubr.f32.gmra.mrb[0].mxu0 %v6522
          %v6626 = vpop.f32.mrb[0].mxu0
          %v6627 = vadd.f32 %v6538, %v6626
          %v6628 = vpop.f32.mrb[0].mxu0
          %6629 = vmatprep.mubr.f32.mxu0 0.0
          %6630 = vmatmul.mubr.f32.gmra.mrb[0].mxu0 %v6523
          %v6631 = vpop.f32.mrb[0].mxu0
          %v6632 = vadd.f32 %v6538, %v6631
          %v6633 = vpop.f32.mrb[0].mxu0
          %6634 = vmatprep.mubr.f32.mxu0 0.0
          %6635 = vmatmul.mubr.f32.gmra.mrb[0].mxu0 %v6524
          %v6636 = vpop.f32.mrb[0].mxu0
          %v6637 = vadd.f32 %v6538, %v6636
          %v6638 = vpop.f32.mrb[0].mxu0
          %6639 = vmatprep.mubr.f32.mxu0 0.0
          %6640 = vmatmul.mubr.f32.gmra.mrb[0].mxu0 %v6525
          %v6641 = vpop.f32.mrb[0].mxu0
          %v6642 = vadd.f32 %v6538, %v6641
          %v6643 = vpop.f32.mrb[0].mxu0
          %6644 = vmatprep.mubr.f32.mxu0 0.0
          %6645 = vmatmul.mubr.f32.gmra.mrb[0].mxu0 %v6526
          %v6646 = vpop.f32.mrb[0].mxu0
          %v6647 = vadd.f32 %v6538, %v6646
          %v6648 = vpop.f32.mrb[0].mxu0
          %6649 = vmatprep.mubr.f32.mxu0 0.0
          %6650 = vmatmul.mubr.f32.gmra.mrb[0].mxu0 %v6527
          %v6651 = vpop.f32.mrb[0].mxu0
          %v6652 = vadd.f32 %v6538, %v6651
          %v6653 = vpop.f32.mrb[0].mxu0
          %6654 = vmatprep.mubr.f32.mxu0 0.0
          %6655 = vmatmul.mubr.f32.gmra.mrb[0].mxu0 %v6528
          %v6656 = vpop.f32.mrb[0].mxu0
          %v6657 = vadd.f32 %v6538, %v6656
          %v6658 = vpop.f32.mrb[0].mxu0
          %6659 = vmatprep.mubr.f32.mxu0 0.0
          %6660 = vmatmul.mubr.f32.gmra.mrb[0].mxu0 %v6529
          %v6661 = vpop.f32.mrb[0].mxu0
          %v6662 = vadd.f32 %v6538, %v6661
          %v6663 = vpop.f32.mrb[0].mxu0
          %6664 = vmatprep.mubr.f32.mxu0 0.0
          %6665 = vmatmul.mubr.f32.gmra.mrb[0].mxu0 %v6530
          %v6666 = vpop.f32.mrb[0].mxu0
          %v6667 = vadd.f32 %v6538, %v6666
          %v6668 = vpop.f32.mrb[0].mxu0
          %6669 = vmatprep.mubr.f32.mxu0 0.0
          %6670 = vmatmul.mubr.f32.gmra.mrb[0].mxu0 %v6531
          %v6671 = vpop.f32.mrb[0].mxu0
          %v6672 = vadd.f32 %v6538, %v6671
          %v6673 = vpop.f32.mrb[0].mxu0
          %6674 = vmatprep.mubr.f32.mxu0 0.0
          %6675 = vmatmul.mubr.f32.gmra.mrb[0].mxu0 %v6532
          %v6676 = vpop.f32.mrb[0].mxu0
          %v6677 = vadd.f32 %v6538, %v6676
          %v6678 = vpop.f32.mrb[0].mxu0
          %6679 = vmatprep.mubr.f32.mxu0 0.0
          %6680 = vmatmul.mubr.f32.gmra.mrb[0].mxu0 %v6533
          %v6681 = vpop.f32.mrb[0].mxu0
          %v6682 = vadd.f32 %v6538, %v6681
          %v6683 = vpop.f32.mrb[0].mxu0
          %6684 = vdwg.mxu0
          %v6685 = vpack.c.bf16 %v6519, %v6518
          %v6686 = vpack.c.bf16 %v6521, %v6520
          %v6687 = vpack.c.bf16 %v6523, %v6522
          %v6688 = vpack.c.bf16 %v6525, %v6524
          %v6689 = vpack.c.bf16 %v6527, %v6526
          %v6690 = vpack.c.bf16 %v6529, %v6528
          %v6691 = vpack.c.bf16 %v6531, %v6530
          %v6692 = vpack.c.bf16 %v6533, %v6532
          %v6725 = vunpack.c.l.b16 %v1444
          %v6726 = vunpack.c.l.b16 %v1445
          %v6727 = vunpack.c.l.b16 %v1446
          %v6728 = vunpack.c.l.b16 %v1447
          %v6729 = vunpack.c.l.b16 %v1448
          %v6730 = vunpack.c.l.b16 %v1449
          %v6731 = vunpack.c.l.b16 %v1450
          %v6732 = vunpack.c.l.b16 %v1451
          %v6733 = vunpack.c.l.b16 %v1452
          %v6734 = vunpack.c.l.b16 %v1453
          %v6735 = vunpack.c.l.b16 %v1454
          %v6736 = vunpack.c.l.b16 %v1455
          %v6737 = vunpack.c.l.b16 %v1456
          %v6738 = vunpack.c.l.b16 %v1457
          %v6739 = vunpack.c.l.b16 %v1458
          %v6740 = vunpack.c.l.b16 %v1459
          %v6741 = vunpack.c.l.b16 %v1460
          %v6742 = vunpack.c.l.b16 %v1461
          %v6743 = vunpack.c.l.b16 %v1462
          %v6744 = vunpack.c.l.b16 %v1463
          %v6745 = vunpack.c.l.b16 %v1464
          %v6746 = vunpack.c.l.b16 %v1465
          %v6747 = vunpack.c.l.b16 %v1466
          %v6748 = vunpack.c.l.b16 %v1467
          %v6749 = vunpack.c.l.b16 %v1468
          %v6750 = vunpack.c.l.b16 %v1469
          %v6751 = vunpack.c.l.b16 %v1470
          %v6752 = vunpack.c.l.b16 %v1471
          %v6753 = vunpack.c.l.b16 %v1472
          %v6754 = vunpack.c.l.b16 %v1473
          %v6755 = vunpack.c.l.b16 %v1474
          %v6756 = vunpack.c.l.b16 %v1475
          %v6757 = vpack.c.b16 %v6726, %v6725
          %v6758 = vpack.c.b16 %v6728, %v6727
          %v6759 = vpack.c.b16 %v6730, %v6729
          %v6760 = vpack.c.b16 %v6732, %v6731
          %v6761 = vpack.c.b16 %v6734, %v6733
          %v6762 = vpack.c.b16 %v6736, %v6735
          %v6763 = vpack.c.b16 %v6738, %v6737
          %v6764 = vpack.c.b16 %v6740, %v6739
          %v6765 = vpack.c.b16 %v6742, %v6741
          %v6766 = vpack.c.b16 %v6744, %v6743
          %v6767 = vpack.c.b16 %v6746, %v6745
          %v6768 = vpack.c.b16 %v6748, %v6747
          %v6769 = vpack.c.b16 %v6750, %v6749
          %v6770 = vpack.c.b16 %v6752, %v6751
          %v6771 = vpack.c.b16 %v6754, %v6753
          %v6772 = vpack.c.b16 %v6756, %v6755
          %6789 = vmatprep.subr.bf16.mxu0 0
          %6790 = vmatpush1.bf16.msra.mxu0 %v6685
          %6791 = vmatprep.subr.bf16.mxu0 0
          %6792 = vmatpush1.bf16.msra.mxu0 %v6686
          %6793 = vmatprep.subr.bf16.mxu0 0
          %6794 = vmatpush1.bf16.msra.mxu0 %v6687
          %6795 = vmatprep.subr.bf16.mxu0 0
          %6796 = vmatpush1.bf16.msra.mxu0 %v6688
          %6797 = vmatprep.subr.bf16.mxu0 0
          %6798 = vmatpush1.bf16.msra.mxu0 %v6689
          %6799 = vmatprep.subr.bf16.mxu0 0
          %6800 = vmatpush1.bf16.msra.mxu0 %v6690
          %6801 = vmatprep.subr.bf16.mxu0 0
          %6802 = vmatpush1.bf16.msra.mxu0 %v6691
          %6803 = vmatprep.subr.bf16.mxu0 0
          %6804 = vmatpush1.bf16.msra.mxu0 %v6692
          %6805 = vmatprep.subr.bf16.mxu0 0
          %6806 = vmatpush1.bf16.msra.mxu0 0
          %6807 = vmatprep.subr.bf16.mxu0 0
          %6808 = vmatpush1.bf16.msra.mxu0 0
          %6809 = vmatprep.subr.bf16.mxu0 0
          %6810 = vmatpush1.bf16.msra.mxu0 0
          %6811 = vmatprep.subr.bf16.mxu0 0
          %6812 = vmatpush1.bf16.msra.mxu0 0
          %6813 = vmatprep.subr.bf16.mxu0 0
          %6814 = vmatpush1.bf16.msra.mxu0 0
          %6815 = vmatprep.subr.bf16.mxu0 0
          %6816 = vmatpush1.bf16.msra.mxu0 0
          %6817 = vmatprep.subr.bf16.mxu0 0
          %6818 = vmatpush1.bf16.msra.mxu0 0
          %6819 = vmatprep.subr.bf16.mxu0 0
          %6820 = vmatpush1.bf16.msra.mxu0 0
          %6821 = vmatprep.mubr.bf16.mxu0 0
          %6822 = vmatmul.mubr.bf16.gmra.mrb[0].mxu0 %v6757
          %v6823 = vpop.f32.mrb[0].mxu0
          %v6824 = vadd.f32 0.0, %v6823
          %v6825 = vpop.f32.mrb[0].mxu0
          %v6826 = vpop.f32.mrb[0].mxu0
          %v6827 = vadd.f32 0.0, %v6826
          %v6828 = vpop.f32.mrb[0].mxu0
          %6829 = vmatprep.mubr.bf16.mxu0 0
          %6830 = vmatmul.mubr.bf16.gmra.mrb[0].mxu0 %v6758
          %v6831 = vpop.f32.mrb[0].mxu0
          %v6832 = vadd.f32 0.0, %v6831
          %v6833 = vpop.f32.mrb[0].mxu0
          %v6834 = vpop.f32.mrb[0].mxu0
          %v6835 = vadd.f32 0.0, %v6834
          %v6836 = vpop.f32.mrb[0].mxu0
          %6837 = vmatprep.mubr.bf16.mxu0 0
          %6838 = vmatmul.mubr.bf16.gmra.mrb[0].mxu0 %v6759
          %v6839 = vpop.f32.mrb[0].mxu0
          %v6840 = vadd.f32 0.0, %v6839
          %v6841 = vpop.f32.mrb[0].mxu0
          %v6842 = vpop.f32.mrb[0].mxu0
          %v6843 = vadd.f32 0.0, %v6842
          %v6844 = vpop.f32.mrb[0].mxu0
          %6845 = vmatprep.mubr.bf16.mxu0 0
          %6846 = vmatmul.mubr.bf16.gmra.mrb[0].mxu0 %v6760
          %v6847 = vpop.f32.mrb[0].mxu0
          %v6848 = vadd.f32 0.0, %v6847
          %v6849 = vpop.f32.mrb[0].mxu0
          %v6850 = vpop.f32.mrb[0].mxu0
          %v6851 = vadd.f32 0.0, %v6850
          %v6852 = vpop.f32.mrb[0].mxu0
          %6853 = vmatprep.mubr.bf16.mxu0 0
          %6854 = vmatmul.mubr.bf16.gmra.mrb[0].mxu0 %v6761
          %v6855 = vpop.f32.mrb[0].mxu0
          %v6856 = vadd.f32 0.0, %v6855
          %v6857 = vpop.f32.mrb[0].mxu0
          %v6858 = vpop.f32.mrb[0].mxu0
          %v6859 = vadd.f32 0.0, %v6858
          %v6860 = vpop.f32.mrb[0].mxu0
          %6861 = vmatprep.mubr.bf16.mxu0 0
          %6862 = vmatmul.mubr.bf16.gmra.mrb[0].mxu0 %v6762
          %v6863 = vpop.f32.mrb[0].mxu0
          %v6864 = vadd.f32 0.0, %v6863
          %v6865 = vpop.f32.mrb[0].mxu0
          %v6866 = vpop.f32.mrb[0].mxu0
          %v6867 = vadd.f32 0.0, %v6866
          %v6868 = vpop.f32.mrb[0].mxu0
          %6869 = vmatprep.mubr.bf16.mxu0 0
          %6870 = vmatmul.mubr.bf16.gmra.mrb[0].mxu0 %v6763
          %v6871 = vpop.f32.mrb[0].mxu0
          %v6872 = vadd.f32 0.0, %v6871
          %v6873 = vpop.f32.mrb[0].mxu0
          %v6874 = vpop.f32.mrb[0].mxu0
          %v6875 = vadd.f32 0.0, %v6874
          %v6876 = vpop.f32.mrb[0].mxu0
          %6877 = vmatprep.mubr.bf16.mxu0 0
          %6878 = vmatmul.mubr.bf16.gmra.mrb[0].mxu0 %v6764
          %v6879 = vpop.f32.mrb[0].mxu0
          %v6880 = vadd.f32 0.0, %v6879
          %v6881 = vpop.f32.mrb[0].mxu0
          %v6882 = vpop.f32.mrb[0].mxu0
          %v6883 = vadd.f32 0.0, %v6882
          %v6884 = vpop.f32.mrb[0].mxu0
          %6885 = vmatprep.mubr.bf16.mxu0 0
          %6886 = vmatmul.mubr.bf16.gmra.mrb[0].mxu0 %v6765
          %v6887 = vpop.f32.mrb[0].mxu0
          %v6888 = vadd.f32 0.0, %v6887
          %v6889 = vpop.f32.mrb[0].mxu0
          %v6890 = vpop.f32.mrb[0].mxu0
          %v6891 = vadd.f32 0.0, %v6890
          %v6892 = vpop.f32.mrb[0].mxu0
          %6893 = vmatprep.mubr.bf16.mxu0 0
          %6894 = vmatmul.mubr.bf16.gmra.mrb[0].mxu0 %v6766
          %v6895 = vpop.f32.mrb[0].mxu0
          %v6896 = vadd.f32 0.0, %v6895
          %v6897 = vpop.f32.mrb[0].mxu0
          %v6898 = vpop.f32.mrb[0].mxu0
          %v6899 = vadd.f32 0.0, %v6898
          %v6900 = vpop.f32.mrb[0].mxu0
          %6901 = vmatprep.mubr.bf16.mxu0 0
          %6902 = vmatmul.mubr.bf16.gmra.mrb[0].mxu0 %v6767
          %v6903 = vpop.f32.mrb[0].mxu0
          %v6904 = vadd.f32 0.0, %v6903
          %v6905 = vpop.f32.mrb[0].mxu0
          %v6906 = vpop.f32.mrb[0].mxu0
          %v6907 = vadd.f32 0.0, %v6906
          %v6908 = vpop.f32.mrb[0].mxu0
          %6909 = vmatprep.mubr.bf16.mxu0 0
          %6910 = vmatmul.mubr.bf16.gmra.mrb[0].mxu0 %v6768
          %v6911 = vpop.f32.mrb[0].mxu0
          %v6912 = vadd.f32 0.0, %v6911
          %v6913 = vpop.f32.mrb[0].mxu0
          %v6914 = vpop.f32.mrb[0].mxu0
          %v6915 = vadd.f32 0.0, %v6914
          %v6916 = vpop.f32.mrb[0].mxu0
          %6917 = vmatprep.mubr.bf16.mxu0 0
          %6918 = vmatmul.mubr.bf16.gmra.mrb[0].mxu0 %v6769
          %v6919 = vpop.f32.mrb[0].mxu0
          %v6920 = vadd.f32 0.0, %v6919
          %v6921 = vpop.f32.mrb[0].mxu0
          %v6922 = vpop.f32.mrb[0].mxu0
          %v6923 = vadd.f32 0.0, %v6922
          %v6924 = vpop.f32.mrb[0].mxu0
          %6925 = vmatprep.mubr.bf16.mxu0 0
          %6926 = vmatmul.mubr.bf16.gmra.mrb[0].mxu0 %v6770
          %v6927 = vpop.f32.mrb[0].mxu0
          %v6928 = vadd.f32 0.0, %v6927
          %v6929 = vpop.f32.mrb[0].mxu0
          %v6930 = vpop.f32.mrb[0].mxu0
          %v6931 = vadd.f32 0.0, %v6930
          %v6932 = vpop.f32.mrb[0].mxu0
          %6933 = vmatprep.mubr.bf16.mxu0 0
          %6934 = vmatmul.mubr.bf16.gmra.mrb[0].mxu0 %v6771
          %v6935 = vpop.f32.mrb[0].mxu0
          %v6936 = vadd.f32 0.0, %v6935
          %v6937 = vpop.f32.mrb[0].mxu0
          %v6938 = vpop.f32.mrb[0].mxu0
          %v6939 = vadd.f32 0.0, %v6938
          %v6940 = vpop.f32.mrb[0].mxu0
          %6941 = vmatprep.mubr.bf16.mxu0 0
          %6942 = vmatmul.mubr.bf16.gmra.mrb[0].mxu0 %v6772
          %v6943 = vpop.f32.mrb[0].mxu0
          %v6944 = vadd.f32 0.0, %v6943
          %v6945 = vpop.f32.mrb[0].mxu0
          %v6946 = vpop.f32.mrb[0].mxu0
          %v6947 = vadd.f32 0.0, %v6946
          %v6948 = vpop.f32.mrb[0].mxu0
          %6949 = vdwg.mxu0
          %v6950 = vpack.c.bf16 %v6612, %v6607
          %v6951 = vpack.c.bf16 %v6622, %v6617
          %v6952 = vpack.c.bf16 %v6632, %v6627
          %v6953 = vpack.c.bf16 %v6642, %v6637
          %v6954 = vpack.c.bf16 %v6652, %v6647
          %v6955 = vpack.c.bf16 %v6662, %v6657
          %v6956 = vpack.c.bf16 %v6672, %v6667
          %v6957 = vpack.c.bf16 %v6682, %v6677
          %v6990 = vunpack.c.l.b16 %v1412
          %v6991 = vunpack.c.l.b16 %v1413
          %v6992 = vunpack.c.l.b16 %v1414
          %v6993 = vunpack.c.l.b16 %v1415
          %v6994 = vunpack.c.l.b16 %v1416
          %v6995 = vunpack.c.l.b16 %v1417
          %v6996 = vunpack.c.l.b16 %v1418
          %v6997 = vunpack.c.l.b16 %v1419
          %v6998 = vunpack.c.l.b16 %v1420
          %v6999 = vunpack.c.l.b16 %v1421
          %v7000 = vunpack.c.l.b16 %v1422
          %v7001 = vunpack.c.l.b16 %v1423
          %v7002 = vunpack.c.l.b16 %v1424
          %v7003 = vunpack.c.l.b16 %v1425
          %v7004 = vunpack.c.l.b16 %v1426
          %v7005 = vunpack.c.l.b16 %v1427
          %v7006 = vunpack.c.l.b16 %v1428
          %v7007 = vunpack.c.l.b16 %v1429
          %v7008 = vunpack.c.l.b16 %v1430
          %v7009 = vunpack.c.l.b16 %v1431
          %v7010 = vunpack.c.l.b16 %v1432
          %v7011 = vunpack.c.l.b16 %v1433
          %v7012 = vunpack.c.l.b16 %v1434
          %v7013 = vunpack.c.l.b16 %v1435
          %v7014 = vunpack.c.l.b16 %v1436
          %v7015 = vunpack.c.l.b16 %v1437
          %v7016 = vunpack.c.l.b16 %v1438
          %v7017 = vunpack.c.l.b16 %v1439
          %v7018 = vunpack.c.l.b16 %v1440
          %v7019 = vunpack.c.l.b16 %v1441
          %v7020 = vunpack.c.l.b16 %v1442
          %v7021 = vunpack.c.l.b16 %v1443
          %v7022 = vpack.c.b16 %v6991, %v6990
          %v7023 = vpack.c.b16 %v6993, %v6992
          %v7024 = vpack.c.b16 %v6995, %v6994
          %v7025 = vpack.c.b16 %v6997, %v6996
          %v7026 = vpack.c.b16 %v6999, %v6998
          %v7027 = vpack.c.b16 %v7001, %v7000
          %v7028 = vpack.c.b16 %v7003, %v7002
          %v7029 = vpack.c.b16 %v7005, %v7004
          %v7030 = vpack.c.b16 %v7007, %v7006
          %v7031 = vpack.c.b16 %v7009, %v7008
          %v7032 = vpack.c.b16 %v7011, %v7010
          %v7033 = vpack.c.b16 %v7013, %v7012
          %v7034 = vpack.c.b16 %v7015, %v7014
          %v7035 = vpack.c.b16 %v7017, %v7016
          %v7036 = vpack.c.b16 %v7019, %v7018
          %v7037 = vpack.c.b16 %v7021, %v7020
          %7054 = vmatprep.subr.bf16.mxu0 %v6950
          %7055 = vmatpush1.bf16.msra.mxu0 %v6685
          %7056 = vmatprep.subr.bf16.mxu0 %v6951
          %7057 = vmatpush1.bf16.msra.mxu0 %v6686
          %7058 = vmatprep.subr.bf16.mxu0 %v6952
          %7059 = vmatpush1.bf16.msra.mxu0 %v6687
          %7060 = vmatprep.subr.bf16.mxu0 %v6953
          %7061 = vmatpush1.bf16.msra.mxu0 %v6688
          %7062 = vmatprep.subr.bf16.mxu0 %v6954
          %7063 = vmatpush1.bf16.msra.mxu0 %v6689
          %7064 = vmatprep.subr.bf16.mxu0 %v6955
          %7065 = vmatpush1.bf16.msra.mxu0 %v6690
          %7066 = vmatprep.subr.bf16.mxu0 %v6956
          %7067 = vmatpush1.bf16.msra.mxu0 %v6691
          %7068 = vmatprep.subr.bf16.mxu0 %v6957
          %7069 = vmatpush1.bf16.msra.mxu0 %v6692
          %7070 = vmatprep.subr.bf16.mxu0 0
          %7071 = vmatpush1.bf16.msra.mxu0 0
          %7072 = vmatprep.subr.bf16.mxu0 0
          %7073 = vmatpush1.bf16.msra.mxu0 0
          %7074 = vmatprep.subr.bf16.mxu0 0
          %7075 = vmatpush1.bf16.msra.mxu0 0
          %7076 = vmatprep.subr.bf16.mxu0 0
          %7077 = vmatpush1.bf16.msra.mxu0 0
          %7078 = vmatprep.subr.bf16.mxu0 0
          %7079 = vmatpush1.bf16.msra.mxu0 0
          %7080 = vmatprep.subr.bf16.mxu0 0
          %7081 = vmatpush1.bf16.msra.mxu0 0
          %7082 = vmatprep.subr.bf16.mxu0 0
          %7083 = vmatpush1.bf16.msra.mxu0 0
          %7084 = vmatprep.subr.bf16.mxu0 0
          %7085 = vmatpush1.bf16.msra.mxu0 0
          %7086 = vmatprep.mubr.bf16.mxu0 0
          %7087 = vmatmul.mubr.bf16.gmra.mrb[0].mxu0 %v7022
          %v7088 = vpop.f32.mrb[0].mxu0
          %v7089 = vadd.f32 0.0, %v7088
          %v7090 = vpop.f32.mrb[0].mxu0
          %v7091 = vadd.f32 0.0, %v7090
          %v7092 = vpop.f32.mrb[0].mxu0
          %v7093 = vadd.f32 0.0, %v7092
          %v7094 = vpop.f32.mrb[0].mxu0
          %v7095 = vadd.f32 0.0, %v7094
          %7096 = vmatprep.mubr.bf16.mxu0 0
          %7097 = vmatmul.mubr.bf16.gmra.mrb[0].mxu0 %v7023
          %v7098 = vpop.f32.mrb[0].mxu0
          %v7099 = vadd.f32 0.0, %v7098
          %v7100 = vpop.f32.mrb[0].mxu0
          %v7101 = vadd.f32 0.0, %v7100
          %v7102 = vpop.f32.mrb[0].mxu0
          %v7103 = vadd.f32 0.0, %v7102
          %v7104 = vpop.f32.mrb[0].mxu0
          %v7105 = vadd.f32 0.0, %v7104
          %7106 = vmatprep.mubr.bf16.mxu0 0
          %7107 = vmatmul.mubr.bf16.gmra.mrb[0].mxu0 %v7024
          %v7108 = vpop.f32.mrb[0].mxu0
          %v7109 = vadd.f32 0.0, %v7108
          %v7110 = vpop.f32.mrb[0].mxu0
          %v7111 = vadd.f32 0.0, %v7110
          %v7112 = vpop.f32.mrb[0].mxu0
          %v7113 = vadd.f32 0.0, %v7112
          %v7114 = vpop.f32.mrb[0].mxu0
          %v7115 = vadd.f32 0.0, %v7114
          %7116 = vmatprep.mubr.bf16.mxu0 0
          %7117 = vmatmul.mubr.bf16.gmra.mrb[0].mxu0 %v7025
          %v7118 = vpop.f32.mrb[0].mxu0
          %v7119 = vadd.f32 0.0, %v7118
          %v7120 = vpop.f32.mrb[0].mxu0
          %v7121 = vadd.f32 0.0, %v7120
          %v7122 = vpop.f32.mrb[0].mxu0
          %v7123 = vadd.f32 0.0, %v7122
          %v7124 = vpop.f32.mrb[0].mxu0
          %v7125 = vadd.f32 0.0, %v7124
          %7126 = vmatprep.mubr.bf16.mxu0 0
          %7127 = vmatmul.mubr.bf16.gmra.mrb[0].mxu0 %v7026
          %v7128 = vpop.f32.mrb[0].mxu0
          %v7129 = vadd.f32 0.0, %v7128
          %v7130 = vpop.f32.mrb[0].mxu0
          %v7131 = vadd.f32 0.0, %v7130
          %v7132 = vpop.f32.mrb[0].mxu0
          %v7133 = vadd.f32 0.0, %v7132
          %v7134 = vpop.f32.mrb[0].mxu0
          %v7135 = vadd.f32 0.0, %v7134
          %7136 = vmatprep.mubr.bf16.mxu0 0
          %7137 = vmatmul.mubr.bf16.gmra.mrb[0].mxu0 %v7027
          %v7138 = vpop.f32.mrb[0].mxu0
          %v7139 = vadd.f32 0.0, %v7138
          %v7140 = vpop.f32.mrb[0].mxu0
          %v7141 = vadd.f32 0.0, %v7140
          %v7142 = vpop.f32.mrb[0].mxu0
          %v7143 = vadd.f32 0.0, %v7142
          %v7144 = vpop.f32.mrb[0].mxu0
          %v7145 = vadd.f32 0.0, %v7144
          %7146 = vmatprep.mubr.bf16.mxu0 0
          %7147 = vmatmul.mubr.bf16.gmra.mrb[0].mxu0 %v7028
          %v7148 = vpop.f32.mrb[0].mxu0
          %v7149 = vadd.f32 0.0, %v7148
          %v7150 = vpop.f32.mrb[0].mxu0
          %v7151 = vadd.f32 0.0, %v7150
          %v7152 = vpop.f32.mrb[0].mxu0
          %v7153 = vadd.f32 0.0, %v7152
          %v7154 = vpop.f32.mrb[0].mxu0
          %v7155 = vadd.f32 0.0, %v7154
          %7156 = vmatprep.mubr.bf16.mxu0 0
          %7157 = vmatmul.mubr.bf16.gmra.mrb[0].mxu0 %v7029
          %v7158 = vpop.f32.mrb[0].mxu0
          %v7159 = vadd.f32 0.0, %v7158
          %v7160 = vpop.f32.mrb[0].mxu0
          %v7161 = vadd.f32 0.0, %v7160
          %v7162 = vpop.f32.mrb[0].mxu0
          %v7163 = vadd.f32 0.0, %v7162
          %v7164 = vpop.f32.mrb[0].mxu0
          %v7165 = vadd.f32 0.0, %v7164
          %7166 = vmatprep.mubr.bf16.mxu0 0
          %7167 = vmatmul.mubr.bf16.gmra.mrb[0].mxu0 %v7030
          %v7168 = vpop.f32.mrb[0].mxu0
          %v7169 = vadd.f32 0.0, %v7168
          %v7170 = vpop.f32.mrb[0].mxu0
          %v7171 = vadd.f32 0.0, %v7170
          %v7172 = vpop.f32.mrb[0].mxu0
          %v7173 = vadd.f32 0.0, %v7172
          %v7174 = vpop.f32.mrb[0].mxu0
          %v7175 = vadd.f32 0.0, %v7174
          %7176 = vmatprep.mubr.bf16.mxu0 0
          %7177 = vmatmul.mubr.bf16.gmra.mrb[0].mxu0 %v7031
          %v7178 = vpop.f32.mrb[0].mxu0
          %v7179 = vadd.f32 0.0, %v7178
          %v7180 = vpop.f32.mrb[0].mxu0
          %v7181 = vadd.f32 0.0, %v7180
          %v7182 = vpop.f32.mrb[0].mxu0
          %v7183 = vadd.f32 0.0, %v7182
          %v7184 = vpop.f32.mrb[0].mxu0
          %v7185 = vadd.f32 0.0, %v7184
          %7186 = vmatprep.mubr.bf16.mxu0 0
          %7187 = vmatmul.mubr.bf16.gmra.mrb[0].mxu0 %v7032
          %v7188 = vpop.f32.mrb[0].mxu0
          %v7189 = vadd.f32 0.0, %v7188
          %v7190 = vpop.f32.mrb[0].mxu0
          %v7191 = vadd.f32 0.0, %v7190
          %v7192 = vpop.f32.mrb[0].mxu0
          %v7193 = vadd.f32 0.0, %v7192
          %v7194 = vpop.f32.mrb[0].mxu0
          %v7195 = vadd.f32 0.0, %v7194
          %7196 = vmatprep.mubr.bf16.mxu0 0
          %7197 = vmatmul.mubr.bf16.gmra.mrb[0].mxu0 %v7033
          %v7198 = vpop.f32.mrb[0].mxu0
          %v7199 = vadd.f32 0.0, %v7198
          %v7200 = vpop.f32.mrb[0].mxu0
          %v7201 = vadd.f32 0.0, %v7200
          %v7202 = vpop.f32.mrb[0].mxu0
          %v7203 = vadd.f32 0.0, %v7202
          %v7204 = vpop.f32.mrb[0].mxu0
          %v7205 = vadd.f32 0.0, %v7204
          %7206 = vmatprep.mubr.bf16.mxu0 0
          %7207 = vmatmul.mubr.bf16.gmra.mrb[0].mxu0 %v7034
          %v7208 = vpop.f32.mrb[0].mxu0
          %v7209 = vadd.f32 0.0, %v7208
          %v7210 = vpop.f32.mrb[0].mxu0
          %v7211 = vadd.f32 0.0, %v7210
          %v7212 = vpop.f32.mrb[0].mxu0
          %v7213 = vadd.f32 0.0, %v7212
          %v7214 = vpop.f32.mrb[0].mxu0
          %v7215 = vadd.f32 0.0, %v7214
          %7216 = vmatprep.mubr.bf16.mxu0 0
          %7217 = vmatmul.mubr.bf16.gmra.mrb[0].mxu0 %v7035
          %v7218 = vpop.f32.mrb[0].mxu0
          %v7219 = vadd.f32 0.0, %v7218
          %v7220 = vpop.f32.mrb[0].mxu0
          %v7221 = vadd.f32 0.0, %v7220
          %v7222 = vpop.f32.mrb[0].mxu0
          %v7223 = vadd.f32 0.0, %v7222
          %v7224 = vpop.f32.mrb[0].mxu0
          %v7225 = vadd.f32 0.0, %v7224
          %7226 = vmatprep.mubr.bf16.mxu0 0
          %7227 = vmatmul.mubr.bf16.gmra.mrb[0].mxu0 %v7036
          %v7228 = vpop.f32.mrb[0].mxu0
          %v7229 = vadd.f32 0.0, %v7228
          %v7230 = vpop.f32.mrb[0].mxu0
          %v7231 = vadd.f32 0.0, %v7230
          %v7232 = vpop.f32.mrb[0].mxu0
          %v7233 = vadd.f32 0.0, %v7232
          %v7234 = vpop.f32.mrb[0].mxu0
          %v7235 = vadd.f32 0.0, %v7234
          %7236 = vmatprep.mubr.bf16.mxu0 0
          %7237 = vmatmul.mubr.bf16.gmra.mrb[0].mxu0 %v7037
          %v7238 = vpop.f32.mrb[0].mxu0
          %v7239 = vadd.f32 0.0, %v7238
          %v7240 = vpop.f32.mrb[0].mxu0
          %v7241 = vadd.f32 0.0, %v7240
          %v7242 = vpop.f32.mrb[0].mxu0
          %v7243 = vadd.f32 0.0, %v7242
          %v7244 = vpop.f32.mrb[0].mxu0
          %v7245 = vadd.f32 0.0, %v7244
          %7246 = vdwg.mxu0
          %7247 = vmatprep.subr.mxu0 0.0
          %7248 = vmatpush1.msra.mxu0 %v6386
          %7249 = vmatprep.subr.mxu0 0.0
          %7250 = vmatpush1.msra.mxu0 %v6387
          %7251 = vmatprep.subr.mxu0 0.0
          %7252 = vmatpush1.msra.mxu0 %v6388
          %7253 = vmatprep.subr.mxu0 0.0
          %7254 = vmatpush1.msra.mxu0 %v6389
          %7255 = vmatprep.subr.mxu0 0.0
          %7256 = vmatpush1.msra.mxu0 %v6390
          %7257 = vmatprep.subr.mxu0 0.0
          %7258 = vmatpush1.msra.mxu0 %v6391
          %7259 = vmatprep.subr.mxu0 0.0
          %7260 = vmatpush1.msra.mxu0 %v6392
          %7261 = vmatprep.subr.mxu0 0.0
          %7262 = vmatpush1.msra.mxu0 %v6393
          %7263 = vmatprep.subr.mxu0 0.0
          %7264 = vmatpush1.msra.mxu0 %v6394
          %7265 = vmatprep.subr.mxu0 0.0
          %7266 = vmatpush1.msra.mxu0 %v6395
          %7267 = vmatprep.subr.mxu0 0.0
          %7268 = vmatpush1.msra.mxu0 %v6396
          %7269 = vmatprep.subr.mxu0 0.0
          %7270 = vmatpush1.msra.mxu0 %v6397
          %7271 = vmatprep.subr.mxu0 0.0
          %7272 = vmatpush1.msra.mxu0 %v6398
          %7273 = vmatprep.subr.mxu0 0.0
          %7274 = vmatpush1.msra.mxu0 %v6399
          %7275 = vmatprep.subr.mxu0 0.0
          %7276 = vmatpush1.msra.mxu0 %v6400
          %7277 = vmatprep.subr.mxu0 0.0
          %7278 = vmatpush1.msra.mxu0 %v6401
          %7279 = vmatprep.subr.mxu0 0.0
          %7280 = vmatpush1.msra.mxu0 0.0
          %7281 = vmatprep.subr.mxu0 0.0
          %7282 = vmatpush1.msra.mxu0 0.0
          %7283 = vmatprep.subr.mxu0 0.0
          %7284 = vmatpush1.msra.mxu0 0.0
          %7285 = vmatprep.subr.mxu0 0.0
          %7286 = vmatpush1.msra.mxu0 0.0
          %7287 = vmatprep.subr.mxu0 0.0
          %7288 = vmatpush1.msra.mxu0 0.0
          %7289 = vmatprep.subr.mxu0 0.0
          %7290 = vmatpush1.msra.mxu0 0.0
          %7291 = vmatprep.subr.mxu0 0.0
          %7292 = vmatpush1.msra.mxu0 0.0
          %7293 = vmatprep.subr.mxu0 0.0
          %7294 = vmatpush1.msra.mxu0 0.0
          %7295 = vmatprep.subr.mxu0 0.0
          %7296 = vmatpush1.msra.mxu0 0.0
          %7297 = vmatprep.subr.mxu0 0.0
          %7298 = vmatpush1.msra.mxu0 0.0
          %7299 = vmatprep.subr.mxu0 0.0
          %7300 = vmatpush1.msra.mxu0 0.0
          %7301 = vmatprep.subr.mxu0 0.0
          %7302 = vmatpush1.msra.mxu0 0.0
          %7303 = vmatprep.subr.mxu0 0.0
          %7304 = vmatpush1.msra.mxu0 0.0
          %7305 = vmatprep.subr.mxu0 0.0
          %7306 = vmatpush1.msra.mxu0 0.0
          %7307 = vmatprep.subr.mxu0 0.0
          %7308 = vmatpush1.msra.mxu0 0.0
          %7309 = vmatprep.subr.mxu0 0.0
          %7310 = vmatpush1.msra.mxu0 0.0
          %7311 = vmatprep.mubr.f32.mxu0 0.0
          %7312 = vmatmul.mubr.f32.gmra.mrb[0].mxu0 %v7089
          %v7313 = vpop.f32.mrb[0].mxu0
          %v7314 = vadd.f32 0.0, %v7313
          %v7315 = vpop.f32.mrb[0].mxu0
          %7316 = vmatprep.mubr.f32.mxu0 0.0
          %7317 = vmatmul.mubr.f32.gmra.mrb[0].mxu0 %v7093
          %v7318 = vpop.f32.mrb[0].mxu0
          %v7319 = vadd.f32 0.0, %v7318
          %v7320 = vpop.f32.mrb[0].mxu0
          %7321 = vmatprep.mubr.f32.mxu0 0.0
          %7322 = vmatmul.mubr.f32.gmra.mrb[0].mxu0 %v7099
          %v7323 = vpop.f32.mrb[0].mxu0
          %v7324 = vadd.f32 0.0, %v7323
          %v7325 = vpop.f32.mrb[0].mxu0
          %7326 = vmatprep.mubr.f32.mxu0 0.0
          %7327 = vmatmul.mubr.f32.gmra.mrb[0].mxu0 %v7103
          %v7328 = vpop.f32.mrb[0].mxu0
          %v7329 = vadd.f32 0.0, %v7328
          %v7330 = vpop.f32.mrb[0].mxu0
          %7331 = vmatprep.mubr.f32.mxu0 0.0
          %7332 = vmatmul.mubr.f32.gmra.mrb[0].mxu0 %v7109
          %v7333 = vpop.f32.mrb[0].mxu0
          %v7334 = vadd.f32 0.0, %v7333
          %v7335 = vpop.f32.mrb[0].mxu0
          %7336 = vmatprep.mubr.f32.mxu0 0.0
          %7337 = vmatmul.mubr.f32.gmra.mrb[0].mxu0 %v7113
          %v7338 = vpop.f32.mrb[0].mxu0
          %v7339 = vadd.f32 0.0, %v7338
          %v7340 = vpop.f32.mrb[0].mxu0
          %7341 = vmatprep.mubr.f32.mxu0 0.0
          %7342 = vmatmul.mubr.f32.gmra.mrb[0].mxu0 %v7119
          %v7343 = vpop.f32.mrb[0].mxu0
          %v7344 = vadd.f32 0.0, %v7343
          %v7345 = vpop.f32.mrb[0].mxu0
          %7346 = vmatprep.mubr.f32.mxu0 0.0
          %7347 = vmatmul.mubr.f32.gmra.mrb[0].mxu0 %v7123
          %v7348 = vpop.f32.mrb[0].mxu0
          %v7349 = vadd.f32 0.0, %v7348
          %v7350 = vpop.f32.mrb[0].mxu0
          %7351 = vmatprep.mubr.f32.mxu0 0.0
          %7352 = vmatmul.mubr.f32.gmra.mrb[0].mxu0 %v7129
          %v7353 = vpop.f32.mrb[0].mxu0
          %v7354 = vadd.f32 0.0, %v7353
          %v7355 = vpop.f32.mrb[0].mxu0
          %7356 = vmatprep.mubr.f32.mxu0 0.0
          %7357 = vmatmul.mubr.f32.gmra.mrb[0].mxu0 %v7133
          %v7358 = vpop.f32.mrb[0].mxu0
          %v7359 = vadd.f32 0.0, %v7358
          %v7360 = vpop.f32.mrb[0].mxu0
          %7361 = vmatprep.mubr.f32.mxu0 0.0
          %7362 = vmatmul.mubr.f32.gmra.mrb[0].mxu0 %v7139
          %v7363 = vpop.f32.mrb[0].mxu0
          %v7364 = vadd.f32 0.0, %v7363
          %v7365 = vpop.f32.mrb[0].mxu0
          %7366 = vmatprep.mubr.f32.mxu0 0.0
          %7367 = vmatmul.mubr.f32.gmra.mrb[0].mxu0 %v7143
          %v7368 = vpop.f32.mrb[0].mxu0
          %v7369 = vadd.f32 0.0, %v7368
          %v7370 = vpop.f32.mrb[0].mxu0
          %7371 = vmatprep.mubr.f32.mxu0 0.0
          %7372 = vmatmul.mubr.f32.gmra.mrb[0].mxu0 %v7149
          %v7373 = vpop.f32.mrb[0].mxu0
          %v7374 = vadd.f32 0.0, %v7373
          %v7375 = vpop.f32.mrb[0].mxu0
          %7376 = vmatprep.mubr.f32.mxu0 0.0
          %7377 = vmatmul.mubr.f32.gmra.mrb[0].mxu0 %v7153
          %v7378 = vpop.f32.mrb[0].mxu0
          %v7379 = vadd.f32 0.0, %v7378
          %v7380 = vpop.f32.mrb[0].mxu0
          %7381 = vmatprep.mubr.f32.mxu0 0.0
          %7382 = vmatmul.mubr.f32.gmra.mrb[0].mxu0 %v7159
          %v7383 = vpop.f32.mrb[0].mxu0
          %v7384 = vadd.f32 0.0, %v7383
          %v7385 = vpop.f32.mrb[0].mxu0
          %7386 = vmatprep.mubr.f32.mxu0 0.0
          %7387 = vmatmul.mubr.f32.gmra.mrb[0].mxu0 %v7163
          %v7388 = vpop.f32.mrb[0].mxu0
          %v7389 = vadd.f32 0.0, %v7388
          %v7390 = vpop.f32.mrb[0].mxu0
          %7391 = vmatprep.mubr.f32.mxu0 0.0
          %7392 = vmatmul.mubr.f32.gmra.mrb[0].mxu0 %v7169
          %v7393 = vpop.f32.mrb[0].mxu0
          %v7394 = vadd.f32 0.0, %v7393
          %v7395 = vpop.f32.mrb[0].mxu0
          %7396 = vmatprep.mubr.f32.mxu0 0.0
          %7397 = vmatmul.mubr.f32.gmra.mrb[0].mxu0 %v7173
          %v7398 = vpop.f32.mrb[0].mxu0
          %v7399 = vadd.f32 0.0, %v7398
          %v7400 = vpop.f32.mrb[0].mxu0
          %7401 = vmatprep.mubr.f32.mxu0 0.0
          %7402 = vmatmul.mubr.f32.gmra.mrb[0].mxu0 %v7179
          %v7403 = vpop.f32.mrb[0].mxu0
          %v7404 = vadd.f32 0.0, %v7403
          %v7405 = vpop.f32.mrb[0].mxu0
          %7406 = vmatprep.mubr.f32.mxu0 0.0
          %7407 = vmatmul.mubr.f32.gmra.mrb[0].mxu0 %v7183
          %v7408 = vpop.f32.mrb[0].mxu0
          %v7409 = vadd.f32 0.0, %v7408
          %v7410 = vpop.f32.mrb[0].mxu0
          %7411 = vmatprep.mubr.f32.mxu0 0.0
          %7412 = vmatmul.mubr.f32.gmra.mrb[0].mxu0 %v7189
          %v7413 = vpop.f32.mrb[0].mxu0
          %v7414 = vadd.f32 0.0, %v7413
          %v7415 = vpop.f32.mrb[0].mxu0
          %7416 = vmatprep.mubr.f32.mxu0 0.0
          %7417 = vmatmul.mubr.f32.gmra.mrb[0].mxu0 %v7193
          %v7418 = vpop.f32.mrb[0].mxu0
          %v7419 = vadd.f32 0.0, %v7418
          %v7420 = vpop.f32.mrb[0].mxu0
          %7421 = vmatprep.mubr.f32.mxu0 0.0
          %7422 = vmatmul.mubr.f32.gmra.mrb[0].mxu0 %v7199
          %v7423 = vpop.f32.mrb[0].mxu0
          %v7424 = vadd.f32 0.0, %v7423
          %v7425 = vpop.f32.mrb[0].mxu0
          %7426 = vmatprep.mubr.f32.mxu0 0.0
          %7427 = vmatmul.mubr.f32.gmra.mrb[0].mxu0 %v7203
          %v7428 = vpop.f32.mrb[0].mxu0
          %v7429 = vadd.f32 0.0, %v7428
          %v7430 = vpop.f32.mrb[0].mxu0
          %7431 = vmatprep.mubr.f32.mxu0 0.0
          %7432 = vmatmul.mubr.f32.gmra.mrb[0].mxu0 %v7209
          %v7433 = vpop.f32.mrb[0].mxu0
          %v7434 = vadd.f32 0.0, %v7433
          %v7435 = vpop.f32.mrb[0].mxu0
          %7436 = vmatprep.mubr.f32.mxu0 0.0
          %7437 = vmatmul.mubr.f32.gmra.mrb[0].mxu0 %v7213
          %v7438 = vpop.f32.mrb[0].mxu0
          %v7439 = vadd.f32 0.0, %v7438
          %v7440 = vpop.f32.mrb[0].mxu0
          %7441 = vmatprep.mubr.f32.mxu0 0.0
          %7442 = vmatmul.mubr.f32.gmra.mrb[0].mxu0 %v7219
          %v7443 = vpop.f32.mrb[0].mxu0
          %v7444 = vadd.f32 0.0, %v7443
          %v7445 = vpop.f32.mrb[0].mxu0
          %7446 = vmatprep.mubr.f32.mxu0 0.0
          %7447 = vmatmul.mubr.f32.gmra.mrb[0].mxu0 %v7223
          %v7448 = vpop.f32.mrb[0].mxu0
          %v7449 = vadd.f32 0.0, %v7448
          %v7450 = vpop.f32.mrb[0].mxu0
          %7451 = vmatprep.mubr.f32.mxu0 0.0
          %7452 = vmatmul.mubr.f32.gmra.mrb[0].mxu0 %v7229
          %v7453 = vpop.f32.mrb[0].mxu0
          %v7454 = vadd.f32 0.0, %v7453
          %v7455 = vpop.f32.mrb[0].mxu0
          %7456 = vmatprep.mubr.f32.mxu0 0.0
          %7457 = vmatmul.mubr.f32.gmra.mrb[0].mxu0 %v7233
          %v7458 = vpop.f32.mrb[0].mxu0
          %v7459 = vadd.f32 0.0, %v7458
          %v7460 = vpop.f32.mrb[0].mxu0
          %7461 = vmatprep.mubr.f32.mxu0 0.0
          %7462 = vmatmul.mubr.f32.gmra.mrb[0].mxu0 %v7239
          %v7463 = vpop.f32.mrb[0].mxu0
          %v7464 = vadd.f32 0.0, %v7463
          %v7465 = vpop.f32.mrb[0].mxu0
          %7466 = vmatprep.mubr.f32.mxu0 0.0
          %7467 = vmatmul.mubr.f32.gmra.mrb[0].mxu0 %v7243
          %v7468 = vpop.f32.mrb[0].mxu0
          %v7469 = vadd.f32 0.0, %v7468
          %v7470 = vpop.f32.mrb[0].mxu0
          %7471 = vdwg.mxu0
          %7472 = vmatprep.subr.mxu0 0.0
          %7473 = vmatpush1.msra.mxu0 %v6370
          %7474 = vmatprep.subr.mxu0 0.0
          %7475 = vmatpush1.msra.mxu0 %v6371
          %7476 = vmatprep.subr.mxu0 0.0
          %7477 = vmatpush1.msra.mxu0 %v6372
          %7478 = vmatprep.subr.mxu0 0.0
          %7479 = vmatpush1.msra.mxu0 %v6373
          %7480 = vmatprep.subr.mxu0 0.0
          %7481 = vmatpush1.msra.mxu0 %v6374
          %7482 = vmatprep.subr.mxu0 0.0
          %7483 = vmatpush1.msra.mxu0 %v6375
          %7484 = vmatprep.subr.mxu0 0.0
          %7485 = vmatpush1.msra.mxu0 %v6376
          %7486 = vmatprep.subr.mxu0 0.0
          %7487 = vmatpush1.msra.mxu0 %v6377
          %7488 = vmatprep.subr.mxu0 0.0
          %7489 = vmatpush1.msra.mxu0 %v6378
          %7490 = vmatprep.subr.mxu0 0.0
          %7491 = vmatpush1.msra.mxu0 %v6379
          %7492 = vmatprep.subr.mxu0 0.0
          %7493 = vmatpush1.msra.mxu0 %v6380
          %7494 = vmatprep.subr.mxu0 0.0
          %7495 = vmatpush1.msra.mxu0 %v6381
          %7496 = vmatprep.subr.mxu0 0.0
          %7497 = vmatpush1.msra.mxu0 %v6382
          %7498 = vmatprep.subr.mxu0 0.0
          %7499 = vmatpush1.msra.mxu0 %v6383
          %7500 = vmatprep.subr.mxu0 0.0
          %7501 = vmatpush1.msra.mxu0 %v6384
          %7502 = vmatprep.subr.mxu0 0.0
          %7503 = vmatpush1.msra.mxu0 %v6385
          %7504 = vmatprep.subr.mxu0 0.0
          %7505 = vmatpush1.msra.mxu0 0.0
          %7506 = vmatprep.subr.mxu0 0.0
          %7507 = vmatpush1.msra.mxu0 0.0
          %7508 = vmatprep.subr.mxu0 0.0
          %7509 = vmatpush1.msra.mxu0 0.0
          %7510 = vmatprep.subr.mxu0 0.0
          %7511 = vmatpush1.msra.mxu0 0.0
          %7512 = vmatprep.subr.mxu0 0.0
          %7513 = vmatpush1.msra.mxu0 0.0
          %7514 = vmatprep.subr.mxu0 0.0
          %7515 = vmatpush1.msra.mxu0 0.0
          %7516 = vmatprep.subr.mxu0 0.0
          %7517 = vmatpush1.msra.mxu0 0.0
          %7518 = vmatprep.subr.mxu0 0.0
          %7519 = vmatpush1.msra.mxu0 0.0
          %7520 = vmatprep.subr.mxu0 0.0
          %7521 = vmatpush1.msra.mxu0 0.0
          %7522 = vmatprep.subr.mxu0 0.0
          %7523 = vmatpush1.msra.mxu0 0.0
          %7524 = vmatprep.subr.mxu0 0.0
          %7525 = vmatpush1.msra.mxu0 0.0
          %7526 = vmatprep.subr.mxu0 0.0
          %7527 = vmatpush1.msra.mxu0 0.0
          %7528 = vmatprep.subr.mxu0 0.0
          %7529 = vmatpush1.msra.mxu0 0.0
          %7530 = vmatprep.subr.mxu0 0.0
          %7531 = vmatpush1.msra.mxu0 0.0
          %7532 = vmatprep.subr.mxu0 0.0
          %7533 = vmatpush1.msra.mxu0 0.0
          %7534 = vmatprep.subr.mxu0 0.0
          %7535 = vmatpush1.msra.mxu0 0.0
          %7536 = vmatprep.mubr.f32.mxu0 0.0
          %7537 = vmatmul.mubr.f32.gmra.mrb[0].mxu0 %v6824
          %v7538 = vpop.f32.mrb[0].mxu0
          %v7539 = vadd.f32 %v7314, %v7538
          %v7540 = vpop.f32.mrb[0].mxu0
          %7541 = vmatprep.mubr.f32.mxu0 0.0
          %7542 = vmatmul.mubr.f32.gmra.mrb[0].mxu0 %v6827
          %v7543 = vpop.f32.mrb[0].mxu0
          %v7544 = vadd.f32 %v7319, %v7543
          %v7545 = vpop.f32.mrb[0].mxu0
          %7546 = vmatprep.mubr.f32.mxu0 0.0
          %7547 = vmatmul.mubr.f32.gmra.mrb[0].mxu0 %v6832
          %v7548 = vpop.f32.mrb[0].mxu0
          %v7549 = vadd.f32 %v7324, %v7548
          %v7550 = vpop.f32.mrb[0].mxu0
          %7551 = vmatprep.mubr.f32.mxu0 0.0
          %7552 = vmatmul.mubr.f32.gmra.mrb[0].mxu0 %v6835
          %v7553 = vpop.f32.mrb[0].mxu0
          %v7554 = vadd.f32 %v7329, %v7553
          %v7555 = vpop.f32.mrb[0].mxu0
          %7556 = vmatprep.mubr.f32.mxu0 0.0
          %7557 = vmatmul.mubr.f32.gmra.mrb[0].mxu0 %v6840
          %v7558 = vpop.f32.mrb[0].mxu0
          %v7559 = vadd.f32 %v7334, %v7558
          %v7560 = vpop.f32.mrb[0].mxu0
          %7561 = vmatprep.mubr.f32.mxu0 0.0
          %7562 = vmatmul.mubr.f32.gmra.mrb[0].mxu0 %v6843
          %v7563 = vpop.f32.mrb[0].mxu0
          %v7564 = vadd.f32 %v7339, %v7563
          %v7565 = vpop.f32.mrb[0].mxu0
          %7566 = vmatprep.mubr.f32.mxu0 0.0
          %7567 = vmatmul.mubr.f32.gmra.mrb[0].mxu0 %v6848
          %v7568 = vpop.f32.mrb[0].mxu0
          %v7569 = vadd.f32 %v7344, %v7568
          %v7570 = vpop.f32.mrb[0].mxu0
          %7571 = vmatprep.mubr.f32.mxu0 0.0
          %7572 = vmatmul.mubr.f32.gmra.mrb[0].mxu0 %v6851
          %v7573 = vpop.f32.mrb[0].mxu0
          %v7574 = vadd.f32 %v7349, %v7573
          %v7575 = vpop.f32.mrb[0].mxu0
          %7576 = vmatprep.mubr.f32.mxu0 0.0
          %7577 = vmatmul.mubr.f32.gmra.mrb[0].mxu0 %v6856
          %v7578 = vpop.f32.mrb[0].mxu0
          %v7579 = vadd.f32 %v7354, %v7578
          %v7580 = vpop.f32.mrb[0].mxu0
          %7581 = vmatprep.mubr.f32.mxu0 0.0
          %7582 = vmatmul.mubr.f32.gmra.mrb[0].mxu0 %v6859
          %v7583 = vpop.f32.mrb[0].mxu0
          %v7584 = vadd.f32 %v7359, %v7583
          %v7585 = vpop.f32.mrb[0].mxu0
          %7586 = vmatprep.mubr.f32.mxu0 0.0
          %7587 = vmatmul.mubr.f32.gmra.mrb[0].mxu0 %v6864
          %v7588 = vpop.f32.mrb[0].mxu0
          %v7589 = vadd.f32 %v7364, %v7588
          %v7590 = vpop.f32.mrb[0].mxu0
          %7591 = vmatprep.mubr.f32.mxu0 0.0
          %7592 = vmatmul.mubr.f32.gmra.mrb[0].mxu0 %v6867
          %v7593 = vpop.f32.mrb[0].mxu0
          %v7594 = vadd.f32 %v7369, %v7593
          %v7595 = vpop.f32.mrb[0].mxu0
          %7596 = vmatprep.mubr.f32.mxu0 0.0
          %7597 = vmatmul.mubr.f32.gmra.mrb[0].mxu0 %v6872
          %v7598 = vpop.f32.mrb[0].mxu0
          %v7599 = vadd.f32 %v7374, %v7598
          %v7600 = vpop.f32.mrb[0].mxu0
          %7601 = vmatprep.mubr.f32.mxu0 0.0
          %7602 = vmatmul.mubr.f32.gmra.mrb[0].mxu0 %v6875
          %v7603 = vpop.f32.mrb[0].mxu0
          %v7604 = vadd.f32 %v7379, %v7603
          %v7605 = vpop.f32.mrb[0].mxu0
          %7606 = vmatprep.mubr.f32.mxu0 0.0
          %7607 = vmatmul.mubr.f32.gmra.mrb[0].mxu0 %v6880
          %v7608 = vpop.f32.mrb[0].mxu0
          %v7609 = vadd.f32 %v7384, %v7608
          %v7610 = vpop.f32.mrb[0].mxu0
          %7611 = vmatprep.mubr.f32.mxu0 0.0
          %7612 = vmatmul.mubr.f32.gmra.mrb[0].mxu0 %v6883
          %v7613 = vpop.f32.mrb[0].mxu0
          %v7614 = vadd.f32 %v7389, %v7613
          %v7615 = vpop.f32.mrb[0].mxu0
          %7616 = vmatprep.mubr.f32.mxu0 0.0
          %7617 = vmatmul.mubr.f32.gmra.mrb[0].mxu0 %v6888
          %v7618 = vpop.f32.mrb[0].mxu0
          %v7619 = vadd.f32 %v7394, %v7618
          %v7620 = vpop.f32.mrb[0].mxu0
          %7621 = vmatprep.mubr.f32.mxu0 0.0
          %7622 = vmatmul.mubr.f32.gmra.mrb[0].mxu0 %v6891
          %v7623 = vpop.f32.mrb[0].mxu0
          %v7624 = vadd.f32 %v7399, %v7623
          %v7625 = vpop.f32.mrb[0].mxu0
          %7626 = vmatprep.mubr.f32.mxu0 0.0
          %7627 = vmatmul.mubr.f32.gmra.mrb[0].mxu0 %v6896
          %v7628 = vpop.f32.mrb[0].mxu0
          %v7629 = vadd.f32 %v7404, %v7628
          %v7630 = vpop.f32.mrb[0].mxu0
          %7631 = vmatprep.mubr.f32.mxu0 0.0
          %7632 = vmatmul.mubr.f32.gmra.mrb[0].mxu0 %v6899
          %v7633 = vpop.f32.mrb[0].mxu0
          %v7634 = vadd.f32 %v7409, %v7633
          %v7635 = vpop.f32.mrb[0].mxu0
          %7636 = vmatprep.mubr.f32.mxu0 0.0
          %7637 = vmatmul.mubr.f32.gmra.mrb[0].mxu0 %v6904
          %v7638 = vpop.f32.mrb[0].mxu0
          %v7639 = vadd.f32 %v7414, %v7638
          %v7640 = vpop.f32.mrb[0].mxu0
          %7641 = vmatprep.mubr.f32.mxu0 0.0
          %7642 = vmatmul.mubr.f32.gmra.mrb[0].mxu0 %v6907
          %v7643 = vpop.f32.mrb[0].mxu0
          %v7644 = vadd.f32 %v7419, %v7643
          %v7645 = vpop.f32.mrb[0].mxu0
          %7646 = vmatprep.mubr.f32.mxu0 0.0
          %7647 = vmatmul.mubr.f32.gmra.mrb[0].mxu0 %v6912
          %v7648 = vpop.f32.mrb[0].mxu0
          %v7649 = vadd.f32 %v7424, %v7648
          %v7650 = vpop.f32.mrb[0].mxu0
          %7651 = vmatprep.mubr.f32.mxu0 0.0
          %7652 = vmatmul.mubr.f32.gmra.mrb[0].mxu0 %v6915
          %v7653 = vpop.f32.mrb[0].mxu0
          %v7654 = vadd.f32 %v7429, %v7653
          %v7655 = vpop.f32.mrb[0].mxu0
          %7656 = vmatprep.mubr.f32.mxu0 0.0
          %7657 = vmatmul.mubr.f32.gmra.mrb[0].mxu0 %v6920
          %v7658 = vpop.f32.mrb[0].mxu0
          %v7659 = vadd.f32 %v7434, %v7658
          %v7660 = vpop.f32.mrb[0].mxu0
          %7661 = vmatprep.mubr.f32.mxu0 0.0
          %7662 = vmatmul.mubr.f32.gmra.mrb[0].mxu0 %v6923
          %v7663 = vpop.f32.mrb[0].mxu0
          %v7664 = vadd.f32 %v7439, %v7663
          %v7665 = vpop.f32.mrb[0].mxu0
          %7666 = vmatprep.mubr.f32.mxu0 0.0
          %7667 = vmatmul.mubr.f32.gmra.mrb[0].mxu0 %v6928
          %v7668 = vpop.f32.mrb[0].mxu0
          %v7669 = vadd.f32 %v7444, %v7668
          %v7670 = vpop.f32.mrb[0].mxu0
          %7671 = vmatprep.mubr.f32.mxu0 0.0
          %7672 = vmatmul.mubr.f32.gmra.mrb[0].mxu0 %v6931
          %v7673 = vpop.f32.mrb[0].mxu0
          %v7674 = vadd.f32 %v7449, %v7673
          %v7675 = vpop.f32.mrb[0].mxu0
          %7676 = vmatprep.mubr.f32.mxu0 0.0
          %7677 = vmatmul.mubr.f32.gmra.mrb[0].mxu0 %v6936
          %v7678 = vpop.f32.mrb[0].mxu0
          %v7679 = vadd.f32 %v7454, %v7678
          %v7680 = vpop.f32.mrb[0].mxu0
          %7681 = vmatprep.mubr.f32.mxu0 0.0
          %7682 = vmatmul.mubr.f32.gmra.mrb[0].mxu0 %v6939
          %v7683 = vpop.f32.mrb[0].mxu0
          %v7684 = vadd.f32 %v7459, %v7683
          %v7685 = vpop.f32.mrb[0].mxu0
          %7686 = vmatprep.mubr.f32.mxu0 0.0
          %7687 = vmatmul.mubr.f32.gmra.mrb[0].mxu0 %v6944
          %v7688 = vpop.f32.mrb[0].mxu0
          %v7689 = vadd.f32 %v7464, %v7688
          %v7690 = vpop.f32.mrb[0].mxu0
          %7691 = vmatprep.mubr.f32.mxu0 0.0
          %7692 = vmatmul.mubr.f32.gmra.mrb[0].mxu0 %v6947
          %v7693 = vpop.f32.mrb[0].mxu0
          %v7694 = vadd.f32 %v7469, %v7693
          %v7695 = vpop.f32.mrb[0].mxu0
          %7696 = vdwg.mxu0
          %v7698 = vlaneseq
          %v7699 = vshrl.u32 %v7698, 7
          %v7700 = vsub.s32 0, %v7699
          %v7701 = vrot.slane %v6402, %v7700
          %v7703 = vadd.f32 %v7539, %v7701
          %v7704 = vadd.f32 %v7544, %v7701
          %v7705 = vadd.f32 %v7549, %v7701
          %v7706 = vadd.f32 %v7554, %v7701
          %v7707 = vadd.f32 %v7559, %v7701
          %v7708 = vadd.f32 %v7564, %v7701
          %v7709 = vadd.f32 %v7569, %v7701
          %v7710 = vadd.f32 %v7574, %v7701
          %v7711 = vadd.f32 %v7579, %v7701
          %v7712 = vadd.f32 %v7584, %v7701
          %v7713 = vadd.f32 %v7589, %v7701
          %v7714 = vadd.f32 %v7594, %v7701
          %v7715 = vadd.f32 %v7599, %v7701
          %v7716 = vadd.f32 %v7604, %v7701
          %v7717 = vadd.f32 %v7609, %v7701
          %v7718 = vadd.f32 %v7614, %v7701
          %v7719 = vadd.f32 %v7619, %v7701
          %v7720 = vadd.f32 %v7624, %v7701
          %v7721 = vadd.f32 %v7629, %v7701
          %v7722 = vadd.f32 %v7634, %v7701
          %v7723 = vadd.f32 %v7639, %v7701
          %v7724 = vadd.f32 %v7644, %v7701
          %v7725 = vadd.f32 %v7649, %v7701
          %v7726 = vadd.f32 %v7654, %v7701
          %v7727 = vadd.f32 %v7659, %v7701
          %v7728 = vadd.f32 %v7664, %v7701
          %v7729 = vadd.f32 %v7669, %v7701
          %v7730 = vadd.f32 %v7674, %v7701
          %v7731 = vadd.f32 %v7679, %v7701
          %v7732 = vadd.f32 %v7684, %v7701
          %v7733 = vadd.f32 %v7689, %v7701
          %v7734 = vadd.f32 %v7694, %v7701
          %vm7735 = vcmp.gt.f32.partialorder %v7703, 0.0
          %vm7736 = vcmp.gt.f32.partialorder %v7704, 0.0
          %vm7737 = vcmp.gt.f32.partialorder %v7705, 0.0
          %vm7738 = vcmp.gt.f32.partialorder %v7706, 0.0
          %vm7739 = vcmp.gt.f32.partialorder %v7707, 0.0
          %vm7740 = vcmp.gt.f32.partialorder %v7708, 0.0
          %vm7741 = vcmp.gt.f32.partialorder %v7709, 0.0
          %vm7742 = vcmp.gt.f32.partialorder %v7710, 0.0
          %vm7743 = vcmp.gt.f32.partialorder %v7711, 0.0
          %vm7744 = vcmp.gt.f32.partialorder %v7712, 0.0
          %vm7745 = vcmp.gt.f32.partialorder %v7713, 0.0
          %vm7746 = vcmp.gt.f32.partialorder %v7714, 0.0
          %vm7747 = vcmp.gt.f32.partialorder %v7715, 0.0
          %vm7748 = vcmp.gt.f32.partialorder %v7716, 0.0
          %vm7749 = vcmp.gt.f32.partialorder %v7717, 0.0
          %vm7750 = vcmp.gt.f32.partialorder %v7718, 0.0
          %vm7751 = vcmp.gt.f32.partialorder %v7719, 0.0
          %vm7752 = vcmp.gt.f32.partialorder %v7720, 0.0
          %vm7753 = vcmp.gt.f32.partialorder %v7721, 0.0
          %vm7754 = vcmp.gt.f32.partialorder %v7722, 0.0
          %vm7755 = vcmp.gt.f32.partialorder %v7723, 0.0
          %vm7756 = vcmp.gt.f32.partialorder %v7724, 0.0
          %vm7757 = vcmp.gt.f32.partialorder %v7725, 0.0
          %vm7758 = vcmp.gt.f32.partialorder %v7726, 0.0
          %vm7759 = vcmp.gt.f32.partialorder %v7727, 0.0
          %vm7760 = vcmp.gt.f32.partialorder %v7728, 0.0
          %vm7761 = vcmp.gt.f32.partialorder %v7729, 0.0
          %vm7762 = vcmp.gt.f32.partialorder %v7730, 0.0
          %vm7763 = vcmp.gt.f32.partialorder %v7731, 0.0
          %vm7764 = vcmp.gt.f32.partialorder %v7732, 0.0
          %vm7765 = vcmp.gt.f32.partialorder %v7733, 0.0
          %vm7766 = vcmp.gt.f32.partialorder %v7734, 0.0
          %v7767 = vmul.f32 %v7703, 0.01
          %v7768 = vmul.f32 %v7704, 0.01
          %v7769 = vmul.f32 %v7705, 0.01
          %v7770 = vmul.f32 %v7706, 0.01
          %v7771 = vmul.f32 %v7707, 0.01
          %v7772 = vmul.f32 %v7708, 0.01
          %v7773 = vmul.f32 %v7709, 0.01
          %v7774 = vmul.f32 %v7710, 0.01
          %v7775 = vmul.f32 %v7711, 0.01
          %v7776 = vmul.f32 %v7712, 0.01
          %v7777 = vmul.f32 %v7713, 0.01
          %v7778 = vmul.f32 %v7714, 0.01
          %v7779 = vmul.f32 %v7715, 0.01
          %v7780 = vmul.f32 %v7716, 0.01
          %v7781 = vmul.f32 %v7717, 0.01
          %v7782 = vmul.f32 %v7718, 0.01
          %v7783 = vmul.f32 %v7719, 0.01
          %v7784 = vmul.f32 %v7720, 0.01
          %v7785 = vmul.f32 %v7721, 0.01
          %v7786 = vmul.f32 %v7722, 0.01
          %v7787 = vmul.f32 %v7723, 0.01
          %v7788 = vmul.f32 %v7724, 0.01
          %v7789 = vmul.f32 %v7725, 0.01
          %v7790 = vmul.f32 %v7726, 0.01
          %v7791 = vmul.f32 %v7727, 0.01
          %v7792 = vmul.f32 %v7728, 0.01
          %v7793 = vmul.f32 %v7729, 0.01
          %v7794 = vmul.f32 %v7730, 0.01
          %v7795 = vmul.f32 %v7731, 0.01
          %v7796 = vmul.f32 %v7732, 0.01
          %v7797 = vmul.f32 %v7733, 0.01
          %v7798 = vmul.f32 %v7734, 0.01
          %v7799 = vsel %vm7735, %v7703, %v7767
          %v7800 = vsel %vm7736, %v7704, %v7768
          %v7801 = vsel %vm7737, %v7705, %v7769
          %v7802 = vsel %vm7738, %v7706, %v7770
          %v7803 = vsel %vm7739, %v7707, %v7771
          %v7804 = vsel %vm7740, %v7708, %v7772
          %v7805 = vsel %vm7741, %v7709, %v7773
          %v7806 = vsel %vm7742, %v7710, %v7774
          %v7807 = vsel %vm7743, %v7711, %v7775
          %v7808 = vsel %vm7744, %v7712, %v7776
          %v7809 = vsel %vm7745, %v7713, %v7777
          %v7810 = vsel %vm7746, %v7714, %v7778
          %v7811 = vsel %vm7747, %v7715, %v7779
          %v7812 = vsel %vm7748, %v7716, %v7780
          %v7813 = vsel %vm7749, %v7717, %v7781
          %v7814 = vsel %vm7750, %v7718, %v7782
          %v7815 = vsel %vm7751, %v7719, %v7783
          %v7816 = vsel %vm7752, %v7720, %v7784
          %v7817 = vsel %vm7753, %v7721, %v7785
          %v7818 = vsel %vm7754, %v7722, %v7786
          %v7819 = vsel %vm7755, %v7723, %v7787
          %v7820 = vsel %vm7756, %v7724, %v7788
          %v7821 = vsel %vm7757, %v7725, %v7789
          %v7822 = vsel %vm7758, %v7726, %v7790
          %v7823 = vsel %vm7759, %v7727, %v7791
          %v7824 = vsel %vm7760, %v7728, %v7792
          %v7825 = vsel %vm7761, %v7729, %v7793
          %v7826 = vsel %vm7762, %v7730, %v7794
          %v7827 = vsel %vm7763, %v7731, %v7795
          %v7828 = vsel %vm7764, %v7732, %v7796
          %v7829 = vsel %vm7765, %v7733, %v7797
          %v7830 = vsel %vm7766, %v7734, %v7798
          %7832 = vset.pattern.permute.xlu0 0
          %7833 = vperm.xlu0 %7832, %v7799
          %v7834 = vpop.permute.xlu0 %7833
          %7837 = vset.pattern.permute.xlu0 0
          %7838 = vperm.xlu0 %7837, %v7800
          %v7839 = vpop.permute.xlu0 %7838
          %7842 = vset.pattern.permute.xlu0 0
          %7843 = vperm.xlu0 %7842, %v7801
          %v7844 = vpop.permute.xlu0 %7843
          %7847 = vset.pattern.permute.xlu0 0
          %7848 = vperm.xlu0 %7847, %v7802
          %v7849 = vpop.permute.xlu0 %7848
          %7852 = vset.pattern.permute.xlu0 0
          %7853 = vperm.xlu0 %7852, %v7803
          %v7854 = vpop.permute.xlu0 %7853
          %7857 = vset.pattern.permute.xlu0 0
          %7858 = vperm.xlu0 %7857, %v7804
          %v7859 = vpop.permute.xlu0 %7858
          %7862 = vset.pattern.permute.xlu0 0
          %7863 = vperm.xlu0 %7862, %v7805
          %v7864 = vpop.permute.xlu0 %7863
          %7867 = vset.pattern.permute.xlu0 0
          %7868 = vperm.xlu0 %7867, %v7806
          %v7869 = vpop.permute.xlu0 %7868
          %7872 = vset.pattern.permute.xlu0 0
          %7873 = vperm.xlu0 %7872, %v7807
          %v7874 = vpop.permute.xlu0 %7873
          %7877 = vset.pattern.permute.xlu0 0
          %7878 = vperm.xlu0 %7877, %v7808
          %v7879 = vpop.permute.xlu0 %7878
          %7882 = vset.pattern.permute.xlu0 0
          %7883 = vperm.xlu0 %7882, %v7809
          %v7884 = vpop.permute.xlu0 %7883
          %7887 = vset.pattern.permute.xlu0 0
          %7888 = vperm.xlu0 %7887, %v7810
          %v7889 = vpop.permute.xlu0 %7888
          %7892 = vset.pattern.permute.xlu0 0
          %7893 = vperm.xlu0 %7892, %v7811
          %v7894 = vpop.permute.xlu0 %7893
          %7897 = vset.pattern.permute.xlu0 0
          %7898 = vperm.xlu0 %7897, %v7812
          %v7899 = vpop.permute.xlu0 %7898
          %7902 = vset.pattern.permute.xlu0 0
          %7903 = vperm.xlu0 %7902, %v7813
          %v7904 = vpop.permute.xlu0 %7903
          %7907 = vset.pattern.permute.xlu0 0
          %7908 = vperm.xlu0 %7907, %v7814
          %v7909 = vpop.permute.xlu0 %7908
          %7912 = vset.pattern.permute.xlu0 0
          %7913 = vperm.xlu0 %7912, %v7815
          %v7914 = vpop.permute.xlu0 %7913
          %7917 = vset.pattern.permute.xlu0 0
          %7918 = vperm.xlu0 %7917, %v7816
          %v7919 = vpop.permute.xlu0 %7918
          %7922 = vset.pattern.permute.xlu0 0
          %7923 = vperm.xlu0 %7922, %v7817
          %v7924 = vpop.permute.xlu0 %7923
          %7927 = vset.pattern.permute.xlu0 0
          %7928 = vperm.xlu0 %7927, %v7818
          %v7929 = vpop.permute.xlu0 %7928
          %7932 = vset.pattern.permute.xlu0 0
          %7933 = vperm.xlu0 %7932, %v7819
          %v7934 = vpop.permute.xlu0 %7933
          %7937 = vset.pattern.permute.xlu0 0
          %7938 = vperm.xlu0 %7937, %v7820
          %v7939 = vpop.permute.xlu0 %7938
          %7942 = vset.pattern.permute.xlu0 0
          %7943 = vperm.xlu0 %7942, %v7821
          %v7944 = vpop.permute.xlu0 %7943
          %7947 = vset.pattern.permute.xlu0 0
          %7948 = vperm.xlu0 %7947, %v7822
          %v7949 = vpop.permute.xlu0 %7948
          %7952 = vset.pattern.permute.xlu0 0
          %7953 = vperm.xlu0 %7952, %v7823
          %v7954 = vpop.permute.xlu0 %7953
          %7957 = vset.pattern.permute.xlu0 0
          %7958 = vperm.xlu0 %7957, %v7824
          %v7959 = vpop.permute.xlu0 %7958
          %7962 = vset.pattern.permute.xlu0 0
          %7963 = vperm.xlu0 %7962, %v7825
          %v7964 = vpop.permute.xlu0 %7963
          %7967 = vset.pattern.permute.xlu0 0
          %7968 = vperm.xlu0 %7967, %v7826
          %v7969 = vpop.permute.xlu0 %7968
          %7972 = vset.pattern.permute.xlu0 0
          %7973 = vperm.xlu0 %7972, %v7827
          %v7974 = vpop.permute.xlu0 %7973
          %7977 = vset.pattern.permute.xlu0 0
          %7978 = vperm.xlu0 %7977, %v7828
          %v7979 = vpop.permute.xlu0 %7978
          %7982 = vset.pattern.permute.xlu0 0
          %7983 = vperm.xlu0 %7982, %v7829
          %v7984 = vpop.permute.xlu0 %7983
          %7987 = vset.pattern.permute.xlu0 0
          %7988 = vperm.xlu0 %7987, %v7830
          %v7989 = vpop.permute.xlu0 %7988
          %v7991 = vadd.f32 %v7834, %v1508
          %v7992 = vadd.f32 %v7839, %v1509
          %v7993 = vadd.f32 %v7844, %v1510
          %v7994 = vadd.f32 %v7849, %v1511
          %v7995 = vadd.f32 %v7854, %v1512
          %v7996 = vadd.f32 %v7859, %v1513
          %v7997 = vadd.f32 %v7864, %v1514
          %v7998 = vadd.f32 %v7869, %v1515
          %v7999 = vadd.f32 %v7874, %v1516
          %v8000 = vadd.f32 %v7879, %v1517
          %v8001 = vadd.f32 %v7884, %v1518
          %v8002 = vadd.f32 %v7889, %v1519
          %v8003 = vadd.f32 %v7894, %v1520
          %v8004 = vadd.f32 %v7899, %v1521
          %v8005 = vadd.f32 %v7904, %v1522
          %v8006 = vadd.f32 %v7909, %v1523
          %v8007 = vadd.f32 %v7914, %v1524
          %v8008 = vadd.f32 %v7919, %v1525
          %v8009 = vadd.f32 %v7924, %v1526
          %v8010 = vadd.f32 %v7929, %v1527
          %v8011 = vadd.f32 %v7934, %v1528
          %v8012 = vadd.f32 %v7939, %v1529
          %v8013 = vadd.f32 %v7944, %v1530
          %v8014 = vadd.f32 %v7949, %v1531
          %v8015 = vadd.f32 %v7954, %v1532
          %v8016 = vadd.f32 %v7959, %v1533
          %v8017 = vadd.f32 %v7964, %v1534
          %v8018 = vadd.f32 %v7969, %v1535
          %v8019 = vadd.f32 %v7974, %v1536
          %v8020 = vadd.f32 %v7979, %v1537
          %v8021 = vadd.f32 %v7984, %v1538
          %v8022 = vadd.f32 %v7989, %v1539
          %v8023 = vmax.f32 %v7991, %v7995
          %v8024 = vmax.f32 %v7992, %v7996
          %v8025 = vmax.f32 %v7993, %v7997
          %v8026 = vmax.f32 %v7994, %v7998
          %v8027 = vmax.f32 %v8023, %v7999
          %v8028 = vmax.f32 %v8024, %v8000
          %v8029 = vmax.f32 %v8025, %v8001
          %v8030 = vmax.f32 %v8026, %v8002
          %v8031 = vmax.f32 %v8027, %v8003
          %v8032 = vmax.f32 %v8028, %v8004
          %v8033 = vmax.f32 %v8029, %v8005
          %v8034 = vmax.f32 %v8030, %v8006
          %v8035 = vmax.f32 %v8031, %v8007
          %v8036 = vmax.f32 %v8032, %v8008
          %v8037 = vmax.f32 %v8033, %v8009
          %v8038 = vmax.f32 %v8034, %v8010
          %v8039 = vmax.f32 %v8035, %v8011
          %v8040 = vmax.f32 %v8036, %v8012
          %v8041 = vmax.f32 %v8037, %v8013
          %v8042 = vmax.f32 %v8038, %v8014
          %v8043 = vmax.f32 %v8039, %v8015
          %v8044 = vmax.f32 %v8040, %v8016
          %v8045 = vmax.f32 %v8041, %v8017
          %v8046 = vmax.f32 %v8042, %v8018
          %v8047 = vmax.f32 %v8043, %v8019
          %v8048 = vmax.f32 %v8044, %v8020
          %v8049 = vmax.f32 %v8045, %v8021
          %v8050 = vmax.f32 %v8046, %v8022
          %v8051 = vmax.f32 %v8047, %v8048
          %v8052 = vmax.f32 %v8049, %v8050
          %v8053 = vmax.f32 %v8051, %v8052
          %v8054 = vrot.slane %v8053, 4
          %v8055 = vmax.f32 %v8053, %v8054
          %v8056 = vrot.slane %v8055, 2
          %v8057 = vmax.f32 %v8055, %v8056
          %v8058 = vrot.slane %v8057, 1
          %v8059 = vmax.f32 %v8057, %v8058
          %8060 = vxpose.xlu0.b32.start [1/16] %v8059, 128
          %8061 = vxpose.xlu0.b32.cont [2/16] 0.0, 128
          %8062 = vxpose.xlu0.b32.cont [3/16] 0.0, 128
          %8063 = vxpose.xlu0.b32.cont [4/16] 0.0, 128
          %8064 = vxpose.xlu0.b32.cont [5/16] 0.0, 128
          %8065 = vxpose.xlu0.b32.cont [6/16] 0.0, 128
          %8066 = vxpose.xlu0.b32.cont [7/16] 0.0, 128
          %8067 = vxpose.xlu0.b32.cont [8/16] 0.0, 128
          %8068 = vxpose.xlu0.b32.cont [9/16] 0.0, 128
          %8069 = vxpose.xlu0.b32.cont [10/16] 0.0, 128
          %8070 = vxpose.xlu0.b32.cont [11/16] 0.0, 128
          %8071 = vxpose.xlu0.b32.cont [12/16] 0.0, 128
          %8072 = vxpose.xlu0.b32.cont [13/16] 0.0, 128
          %8073 = vxpose.xlu0.b32.cont [14/16] 0.0, 128
          %8074 = vxpose.xlu0.b32.cont [15/16] 0.0, 128
          %8075 = vxpose.xlu0.b32.end [16/16] 0.0, 128
          %v8076 = vpop.trf.xlu0
          %v8077 = vpop.trf.xlu0
          %v8078 = vpop.trf.xlu0
          %v8079 = vpop.trf.xlu0
          %v8080 = vpop.trf.xlu0
          %v8081 = vpop.trf.xlu0
          %v8082 = vpop.trf.xlu0
          %v8083 = vpop.trf.xlu0
          %v8084 = vpop.trf.xlu0
          %v8085 = vpop.trf.xlu0
          %v8086 = vpop.trf.xlu0
          %v8087 = vpop.trf.xlu0
          %v8088 = vpop.trf.xlu0
          %v8089 = vpop.trf.xlu0
          %v8090 = vpop.trf.xlu0
          %v8091 = vpop.trf.xlu0
          %v8092 = vpack.c.bf16 %v8077, %v8076
          %v8093 = vpack.c.bf16 %v8079, %v8078
          %v8094 = vpack.c.bf16 %v8081, %v8080
          %v8095 = vpack.c.bf16 %v8083, %v8082
          %v8096 = vpack.c.bf16 %v8085, %v8084
          %v8097 = vpack.c.bf16 %v8087, %v8086
          %v8098 = vpack.c.bf16 %v8089, %v8088
          %v8099 = vpack.c.bf16 %v8091, %v8090
          %8100 = vmatprep.subr.bf16.mxu0 0
          %8101 = vmatpush1.bf16.msra.mxu0 %v8092
          %8102 = vmatprep.subr.bf16.mxu0 0
          %8103 = vmatpush1.bf16.msra.mxu0 %v8093
          %8104 = vmatprep.subr.bf16.mxu0 0
          %8105 = vmatpush1.bf16.msra.mxu0 %v8094
          %8106 = vmatprep.subr.bf16.mxu0 0
          %8107 = vmatpush1.bf16.msra.mxu0 %v8095
          %8108 = vmatprep.subr.bf16.mxu0 0
          %8109 = vmatpush1.bf16.msra.mxu0 %v8096
          %8110 = vmatprep.subr.bf16.mxu0 0
          %8111 = vmatpush1.bf16.msra.mxu0 %v8097
          %8112 = vmatprep.subr.bf16.mxu0 0
          %8113 = vmatpush1.bf16.msra.mxu0 %v8098
          %8114 = vmatprep.subr.bf16.mxu0 0
          %8115 = vmatpush1.bf16.msra.mxu0 %v8099
          %8116 = vmatprep.subr.bf16.mxu0 0
          %8117 = vmatpush1.bf16.msra.mxu0 0
          %8118 = vmatprep.subr.bf16.mxu0 0
          %8119 = vmatpush1.bf16.msra.mxu0 0
          %8120 = vmatprep.subr.bf16.mxu0 0
          %8121 = vmatpush1.bf16.msra.mxu0 0
          %8122 = vmatprep.subr.bf16.mxu0 0
          %8123 = vmatpush1.bf16.msra.mxu0 0
          %8124 = vmatprep.subr.bf16.mxu0 0
          %8125 = vmatpush1.bf16.msra.mxu0 0
          %8126 = vmatprep.subr.bf16.mxu0 0
          %8127 = vmatpush1.bf16.msra.mxu0 0
          %8128 = vmatprep.subr.bf16.mxu0 0
          %8129 = vmatpush1.bf16.msra.mxu0 0
          %8130 = vmatprep.subr.bf16.mxu0 0
          %8131 = vmatpush1.bf16.msra.mxu0 0
          %8132 = vmatprep.mubr.bf16.mxu0 0
          %8133 = vmatmul.mubr.bf16.gmra.mrb[0].mxu0 %v6757
          %v8134 = vpop.f32.mrb[0].mxu0
          %v8135 = vadd.f32 0.0, %v8134
          %v8136 = vpop.f32.mrb[0].mxu0
          %v8137 = vpop.f32.mrb[0].mxu0
          %v8138 = vadd.f32 0.0, %v8137
          %v8139 = vpop.f32.mrb[0].mxu0
          %8140 = vmatprep.mubr.bf16.mxu0 0
          %8141 = vmatmul.mubr.bf16.gmra.mrb[0].mxu0 %v6758
          %v8142 = vpop.f32.mrb[0].mxu0
          %v8143 = vadd.f32 0.0, %v8142
          %v8144 = vpop.f32.mrb[0].mxu0
          %v8145 = vpop.f32.mrb[0].mxu0
          %v8146 = vadd.f32 0.0, %v8145
          %v8147 = vpop.f32.mrb[0].mxu0
          %8148 = vmatprep.mubr.bf16.mxu0 0
          %8149 = vmatmul.mubr.bf16.gmra.mrb[0].mxu0 %v6759
          %v8150 = vpop.f32.mrb[0].mxu0
          %v8151 = vadd.f32 0.0, %v8150
          %v8152 = vpop.f32.mrb[0].mxu0
          %v8153 = vpop.f32.mrb[0].mxu0
          %v8154 = vadd.f32 0.0, %v8153
          %v8155 = vpop.f32.mrb[0].mxu0
          %8156 = vmatprep.mubr.bf16.mxu0 0
          %8157 = vmatmul.mubr.bf16.gmra.mrb[0].mxu0 %v6760
          %v8158 = vpop.f32.mrb[0].mxu0
          %v8159 = vadd.f32 0.0, %v8158
          %v8160 = vpop.f32.mrb[0].mxu0
          %v8161 = vpop.f32.mrb[0].mxu0
          %v8162 = vadd.f32 0.0, %v8161
          %v8163 = vpop.f32.mrb[0].mxu0
          %8164 = vmatprep.mubr.bf16.mxu0 0
          %8165 = vmatmul.mubr.bf16.gmra.mrb[0].mxu0 %v6761
          %v8166 = vpop.f32.mrb[0].mxu0
          %v8167 = vadd.f32 0.0, %v8166
          %v8168 = vpop.f32.mrb[0].mxu0
          %v8169 = vpop.f32.mrb[0].mxu0
          %v8170 = vadd.f32 0.0, %v8169
          %v8171 = vpop.f32.mrb[0].mxu0
          %8172 = vmatprep.mubr.bf16.mxu0 0
          %8173 = vmatmul.mubr.bf16.gmra.mrb[0].mxu0 %v6762
          %v8174 = vpop.f32.mrb[0].mxu0
          %v8175 = vadd.f32 0.0, %v8174
          %v8176 = vpop.f32.mrb[0].mxu0
          %v8177 = vpop.f32.mrb[0].mxu0
          %v8178 = vadd.f32 0.0, %v8177
          %v8179 = vpop.f32.mrb[0].mxu0
          %8180 = vmatprep.mubr.bf16.mxu0 0
          %8181 = vmatmul.mubr.bf16.gmra.mrb[0].mxu0 %v6763
          %v8182 = vpop.f32.mrb[0].mxu0
          %v8183 = vadd.f32 0.0, %v8182
          %v8184 = vpop.f32.mrb[0].mxu0
          %v8185 = vpop.f32.mrb[0].mxu0
          %v8186 = vadd.f32 0.0, %v8185
          %v8187 = vpop.f32.mrb[0].mxu0
          %8188 = vmatprep.mubr.bf16.mxu0 0
          %8189 = vmatmul.mubr.bf16.gmra.mrb[0].mxu0 %v6764
          %v8190 = vpop.f32.mrb[0].mxu0
          %v8191 = vadd.f32 0.0, %v8190
          %v8192 = vpop.f32.mrb[0].mxu0
          %v8193 = vpop.f32.mrb[0].mxu0
          %v8194 = vadd.f32 0.0, %v8193
          %v8195 = vpop.f32.mrb[0].mxu0
          %8196 = vmatprep.mubr.bf16.mxu0 0
          %8197 = vmatmul.mubr.bf16.gmra.mrb[0].mxu0 %v6765
          %v8198 = vpop.f32.mrb[0].mxu0
          %v8199 = vadd.f32 0.0, %v8198
          %v8200 = vpop.f32.mrb[0].mxu0
          %v8201 = vpop.f32.mrb[0].mxu0
          %v8202 = vadd.f32 0.0, %v8201
          %v8203 = vpop.f32.mrb[0].mxu0
          %8204 = vmatprep.mubr.bf16.mxu0 0
          %8205 = vmatmul.mubr.bf16.gmra.mrb[0].mxu0 %v6766
          %v8206 = vpop.f32.mrb[0].mxu0
          %v8207 = vadd.f32 0.0, %v8206
          %v8208 = vpop.f32.mrb[0].mxu0
          %v8209 = vpop.f32.mrb[0].mxu0
          %v8210 = vadd.f32 0.0, %v8209
          %v8211 = vpop.f32.mrb[0].mxu0
          %8212 = vmatprep.mubr.bf16.mxu0 0
          %8213 = vmatmul.mubr.bf16.gmra.mrb[0].mxu0 %v6767
          %v8214 = vpop.f32.mrb[0].mxu0
          %v8215 = vadd.f32 0.0, %v8214
          %v8216 = vpop.f32.mrb[0].mxu0
          %v8217 = vpop.f32.mrb[0].mxu0
          %v8218 = vadd.f32 0.0, %v8217
          %v8219 = vpop.f32.mrb[0].mxu0
          %8220 = vmatprep.mubr.bf16.mxu0 0
          %8221 = vmatmul.mubr.bf16.gmra.mrb[0].mxu0 %v6768
          %v8222 = vpop.f32.mrb[0].mxu0
          %v8223 = vadd.f32 0.0, %v8222
          %v8224 = vpop.f32.mrb[0].mxu0
          %v8225 = vpop.f32.mrb[0].mxu0
          %v8226 = vadd.f32 0.0, %v8225
          %v8227 = vpop.f32.mrb[0].mxu0
          %8228 = vmatprep.mubr.bf16.mxu0 0
          %8229 = vmatmul.mubr.bf16.gmra.mrb[0].mxu0 %v6769
          %v8230 = vpop.f32.mrb[0].mxu0
          %v8231 = vadd.f32 0.0, %v8230
          %v8232 = vpop.f32.mrb[0].mxu0
          %v8233 = vpop.f32.mrb[0].mxu0
          %v8234 = vadd.f32 0.0, %v8233
          %v8235 = vpop.f32.mrb[0].mxu0
          %8236 = vmatprep.mubr.bf16.mxu0 0
          %8237 = vmatmul.mubr.bf16.gmra.mrb[0].mxu0 %v6770
          %v8238 = vpop.f32.mrb[0].mxu0
          %v8239 = vadd.f32 0.0, %v8238
          %v8240 = vpop.f32.mrb[0].mxu0
          %v8241 = vpop.f32.mrb[0].mxu0
          %v8242 = vadd.f32 0.0, %v8241
          %v8243 = vpop.f32.mrb[0].mxu0
          %8244 = vmatprep.mubr.bf16.mxu0 0
          %8245 = vmatmul.mubr.bf16.gmra.mrb[0].mxu0 %v6771
          %v8246 = vpop.f32.mrb[0].mxu0
          %v8247 = vadd.f32 0.0, %v8246
          %v8248 = vpop.f32.mrb[0].mxu0
          %v8249 = vpop.f32.mrb[0].mxu0
          %v8250 = vadd.f32 0.0, %v8249
          %v8251 = vpop.f32.mrb[0].mxu0
          %8252 = vmatprep.mubr.bf16.mxu0 0
          %8253 = vmatmul.mubr.bf16.gmra.mrb[0].mxu0 %v6772
          %v8254 = vpop.f32.mrb[0].mxu0
          %v8255 = vadd.f32 0.0, %v8254
          %v8256 = vpop.f32.mrb[0].mxu0
          %v8257 = vpop.f32.mrb[0].mxu0
          %v8258 = vadd.f32 0.0, %v8257
          %v8259 = vpop.f32.mrb[0].mxu0
          %8260 = vdwg.mxu0
          %v8261 = vsub.f32 %v7799, %v8135
          %v8262 = vsub.f32 %v7800, %v8138
          %v8263 = vsub.f32 %v7801, %v8143
          %v8264 = vsub.f32 %v7802, %v8146
          %v8265 = vsub.f32 %v7803, %v8151
          %v8266 = vsub.f32 %v7804, %v8154
          %v8267 = vsub.f32 %v7805, %v8159
          %v8268 = vsub.f32 %v7806, %v8162
          %v8269 = vsub.f32 %v7807, %v8167
          %v8270 = vsub.f32 %v7808, %v8170
          %v8271 = vsub.f32 %v7809, %v8175
          %v8272 = vsub.f32 %v7810, %v8178
          %v8273 = vsub.f32 %v7811, %v8183
          %v8274 = vsub.f32 %v7812, %v8186
          %v8275 = vsub.f32 %v7813, %v8191
          %v8276 = vsub.f32 %v7814, %v8194
          %v8277 = vsub.f32 %v7815, %v8199
          %v8278 = vsub.f32 %v7816, %v8202
          %v8279 = vsub.f32 %v7817, %v8207
          %v8280 = vsub.f32 %v7818, %v8210
          %v8281 = vsub.f32 %v7819, %v8215
          %v8282 = vsub.f32 %v7820, %v8218
          %v8283 = vsub.f32 %v7821, %v8223
          %v8284 = vsub.f32 %v7822, %v8226
          %v8285 = vsub.f32 %v7823, %v8231
          %v8286 = vsub.f32 %v7824, %v8234
          %v8287 = vsub.f32 %v7825, %v8239
          %v8288 = vsub.f32 %v7826, %v8242
          %v8289 = vsub.f32 %v7827, %v8247
          %v8290 = vsub.f32 %v7828, %v8250
          %v8291 = vsub.f32 %v7829, %v8255
          %v8292 = vsub.f32 %v7830, %v8258
          %v8293 = vmul.f32 %v8261, 1.442695
          %v8294 = vpow.pop %v8293
          %v8295 = vmul.f32 %v8262, 1.442695
          %v8296 = vpow.pop %v8295
          %v8297 = vmul.f32 %v8263, 1.442695
          %v8298 = vpow.pop %v8297
          %v8299 = vmul.f32 %v8264, 1.442695
          %v8300 = vpow.pop %v8299
          %v8301 = vmul.f32 %v8265, 1.442695
          %v8302 = vpow.pop %v8301
          %v8303 = vmul.f32 %v8266, 1.442695
          %v8304 = vpow.pop %v8303
          %v8305 = vmul.f32 %v8267, 1.442695
          %v8306 = vpow.pop %v8305
          %v8307 = vmul.f32 %v8268, 1.442695
          %v8308 = vpow.pop %v8307
          %v8309 = vmul.f32 %v8269, 1.442695
          %v8310 = vpow.pop %v8309
          %v8311 = vmul.f32 %v8270, 1.442695
          %v8312 = vpow.pop %v8311
          %v8313 = vmul.f32 %v8271, 1.442695
          %v8314 = vpow.pop %v8313
          %v8315 = vmul.f32 %v8272, 1.442695
          %v8316 = vpow.pop %v8315
          %v8317 = vmul.f32 %v8273, 1.442695
          %v8318 = vpow.pop %v8317
          %v8319 = vmul.f32 %v8274, 1.442695
          %v8320 = vpow.pop %v8319
          %v8321 = vmul.f32 %v8275, 1.442695
          %v8322 = vpow.pop %v8321
          %v8323 = vmul.f32 %v8276, 1.442695
          %v8324 = vpow.pop %v8323
          %v8325 = vmul.f32 %v8277, 1.442695
          %v8326 = vpow.pop %v8325
          %v8327 = vmul.f32 %v8278, 1.442695
          %v8328 = vpow.pop %v8327
          %v8329 = vmul.f32 %v8279, 1.442695
          %v8330 = vpow.pop %v8329
          %v8331 = vmul.f32 %v8280, 1.442695
          %v8332 = vpow.pop %v8331
          %v8333 = vmul.f32 %v8281, 1.442695
          %v8334 = vpow.pop %v8333
          %v8335 = vmul.f32 %v8282, 1.442695
          %v8336 = vpow.pop %v8335
          %v8337 = vmul.f32 %v8283, 1.442695
          %v8338 = vpow.pop %v8337
          %v8339 = vmul.f32 %v8284, 1.442695
          %v8340 = vpow.pop %v8339
          %v8341 = vmul.f32 %v8285, 1.442695
          %v8342 = vpow.pop %v8341
          %v8343 = vmul.f32 %v8286, 1.442695
          %v8344 = vpow.pop %v8343
          %v8345 = vmul.f32 %v8287, 1.442695
          %v8346 = vpow.pop %v8345
          %v8347 = vmul.f32 %v8288, 1.442695
          %v8348 = vpow.pop %v8347
          %v8349 = vmul.f32 %v8289, 1.442695
          %v8350 = vpow.pop %v8349
          %v8351 = vmul.f32 %v8290, 1.442695
          %v8352 = vpow.pop %v8351
          %v8353 = vmul.f32 %v8291, 1.442695
          %v8354 = vpow.pop %v8353
          %v8355 = vmul.f32 %v8292, 1.442695
          %v8356 = vpow.pop %v8355
          %8358 = vset.pattern.permute.xlu0 0
          %8359 = vperm.xlu0 %8358, %v8294
          %v8360 = vpop.permute.xlu0 %8359
          %8363 = vset.pattern.permute.xlu0 0
          %8364 = vperm.xlu0 %8363, %v8296
          %v8365 = vpop.permute.xlu0 %8364
          %8368 = vset.pattern.permute.xlu0 0
          %8369 = vperm.xlu0 %8368, %v8298
          %v8370 = vpop.permute.xlu0 %8369
          %8373 = vset.pattern.permute.xlu0 0
          %8374 = vperm.xlu0 %8373, %v8300
          %v8375 = vpop.permute.xlu0 %8374
          %8378 = vset.pattern.permute.xlu0 0
          %8379 = vperm.xlu0 %8378, %v8302
          %v8380 = vpop.permute.xlu0 %8379
          %8383 = vset.pattern.permute.xlu0 0
          %8384 = vperm.xlu0 %8383, %v8304
          %v8385 = vpop.permute.xlu0 %8384
          %8388 = vset.pattern.permute.xlu0 0
          %8389 = vperm.xlu0 %8388, %v8306
          %v8390 = vpop.permute.xlu0 %8389
          %8393 = vset.pattern.permute.xlu0 0
          %8394 = vperm.xlu0 %8393, %v8308
          %v8395 = vpop.permute.xlu0 %8394
          %8398 = vset.pattern.permute.xlu0 0
          %8399 = vperm.xlu0 %8398, %v8310
          %v8400 = vpop.permute.xlu0 %8399
          %8403 = vset.pattern.permute.xlu0 0
          %8404 = vperm.xlu0 %8403, %v8312
          %v8405 = vpop.permute.xlu0 %8404
          %8408 = vset.pattern.permute.xlu0 0
          %8409 = vperm.xlu0 %8408, %v8314
          %v8410 = vpop.permute.xlu0 %8409
          %8413 = vset.pattern.permute.xlu0 0
          %8414 = vperm.xlu0 %8413, %v8316
          %v8415 = vpop.permute.xlu0 %8414
          %8418 = vset.pattern.permute.xlu0 0
          %8419 = vperm.xlu0 %8418, %v8318
          %v8420 = vpop.permute.xlu0 %8419
          %8423 = vset.pattern.permute.xlu0 0
          %8424 = vperm.xlu0 %8423, %v8320
          %v8425 = vpop.permute.xlu0 %8424
          %8428 = vset.pattern.permute.xlu0 0
          %8429 = vperm.xlu0 %8428, %v8322
          %v8430 = vpop.permute.xlu0 %8429
          %8433 = vset.pattern.permute.xlu0 0
          %8434 = vperm.xlu0 %8433, %v8324
          %v8435 = vpop.permute.xlu0 %8434
          %8438 = vset.pattern.permute.xlu0 0
          %8439 = vperm.xlu0 %8438, %v8326
          %v8440 = vpop.permute.xlu0 %8439
          %8443 = vset.pattern.permute.xlu0 0
          %8444 = vperm.xlu0 %8443, %v8328
          %v8445 = vpop.permute.xlu0 %8444
          %8448 = vset.pattern.permute.xlu0 0
          %8449 = vperm.xlu0 %8448, %v8330
          %v8450 = vpop.permute.xlu0 %8449
          %8453 = vset.pattern.permute.xlu0 0
          %8454 = vperm.xlu0 %8453, %v8332
          %v8455 = vpop.permute.xlu0 %8454
          %8458 = vset.pattern.permute.xlu0 0
          %8459 = vperm.xlu0 %8458, %v8334
          %v8460 = vpop.permute.xlu0 %8459
          %8463 = vset.pattern.permute.xlu0 0
          %8464 = vperm.xlu0 %8463, %v8336
          %v8465 = vpop.permute.xlu0 %8464
          %8468 = vset.pattern.permute.xlu0 0
          %8469 = vperm.xlu0 %8468, %v8338
          %v8470 = vpop.permute.xlu0 %8469
          %8473 = vset.pattern.permute.xlu0 0
          %8474 = vperm.xlu0 %8473, %v8340
          %v8475 = vpop.permute.xlu0 %8474
          %8478 = vset.pattern.permute.xlu0 0
          %8479 = vperm.xlu0 %8478, %v8342
          %v8480 = vpop.permute.xlu0 %8479
          %8483 = vset.pattern.permute.xlu0 0
          %8484 = vperm.xlu0 %8483, %v8344
          %v8485 = vpop.permute.xlu0 %8484
          %8488 = vset.pattern.permute.xlu0 0
          %8489 = vperm.xlu0 %8488, %v8346
          %v8490 = vpop.permute.xlu0 %8489
          %8493 = vset.pattern.permute.xlu0 0
          %8494 = vperm.xlu0 %8493, %v8348
          %v8495 = vpop.permute.xlu0 %8494
          %8498 = vset.pattern.permute.xlu0 0
          %8499 = vperm.xlu0 %8498, %v8350
          %v8500 = vpop.permute.xlu0 %8499
          %8503 = vset.pattern.permute.xlu0 0
          %8504 = vperm.xlu0 %8503, %v8352
          %v8505 = vpop.permute.xlu0 %8504
          %8508 = vset.pattern.permute.xlu0 0
          %8509 = vperm.xlu0 %8508, %v8354
          %v8510 = vpop.permute.xlu0 %8509
          %8513 = vset.pattern.permute.xlu0 0
          %8514 = vperm.xlu0 %8513, %v8356
          %v8515 = vpop.permute.xlu0 %8514
          %v8517 = vmul.f32 %v8360, %v7091
          %v8518 = vmul.f32 %v8365, %v7095
          %v8519 = vmul.f32 %v8370, %v7101
          %v8520 = vmul.f32 %v8375, %v7105
          %v8521 = vmul.f32 %v8380, %v7111
          %v8522 = vmul.f32 %v8385, %v7115
          %v8523 = vmul.f32 %v8390, %v7121
          %v8524 = vmul.f32 %v8395, %v7125
          %v8525 = vmul.f32 %v8400, %v7131
          %v8526 = vmul.f32 %v8405, %v7135
          %v8527 = vmul.f32 %v8410, %v7141
          %v8528 = vmul.f32 %v8415, %v7145
          %v8529 = vmul.f32 %v8420, %v7151
          %v8530 = vmul.f32 %v8425, %v7155
          %v8531 = vmul.f32 %v8430, %v7161
          %v8532 = vmul.f32 %v8435, %v7165
          %v8533 = vmul.f32 %v8440, %v7171
          %v8534 = vmul.f32 %v8445, %v7175
          %v8535 = vmul.f32 %v8450, %v7181
          %v8536 = vmul.f32 %v8455, %v7185
          %v8537 = vmul.f32 %v8460, %v7191
          %v8538 = vmul.f32 %v8465, %v7195
          %v8539 = vmul.f32 %v8470, %v7201
          %v8540 = vmul.f32 %v8475, %v7205
          %v8541 = vmul.f32 %v8480, %v7211
          %v8542 = vmul.f32 %v8485, %v7215
          %v8543 = vmul.f32 %v8490, %v7221
          %v8544 = vmul.f32 %v8495, %v7225
          %v8545 = vmul.f32 %v8500, %v7231
          %v8546 = vmul.f32 %v8505, %v7235
          %v8547 = vmul.f32 %v8510, %v7241
          %v8548 = vmul.f32 %v8515, %v7245
          %8549 = vmatprep.subr.mxu0 0.0
          %8550 = vmatpush1.msra.mxu0 %v8517
          %8551 = vmatprep.subr.mxu0 0.0
          %8552 = vmatpush1.msra.mxu0 %v8518
          %8553 = vmatprep.subr.mxu0 0.0
          %8554 = vmatpush1.msra.mxu0 %v8519
          %8555 = vmatprep.subr.mxu0 0.0
          %8556 = vmatpush1.msra.mxu0 %v8520
          %8557 = vmatprep.subr.mxu0 0.0
          %8558 = vmatpush1.msra.mxu0 %v8521
          %8559 = vmatprep.subr.mxu0 0.0
          %8560 = vmatpush1.msra.mxu0 %v8522
          %8561 = vmatprep.subr.mxu0 0.0
          %8562 = vmatpush1.msra.mxu0 %v8523
          %8563 = vmatprep.subr.mxu0 0.0
          %8564 = vmatpush1.msra.mxu0 %v8524
          %8565 = vmatprep.subr.mxu0 0.0
          %8566 = vmatpush1.msra.mxu0 %v8525
          %8567 = vmatprep.subr.mxu0 0.0
          %8568 = vmatpush1.msra.mxu0 %v8526
          %8569 = vmatprep.subr.mxu0 0.0
          %8570 = vmatpush1.msra.mxu0 %v8527
          %8571 = vmatprep.subr.mxu0 0.0
          %8572 = vmatpush1.msra.mxu0 %v8528
          %8573 = vmatprep.subr.mxu0 0.0
          %8574 = vmatpush1.msra.mxu0 %v8529
          %8575 = vmatprep.subr.mxu0 0.0
          %8576 = vmatpush1.msra.mxu0 %v8530
          %8577 = vmatprep.subr.mxu0 0.0
          %8578 = vmatpush1.msra.mxu0 %v8531
          %8579 = vmatprep.subr.mxu0 0.0
          %8580 = vmatpush1.msra.mxu0 %v8532
          %8581 = vmatprep.subr.mxu0 0.0
          %8582 = vmatpush1.msra.mxu0 %v8533
          %8583 = vmatprep.subr.mxu0 0.0
          %8584 = vmatpush1.msra.mxu0 %v8534
          %8585 = vmatprep.subr.mxu0 0.0
          %8586 = vmatpush1.msra.mxu0 %v8535
          %8587 = vmatprep.subr.mxu0 0.0
          %8588 = vmatpush1.msra.mxu0 %v8536
          %8589 = vmatprep.subr.mxu0 0.0
          %8590 = vmatpush1.msra.mxu0 %v8537
          %8591 = vmatprep.subr.mxu0 0.0
          %8592 = vmatpush1.msra.mxu0 %v8538
          %8593 = vmatprep.subr.mxu0 0.0
          %8594 = vmatpush1.msra.mxu0 %v8539
          %8595 = vmatprep.subr.mxu0 0.0
          %8596 = vmatpush1.msra.mxu0 %v8540
          %8597 = vmatprep.subr.mxu0 0.0
          %8598 = vmatpush1.msra.mxu0 %v8541
          %8599 = vmatprep.subr.mxu0 0.0
          %8600 = vmatpush1.msra.mxu0 %v8542
          %8601 = vmatprep.subr.mxu0 0.0
          %8602 = vmatpush1.msra.mxu0 %v8543
          %8603 = vmatprep.subr.mxu0 0.0
          %8604 = vmatpush1.msra.mxu0 %v8544
          %8605 = vmatprep.subr.mxu0 0.0
          %8606 = vmatpush1.msra.mxu0 %v8545
          %8607 = vmatprep.subr.mxu0 0.0
          %8608 = vmatpush1.msra.mxu0 %v8546
          %8609 = vmatprep.subr.mxu0 0.0
          %8610 = vmatpush1.msra.mxu0 %v8547
          %8611 = vmatprep.subr.mxu0 0.0
          %8612 = vmatpush1.msra.mxu0 %v8548
          %8613 = vmatprep.mubr.f32.mxu0 %v1477
          %8614 = vmatmul.mubr.f32.gmra.mrb[0].mxu0 %v1476
          %v8615 = vpop.f32.mrb[0].mxu0
          %v8616 = vadd.f32 0.0, %v8615
          %v8617 = vpop.f32.mrb[0].mxu0
          %8618 = vmatprep.mubr.f32.mxu0 %v1479
          %8619 = vmatmul.mubr.f32.gmra.mrb[0].mxu0 %v1478
          %v8620 = vpop.f32.mrb[0].mxu0
          %v8621 = vadd.f32 0.0, %v8620
          %v8622 = vpop.f32.mrb[0].mxu0
          %8623 = vmatprep.mubr.f32.mxu0 %v1481
          %8624 = vmatmul.mubr.f32.gmra.mrb[0].mxu0 %v1480
          %v8625 = vpop.f32.mrb[0].mxu0
          %v8626 = vadd.f32 0.0, %v8625
          %v8627 = vpop.f32.mrb[0].mxu0
          %8628 = vmatprep.mubr.f32.mxu0 %v1483
          %8629 = vmatmul.mubr.f32.gmra.mrb[0].mxu0 %v1482
          %v8630 = vpop.f32.mrb[0].mxu0
          %v8631 = vadd.f32 0.0, %v8630
          %v8632 = vpop.f32.mrb[0].mxu0
          %8633 = vmatprep.mubr.f32.mxu0 %v1485
          %8634 = vmatmul.mubr.f32.gmra.mrb[0].mxu0 %v1484
          %v8635 = vpop.f32.mrb[0].mxu0
          %v8636 = vadd.f32 0.0, %v8635
          %v8637 = vpop.f32.mrb[0].mxu0
          %8638 = vmatprep.mubr.f32.mxu0 %v1487
          %8639 = vmatmul.mubr.f32.gmra.mrb[0].mxu0 %v1486
          %v8640 = vpop.f32.mrb[0].mxu0
          %v8641 = vadd.f32 0.0, %v8640
          %v8642 = vpop.f32.mrb[0].mxu0
          %8643 = vmatprep.mubr.f32.mxu0 %v1489
          %8644 = vmatmul.mubr.f32.gmra.mrb[0].mxu0 %v1488
          %v8645 = vpop.f32.mrb[0].mxu0
          %v8646 = vadd.f32 0.0, %v8645
          %v8647 = vpop.f32.mrb[0].mxu0
          %8648 = vmatprep.mubr.f32.mxu0 %v1491
          %8649 = vmatmul.mubr.f32.gmra.mrb[0].mxu0 %v1490
          %v8650 = vpop.f32.mrb[0].mxu0
          %v8651 = vadd.f32 0.0, %v8650
          %v8652 = vpop.f32.mrb[0].mxu0
          %8653 = vmatprep.mubr.f32.mxu0 %v1493
          %8654 = vmatmul.mubr.f32.gmra.mrb[0].mxu0 %v1492
          %v8655 = vpop.f32.mrb[0].mxu0
          %v8656 = vadd.f32 0.0, %v8655
          %v8657 = vpop.f32.mrb[0].mxu0
          %8658 = vmatprep.mubr.f32.mxu0 %v1495
          %8659 = vmatmul.mubr.f32.gmra.mrb[0].mxu0 %v1494
          %v8660 = vpop.f32.mrb[0].mxu0
          %v8661 = vadd.f32 0.0, %v8660
          %v8662 = vpop.f32.mrb[0].mxu0
          %8663 = vmatprep.mubr.f32.mxu0 %v1497
          %8664 = vmatmul.mubr.f32.gmra.mrb[0].mxu0 %v1496
          %v8665 = vpop.f32.mrb[0].mxu0
          %v8666 = vadd.f32 0.0, %v8665
          %v8667 = vpop.f32.mrb[0].mxu0
          %8668 = vmatprep.mubr.f32.mxu0 %v1499
          %8669 = vmatmul.mubr.f32.gmra.mrb[0].mxu0 %v1498
          %v8670 = vpop.f32.mrb[0].mxu0
          %v8671 = vadd.f32 0.0, %v8670
          %v8672 = vpop.f32.mrb[0].mxu0
          %8673 = vmatprep.mubr.f32.mxu0 %v1501
          %8674 = vmatmul.mubr.f32.gmra.mrb[0].mxu0 %v1500
          %v8675 = vpop.f32.mrb[0].mxu0
          %v8676 = vadd.f32 0.0, %v8675
          %v8677 = vpop.f32.mrb[0].mxu0
          %8678 = vmatprep.mubr.f32.mxu0 %v1503
          %8679 = vmatmul.mubr.f32.gmra.mrb[0].mxu0 %v1502
          %v8680 = vpop.f32.mrb[0].mxu0
          %v8681 = vadd.f32 0.0, %v8680
          %v8682 = vpop.f32.mrb[0].mxu0
          %8683 = vmatprep.mubr.f32.mxu0 %v1505
          %8684 = vmatmul.mubr.f32.gmra.mrb[0].mxu0 %v1504
          %v8685 = vpop.f32.mrb[0].mxu0
          %v8686 = vadd.f32 0.0, %v8685
          %v8687 = vpop.f32.mrb[0].mxu0
          %8688 = vmatprep.mubr.f32.mxu0 %v1507
          %8689 = vmatmul.mubr.f32.gmra.mrb[0].mxu0 %v1506
          %v8690 = vpop.f32.mrb[0].mxu0
          %v8691 = vadd.f32 0.0, %v8690
          %v8692 = vpop.f32.mrb[0].mxu0
          %8693 = vdwg.mxu0
          %8694 = vmatprep.subr.mxu0 0.0
          %8695 = vmatpush1.msra.mxu0 %v8294
          %8696 = vmatprep.subr.mxu0 0.0
          %8697 = vmatpush1.msra.mxu0 %v8296
          %8698 = vmatprep.subr.mxu0 0.0
          %8699 = vmatpush1.msra.mxu0 %v8298
          %8700 = vmatprep.subr.mxu0 0.0
          %8701 = vmatpush1.msra.mxu0 %v8300
          %8702 = vmatprep.subr.mxu0 0.0
          %8703 = vmatpush1.msra.mxu0 %v8302
          %8704 = vmatprep.subr.mxu0 0.0
          %8705 = vmatpush1.msra.mxu0 %v8304
          %8706 = vmatprep.subr.mxu0 0.0
          %8707 = vmatpush1.msra.mxu0 %v8306
          %8708 = vmatprep.subr.mxu0 0.0
          %8709 = vmatpush1.msra.mxu0 %v8308
          %8710 = vmatprep.subr.mxu0 0.0
          %8711 = vmatpush1.msra.mxu0 %v8310
          %8712 = vmatprep.subr.mxu0 0.0
          %8713 = vmatpush1.msra.mxu0 %v8312
          %8714 = vmatprep.subr.mxu0 0.0
          %8715 = vmatpush1.msra.mxu0 %v8314
          %8716 = vmatprep.subr.mxu0 0.0
          %8717 = vmatpush1.msra.mxu0 %v8316
          %8718 = vmatprep.subr.mxu0 0.0
          %8719 = vmatpush1.msra.mxu0 %v8318
          %8720 = vmatprep.subr.mxu0 0.0
          %8721 = vmatpush1.msra.mxu0 %v8320
          %8722 = vmatprep.subr.mxu0 0.0
          %8723 = vmatpush1.msra.mxu0 %v8322
          %8724 = vmatprep.subr.mxu0 0.0
          %8725 = vmatpush1.msra.mxu0 %v8324
          %8726 = vmatprep.subr.mxu0 0.0
          %8727 = vmatpush1.msra.mxu0 %v8326
          %8728 = vmatprep.subr.mxu0 0.0
          %8729 = vmatpush1.msra.mxu0 %v8328
          %8730 = vmatprep.subr.mxu0 0.0
          %8731 = vmatpush1.msra.mxu0 %v8330
          %8732 = vmatprep.subr.mxu0 0.0
          %8733 = vmatpush1.msra.mxu0 %v8332
          %8734 = vmatprep.subr.mxu0 0.0
          %8735 = vmatpush1.msra.mxu0 %v8334
          %8736 = vmatprep.subr.mxu0 0.0
          %8737 = vmatpush1.msra.mxu0 %v8336
          %8738 = vmatprep.subr.mxu0 0.0
          %8739 = vmatpush1.msra.mxu0 %v8338
          %8740 = vmatprep.subr.mxu0 0.0
          %8741 = vmatpush1.msra.mxu0 %v8340
          %8742 = vmatprep.subr.mxu0 0.0
          %8743 = vmatpush1.msra.mxu0 %v8342
          %8744 = vmatprep.subr.mxu0 0.0
          %8745 = vmatpush1.msra.mxu0 %v8344
          %8746 = vmatprep.subr.mxu0 0.0
          %8747 = vmatpush1.msra.mxu0 %v8346
          %8748 = vmatprep.subr.mxu0 0.0
          %8749 = vmatpush1.msra.mxu0 %v8348
          %8750 = vmatprep.subr.mxu0 0.0
          %8751 = vmatpush1.msra.mxu0 %v8350
          %8752 = vmatprep.subr.mxu0 0.0
          %8753 = vmatpush1.msra.mxu0 %v8352
          %8754 = vmatprep.subr.mxu0 0.0
          %8755 = vmatpush1.msra.mxu0 %v8354
          %8756 = vmatprep.subr.mxu0 0.0
          %8757 = vmatpush1.msra.mxu0 %v8356
          %8758 = vmatprep.mubr.f32.mxu0 %v1477
          %8759 = vmatmul.mubr.f32.gmra.mrb[0].mxu0 %v1476
          %v8760 = vpop.f32.mrb[0].mxu0
          %v8761 = vadd.f32 0.0, %v8760
          %v8762 = vpop.f32.mrb[0].mxu0
          %8763 = vmatprep.mubr.f32.mxu0 %v1479
          %8764 = vmatmul.mubr.f32.gmra.mrb[0].mxu0 %v1478
          %v8765 = vpop.f32.mrb[0].mxu0
          %v8766 = vadd.f32 0.0, %v8765
          %v8767 = vpop.f32.mrb[0].mxu0
          %8768 = vmatprep.mubr.f32.mxu0 %v1481
          %8769 = vmatmul.mubr.f32.gmra.mrb[0].mxu0 %v1480
          %v8770 = vpop.f32.mrb[0].mxu0
          %v8771 = vadd.f32 0.0, %v8770
          %v8772 = vpop.f32.mrb[0].mxu0
          %8773 = vmatprep.mubr.f32.mxu0 %v1483
          %8774 = vmatmul.mubr.f32.gmra.mrb[0].mxu0 %v1482
          %v8775 = vpop.f32.mrb[0].mxu0
          %v8776 = vadd.f32 0.0, %v8775
          %v8777 = vpop.f32.mrb[0].mxu0
          %8778 = vmatprep.mubr.f32.mxu0 %v1485
          %8779 = vmatmul.mubr.f32.gmra.mrb[0].mxu0 %v1484
          %v8780 = vpop.f32.mrb[0].mxu0
          %v8781 = vadd.f32 0.0, %v8780
          %v8782 = vpop.f32.mrb[0].mxu0
          %8783 = vmatprep.mubr.f32.mxu0 %v1487
          %8784 = vmatmul.mubr.f32.gmra.mrb[0].mxu0 %v1486
          %v8785 = vpop.f32.mrb[0].mxu0
          %v8786 = vadd.f32 0.0, %v8785
          %v8787 = vpop.f32.mrb[0].mxu0
          %8788 = vmatprep.mubr.f32.mxu0 %v1489
          %8789 = vmatmul.mubr.f32.gmra.mrb[0].mxu0 %v1488
          %v8790 = vpop.f32.mrb[0].mxu0
          %v8791 = vadd.f32 0.0, %v8790
          %v8792 = vpop.f32.mrb[0].mxu0
          %8793 = vmatprep.mubr.f32.mxu0 %v1491
          %8794 = vmatmul.mubr.f32.gmra.mrb[0].mxu0 %v1490
          %v8795 = vpop.f32.mrb[0].mxu0
          %v8796 = vadd.f32 0.0, %v8795
          %v8797 = vpop.f32.mrb[0].mxu0
          %8798 = vmatprep.mubr.f32.mxu0 %v1493
          %8799 = vmatmul.mubr.f32.gmra.mrb[0].mxu0 %v1492
          %v8800 = vpop.f32.mrb[0].mxu0
          %v8801 = vadd.f32 0.0, %v8800
          %v8802 = vpop.f32.mrb[0].mxu0
          %8803 = vmatprep.mubr.f32.mxu0 %v1495
          %8804 = vmatmul.mubr.f32.gmra.mrb[0].mxu0 %v1494
          %v8805 = vpop.f32.mrb[0].mxu0
          %v8806 = vadd.f32 0.0, %v8805
          %v8807 = vpop.f32.mrb[0].mxu0
          %8808 = vmatprep.mubr.f32.mxu0 %v1497
          %8809 = vmatmul.mubr.f32.gmra.mrb[0].mxu0 %v1496
          %v8810 = vpop.f32.mrb[0].mxu0
          %v8811 = vadd.f32 0.0, %v8810
          %v8812 = vpop.f32.mrb[0].mxu0
          %8813 = vmatprep.mubr.f32.mxu0 %v1499
          %8814 = vmatmul.mubr.f32.gmra.mrb[0].mxu0 %v1498
          %v8815 = vpop.f32.mrb[0].mxu0
          %v8816 = vadd.f32 0.0, %v8815
          %v8817 = vpop.f32.mrb[0].mxu0
          %8818 = vmatprep.mubr.f32.mxu0 %v1501
          %8819 = vmatmul.mubr.f32.gmra.mrb[0].mxu0 %v1500
          %v8820 = vpop.f32.mrb[0].mxu0
          %v8821 = vadd.f32 0.0, %v8820
          %v8822 = vpop.f32.mrb[0].mxu0
          %8823 = vmatprep.mubr.f32.mxu0 %v1503
          %8824 = vmatmul.mubr.f32.gmra.mrb[0].mxu0 %v1502
          %v8825 = vpop.f32.mrb[0].mxu0
          %v8826 = vadd.f32 0.0, %v8825
          %v8827 = vpop.f32.mrb[0].mxu0
          %8828 = vmatprep.mubr.f32.mxu0 %v1505
          %8829 = vmatmul.mubr.f32.gmra.mrb[0].mxu0 %v1504
          %v8830 = vpop.f32.mrb[0].mxu0
          %v8831 = vadd.f32 0.0, %v8830
          %v8832 = vpop.f32.mrb[0].mxu0
          %8833 = vmatprep.mubr.f32.mxu0 %v1507
          %8834 = vmatmul.mubr.f32.gmra.mrb[0].mxu0 %v1506
          %v8835 = vpop.f32.mrb[0].mxu0
          %v8836 = vadd.f32 0.0, %v8835
          %v8837 = vpop.f32.mrb[0].mxu0
          %8838 = vdwg.mxu0
          %v8839 = vmax.f32 %v8761, 1e-30
          %v8840 = vmax.f32 %v8766, 1e-30
          %v8841 = vmax.f32 %v8771, 1e-30
          %v8842 = vmax.f32 %v8776, 1e-30
          %v8843 = vmax.f32 %v8781, 1e-30
          %v8844 = vmax.f32 %v8786, 1e-30
          %v8845 = vmax.f32 %v8791, 1e-30
          %v8846 = vmax.f32 %v8796, 1e-30
          %v8847 = vmax.f32 %v8801, 1e-30
          %v8848 = vmax.f32 %v8806, 1e-30
          %v8849 = vmax.f32 %v8811, 1e-30
          %v8850 = vmax.f32 %v8816, 1e-30
          %v8851 = vmax.f32 %v8821, 1e-30
          %v8852 = vmax.f32 %v8826, 1e-30
          %v8853 = vmax.f32 %v8831, 1e-30
          %v8854 = vmax.f32 %v8836, 1e-30
          %8856 = vset.pattern.permute.xlu0 0
          %8857 = vperm.xlu0 %8856, %v8839
          %v8858 = vpop.permute.xlu0 %8857
          %8861 = vset.pattern.permute.xlu0 0
          %8862 = vperm.xlu0 %8861, %v8840
          %v8863 = vpop.permute.xlu0 %8862
          %8866 = vset.pattern.permute.xlu0 0
          %8867 = vperm.xlu0 %8866, %v8841
          %v8868 = vpop.permute.xlu0 %8867
          %8871 = vset.pattern.permute.xlu0 0
          %8872 = vperm.xlu0 %8871, %v8842
          %v8873 = vpop.permute.xlu0 %8872
          %8876 = vset.pattern.permute.xlu0 0
          %8877 = vperm.xlu0 %8876, %v8843
          %v8878 = vpop.permute.xlu0 %8877
          %8881 = vset.pattern.permute.xlu0 0
          %8882 = vperm.xlu0 %8881, %v8844
          %v8883 = vpop.permute.xlu0 %8882
          %8886 = vset.pattern.permute.xlu0 0
          %8887 = vperm.xlu0 %8886, %v8845
          %v8888 = vpop.permute.xlu0 %8887
          %8891 = vset.pattern.permute.xlu0 0
          %8892 = vperm.xlu0 %8891, %v8846
          %v8893 = vpop.permute.xlu0 %8892
          %8896 = vset.pattern.permute.xlu0 0
          %8897 = vperm.xlu0 %8896, %v8847
          %v8898 = vpop.permute.xlu0 %8897
          %8901 = vset.pattern.permute.xlu0 0
          %8902 = vperm.xlu0 %8901, %v8848
          %v8903 = vpop.permute.xlu0 %8902
          %8906 = vset.pattern.permute.xlu0 0
          %8907 = vperm.xlu0 %8906, %v8849
          %v8908 = vpop.permute.xlu0 %8907
          %8911 = vset.pattern.permute.xlu0 0
          %8912 = vperm.xlu0 %8911, %v8850
          %v8913 = vpop.permute.xlu0 %8912
          %8916 = vset.pattern.permute.xlu0 0
          %8917 = vperm.xlu0 %8916, %v8851
          %v8918 = vpop.permute.xlu0 %8917
          %8921 = vset.pattern.permute.xlu0 0
          %8922 = vperm.xlu0 %8921, %v8852
          %v8923 = vpop.permute.xlu0 %8922
          %8926 = vset.pattern.permute.xlu0 0
          %8927 = vperm.xlu0 %8926, %v8853
          %v8928 = vpop.permute.xlu0 %8927
          %8931 = vset.pattern.permute.xlu0 0
          %8932 = vperm.xlu0 %8931, %v8854
          %v8933 = vpop.permute.xlu0 %8932
          %v8935 = vrcp.pop %v8858
          %v8936 = vmul.f32 %v8616, %v8935
          %v8937 = vrcp.pop %v8863
          %v8938 = vmul.f32 %v8621, %v8937
          %v8939 = vrcp.pop %v8868
          %v8940 = vmul.f32 %v8626, %v8939
          %v8941 = vrcp.pop %v8873
          %v8942 = vmul.f32 %v8631, %v8941
          %v8943 = vrcp.pop %v8878
          %v8944 = vmul.f32 %v8636, %v8943
          %v8945 = vrcp.pop %v8883
          %v8946 = vmul.f32 %v8641, %v8945
          %v8947 = vrcp.pop %v8888
          %v8948 = vmul.f32 %v8646, %v8947
          %v8949 = vrcp.pop %v8893
          %v8950 = vmul.f32 %v8651, %v8949
          %v8951 = vrcp.pop %v8898
          %v8952 = vmul.f32 %v8656, %v8951
          %v8953 = vrcp.pop %v8903
          %v8954 = vmul.f32 %v8661, %v8953
          %v8955 = vrcp.pop %v8908
          %v8956 = vmul.f32 %v8666, %v8955
          %v8957 = vrcp.pop %v8913
          %v8958 = vmul.f32 %v8671, %v8957
          %v8959 = vrcp.pop %v8918
          %v8960 = vmul.f32 %v8676, %v8959
          %v8961 = vrcp.pop %v8923
          %v8962 = vmul.f32 %v8681, %v8961
          %v8963 = vrcp.pop %v8928
          %v8964 = vmul.f32 %v8686, %v8963
          %v8965 = vrcp.pop %v8933
          %v8966 = vmul.f32 %v8691, %v8965
          %vm8967 = vcmp.gt.f32.partialorder %v8936, 0.0
          %vm8968 = vcmp.gt.f32.partialorder %v8938, 0.0
          %vm8969 = vcmp.gt.f32.partialorder %v8940, 0.0
          %vm8970 = vcmp.gt.f32.partialorder %v8942, 0.0
          %vm8971 = vcmp.gt.f32.partialorder %v8944, 0.0
          %vm8972 = vcmp.gt.f32.partialorder %v8946, 0.0
          %vm8973 = vcmp.gt.f32.partialorder %v8948, 0.0
          %vm8974 = vcmp.gt.f32.partialorder %v8950, 0.0
          %vm8975 = vcmp.gt.f32.partialorder %v8952, 0.0
          %vm8976 = vcmp.gt.f32.partialorder %v8954, 0.0
          %vm8977 = vcmp.gt.f32.partialorder %v8956, 0.0
          %vm8978 = vcmp.gt.f32.partialorder %v8958, 0.0
          %vm8979 = vcmp.gt.f32.partialorder %v8960, 0.0
          %vm8980 = vcmp.gt.f32.partialorder %v8962, 0.0
          %vm8981 = vcmp.gt.f32.partialorder %v8964, 0.0
          %vm8982 = vcmp.gt.f32.partialorder %v8966, 0.0
          %v8983 = vmin.f32 %v8936, 0.0
          %v8984 = vmin.f32 %v8938, 0.0
          %v8985 = vmin.f32 %v8940, 0.0
          %v8986 = vmin.f32 %v8942, 0.0
          %v8987 = vmin.f32 %v8944, 0.0
          %v8988 = vmin.f32 %v8946, 0.0
          %v8989 = vmin.f32 %v8948, 0.0
          %v8990 = vmin.f32 %v8950, 0.0
          %v8991 = vmin.f32 %v8952, 0.0
          %v8992 = vmin.f32 %v8954, 0.0
          %v8993 = vmin.f32 %v8956, 0.0
          %v8994 = vmin.f32 %v8958, 0.0
          %v8995 = vmin.f32 %v8960, 0.0
          %v8996 = vmin.f32 %v8962, 0.0
          %v8997 = vmin.f32 %v8964, 0.0
          %v8998 = vmin.f32 %v8966, 0.0
          %v8999 = vmul.f32 %v8983, 1.442695
          %v9000 = vpow.pop %v8999
          %v9001 = vmul.f32 %v8984, 1.442695
          %v9002 = vpow.pop %v9001
          %v9003 = vmul.f32 %v8985, 1.442695
          %v9004 = vpow.pop %v9003
          %v9005 = vmul.f32 %v8986, 1.442695
          %v9006 = vpow.pop %v9005
          %v9007 = vmul.f32 %v8987, 1.442695
          %v9008 = vpow.pop %v9007
          %v9009 = vmul.f32 %v8988, 1.442695
          %v9010 = vpow.pop %v9009
          %v9011 = vmul.f32 %v8989, 1.442695
          %v9012 = vpow.pop %v9011
          %v9013 = vmul.f32 %v8990, 1.442695
          %v9014 = vpow.pop %v9013
          %v9015 = vmul.f32 %v8991, 1.442695
          %v9016 = vpow.pop %v9015
          %v9017 = vmul.f32 %v8992, 1.442695
          %v9018 = vpow.pop %v9017
          %v9019 = vmul.f32 %v8993, 1.442695
          %v9020 = vpow.pop %v9019
          %v9021 = vmul.f32 %v8994, 1.442695
          %v9022 = vpow.pop %v9021
          %v9023 = vmul.f32 %v8995, 1.442695
          %v9024 = vpow.pop %v9023
          %v9025 = vmul.f32 %v8996, 1.442695
          %v9026 = vpow.pop %v9025
          %v9027 = vmul.f32 %v8997, 1.442695
          %v9028 = vpow.pop %v9027
          %v9029 = vmul.f32 %v8998, 1.442695
          %v9030 = vpow.pop %v9029
          %v9031 = vsub.f32 %v9000, 1.0
          %v9032 = vsub.f32 %v9002, 1.0
          %v9033 = vsub.f32 %v9004, 1.0
          %v9034 = vsub.f32 %v9006, 1.0
          %v9035 = vsub.f32 %v9008, 1.0
          %v9036 = vsub.f32 %v9010, 1.0
          %v9037 = vsub.f32 %v9012, 1.0
          %v9038 = vsub.f32 %v9014, 1.0
          %v9039 = vsub.f32 %v9016, 1.0
          %v9040 = vsub.f32 %v9018, 1.0
          %v9041 = vsub.f32 %v9020, 1.0
          %v9042 = vsub.f32 %v9022, 1.0
          %v9043 = vsub.f32 %v9024, 1.0
          %v9044 = vsub.f32 %v9026, 1.0
          %v9045 = vsub.f32 %v9028, 1.0
          %v9046 = vsub.f32 %v9030, 1.0
          %v9047 = vsel %vm8967, %v8936, %v9031
          %v9048 = vsel %vm8968, %v8938, %v9032
          %v9049 = vsel %vm8969, %v8940, %v9033
          %v9050 = vsel %vm8970, %v8942, %v9034
          %v9051 = vsel %vm8971, %v8944, %v9035
          %v9052 = vsel %vm8972, %v8946, %v9036
          %v9053 = vsel %vm8973, %v8948, %v9037
          %v9054 = vsel %vm8974, %v8950, %v9038
          %v9055 = vsel %vm8975, %v8952, %v9039
          %v9056 = vsel %vm8976, %v8954, %v9040
          %v9057 = vsel %vm8977, %v8956, %v9041
          %v9058 = vsel %vm8978, %v8958, %v9042
          %v9059 = vsel %vm8979, %v8960, %v9043
          %v9060 = vsel %vm8980, %v8962, %v9044
          %v9061 = vsel %vm8981, %v8964, %v9045
          %v9062 = vsel %vm8982, %v8966, %v9046
          %v9064 = vlaneseq
          %v9065 = vshrl.u32 %v9064, 7
          %v9066 = vsub.s32 0, %v9065
          %v9067 = vrot.slane %v6516, %v9066
          %v9068 = vlaneseq
          %v9069 = vshrl.u32 %v9068, 7
          %v9070 = vsub.s32 1, %v9069
          %v9071 = vrot.slane %v6516, %v9070
          %v9072 = vlaneseq
          %v9073 = vshrl.u32 %v9072, 7
          %v9074 = vsub.s32 2, %v9073
          %v9075 = vrot.slane %v6516, %v9074
          %9079 = vmatprep.subr.mxu0 %v6421
          %9080 = vmatpush1.msra.mxu0 %v6420
          %9081 = vmatprep.subr.mxu0 %v6424
          %9082 = vmatpush1.msra.mxu0 %v6423
          %9083 = vmatprep.subr.mxu0 %v6427
          %9084 = vmatpush1.msra.mxu0 %v6426
          %9085 = vmatprep.subr.mxu0 %v6430
          %9086 = vmatpush1.msra.mxu0 %v6429
          %9087 = vmatprep.subr.mxu0 %v6433
          %9088 = vmatpush1.msra.mxu0 %v6432
          %9089 = vmatprep.subr.mxu0 %v6436
          %9090 = vmatpush1.msra.mxu0 %v6435
          %9091 = vmatprep.subr.mxu0 %v6439
          %9092 = vmatpush1.msra.mxu0 %v6438
          %9093 = vmatprep.subr.mxu0 %v6442
          %9094 = vmatpush1.msra.mxu0 %v6441
          %9095 = vmatprep.subr.mxu0 %v6445
          %9096 = vmatpush1.msra.mxu0 %v6444
          %9097 = vmatprep.subr.mxu0 %v6448
          %9098 = vmatpush1.msra.mxu0 %v6447
          %9099 = vmatprep.subr.mxu0 %v6451
          %9100 = vmatpush1.msra.mxu0 %v6450
          %9101 = vmatprep.subr.mxu0 %v6454
          %9102 = vmatpush1.msra.mxu0 %v6453
          %9103 = vmatprep.subr.mxu0 %v6457
          %9104 = vmatpush1.msra.mxu0 %v6456
          %9105 = vmatprep.subr.mxu0 %v6460
          %9106 = vmatpush1.msra.mxu0 %v6459
          %9107 = vmatprep.subr.mxu0 %v6463
          %9108 = vmatpush1.msra.mxu0 %v6462
          %9109 = vmatprep.subr.mxu0 %v6466
          %9110 = vmatpush1.msra.mxu0 %v6465
          %9111 = vmatprep.subr.mxu0 0.0
          %9112 = vmatpush1.msra.mxu0 0.0
          %9113 = vmatprep.subr.mxu0 0.0
          %9114 = vmatpush1.msra.mxu0 0.0
          %9115 = vmatprep.subr.mxu0 0.0
          %9116 = vmatpush1.msra.mxu0 0.0
          %9117 = vmatprep.subr.mxu0 0.0
          %9118 = vmatpush1.msra.mxu0 0.0
          %9119 = vmatprep.subr.mxu0 0.0
          %9120 = vmatpush1.msra.mxu0 0.0
          %9121 = vmatprep.subr.mxu0 0.0
          %9122 = vmatpush1.msra.mxu0 0.0
          %9123 = vmatprep.subr.mxu0 0.0
          %9124 = vmatpush1.msra.mxu0 0.0
          %9125 = vmatprep.subr.mxu0 0.0
          %9126 = vmatpush1.msra.mxu0 0.0
          %9127 = vmatprep.subr.mxu0 0.0
          %9128 = vmatpush1.msra.mxu0 0.0
          %9129 = vmatprep.subr.mxu0 0.0
          %9130 = vmatpush1.msra.mxu0 0.0
          %9131 = vmatprep.subr.mxu0 0.0
          %9132 = vmatpush1.msra.mxu0 0.0
          %9133 = vmatprep.subr.mxu0 0.0
          %9134 = vmatpush1.msra.mxu0 0.0
          %9135 = vmatprep.subr.mxu0 0.0
          %9136 = vmatpush1.msra.mxu0 0.0
          %9137 = vmatprep.subr.mxu0 0.0
          %9138 = vmatpush1.msra.mxu0 0.0
          %9139 = vmatprep.subr.mxu0 0.0
          %9140 = vmatpush1.msra.mxu0 0.0
          %9141 = vmatprep.subr.mxu0 0.0
          %9142 = vmatpush1.msra.mxu0 0.0
          %9143 = vmatprep.mubr.f32.mxu0 0.0
          %9144 = vmatmul.mubr.f32.gmra.mrb[0].mxu0 %v9047
          %v9145 = vpop.f32.mrb[0].mxu0
          %v9146 = vadd.f32 %v9067, %v9145
          %v9147 = vpop.f32.mrb[0].mxu0
          %v9148 = vadd.f32 %v9071, %v9147
          %9149 = vmatprep.mubr.f32.mxu0 0.0
          %9150 = vmatmul.mubr.f32.gmra.mrb[0].mxu0 %v9048
          %v9151 = vpop.f32.mrb[0].mxu0
          %v9152 = vadd.f32 %v9067, %v9151
          %v9153 = vpop.f32.mrb[0].mxu0
          %v9154 = vadd.f32 %v9071, %v9153
          %9155 = vmatprep.mubr.f32.mxu0 0.0
          %9156 = vmatmul.mubr.f32.gmra.mrb[0].mxu0 %v9049
          %v9157 = vpop.f32.mrb[0].mxu0
          %v9158 = vadd.f32 %v9067, %v9157
          %v9159 = vpop.f32.mrb[0].mxu0
          %v9160 = vadd.f32 %v9071, %v9159
          %9161 = vmatprep.mubr.f32.mxu0 0.0
          %9162 = vmatmul.mubr.f32.gmra.mrb[0].mxu0 %v9050
          %v9163 = vpop.f32.mrb[0].mxu0
          %v9164 = vadd.f32 %v9067, %v9163
          %v9165 = vpop.f32.mrb[0].mxu0
          %v9166 = vadd.f32 %v9071, %v9165
          %9167 = vmatprep.mubr.f32.mxu0 0.0
          %9168 = vmatmul.mubr.f32.gmra.mrb[0].mxu0 %v9051
          %v9169 = vpop.f32.mrb[0].mxu0
          %v9170 = vadd.f32 %v9067, %v9169
          %v9171 = vpop.f32.mrb[0].mxu0
          %v9172 = vadd.f32 %v9071, %v9171
          %9173 = vmatprep.mubr.f32.mxu0 0.0
          %9174 = vmatmul.mubr.f32.gmra.mrb[0].mxu0 %v9052
          %v9175 = vpop.f32.mrb[0].mxu0
          %v9176 = vadd.f32 %v9067, %v9175
          %v9177 = vpop.f32.mrb[0].mxu0
          %v9178 = vadd.f32 %v9071, %v9177
          %9179 = vmatprep.mubr.f32.mxu0 0.0
          %9180 = vmatmul.mubr.f32.gmra.mrb[0].mxu0 %v9053
          %v9181 = vpop.f32.mrb[0].mxu0
          %v9182 = vadd.f32 %v9067, %v9181
          %v9183 = vpop.f32.mrb[0].mxu0
          %v9184 = vadd.f32 %v9071, %v9183
          %9185 = vmatprep.mubr.f32.mxu0 0.0
          %9186 = vmatmul.mubr.f32.gmra.mrb[0].mxu0 %v9054
          %v9187 = vpop.f32.mrb[0].mxu0
          %v9188 = vadd.f32 %v9067, %v9187
          %v9189 = vpop.f32.mrb[0].mxu0
          %v9190 = vadd.f32 %v9071, %v9189
          %9191 = vmatprep.mubr.f32.mxu0 0.0
          %9192 = vmatmul.mubr.f32.gmra.mrb[0].mxu0 %v9055
          %v9193 = vpop.f32.mrb[0].mxu0
          %v9194 = vadd.f32 %v9067, %v9193
          %v9195 = vpop.f32.mrb[0].mxu0
          %v9196 = vadd.f32 %v9071, %v9195
          %9197 = vmatprep.mubr.f32.mxu0 0.0
          %9198 = vmatmul.mubr.f32.gmra.mrb[0].mxu0 %v9056
          %v9199 = vpop.f32.mrb[0].mxu0
          %v9200 = vadd.f32 %v9067, %v9199
          %v9201 = vpop.f32.mrb[0].mxu0
          %v9202 = vadd.f32 %v9071, %v9201
          %9203 = vmatprep.mubr.f32.mxu0 0.0
          %9204 = vmatmul.mubr.f32.gmra.mrb[0].mxu0 %v9057
          %v9205 = vpop.f32.mrb[0].mxu0
          %v9206 = vadd.f32 %v9067, %v9205
          %v9207 = vpop.f32.mrb[0].mxu0
          %v9208 = vadd.f32 %v9071, %v9207
          %9209 = vmatprep.mubr.f32.mxu0 0.0
          %9210 = vmatmul.mubr.f32.gmra.mrb[0].mxu0 %v9058
          %v9211 = vpop.f32.mrb[0].mxu0
          %v9212 = vadd.f32 %v9067, %v9211
          %v9213 = vpop.f32.mrb[0].mxu0
          %v9214 = vadd.f32 %v9071, %v9213
          %9215 = vmatprep.mubr.f32.mxu0 0.0
          %9216 = vmatmul.mubr.f32.gmra.mrb[0].mxu0 %v9059
          %v9217 = vpop.f32.mrb[0].mxu0
          %v9218 = vadd.f32 %v9067, %v9217
          %v9219 = vpop.f32.mrb[0].mxu0
          %v9220 = vadd.f32 %v9071, %v9219
          %9221 = vmatprep.mubr.f32.mxu0 0.0
          %9222 = vmatmul.mubr.f32.gmra.mrb[0].mxu0 %v9060
          %v9223 = vpop.f32.mrb[0].mxu0
          %v9224 = vadd.f32 %v9067, %v9223
          %v9225 = vpop.f32.mrb[0].mxu0
          %v9226 = vadd.f32 %v9071, %v9225
          %9227 = vmatprep.mubr.f32.mxu0 0.0
          %9228 = vmatmul.mubr.f32.gmra.mrb[0].mxu0 %v9061
          %v9229 = vpop.f32.mrb[0].mxu0
          %v9230 = vadd.f32 %v9067, %v9229
          %v9231 = vpop.f32.mrb[0].mxu0
          %v9232 = vadd.f32 %v9071, %v9231
          %9233 = vmatprep.mubr.f32.mxu0 0.0
          %9234 = vmatmul.mubr.f32.gmra.mrb[0].mxu0 %v9062
          %v9235 = vpop.f32.mrb[0].mxu0
          %v9236 = vadd.f32 %v9067, %v9235
          %v9237 = vpop.f32.mrb[0].mxu0
          %v9238 = vadd.f32 %v9071, %v9237
          %9239 = vdwg.mxu0
          %9240 = vmatprep.subr.mxu0 0.0
          %9241 = vmatpush1.msra.mxu0 %v6422
          %9242 = vmatprep.subr.mxu0 0.0
          %9243 = vmatpush1.msra.mxu0 %v6425
          %9244 = vmatprep.subr.mxu0 0.0
          %9245 = vmatpush1.msra.mxu0 %v6428
          %9246 = vmatprep.subr.mxu0 0.0
          %9247 = vmatpush1.msra.mxu0 %v6431
          %9248 = vmatprep.subr.mxu0 0.0
          %9249 = vmatpush1.msra.mxu0 %v6434
          %9250 = vmatprep.subr.mxu0 0.0
          %9251 = vmatpush1.msra.mxu0 %v6437
          %9252 = vmatprep.subr.mxu0 0.0
          %9253 = vmatpush1.msra.mxu0 %v6440
          %9254 = vmatprep.subr.mxu0 0.0
          %9255 = vmatpush1.msra.mxu0 %v6443
          %9256 = vmatprep.subr.mxu0 0.0
          %9257 = vmatpush1.msra.mxu0 %v6446
          %9258 = vmatprep.subr.mxu0 0.0
          %9259 = vmatpush1.msra.mxu0 %v6449
          %9260 = vmatprep.subr.mxu0 0.0
          %9261 = vmatpush1.msra.mxu0 %v6452
          %9262 = vmatprep.subr.mxu0 0.0
          %9263 = vmatpush1.msra.mxu0 %v6455
          %9264 = vmatprep.subr.mxu0 0.0
          %9265 = vmatpush1.msra.mxu0 %v6458
          %9266 = vmatprep.subr.mxu0 0.0
          %9267 = vmatpush1.msra.mxu0 %v6461
          %9268 = vmatprep.subr.mxu0 0.0
          %9269 = vmatpush1.msra.mxu0 %v6464
          %9270 = vmatprep.subr.mxu0 0.0
          %9271 = vmatpush1.msra.mxu0 %v6467
          %9272 = vmatprep.subr.mxu0 0.0
          %9273 = vmatpush1.msra.mxu0 0.0
          %9274 = vmatprep.subr.mxu0 0.0
          %9275 = vmatpush1.msra.mxu0 0.0
          %9276 = vmatprep.subr.mxu0 0.0
          %9277 = vmatpush1.msra.mxu0 0.0
          %9278 = vmatprep.subr.mxu0 0.0
          %9279 = vmatpush1.msra.mxu0 0.0
          %9280 = vmatprep.subr.mxu0 0.0
          %9281 = vmatpush1.msra.mxu0 0.0
          %9282 = vmatprep.subr.mxu0 0.0
          %9283 = vmatpush1.msra.mxu0 0.0
          %9284 = vmatprep.subr.mxu0 0.0
          %9285 = vmatpush1.msra.mxu0 0.0
          %9286 = vmatprep.subr.mxu0 0.0
          %9287 = vmatpush1.msra.mxu0 0.0
          %9288 = vmatprep.subr.mxu0 0.0
          %9289 = vmatpush1.msra.mxu0 0.0
          %9290 = vmatprep.subr.mxu0 0.0
          %9291 = vmatpush1.msra.mxu0 0.0
          %9292 = vmatprep.subr.mxu0 0.0
          %9293 = vmatpush1.msra.mxu0 0.0
          %9294 = vmatprep.subr.mxu0 0.0
          %9295 = vmatpush1.msra.mxu0 0.0
          %9296 = vmatprep.subr.mxu0 0.0
          %9297 = vmatpush1.msra.mxu0 0.0
          %9298 = vmatprep.subr.mxu0 0.0
          %9299 = vmatpush1.msra.mxu0 0.0
          %9300 = vmatprep.subr.mxu0 0.0
          %9301 = vmatpush1.msra.mxu0 0.0
          %9302 = vmatprep.subr.mxu0 0.0
          %9303 = vmatpush1.msra.mxu0 0.0
          %9304 = vmatprep.mubr.f32.mxu0 0.0
          %9305 = vmatmul.mubr.f32.gmra.mrb[0].mxu0 %v9047
          %v9306 = vpop.f32.mrb[0].mxu0
          %v9307 = vadd.f32 %v9075, %v9306
          %v9308 = vpop.f32.mrb[0].mxu0
          %9309 = vmatprep.mubr.f32.mxu0 0.0
          %9310 = vmatmul.mubr.f32.gmra.mrb[0].mxu0 %v9048
          %v9311 = vpop.f32.mrb[0].mxu0
          %v9312 = vadd.f32 %v9075, %v9311
          %v9313 = vpop.f32.mrb[0].mxu0
          %9314 = vmatprep.mubr.f32.mxu0 0.0
          %9315 = vmatmul.mubr.f32.gmra.mrb[0].mxu0 %v9049
          %v9316 = vpop.f32.mrb[0].mxu0
          %v9317 = vadd.f32 %v9075, %v9316
          %v9318 = vpop.f32.mrb[0].mxu0
          %9319 = vmatprep.mubr.f32.mxu0 0.0
          %9320 = vmatmul.mubr.f32.gmra.mrb[0].mxu0 %v9050
          %v9321 = vpop.f32.mrb[0].mxu0
          %v9322 = vadd.f32 %v9075, %v9321
          %v9323 = vpop.f32.mrb[0].mxu0
          %9324 = vmatprep.mubr.f32.mxu0 0.0
          %9325 = vmatmul.mubr.f32.gmra.mrb[0].mxu0 %v9051
          %v9326 = vpop.f32.mrb[0].mxu0
          %v9327 = vadd.f32 %v9075, %v9326
          %v9328 = vpop.f32.mrb[0].mxu0
          %9329 = vmatprep.mubr.f32.mxu0 0.0
          %9330 = vmatmul.mubr.f32.gmra.mrb[0].mxu0 %v9052
          %v9331 = vpop.f32.mrb[0].mxu0
          %v9332 = vadd.f32 %v9075, %v9331
          %v9333 = vpop.f32.mrb[0].mxu0
          %9334 = vmatprep.mubr.f32.mxu0 0.0
          %9335 = vmatmul.mubr.f32.gmra.mrb[0].mxu0 %v9053
          %v9336 = vpop.f32.mrb[0].mxu0
          %v9337 = vadd.f32 %v9075, %v9336
          %v9338 = vpop.f32.mrb[0].mxu0
          %9339 = vmatprep.mubr.f32.mxu0 0.0
          %9340 = vmatmul.mubr.f32.gmra.mrb[0].mxu0 %v9054
          %v9341 = vpop.f32.mrb[0].mxu0
          %v9342 = vadd.f32 %v9075, %v9341
          %v9343 = vpop.f32.mrb[0].mxu0
          %9344 = vmatprep.mubr.f32.mxu0 0.0
          %9345 = vmatmul.mubr.f32.gmra.mrb[0].mxu0 %v9055
          %v9346 = vpop.f32.mrb[0].mxu0
          %v9347 = vadd.f32 %v9075, %v9346
          %v9348 = vpop.f32.mrb[0].mxu0
          %9349 = vmatprep.mubr.f32.mxu0 0.0
          %9350 = vmatmul.mubr.f32.gmra.mrb[0].mxu0 %v9056
          %v9351 = vpop.f32.mrb[0].mxu0
          %v9352 = vadd.f32 %v9075, %v9351
          %v9353 = vpop.f32.mrb[0].mxu0
          %9354 = vmatprep.mubr.f32.mxu0 0.0
          %9355 = vmatmul.mubr.f32.gmra.mrb[0].mxu0 %v9057
          %v9356 = vpop.f32.mrb[0].mxu0
          %v9357 = vadd.f32 %v9075, %v9356
          %v9358 = vpop.f32.mrb[0].mxu0
          %9359 = vmatprep.mubr.f32.mxu0 0.0
          %9360 = vmatmul.mubr.f32.gmra.mrb[0].mxu0 %v9058
          %v9361 = vpop.f32.mrb[0].mxu0
          %v9362 = vadd.f32 %v9075, %v9361
          %v9363 = vpop.f32.mrb[0].mxu0
          %9364 = vmatprep.mubr.f32.mxu0 0.0
          %9365 = vmatmul.mubr.f32.gmra.mrb[0].mxu0 %v9059
          %v9366 = vpop.f32.mrb[0].mxu0
          %v9367 = vadd.f32 %v9075, %v9366
          %v9368 = vpop.f32.mrb[0].mxu0
          %9369 = vmatprep.mubr.f32.mxu0 0.0
          %9370 = vmatmul.mubr.f32.gmra.mrb[0].mxu0 %v9060
          %v9371 = vpop.f32.mrb[0].mxu0
          %v9372 = vadd.f32 %v9075, %v9371
          %v9373 = vpop.f32.mrb[0].mxu0
          %9374 = vmatprep.mubr.f32.mxu0 0.0
          %9375 = vmatmul.mubr.f32.gmra.mrb[0].mxu0 %v9061
          %v9376 = vpop.f32.mrb[0].mxu0
          %v9377 = vadd.f32 %v9075, %v9376
          %v9378 = vpop.f32.mrb[0].mxu0
          %9379 = vmatprep.mubr.f32.mxu0 0.0
          %9380 = vmatmul.mubr.f32.gmra.mrb[0].mxu0 %v9062
          %v9381 = vpop.f32.mrb[0].mxu0
          %v9382 = vadd.f32 %v9075, %v9381
          %v9383 = vpop.f32.mrb[0].mxu0
          %9384 = vdwg.mxu0
          %v9386 = vlaneseq
          %v9387 = vshrl.u32 %v9386, 7
          %v9388 = vsub.s32 0, %v9387
          %v9389 = vrot.slane %v6517, %v9388
          %v9390 = vlaneseq
          %v9391 = vshrl.u32 %v9390, 7
          %v9392 = vsub.s32 1, %v9391
          %v9393 = vrot.slane %v6517, %v9392
          %v9394 = vlaneseq
          %v9395 = vshrl.u32 %v9394, 7
          %v9396 = vsub.s32 2, %v9395
          %v9397 = vrot.slane %v6517, %v9396
          %9401 = vmatprep.subr.mxu0 %v6469
          %9402 = vmatpush1.msra.mxu0 %v6468
          %9403 = vmatprep.subr.mxu0 %v6472
          %9404 = vmatpush1.msra.mxu0 %v6471
          %9405 = vmatprep.subr.mxu0 %v6475
          %9406 = vmatpush1.msra.mxu0 %v6474
          %9407 = vmatprep.subr.mxu0 %v6478
          %9408 = vmatpush1.msra.mxu0 %v6477
          %9409 = vmatprep.subr.mxu0 %v6481
          %9410 = vmatpush1.msra.mxu0 %v6480
          %9411 = vmatprep.subr.mxu0 %v6484
          %9412 = vmatpush1.msra.mxu0 %v6483
          %9413 = vmatprep.subr.mxu0 %v6487
          %9414 = vmatpush1.msra.mxu0 %v6486
          %9415 = vmatprep.subr.mxu0 %v6490
          %9416 = vmatpush1.msra.mxu0 %v6489
          %9417 = vmatprep.subr.mxu0 %v6493
          %9418 = vmatpush1.msra.mxu0 %v6492
          %9419 = vmatprep.subr.mxu0 %v6496
          %9420 = vmatpush1.msra.mxu0 %v6495
          %9421 = vmatprep.subr.mxu0 %v6499
          %9422 = vmatpush1.msra.mxu0 %v6498
          %9423 = vmatprep.subr.mxu0 %v6502
          %9424 = vmatpush1.msra.mxu0 %v6501
          %9425 = vmatprep.subr.mxu0 %v6505
          %9426 = vmatpush1.msra.mxu0 %v6504
          %9427 = vmatprep.subr.mxu0 %v6508
          %9428 = vmatpush1.msra.mxu0 %v6507
          %9429 = vmatprep.subr.mxu0 %v6511
          %9430 = vmatpush1.msra.mxu0 %v6510
          %9431 = vmatprep.subr.mxu0 %v6514
          %9432 = vmatpush1.msra.mxu0 %v6513
          %9433 = vmatprep.subr.mxu0 0.0
          %9434 = vmatpush1.msra.mxu0 0.0
          %9435 = vmatprep.subr.mxu0 0.0
          %9436 = vmatpush1.msra.mxu0 0.0
          %9437 = vmatprep.subr.mxu0 0.0
          %9438 = vmatpush1.msra.mxu0 0.0
          %9439 = vmatprep.subr.mxu0 0.0
          %9440 = vmatpush1.msra.mxu0 0.0
          %9441 = vmatprep.subr.mxu0 0.0
          %9442 = vmatpush1.msra.mxu0 0.0
          %9443 = vmatprep.subr.mxu0 0.0
          %9444 = vmatpush1.msra.mxu0 0.0
          %9445 = vmatprep.subr.mxu0 0.0
          %9446 = vmatpush1.msra.mxu0 0.0
          %9447 = vmatprep.subr.mxu0 0.0
          %9448 = vmatpush1.msra.mxu0 0.0
          %9449 = vmatprep.subr.mxu0 0.0
          %9450 = vmatpush1.msra.mxu0 0.0
          %9451 = vmatprep.subr.mxu0 0.0
          %9452 = vmatpush1.msra.mxu0 0.0
          %9453 = vmatprep.subr.mxu0 0.0
          %9454 = vmatpush1.msra.mxu0 0.0
          %9455 = vmatprep.subr.mxu0 0.0
          %9456 = vmatpush1.msra.mxu0 0.0
          %9457 = vmatprep.subr.mxu0 0.0
          %9458 = vmatpush1.msra.mxu0 0.0
          %9459 = vmatprep.subr.mxu0 0.0
          %9460 = vmatpush1.msra.mxu0 0.0
          %9461 = vmatprep.subr.mxu0 0.0
          %9462 = vmatpush1.msra.mxu0 0.0
          %9463 = vmatprep.subr.mxu0 0.0
          %9464 = vmatpush1.msra.mxu0 0.0
          %9465 = vmatprep.mubr.f32.mxu0 0.0
          %9466 = vmatmul.mubr.f32.gmra.mrb[0].mxu0 %v6518
          %v9467 = vpop.f32.mrb[0].mxu0
          %v9468 = vadd.f32 %v9389, %v9467
          %v9469 = vpop.f32.mrb[0].mxu0
          %v9470 = vadd.f32 %v9393, %v9469
          %9471 = vmatprep.mubr.f32.mxu0 0.0
          %9472 = vmatmul.mubr.f32.gmra.mrb[0].mxu0 %v6519
          %v9473 = vpop.f32.mrb[0].mxu0
          %v9474 = vadd.f32 %v9389, %v9473
          %v9475 = vpop.f32.mrb[0].mxu0
          %v9476 = vadd.f32 %v9393, %v9475
          %9477 = vmatprep.mubr.f32.mxu0 0.0
          %9478 = vmatmul.mubr.f32.gmra.mrb[0].mxu0 %v6520
          %v9479 = vpop.f32.mrb[0].mxu0
          %v9480 = vadd.f32 %v9389, %v9479
          %v9481 = vpop.f32.mrb[0].mxu0
          %v9482 = vadd.f32 %v9393, %v9481
          %9483 = vmatprep.mubr.f32.mxu0 0.0
          %9484 = vmatmul.mubr.f32.gmra.mrb[0].mxu0 %v6521
          %v9485 = vpop.f32.mrb[0].mxu0
          %v9486 = vadd.f32 %v9389, %v9485
          %v9487 = vpop.f32.mrb[0].mxu0
          %v9488 = vadd.f32 %v9393, %v9487
          %9489 = vmatprep.mubr.f32.mxu0 0.0
          %9490 = vmatmul.mubr.f32.gmra.mrb[0].mxu0 %v6522
          %v9491 = vpop.f32.mrb[0].mxu0
          %v9492 = vadd.f32 %v9389, %v9491
          %v9493 = vpop.f32.mrb[0].mxu0
          %v9494 = vadd.f32 %v9393, %v9493
          %9495 = vmatprep.mubr.f32.mxu0 0.0
          %9496 = vmatmul.mubr.f32.gmra.mrb[0].mxu0 %v6523
          %v9497 = vpop.f32.mrb[0].mxu0
          %v9498 = vadd.f32 %v9389, %v9497
          %v9499 = vpop.f32.mrb[0].mxu0
          %v9500 = vadd.f32 %v9393, %v9499
          %9501 = vmatprep.mubr.f32.mxu0 0.0
          %9502 = vmatmul.mubr.f32.gmra.mrb[0].mxu0 %v6524
          %v9503 = vpop.f32.mrb[0].mxu0
          %v9504 = vadd.f32 %v9389, %v9503
          %v9505 = vpop.f32.mrb[0].mxu0
          %v9506 = vadd.f32 %v9393, %v9505
          %9507 = vmatprep.mubr.f32.mxu0 0.0
          %9508 = vmatmul.mubr.f32.gmra.mrb[0].mxu0 %v6525
          %v9509 = vpop.f32.mrb[0].mxu0
          %v9510 = vadd.f32 %v9389, %v9509
          %v9511 = vpop.f32.mrb[0].mxu0
          %v9512 = vadd.f32 %v9393, %v9511
          %9513 = vmatprep.mubr.f32.mxu0 0.0
          %9514 = vmatmul.mubr.f32.gmra.mrb[0].mxu0 %v6526
          %v9515 = vpop.f32.mrb[0].mxu0
          %v9516 = vadd.f32 %v9389, %v9515
          %v9517 = vpop.f32.mrb[0].mxu0
          %v9518 = vadd.f32 %v9393, %v9517
          %9519 = vmatprep.mubr.f32.mxu0 0.0
          %9520 = vmatmul.mubr.f32.gmra.mrb[0].mxu0 %v6527
          %v9521 = vpop.f32.mrb[0].mxu0
          %v9522 = vadd.f32 %v9389, %v9521
          %v9523 = vpop.f32.mrb[0].mxu0
          %v9524 = vadd.f32 %v9393, %v9523
          %9525 = vmatprep.mubr.f32.mxu0 0.0
          %9526 = vmatmul.mubr.f32.gmra.mrb[0].mxu0 %v6528
          %v9527 = vpop.f32.mrb[0].mxu0
          %v9528 = vadd.f32 %v9389, %v9527
          %v9529 = vpop.f32.mrb[0].mxu0
          %v9530 = vadd.f32 %v9393, %v9529
          %9531 = vmatprep.mubr.f32.mxu0 0.0
          %9532 = vmatmul.mubr.f32.gmra.mrb[0].mxu0 %v6529
          %v9533 = vpop.f32.mrb[0].mxu0
          %v9534 = vadd.f32 %v9389, %v9533
          %v9535 = vpop.f32.mrb[0].mxu0
          %v9536 = vadd.f32 %v9393, %v9535
          %9537 = vmatprep.mubr.f32.mxu0 0.0
          %9538 = vmatmul.mubr.f32.gmra.mrb[0].mxu0 %v6530
          %v9539 = vpop.f32.mrb[0].mxu0
          %v9540 = vadd.f32 %v9389, %v9539
          %v9541 = vpop.f32.mrb[0].mxu0
          %v9542 = vadd.f32 %v9393, %v9541
          %9543 = vmatprep.mubr.f32.mxu0 0.0
          %9544 = vmatmul.mubr.f32.gmra.mrb[0].mxu0 %v6531
          %v9545 = vpop.f32.mrb[0].mxu0
          %v9546 = vadd.f32 %v9389, %v9545
          %v9547 = vpop.f32.mrb[0].mxu0
          %v9548 = vadd.f32 %v9393, %v9547
          %9549 = vmatprep.mubr.f32.mxu0 0.0
          %9550 = vmatmul.mubr.f32.gmra.mrb[0].mxu0 %v6532
          %v9551 = vpop.f32.mrb[0].mxu0
          %v9552 = vadd.f32 %v9389, %v9551
          %v9553 = vpop.f32.mrb[0].mxu0
          %v9554 = vadd.f32 %v9393, %v9553
          %9555 = vmatprep.mubr.f32.mxu0 0.0
          %9556 = vmatmul.mubr.f32.gmra.mrb[0].mxu0 %v6533
          %v9557 = vpop.f32.mrb[0].mxu0
          %v9558 = vadd.f32 %v9389, %v9557
          %v9559 = vpop.f32.mrb[0].mxu0
          %v9560 = vadd.f32 %v9393, %v9559
          %9561 = vdwg.mxu0
          %9562 = vmatprep.subr.mxu0 0.0
          %9563 = vmatpush1.msra.mxu0 %v6470
          %9564 = vmatprep.subr.mxu0 0.0
          %9565 = vmatpush1.msra.mxu0 %v6473
          %9566 = vmatprep.subr.mxu0 0.0
          %9567 = vmatpush1.msra.mxu0 %v6476
          %9568 = vmatprep.subr.mxu0 0.0
          %9569 = vmatpush1.msra.mxu0 %v6479
          %9570 = vmatprep.subr.mxu0 0.0
          %9571 = vmatpush1.msra.mxu0 %v6482
          %9572 = vmatprep.subr.mxu0 0.0
          %9573 = vmatpush1.msra.mxu0 %v6485
          %9574 = vmatprep.subr.mxu0 0.0
          %9575 = vmatpush1.msra.mxu0 %v6488
          %9576 = vmatprep.subr.mxu0 0.0
          %9577 = vmatpush1.msra.mxu0 %v6491
          %9578 = vmatprep.subr.mxu0 0.0
          %9579 = vmatpush1.msra.mxu0 %v6494
          %9580 = vmatprep.subr.mxu0 0.0
          %9581 = vmatpush1.msra.mxu0 %v6497
          %9582 = vmatprep.subr.mxu0 0.0
          %9583 = vmatpush1.msra.mxu0 %v6500
          %9584 = vmatprep.subr.mxu0 0.0
          %9585 = vmatpush1.msra.mxu0 %v6503
          %9586 = vmatprep.subr.mxu0 0.0
          %9587 = vmatpush1.msra.mxu0 %v6506
          %9588 = vmatprep.subr.mxu0 0.0
          %9589 = vmatpush1.msra.mxu0 %v6509
          %9590 = vmatprep.subr.mxu0 0.0
          %9591 = vmatpush1.msra.mxu0 %v6512
          %9592 = vmatprep.subr.mxu0 0.0
          %9593 = vmatpush1.msra.mxu0 %v6515
          %9594 = vmatprep.subr.mxu0 0.0
          %9595 = vmatpush1.msra.mxu0 0.0
          %9596 = vmatprep.subr.mxu0 0.0
          %9597 = vmatpush1.msra.mxu0 0.0
          %9598 = vmatprep.subr.mxu0 0.0
          %9599 = vmatpush1.msra.mxu0 0.0
          %9600 = vmatprep.subr.mxu0 0.0
          %9601 = vmatpush1.msra.mxu0 0.0
          %9602 = vmatprep.subr.mxu0 0.0
          %9603 = vmatpush1.msra.mxu0 0.0
          %9604 = vmatprep.subr.mxu0 0.0
          %9605 = vmatpush1.msra.mxu0 0.0
          %9606 = vmatprep.subr.mxu0 0.0
          %9607 = vmatpush1.msra.mxu0 0.0
          %9608 = vmatprep.subr.mxu0 0.0
          %9609 = vmatpush1.msra.mxu0 0.0
          %9610 = vmatprep.subr.mxu0 0.0
          %9611 = vmatpush1.msra.mxu0 0.0
          %9612 = vmatprep.subr.mxu0 0.0
          %9613 = vmatpush1.msra.mxu0 0.0
          %9614 = vmatprep.subr.mxu0 0.0
          %9615 = vmatpush1.msra.mxu0 0.0
          %9616 = vmatprep.subr.mxu0 0.0
          %9617 = vmatpush1.msra.mxu0 0.0
          %9618 = vmatprep.subr.mxu0 0.0
          %9619 = vmatpush1.msra.mxu0 0.0
          %9620 = vmatprep.subr.mxu0 0.0
          %9621 = vmatpush1.msra.mxu0 0.0
          %9622 = vmatprep.subr.mxu0 0.0
          %9623 = vmatpush1.msra.mxu0 0.0
          %9624 = vmatprep.subr.mxu0 0.0
          %9625 = vmatpush1.msra.mxu0 0.0
          %9626 = vmatprep.mubr.f32.mxu0 0.0
          %9627 = vmatmul.mubr.f32.gmra.mrb[0].mxu0 %v6518
          %v9628 = vpop.f32.mrb[0].mxu0
          %v9629 = vadd.f32 %v9397, %v9628
          %v9630 = vpop.f32.mrb[0].mxu0
          %9631 = vmatprep.mubr.f32.mxu0 0.0
          %9632 = vmatmul.mubr.f32.gmra.mrb[0].mxu0 %v6519
          %v9633 = vpop.f32.mrb[0].mxu0
          %v9634 = vadd.f32 %v9397, %v9633
          %v9635 = vpop.f32.mrb[0].mxu0
          %9636 = vmatprep.mubr.f32.mxu0 0.0
          %9637 = vmatmul.mubr.f32.gmra.mrb[0].mxu0 %v6520
          %v9638 = vpop.f32.mrb[0].mxu0
          %v9639 = vadd.f32 %v9397, %v9638
          %v9640 = vpop.f32.mrb[0].mxu0
          %9641 = vmatprep.mubr.f32.mxu0 0.0
          %9642 = vmatmul.mubr.f32.gmra.mrb[0].mxu0 %v6521
          %v9643 = vpop.f32.mrb[0].mxu0
          %v9644 = vadd.f32 %v9397, %v9643
          %v9645 = vpop.f32.mrb[0].mxu0
          %9646 = vmatprep.mubr.f32.mxu0 0.0
          %9647 = vmatmul.mubr.f32.gmra.mrb[0].mxu0 %v6522
          %v9648 = vpop.f32.mrb[0].mxu0
          %v9649 = vadd.f32 %v9397, %v9648
          %v9650 = vpop.f32.mrb[0].mxu0
          %9651 = vmatprep.mubr.f32.mxu0 0.0
          %9652 = vmatmul.mubr.f32.gmra.mrb[0].mxu0 %v6523
          %v9653 = vpop.f32.mrb[0].mxu0
          %v9654 = vadd.f32 %v9397, %v9653
          %v9655 = vpop.f32.mrb[0].mxu0
          %9656 = vmatprep.mubr.f32.mxu0 0.0
          %9657 = vmatmul.mubr.f32.gmra.mrb[0].mxu0 %v6524
          %v9658 = vpop.f32.mrb[0].mxu0
          %v9659 = vadd.f32 %v9397, %v9658
          %v9660 = vpop.f32.mrb[0].mxu0
          %9661 = vmatprep.mubr.f32.mxu0 0.0
          %9662 = vmatmul.mubr.f32.gmra.mrb[0].mxu0 %v6525
          %v9663 = vpop.f32.mrb[0].mxu0
          %v9664 = vadd.f32 %v9397, %v9663
          %v9665 = vpop.f32.mrb[0].mxu0
          %9666 = vmatprep.mubr.f32.mxu0 0.0
          %9667 = vmatmul.mubr.f32.gmra.mrb[0].mxu0 %v6526
          %v9668 = vpop.f32.mrb[0].mxu0
          %v9669 = vadd.f32 %v9397, %v9668
          %v9670 = vpop.f32.mrb[0].mxu0
          %9671 = vmatprep.mubr.f32.mxu0 0.0
          %9672 = vmatmul.mubr.f32.gmra.mrb[0].mxu0 %v6527
          %v9673 = vpop.f32.mrb[0].mxu0
          %v9674 = vadd.f32 %v9397, %v9673
          %v9675 = vpop.f32.mrb[0].mxu0
          %9676 = vmatprep.mubr.f32.mxu0 0.0
          %9677 = vmatmul.mubr.f32.gmra.mrb[0].mxu0 %v6528
          %v9678 = vpop.f32.mrb[0].mxu0
          %v9679 = vadd.f32 %v9397, %v9678
          %v9680 = vpop.f32.mrb[0].mxu0
          %9681 = vmatprep.mubr.f32.mxu0 0.0
          %9682 = vmatmul.mubr.f32.gmra.mrb[0].mxu0 %v6529
          %v9683 = vpop.f32.mrb[0].mxu0
          %v9684 = vadd.f32 %v9397, %v9683
          %v9685 = vpop.f32.mrb[0].mxu0
          %9686 = vmatprep.mubr.f32.mxu0 0.0
          %9687 = vmatmul.mubr.f32.gmra.mrb[0].mxu0 %v6530
          %v9688 = vpop.f32.mrb[0].mxu0
          %v9689 = vadd.f32 %v9397, %v9688
          %v9690 = vpop.f32.mrb[0].mxu0
          %9691 = vmatprep.mubr.f32.mxu0 0.0
          %9692 = vmatmul.mubr.f32.gmra.mrb[0].mxu0 %v6531
          %v9693 = vpop.f32.mrb[0].mxu0
          %v9694 = vadd.f32 %v9397, %v9693
          %v9695 = vpop.f32.mrb[0].mxu0
          %9696 = vmatprep.mubr.f32.mxu0 0.0
          %9697 = vmatmul.mubr.f32.gmra.mrb[0].mxu0 %v6532
          %v9698 = vpop.f32.mrb[0].mxu0
          %v9699 = vadd.f32 %v9397, %v9698
          %v9700 = vpop.f32.mrb[0].mxu0
          %9701 = vmatprep.mubr.f32.mxu0 0.0
          %9702 = vmatmul.mubr.f32.gmra.mrb[0].mxu0 %v6533
          %v9703 = vpop.f32.mrb[0].mxu0
          %v9704 = vadd.f32 %v9397, %v9703
          %v9705 = vpop.f32.mrb[0].mxu0
          %9706 = vdwg.mxu0
          %v9707 = vadd.f32 %v9146, %v9468
          %v9708 = vadd.f32 %v9152, %v9474
          %v9709 = vadd.f32 %v9158, %v9480
          %v9710 = vadd.f32 %v9164, %v9486
          %v9711 = vadd.f32 %v9170, %v9492
          %v9712 = vadd.f32 %v9176, %v9498
          %v9713 = vadd.f32 %v9182, %v9504
          %v9714 = vadd.f32 %v9188, %v9510
          %v9715 = vadd.f32 %v9194, %v9516
          %v9716 = vadd.f32 %v9200, %v9522
          %v9717 = vadd.f32 %v9206, %v9528
          %v9718 = vadd.f32 %v9212, %v9534
          %v9719 = vadd.f32 %v9218, %v9540
          %v9720 = vadd.f32 %v9224, %v9546
          %v9721 = vadd.f32 %v9230, %v9552
          %v9722 = vadd.f32 %v9236, %v9558
          %v9723 = vxor.u32 %v9707, 2147483648
          %v9724 = vxor.u32 %v9708, 2147483648
          %v9725 = vxor.u32 %v9709, 2147483648
          %v9726 = vxor.u32 %v9710, 2147483648
          %v9727 = vxor.u32 %v9711, 2147483648
          %v9728 = vxor.u32 %v9712, 2147483648
          %v9729 = vxor.u32 %v9713, 2147483648
          %v9730 = vxor.u32 %v9714, 2147483648
          %v9731 = vxor.u32 %v9715, 2147483648
          %v9732 = vxor.u32 %v9716, 2147483648
          %v9733 = vxor.u32 %v9717, 2147483648
          %v9734 = vxor.u32 %v9718, 2147483648
          %v9735 = vxor.u32 %v9719, 2147483648
          %v9736 = vxor.u32 %v9720, 2147483648
          %v9737 = vxor.u32 %v9721, 2147483648
          %v9738 = vxor.u32 %v9722, 2147483648
          %v9739 = vmul.f32 %v9723, 1.442695
          %v9740 = vpow.pop %v9739
          %v9741 = vmul.f32 %v9724, 1.442695
          %v9742 = vpow.pop %v9741
          %v9743 = vmul.f32 %v9725, 1.442695
          %v9744 = vpow.pop %v9743
          %v9745 = vmul.f32 %v9726, 1.442695
          %v9746 = vpow.pop %v9745
          %v9747 = vmul.f32 %v9727, 1.442695
          %v9748 = vpow.pop %v9747
          %v9749 = vmul.f32 %v9728, 1.442695
          %v9750 = vpow.pop %v9749
          %v9751 = vmul.f32 %v9729, 1.442695
          %v9752 = vpow.pop %v9751
          %v9753 = vmul.f32 %v9730, 1.442695
          %v9754 = vpow.pop %v9753
          %v9755 = vmul.f32 %v9731, 1.442695
          %v9756 = vpow.pop %v9755
          %v9757 = vmul.f32 %v9732, 1.442695
          %v9758 = vpow.pop %v9757
          %v9759 = vmul.f32 %v9733, 1.442695
          %v9760 = vpow.pop %v9759
          %v9761 = vmul.f32 %v9734, 1.442695
          %v9762 = vpow.pop %v9761
          %v9763 = vmul.f32 %v9735, 1.442695
          %v9764 = vpow.pop %v9763
          %v9765 = vmul.f32 %v9736, 1.442695
          %v9766 = vpow.pop %v9765
          %v9767 = vmul.f32 %v9737, 1.442695
          %v9768 = vpow.pop %v9767
          %v9769 = vmul.f32 %v9738, 1.442695
          %v9770 = vpow.pop %v9769
          %v9771 = vadd.f32 %v9740, 1.0
          %v9772 = vadd.f32 %v9742, 1.0
          %v9773 = vadd.f32 %v9744, 1.0
          %v9774 = vadd.f32 %v9746, 1.0
          %v9775 = vadd.f32 %v9748, 1.0
          %v9776 = vadd.f32 %v9750, 1.0
          %v9777 = vadd.f32 %v9752, 1.0
          %v9778 = vadd.f32 %v9754, 1.0
          %v9779 = vadd.f32 %v9756, 1.0
          %v9780 = vadd.f32 %v9758, 1.0
          %v9781 = vadd.f32 %v9760, 1.0
          %v9782 = vadd.f32 %v9762, 1.0
          %v9783 = vadd.f32 %v9764, 1.0
          %v9784 = vadd.f32 %v9766, 1.0
          %v9785 = vadd.f32 %v9768, 1.0
          %v9786 = vadd.f32 %v9770, 1.0
          %v9787 = vrcp.pop %v9771
          %v9788 = vmul.f32 1.0, %v9787
          %v9789 = vrcp.pop %v9772
          %v9790 = vmul.f32 1.0, %v9789
          %v9791 = vrcp.pop %v9773
          %v9792 = vmul.f32 1.0, %v9791
          %v9793 = vrcp.pop %v9774
          %v9794 = vmul.f32 1.0, %v9793
          %v9795 = vrcp.pop %v9775
          %v9796 = vmul.f32 1.0, %v9795
          %v9797 = vrcp.pop %v9776
          %v9798 = vmul.f32 1.0, %v9797
          %v9799 = vrcp.pop %v9777
          %v9800 = vmul.f32 1.0, %v9799
          %v9801 = vrcp.pop %v9778
          %v9802 = vmul.f32 1.0, %v9801
          %v9803 = vrcp.pop %v9779
          %v9804 = vmul.f32 1.0, %v9803
          %v9805 = vrcp.pop %v9780
          %v9806 = vmul.f32 1.0, %v9805
          %v9807 = vrcp.pop %v9781
          %v9808 = vmul.f32 1.0, %v9807
          %v9809 = vrcp.pop %v9782
          %v9810 = vmul.f32 1.0, %v9809
          %v9811 = vrcp.pop %v9783
          %v9812 = vmul.f32 1.0, %v9811
          %v9813 = vrcp.pop %v9784
          %v9814 = vmul.f32 1.0, %v9813
          %v9815 = vrcp.pop %v9785
          %v9816 = vmul.f32 1.0, %v9815
          %v9817 = vrcp.pop %v9786
          %v9818 = vmul.f32 1.0, %v9817
          %v9819 = vadd.f32 %v9148, %v9470
          %v9820 = vadd.f32 %v9154, %v9476
          %v9821 = vadd.f32 %v9160, %v9482
          %v9822 = vadd.f32 %v9166, %v9488
          %v9823 = vadd.f32 %v9172, %v9494
          %v9824 = vadd.f32 %v9178, %v9500
          %v9825 = vadd.f32 %v9184, %v9506
          %v9826 = vadd.f32 %v9190, %v9512
          %v9827 = vadd.f32 %v9196, %v9518
          %v9828 = vadd.f32 %v9202, %v9524
          %v9829 = vadd.f32 %v9208, %v9530
          %v9830 = vadd.f32 %v9214, %v9536
          %v9831 = vadd.f32 %v9220, %v9542
          %v9832 = vadd.f32 %v9226, %v9548
          %v9833 = vadd.f32 %v9232, %v9554
          %v9834 = vadd.f32 %v9238, %v9560
          %v9835 = vxor.u32 %v9819, 2147483648
          %v9836 = vxor.u32 %v9820, 2147483648
          %v9837 = vxor.u32 %v9821, 2147483648
          %v9838 = vxor.u32 %v9822, 2147483648
          %v9839 = vxor.u32 %v9823, 2147483648
          %v9840 = vxor.u32 %v9824, 2147483648
          %v9841 = vxor.u32 %v9825, 2147483648
          %v9842 = vxor.u32 %v9826, 2147483648
          %v9843 = vxor.u32 %v9827, 2147483648
          %v9844 = vxor.u32 %v9828, 2147483648
          %v9845 = vxor.u32 %v9829, 2147483648
          %v9846 = vxor.u32 %v9830, 2147483648
          %v9847 = vxor.u32 %v9831, 2147483648
          %v9848 = vxor.u32 %v9832, 2147483648
          %v9849 = vxor.u32 %v9833, 2147483648
          %v9850 = vxor.u32 %v9834, 2147483648
          %v9851 = vmul.f32 %v9835, 1.442695
          %v9852 = vpow.pop %v9851
          %v9853 = vmul.f32 %v9836, 1.442695
          %v9854 = vpow.pop %v9853
          %v9855 = vmul.f32 %v9837, 1.442695
          %v9856 = vpow.pop %v9855
          %v9857 = vmul.f32 %v9838, 1.442695
          %v9858 = vpow.pop %v9857
          %v9859 = vmul.f32 %v9839, 1.442695
          %v9860 = vpow.pop %v9859
          %v9861 = vmul.f32 %v9840, 1.442695
          %v9862 = vpow.pop %v9861
          %v9863 = vmul.f32 %v9841, 1.442695
          %v9864 = vpow.pop %v9863
          %v9865 = vmul.f32 %v9842, 1.442695
          %v9866 = vpow.pop %v9865
          %v9867 = vmul.f32 %v9843, 1.442695
          %v9868 = vpow.pop %v9867
          %v9869 = vmul.f32 %v9844, 1.442695
          %v9870 = vpow.pop %v9869
          %v9871 = vmul.f32 %v9845, 1.442695
          %v9872 = vpow.pop %v9871
          %v9873 = vmul.f32 %v9846, 1.442695
          %v9874 = vpow.pop %v9873
          %v9875 = vmul.f32 %v9847, 1.442695
          %v9876 = vpow.pop %v9875
          %v9877 = vmul.f32 %v9848, 1.442695
          %v9878 = vpow.pop %v9877
          %v9879 = vmul.f32 %v9849, 1.442695
          %v9880 = vpow.pop %v9879
          %v9881 = vmul.f32 %v9850, 1.442695
          %v9882 = vpow.pop %v9881
          %v9883 = vadd.f32 %v9852, 1.0
          %v9884 = vadd.f32 %v9854, 1.0
          %v9885 = vadd.f32 %v9856, 1.0
          %v9886 = vadd.f32 %v9858, 1.0
          %v9887 = vadd.f32 %v9860, 1.0
          %v9888 = vadd.f32 %v9862, 1.0
          %v9889 = vadd.f32 %v9864, 1.0
          %v9890 = vadd.f32 %v9866, 1.0
          %v9891 = vadd.f32 %v9868, 1.0
          %v9892 = vadd.f32 %v9870, 1.0
          %v9893 = vadd.f32 %v9872, 1.0
          %v9894 = vadd.f32 %v9874, 1.0
          %v9895 = vadd.f32 %v9876, 1.0
          %v9896 = vadd.f32 %v9878, 1.0
          %v9897 = vadd.f32 %v9880, 1.0
          %v9898 = vadd.f32 %v9882, 1.0
          %v9899 = vrcp.pop %v9883
          %v9900 = vmul.f32 1.0, %v9899
          %v9901 = vrcp.pop %v9884
          %v9902 = vmul.f32 1.0, %v9901
          %v9903 = vrcp.pop %v9885
          %v9904 = vmul.f32 1.0, %v9903
          %v9905 = vrcp.pop %v9886
          %v9906 = vmul.f32 1.0, %v9905
          %v9907 = vrcp.pop %v9887
          %v9908 = vmul.f32 1.0, %v9907
          %v9909 = vrcp.pop %v9888
          %v9910 = vmul.f32 1.0, %v9909
          %v9911 = vrcp.pop %v9889
          %v9912 = vmul.f32 1.0, %v9911
          %v9913 = vrcp.pop %v9890
          %v9914 = vmul.f32 1.0, %v9913
          %v9915 = vrcp.pop %v9891
          %v9916 = vmul.f32 1.0, %v9915
          %v9917 = vrcp.pop %v9892
          %v9918 = vmul.f32 1.0, %v9917
          %v9919 = vrcp.pop %v9893
          %v9920 = vmul.f32 1.0, %v9919
          %v9921 = vrcp.pop %v9894
          %v9922 = vmul.f32 1.0, %v9921
          %v9923 = vrcp.pop %v9895
          %v9924 = vmul.f32 1.0, %v9923
          %v9925 = vrcp.pop %v9896
          %v9926 = vmul.f32 1.0, %v9925
          %v9927 = vrcp.pop %v9897
          %v9928 = vmul.f32 1.0, %v9927
          %v9929 = vrcp.pop %v9898
          %v9930 = vmul.f32 1.0, %v9929
          %v9931 = vmul.f32 %v9788, %v9629
          %v9932 = vmul.f32 %v9790, %v9634
          %v9933 = vmul.f32 %v9792, %v9639
          %v9934 = vmul.f32 %v9794, %v9644
          %v9935 = vmul.f32 %v9796, %v9649
          %v9936 = vmul.f32 %v9798, %v9654
          %v9937 = vmul.f32 %v9800, %v9659
          %v9938 = vmul.f32 %v9802, %v9664
          %v9939 = vmul.f32 %v9804, %v9669
          %v9940 = vmul.f32 %v9806, %v9674
          %v9941 = vmul.f32 %v9808, %v9679
          %v9942 = vmul.f32 %v9810, %v9684
          %v9943 = vmul.f32 %v9812, %v9689
          %v9944 = vmul.f32 %v9814, %v9694
          %v9945 = vmul.f32 %v9816, %v9699
          %v9946 = vmul.f32 %v9818, %v9704
          %v9947 = vadd.f32 %v9307, %v9931
          %v9948 = vadd.f32 %v9312, %v9932
          %v9949 = vadd.f32 %v9317, %v9933
          %v9950 = vadd.f32 %v9322, %v9934
          %v9951 = vadd.f32 %v9327, %v9935
          %v9952 = vadd.f32 %v9332, %v9936
          %v9953 = vadd.f32 %v9337, %v9937
          %v9954 = vadd.f32 %v9342, %v9938
          %v9955 = vadd.f32 %v9347, %v9939
          %v9956 = vadd.f32 %v9352, %v9940
          %v9957 = vadd.f32 %v9357, %v9941
          %v9958 = vadd.f32 %v9362, %v9942
          %v9959 = vadd.f32 %v9367, %v9943
          %v9960 = vadd.f32 %v9372, %v9944
          %v9961 = vadd.f32 %v9377, %v9945
          %v9962 = vadd.f32 %v9382, %v9946
          %v9963 = vtanh.pop %v9947
          %v9964 = vtanh.pop %v9948
          %v9965 = vtanh.pop %v9949
          %v9966 = vtanh.pop %v9950
          %v9967 = vtanh.pop %v9951
          %v9968 = vtanh.pop %v9952
          %v9969 = vtanh.pop %v9953
          %v9970 = vtanh.pop %v9954
          %v9971 = vtanh.pop %v9955
          %v9972 = vtanh.pop %v9956
          %v9973 = vtanh.pop %v9957
          %v9974 = vtanh.pop %v9958
          %v9975 = vtanh.pop %v9959
          %v9976 = vtanh.pop %v9960
          %v9977 = vtanh.pop %v9961
          %v9978 = vtanh.pop %v9962
          %v9979 = vsub.f32 1.0, %v9900
          %v9980 = vsub.f32 1.0, %v9902
          %v9981 = vsub.f32 1.0, %v9904
          %v9982 = vsub.f32 1.0, %v9906
          %v9983 = vsub.f32 1.0, %v9908
          %v9984 = vsub.f32 1.0, %v9910
          %v9985 = vsub.f32 1.0, %v9912
          %v9986 = vsub.f32 1.0, %v9914
          %v9987 = vsub.f32 1.0, %v9916
          %v9988 = vsub.f32 1.0, %v9918
          %v9989 = vsub.f32 1.0, %v9920
          %v9990 = vsub.f32 1.0, %v9922
          %v9991 = vsub.f32 1.0, %v9924
          %v9992 = vsub.f32 1.0, %v9926
          %v9993 = vsub.f32 1.0, %v9928
          %v9994 = vsub.f32 1.0, %v9930
          %v9995 = vmul.f32 %v9979, %v9963
          %v9996 = vmul.f32 %v9980, %v9964
          %v9997 = vmul.f32 %v9981, %v9965
          %v9998 = vmul.f32 %v9982, %v9966
          %v9999 = vmul.f32 %v9983, %v9967
          %v10000 = vmul.f32 %v9984, %v9968
          %v10001 = vmul.f32 %v9985, %v9969
          %v10002 = vmul.f32 %v9986, %v9970
          %v10003 = vmul.f32 %v9987, %v9971
          %v10004 = vmul.f32 %v9988, %v9972
          %v10005 = vmul.f32 %v9989, %v9973
          %v10006 = vmul.f32 %v9990, %v9974
          %v10007 = vmul.f32 %v9991, %v9975
          %v10008 = vmul.f32 %v9992, %v9976
          %v10009 = vmul.f32 %v9993, %v9977
          %v10010 = vmul.f32 %v9994, %v9978
          %v10011 = vmul.f32 %v9900, %v6518
          %v10012 = vmul.f32 %v9902, %v6519
          %v10013 = vmul.f32 %v9904, %v6520
          %v10014 = vmul.f32 %v9906, %v6521
          %v10015 = vmul.f32 %v9908, %v6522
          %v10016 = vmul.f32 %v9910, %v6523
          %v10017 = vmul.f32 %v9912, %v6524
          %v10018 = vmul.f32 %v9914, %v6525
          %v10019 = vmul.f32 %v9916, %v6526
          %v10020 = vmul.f32 %v9918, %v6527
          %v10021 = vmul.f32 %v9920, %v6528
          %v10022 = vmul.f32 %v9922, %v6529
          %v10023 = vmul.f32 %v9924, %v6530
          %v10024 = vmul.f32 %v9926, %v6531
          %v10025 = vmul.f32 %v9928, %v6532
          %v10026 = vmul.f32 %v9930, %v6533
          %v10027 = vadd.f32 %v9995, %v10011
          %v10028 = vadd.f32 %v9996, %v10012
          %v10029 = vadd.f32 %v9997, %v10013
          %v10030 = vadd.f32 %v9998, %v10014
          %v10031 = vadd.f32 %v9999, %v10015
          %v10032 = vadd.f32 %v10000, %v10016
          %v10033 = vadd.f32 %v10001, %v10017
          %v10034 = vadd.f32 %v10002, %v10018
          %v10035 = vadd.f32 %v10003, %v10019
          %v10036 = vadd.f32 %v10004, %v10020
          %v10037 = vadd.f32 %v10005, %v10021
          %v10038 = vadd.f32 %v10006, %v10022
          %v10039 = vadd.f32 %v10007, %v10023
          %v10040 = vadd.f32 %v10008, %v10024
          %v10041 = vadd.f32 %v10009, %v10025
          %v10042 = vadd.f32 %v10010, %v10026
          %v10043 = vmax.f32 %v10027, 0.0
          %v10044 = vmax.f32 %v10028, 0.0
          %v10045 = vmax.f32 %v10029, 0.0
          %v10046 = vmax.f32 %v10030, 0.0
          %v10047 = vmax.f32 %v10031, 0.0
          %v10048 = vmax.f32 %v10032, 0.0
          %v10049 = vmax.f32 %v10033, 0.0
          %v10050 = vmax.f32 %v10034, 0.0
          %v10051 = vmax.f32 %v10035, 0.0
          %v10052 = vmax.f32 %v10036, 0.0
          %v10053 = vmax.f32 %v10037, 0.0
          %v10054 = vmax.f32 %v10038, 0.0
          %v10055 = vmax.f32 %v10039, 0.0
          %v10056 = vmax.f32 %v10040, 0.0
          %v10057 = vmax.f32 %v10041, 0.0
          %v10058 = vmax.f32 %v10042, 0.0
          %10059 = vst [vmem:[#allocation26] sm:$0xff] %v10043
          %10060 = vst [vmem:[#allocation26 + $0x8] sm:$0xff] %v10044
          %10061 = vst [vmem:[#allocation26 + $0x10] sm:$0xff] %v10045
          %10062 = vst [vmem:[#allocation26 + $0x18] sm:$0xff] %v10046
          %10063 = vst [vmem:[#allocation26 + $0x20] sm:$0xff] %v10047
          %10064 = vst [vmem:[#allocation26 + $0x28] sm:$0xff] %v10048
          %10065 = vst [vmem:[#allocation26 + $0x30] sm:$0xff] %v10049
          %10066 = vst [vmem:[#allocation26 + $0x38] sm:$0xff] %v10050
          %10067 = vst [vmem:[#allocation26 + $0x40] sm:$0xff] %v10051
          %10068 = vst [vmem:[#allocation26 + $0x48] sm:$0xff] %v10052
          %10069 = vst [vmem:[#allocation26 + $0x50] sm:$0xff] %v10053
          %10070 = vst [vmem:[#allocation26 + $0x58] sm:$0xff] %v10054
          %10071 = vst [vmem:[#allocation26 + $0x60] sm:$0xff] %v10055
          %10072 = vst [vmem:[#allocation26 + $0x68] sm:$0xff] %v10056
          %10073 = vst [vmem:[#allocation26 + $0x70] sm:$0xff] %v10057
          %10074 = vst [vmem:[#allocation26 + $0x78] sm:$0xff] %v10058
        $region204: #{tpu_custom_call.1} parent=135 // pred_fallthru
          _
        // Predicated region
        $region205: #{tpu_custom_call.1} parent=135 // pred_check
          %p10075 = pneg %p801
        $region206: #{tpu_custom_call.1} parent=135 // pred_check_branch
          %10077 = sbr.rel (%p10075) target = $region208
        $region207: #{tpu_custom_call.1} parent=135 // pred_region
          %s10079 = ssub.s32 2048, 2048
          %10080 = vsyncadd [#allocation5], %s10079
          %s10081 = sshll.u32 [#allocation26], 4
          %s10082 = int_to_ptr.vmem [resolvable:$true] %s10081
          %10087 = dma.vmem_to_hbm [thread:$0]  %s10082, 2048, %s59, [#allocation5], 128, 128, 8
        $region208: #{tpu_custom_call.1} parent=135 // pred_fallthru
          _
        // Predicated region
        $region209: #{tpu_custom_call.1} parent=135 // pred_check
          %p10088 = pneg %p801
        $region210: #{tpu_custom_call.1} parent=135 // pred_check_branch
          %10090 = sbr.rel (%p10088) target = $region212
        $region211: #{tpu_custom_call.1} parent=135 // pred_region
          %10091 = dma.done [#allocation5], 2048
        $region212: #{tpu_custom_call.1} parent=135 // pred_fallthru
          _
      $region136: #{tpu_custom_call.1} parent=5 // pred_fallthru
        _
      %p10092 = scmp.le.s32.totalorder 2, %s75
      // Predicated region
      $region213: #{tpu_custom_call.1} parent=5 // pred_check
        %p10093 = pneg %p10092
      $region214: #{tpu_custom_call.1} parent=5 // pred_check_branch
        %10095 = sbr.rel (%p10093) target = $region216
      $region215: #{tpu_custom_call.1} parent=5 // pred_region
        %s10096 = ssub.s32 %s75, 2
      $region216: #{tpu_custom_call.1} parent=5 // pred_fallthru
        _
    $region6: #{tpu_custom_call.1} parent=1 // loop_footer
      %s79 = sadd.s32 1, %s75
    $region7: #{tpu_custom_call.1} parent=1 // loop_footer_branch
      %74 = sbr.rel target = $region3
    $region8: #{tpu_custom_call.1} parent=1 // loop_exit
      _
    %10097 = vsyncpa [#allocation4], 1
    %s10098 = scalar_lea.sflag [#allocation4], 1
    %10099 = vsyncpa %s10098, 1
    %10100 = vsyncpa [#allocation7], 1
    %10101 = vsyncpa [#allocation10], 1
    %10102 = vsyncpa [#allocation13], 1
    %10103 = vsyncpa [#allocation16], 1
    %10104 = vsyncpa [#allocation19], 1
    %10105 = vsyncpa [#allocation22], 1
    %10106 = vsyncpa [#allocation5], 1
    %s10107 = scalar_lea.sflag [#allocation5], 1
    %10108 = vsyncpa %s10107, 1

</llo_original>
